<compile_context>
chip_gen: v7x
topology: tpu7x:2x2x1
jax: 0.10.0
libtpu: 0.0.40
codegen_flags: <defaults>
</compile_context>

<pallas_src>
import functools
import numpy as np
import jax
import jax.numpy as jnp
from jax.experimental import pallas as pl
from jax.experimental.pallas import tpu as pltpu

# ----------------------- synthetic config -----------------------
SB = 2                       # batch size
N_PTS = 512                  # points per batch element
D_LATENT = 32                # cfg.d_latent (voxel feature channels)
D_LANG = 16                  # cfg.d_lang (unused, see TODO)
D_HIDDEN = 64                # cfg.mlp.d_hidden
N_BLOCKS = 5                 # cfg.mlp.n_blocks
COMBINE_LAYER = 3            # cfg.mlp.combine_layer
MAX_SH_DEGREE = 1            # cfg.mlp.max_sh_degree
NUM_FREQS = 6                # cfg.code.num_freqs
FREQ_FACTOR = 1.5            # cfg.code.freq_factor
VOX = 8                      # voxel grid resolution (D=H=W)
COORD_BOUNDS = [-0.3, -0.5, 0.6, 0.7, 0.5, 1.6]   # cfg.coordinate_bounds

D_PE = 3 * (2 * NUM_FREQS + 1)                                   # 39
SH_REST = ((MAX_SH_DEGREE + 1) ** 2 - 1) * 3                     # 9
SPLITS = [3, 1, 3, 4, 3, 3, SH_REST]                             # xyz,opac,scale,rot,dc,feat,rest
D_OUT = sum(SPLITS)                                              # 26
OUT_OFFS = np.cumsum([0] + SPLITS)                               # [0,3,4,7,11,14,17,26]
N_LIN_Z = min(COMBINE_LAYER, N_BLOCKS)                           # 3
assert N_LIN_Z >= 2

# lane-packed slab layouts (width 128 => unmasked full-lane loads/stores)
D_PACK = 128                 # packed input width
OFF_XYZ = 0                  # world xyz (aligned with output xyz lanes for residual add)
OFF_Z = 3                    # voxel latent
OFF_PE = OFF_Z + D_LATENT    # 35: positional encoding
D_USED = OFF_PE + D_PE       # 74
D_OUT_PAD = 128              # padded output width
D_FRONT = N_LIN_Z * 128      # fused front matmul width (128-aligned groups)


# ----------------------- Pallas kernel -----------------------
def gs_embed_kernel(in_ref, wf_ref, bf_ref, blk_w_ref, blk_b_ref,
                    wout_ref, bout_ref, regw_ref, regb_ref, out_ref):
    dot = functools.partial(jnp.dot, preferred_element_type=jnp.float32)
    relu = lambda v: jnp.maximum(v, 0.0)

    pin32 = in_ref[...]                       # (TM, 128) f32: [xyz | z | PE | 0]
    pin = pin32.astype(jnp.bfloat16)          # bf16 operand for all MXU work

    # Fused front matmul: group 0 = lin_in(PE) + lin_z[0](z) (+ biases),
    # group g>=1 = lin_z[g](z) (+ bias).  Groups are 128-lane aligned so the
    # slices below are free (no lane re-layout).
    front = dot(pin, wf_ref[...]) + bf_ref[...]       # (TM, N_LIN_Z*128) f32
    x = front[:, 0:D_HIDDEN]                          # (TM, 64) f32

    # ResnetFC trunk (beta=0 -> ReLU; use_spade=False).
    # combine_interleaved at blk == COMBINE_LAYER is identity (NS == 1 view).
    for blk in range(N_BLOCKS):
        if 1 <= blk < N_LIN_Z:                        # remaining pre-combine injections
            g = blk * 128
            x = x + front[:, g:g + D_HIDDEN]
        net = (dot(relu(x).astype(jnp.bfloat16), blk_w_ref[2 * blk])
               + blk_b_ref[2 * blk:2 * blk + 1, :])
        dx = (dot(relu(net).astype(jnp.bfloat16), blk_w_ref[2 * blk + 1])
              + blk_b_ref[2 * blk + 1:2 * blk + 2, :])
        x = x + dx

    lat = dot(relu(x).astype(jnp.bfloat16), wout_ref[...]) + bout_ref[...]    # (TM, 128)

    # GSPointCloudRegresser: softplus(beta=100, threshold=20) + fused Linear (padded lanes
    # carry softplus(0) but hit zero rows of regw, so they contribute nothing).
    bx = 100.0 * lat
    sp = jnp.where(bx > 20.0, lat, jnp.log1p(jnp.exp(jnp.minimum(bx, 20.0))) * 0.01)
    raw = dot(sp.astype(jnp.bfloat16), regw_ref[...]) + regb_ref[...]         # (TM, 128)

    # per-group output activations via lane masks -> single lane-dense store
    e_xyz, e_opac, e_scale, e_rot = (int(OUT_OFFS[i]) for i in (1, 2, 3, 4))
    lane = jax.lax.broadcasted_iota(jnp.int32, raw.shape, 1)

    xyz_res = raw + pin32                                     # world xyz sits at lanes [0,3)
    opac = jax.nn.sigmoid(raw)                                # opacity_activation
    scal = jnp.minimum(jnp.exp(raw), 0.05)                    # exp + clamp_max(0.05)
    rot_mask = (lane >= e_scale) & (lane < e_rot)
    rsum = jnp.sum(jnp.where(rot_mask, raw * raw, 0.0), axis=-1, keepdims=True)
    rot = raw * jax.lax.rsqrt(jnp.maximum(rsum, 1e-24))       # F.normalize(dim=-1, eps=1e-12)

    out_ref[...] = jnp.where(lane < e_xyz, xyz_res,
                   jnp.where(lane < e_opac, opac,
                   jnp.where(lane < e_scale, scal,
                   jnp.where(lane < e_rot, rot, raw))))


# ----------------------- JAX glue -----------------------
def positional_encoding(xc):
    """pixelNeRF ordering: [x, sin(f0 x), cos(f0 x), sin(f1 x), cos(f1 x), ...]"""
    feats = [xc]
    for k in range(NUM_FREQS):
        f = FREQ_FACTOR * (2.0 ** k)
        feats.append(jnp.sin(f * xc))
        feats.append(jnp.cos(f * xc))
    return jnp.concatenate(feats, axis=-1)                    # (M, 39)


def trilinear_sample(vox, grid_xyz):
    """F.grid_sample(vox, grid[:, None, None], mode='bilinear', align_corners=True)
    for a 5-D input, then squeeze/permute -> (B, N, C). Coordinates in-bounds."""
    # TODO(synk): grid_sample is a data-dependent gather; kept as JAX glue, not Pallas.
    B, C, D, H, W = vox.shape
    gx = (grid_xyz[..., 0] + 1.0) * 0.5 * (W - 1)
    gy = (grid_xyz[..., 1] + 1.0) * 0.5 * (H - 1)
    gz = (grid_xyz[..., 2] + 1.0) * 0.5 * (D - 1)
    x0 = jnp.floor(gx); y0 = jnp.floor(gy); z0 = jnp.floor(gz)
    wx = gx - x0; wy = gy - y0; wz = gz - z0
    x0i = jnp.clip(x0.astype(jnp.int32), 0, W - 1); x1i = jnp.clip(x0i + 1, 0, W - 1)
    y0i = jnp.clip(y0.astype(jnp.int32), 0, H - 1); y1i = jnp.clip(y0i + 1, 0, H - 1)
    z0i = jnp.clip(z0.astype(jnp.int32), 0, D - 1); z1i = jnp.clip(z0i + 1, 0, D - 1)
    vflat = vox.reshape(B, C, D * H * W)

    def gather(zi, yi, xi):
        idx = (zi * H + yi) * W + xi                       # (B, N)
        return jax.vmap(lambda v, i: v[:, i])(vflat, idx)  # (B, C, N)

    wx = wx[:, None, :]; wy = wy[:, None, :]; wz = wz[:, None, :]
    out = (gather(z0i, y0i, x0i) * (1 - wz) * (1 - wy) * (1 - wx)
           + gather(z0i, y0i, x1i) * (1 - wz) * (1 - wy) * wx
           + gather(z0i, y1i, x0i) * (1 - wz) * wy * (1 - wx)
           + gather(z0i, y1i, x1i) * (1 - wz) * wy * wx
           + gather(z1i, y0i, x0i) * wz * (1 - wy) * (1 - wx)
           + gather(z1i, y0i, x1i) * wz * (1 - wy) * wx
           + gather(z1i, y1i, x0i) * wz * wy * (1 - wx)
           + gather(z1i, y1i, x1i) * wz * wy * wx)
    return jnp.transpose(out, (0, 2, 1))                   # (B, N, C)


def init_params(key):
    ks = jax.random.split(key, 10)
    nrm = lambda k, s, sc=0.1: (sc * jax.random.normal(k, s)).astype(jnp.float32)
    return {
        'lin_in_w': nrm(ks[0], (D_PE, D_HIDDEN)),
        'lin_in_b': nrm(ks[1], (1, D_HIDDEN), 0.02),
        'linz_w': nrm(ks[2], (N_LIN_Z, D_LATENT, D_HIDDEN)),
        'linz_b': nrm(ks[3], (N_LIN_Z, D_HIDDEN), 0.02),
        'blk_w': nrm(ks[4], (2 * N_BLOCKS, D_HIDDEN, D_HIDDEN)),
        'blk_b': nrm(ks[5], (2 * N_BLOCKS, D_HIDDEN), 0.02),
        'lin_out_w': nrm(ks[6], (D_HIDDEN, D_OUT)),
        'lin_out_b': nrm(ks[7], (1, D_OUT), 0.02),
        'reg_w': nrm(ks[8], (D_OUT, D_OUT)),
        'reg_b': nrm(ks[9], (1, D_OUT), 0.02),
    }


def _pack_weights(params):
    """Consolidate/pad weights: bf16 MXU operands, f32 biases, zero rows/cols for pad lanes."""
    bf16 = jnp.bfloat16

    # Fused front matmul weight (128-lane aligned groups):
    #   group 0: lin_z[0] (rows OFF_Z:) + lin_in (rows OFF_PE:), cols [0, D_HIDDEN)
    #   group g>=1: lin_z[g] (rows OFF_Z:), cols [g*128, g*128 + D_HIDDEN)
    wf = jnp.zeros((D_PACK, D_FRONT), jnp.float32)
    bf = jnp.zeros((1, D_FRONT), jnp.float32)
    wf = wf.at[OFF_Z:OFF_Z + D_LATENT, 0:D_HIDDEN].set(params['linz_w'][0])
    wf = wf.at[OFF_PE:OFF_PE + D_PE, 0:D_HIDDEN].set(params['lin_in_w'])
    bf = bf.at[:, 0:D_HIDDEN].set(params['lin_in_b'] + params['linz_b'][0:1])
    for g in range(1, N_LIN_Z):
        c = g * 128
        wf = wf.at[OFF_Z:OFF_Z + D_LATENT, c:c + D_HIDDEN].set(params['linz_w'][g])
        bf = bf.at[:, c:c + D_HIDDEN].set(params['linz_b'][g:g + 1])

    wout = jnp.zeros((D_HIDDEN, D_OUT_PAD), jnp.float32).at[:, :D_OUT].set(params['lin_out_w'])
    bout = jnp.zeros((1, D_OUT_PAD), jnp.float32).at[:, :D_OUT].set(params['lin_out_b'])
    regw = jnp.zeros((D_OUT_PAD, D_OUT_PAD), jnp.float32).at[:D_OUT, :D_OUT].set(params['reg_w'])
    regb = jnp.zeros((1, D_OUT_PAD), jnp.float32).at[:, :D_OUT].set(params['reg_b'])

    return (wf.astype(bf16), bf,
            params['blk_w'].astype(bf16), params['blk_b'],
            wout.astype(bf16), bout,
            regw.astype(bf16), regb)


def _choose_tm(M):
    """Largest tile dividing M that still leaves >=2 grid steps (v7x megacore sharding)."""
    for tm in (4096, 2048, 1024, 512, 256, 128):
        if M % tm == 0 and M // tm >= 2:
            return tm
    for tm in (1024, 512, 256, 128, 64, 32, 16, 8):
        if M % tm == 0:
            return tm
    return M


def gs_embed_forward(params, xyz, dec_fts, lang):
    # TODO(synk): ResnetFC language_embed conditioning (ManiGaussian-specific, source not
    # provided) is not reproduced; `lang` is accepted but unused. use_dynamic_field=False.
    del lang
    SB_, N_, _ = xyz.shape
    M = SB_ * N_
    TM = _choose_tm(M)
    assert M % TM == 0

    bb = jnp.asarray(COORD_BOUNDS, jnp.float32)
    canon = (xyz - bb[:3]) / (bb[3:] - bb[:3])                      # world_to_canonical
    point_latent = trilinear_sample(dec_fts, canon * 2.0 - 1.0)     # (SB, N, D_LATENT)

    xyz_flat = xyz.reshape(M, 3).astype(jnp.float32)
    z_flat = point_latent.reshape(M, D_LATENT).astype(jnp.float32)
    pe_flat = positional_encoding(canon.reshape(M, 3).astype(jnp.float32))

    # single lane-packed input slab (one DMA stream, unmasked full-lane loads)
    packed = jnp.concatenate(
        [xyz_flat, z_flat, pe_flat, jnp.zeros((M, D_PACK - D_USED), jnp.float32)], axis=-1)

    weights = _pack_weights(params)

    def full_spec(a):
        nd = a.ndim
        return pl.BlockSpec(a.shape, lambda i, nd=nd: (0,) * nd)

    out = pl.pallas_call(
        gs_embed_kernel,
        out_shape=jax.ShapeDtypeStruct((M, D_OUT_PAD), jnp.float32),
        grid_spec=pltpu.PrefetchScalarGridSpec(
            num_scalar_prefetch=0,
            grid=(M // TM,),
            in_specs=[pl.BlockSpec((TM, D_PACK), lambda i: (i, 0))]
                     + [full_spec(w) for w in weights],
            out_specs=pl.BlockSpec((TM, D_OUT_PAD), lambda i: (i, 0))),
        compiler_params=pltpu.CompilerParams(dimension_semantics=("parallel",)),
    )(packed, *weights)

    o = [int(v) for v in OUT_OFFS]
    xyz_maps = out[:, o[0]:o[1]]
    opacity = out[:, o[1]:o[2]]
    scale = out[:, o[2]:o[3]]
    rot = out[:, o[3]:o[4]]
    dc = out[:, o[4]:o[5]]
    feat = out[:, o[5]:o[6]]
    rest = out[:, o[6]:o[7]]

    dc_maps = dc.reshape(SB_, N_, 1, 3)
    rest_maps = rest.reshape(SB_, N_, -1, 3)
    data = {
        'xyz_maps': xyz_maps.reshape(SB_, N_, 3),
        'sh_maps': jnp.concatenate([dc_maps, rest_maps], axis=2),   # (SB, N, 4, 3)
        'rot_maps': rot.reshape(SB_, N_, 4),
        'scale_maps': scale.reshape(SB_, N_, 3),
        'opacity_maps': opacity.reshape(SB_, N_, 1),
        'feature_maps': feat.reshape(SB_, N_, 3),
    }
    return data


if __name__ == "__main__":
    key = jax.random.PRNGKey(0)
    kx, kv, kl, kp = jax.random.split(key, 4)
    bb = jnp.asarray(COORD_BOUNDS, jnp.float32)
    # world-space points inside the coordinate bounds (so canonical coords are in [0,1])
    xyz = bb[:3] + (bb[3:] - bb[:3]) * jax.random.uniform(kx, (SB, N_PTS, 3), jnp.float32)
    dec_fts = 0.1 * jax.random.normal(kv, (SB, D_LATENT, VOX, VOX, VOX), jnp.float32)
    lang = jax.random.normal(kl, (SB, D_LANG), jnp.float32)
    params = init_params(kp)

    fwd = jax.jit(gs_embed_forward)
    data = fwd(params, xyz, dec_fts, lang)
    jax.tree_util.tree_map(jax.block_until_ready, data)

    # sanity on shapes and values
    assert data['xyz_maps'].shape == (SB, N_PTS, 3)
    assert data['sh_maps'].shape == (SB, N_PTS, 4, 3)
    assert data['rot_maps'].shape == (SB, N_PTS, 4)
    assert data['scale_maps'].shape == (SB, N_PTS, 3)
    assert data['opacity_maps'].shape == (SB, N_PTS, 1)
    assert data['feature_maps'].shape == (SB, N_PTS, 3)
    for v in jax.tree_util.tree_leaves(data):
        assert bool(jnp.all(jnp.isfinite(v)))
    print("KERNEL_OK")
</pallas_src>

<mosaic_0001>
module attributes {stable_mosaic.version = 11 : i64} {
  func.func @gs_embed_kernel(%arg0: i32, %arg1: memref<512x128xf32, #tpu.memory_space<vmem>>, %arg2: memref<128x384xbf16, #tpu.memory_space<vmem>>, %arg3: memref<1x384xf32, #tpu.memory_space<vmem>>, %arg4: memref<10x64x64xbf16, #tpu.memory_space<vmem>>, %arg5: memref<10x64xf32, #tpu.memory_space<vmem>>, %arg6: memref<64x128xbf16, #tpu.memory_space<vmem>>, %arg7: memref<1x128xf32, #tpu.memory_space<vmem>>, %arg8: memref<128x128xbf16, #tpu.memory_space<vmem>>, %arg9: memref<1x128xf32, #tpu.memory_space<vmem>>, %arg10: memref<512x128xf32, #tpu.memory_space<vmem>>) attributes {dimension_semantics = [#tpu.dimension_semantics<parallel>], iteration_bounds = array<i64: 2>, scalar_prefetch = 0 : i64, scratch_operands = 0 : i64, tpu.core_type = #tpu.core_type<tc>, window_params = [{transform_indices = @transform_0, window_bounds = array<i64: 512, 128>}, {pipeline_mode = #tpu.pipeline_mode<synchronous>, transform_indices = @transform_1, window_bounds = array<i64: 128, 384>}, {pipeline_mode = #tpu.pipeline_mode<synchronous>, transform_indices = @transform_2, window_bounds = array<i64: 1, 384>}, {pipeline_mode = #tpu.pipeline_mode<synchronous>, transform_indices = @transform_3, window_bounds = array<i64: 10, 64, 64>}, {pipeline_mode = #tpu.pipeline_mode<synchronous>, transform_indices = @transform_4, window_bounds = array<i64: 10, 64>}, {pipeline_mode = #tpu.pipeline_mode<synchronous>, transform_indices = @transform_5, window_bounds = array<i64: 64, 128>}, {pipeline_mode = #tpu.pipeline_mode<synchronous>, transform_indices = @transform_6, window_bounds = array<i64: 1, 128>}, {pipeline_mode = #tpu.pipeline_mode<synchronous>, transform_indices = @transform_7, window_bounds = array<i64: 128, 128>}, {pipeline_mode = #tpu.pipeline_mode<synchronous>, transform_indices = @transform_8, window_bounds = array<i64: 1, 128>}, {transform_indices = @transform_9, window_bounds = array<i64: 512, 128>}]} {
    %c0 = arith.constant 0 : index
    %c0_0 = arith.constant 0 : index
    %0 = vector.load %arg1[%c0, %c0_0] : memref<512x128xf32, #tpu.memory_space<vmem>>, vector<512x128xf32>
    %1 = arith.truncf %0 : vector<512x128xf32> to vector<512x128xbf16>
    %c0_1 = arith.constant 0 : index
    %c0_2 = arith.constant 0 : index
    %2 = vector.load %arg2[%c0_1, %c0_2] : memref<128x384xbf16, #tpu.memory_space<vmem>>, vector<128x384xbf16>
    %cst = arith.constant dense<0.000000e+00> : vector<512x384xf32>
    %3 = tpu.matmul %1, %2, %cst {dimension_numbers = #tpu.dot_dimension_numbers<[1], [0], [0], [1], [0, 0, 1, 1], [], []>} : vector<512x128xbf16>, vector<128x384xbf16>, vector<512x384xf32> -> vector<512x384xf32>
    %c0_3 = arith.constant 0 : index
    %c0_4 = arith.constant 0 : index
    %4 = vector.load %arg3[%c0_3, %c0_4] : memref<1x384xf32, #tpu.memory_space<vmem>>, vector<1x384xf32>
    %5 = vector.broadcast %4 : vector<1x384xf32> to vector<512x384xf32>
    %6 = arith.addf %3, %5 : vector<512x384xf32>
    %7 = vector.extract_strided_slice %6 {offsets = [0, 0], sizes = [512, 64], strides = [1, 1]} : vector<512x384xf32> to vector<512x64xf32>
    %cst_5 = arith.constant 0.000000e+00 : f32
    %8 = vector.broadcast %cst_5 : f32 to vector<512x64xf32>
    %9 = arith.maximumf %7, %8 : vector<512x64xf32>
    %10 = arith.truncf %9 : vector<512x64xf32> to vector<512x64xbf16>
    %c0_6 = arith.constant 0 : index
    %c0_7 = arith.constant 0 : index
    %c0_8 = arith.constant 0 : index
    %11 = vector.load %arg4[%c0_6, %c0_7, %c0_8] : memref<10x64x64xbf16, #tpu.memory_space<vmem>>, vector<1x64x64xbf16>
    %12 = vector.shape_cast %11 : vector<1x64x64xbf16> to vector<64x64xbf16>
    %cst_9 = arith.constant dense<0.000000e+00> : vector<512x64xf32>
    %13 = tpu.matmul %10, %12, %cst_9 {dimension_numbers = #tpu.dot_dimension_numbers<[1], [0], [0], [1], [0, 0, 1, 1], [], []>} : vector<512x64xbf16>, vector<64x64xbf16>, vector<512x64xf32> -> vector<512x64xf32>
    %c0_10 = arith.constant 0 : index
    %c0_11 = arith.constant 0 : index
    %14 = vector.load %arg5[%c0_10, %c0_11] : memref<10x64xf32, #tpu.memory_space<vmem>>, vector<1x64xf32>
    %15 = vector.broadcast %14 : vector<1x64xf32> to vector<512x64xf32>
    %16 = arith.addf %13, %15 : vector<512x64xf32>
    %cst_12 = arith.constant 0.000000e+00 : f32
    %17 = vector.broadcast %cst_12 : f32 to vector<512x64xf32>
    %18 = arith.maximumf %16, %17 : vector<512x64xf32>
    %19 = arith.truncf %18 : vector<512x64xf32> to vector<512x64xbf16>
    %c1 = arith.constant 1 : index
    %c0_13 = arith.constant 0 : index
    %c0_14 = arith.constant 0 : index
    %20 = vector.load %arg4[%c1, %c0_13, %c0_14] : memref<10x64x64xbf16, #tpu.memory_space<vmem>>, vector<1x64x64xbf16>
    %21 = vector.shape_cast %20 : vector<1x64x64xbf16> to vector<64x64xbf16>
    %cst_15 = arith.constant dense<0.000000e+00> : vector<512x64xf32>
    %22 = tpu.matmul %19, %21, %cst_15 {dimension_numbers = #tpu.dot_dimension_numbers<[1], [0], [0], [1], [0, 0, 1, 1], [], []>} : vector<512x64xbf16>, vector<64x64xbf16>, vector<512x64xf32> -> vector<512x64xf32>
    %c1_16 = arith.constant 1 : index
    %c0_17 = arith.constant 0 : index
    %23 = vector.load %arg5[%c1_16, %c0_17] : memref<10x64xf32, #tpu.memory_space<vmem>>, vector<1x64xf32>
    %24 = vector.broadcast %23 : vector<1x64xf32> to vector<512x64xf32>
    %25 = arith.addf %22, %24 : vector<512x64xf32>
    %26 = arith.addf %7, %25 : vector<512x64xf32>
    %27 = vector.extract_strided_slice %6 {offsets = [0, 128], sizes = [512, 64], strides = [1, 1]} : vector<512x384xf32> to vector<512x64xf32>
    %28 = arith.addf %26, %27 : vector<512x64xf32>
    %cst_18 = arith.constant 0.000000e+00 : f32
    %29 = vector.broadcast %cst_18 : f32 to vector<512x64xf32>
    %30 = arith.maximumf %28, %29 : vector<512x64xf32>
    %31 = arith.truncf %30 : vector<512x64xf32> to vector<512x64xbf16>
    %c2 = arith.constant 2 : index
    %c0_19 = arith.constant 0 : index
    %c0_20 = arith.constant 0 : index
    %32 = vector.load %arg4[%c2, %c0_19, %c0_20] : memref<10x64x64xbf16, #tpu.memory_space<vmem>>, vector<1x64x64xbf16>
    %33 = vector.shape_cast %32 : vector<1x64x64xbf16> to vector<64x64xbf16>
    %cst_21 = arith.constant dense<0.000000e+00> : vector<512x64xf32>
    %34 = tpu.matmul %31, %33, %cst_21 {dimension_numbers = #tpu.dot_dimension_numbers<[1], [0], [0], [1], [0, 0, 1, 1], [], []>} : vector<512x64xbf16>, vector<64x64xbf16>, vector<512x64xf32> -> vector<512x64xf32>
    %c2_22 = arith.constant 2 : index
    %c0_23 = arith.constant 0 : index
    %35 = vector.load %arg5[%c2_22, %c0_23] : memref<10x64xf32, #tpu.memory_space<vmem>>, vector<1x64xf32>
    %36 = vector.broadcast %35 : vector<1x64xf32> to vector<512x64xf32>
    %37 = arith.addf %34, %36 : vector<512x64xf32>
    %cst_24 = arith.constant 0.000000e+00 : f32
    %38 = vector.broadcast %cst_24 : f32 to vector<512x64xf32>
    %39 = arith.maximumf %37, %38 : vector<512x64xf32>
    %40 = arith.truncf %39 : vector<512x64xf32> to vector<512x64xbf16>
    %c3 = arith.constant 3 : index
    %c0_25 = arith.constant 0 : index
    %c0_26 = arith.constant 0 : index
    %41 = vector.load %arg4[%c3, %c0_25, %c0_26] : memref<10x64x64xbf16, #tpu.memory_space<vmem>>, vector<1x64x64xbf16>
    %42 = vector.shape_cast %41 : vector<1x64x64xbf16> to vector<64x64xbf16>
    %cst_27 = arith.constant dense<0.000000e+00> : vector<512x64xf32>
    %43 = tpu.matmul %40, %42, %cst_27 {dimension_numbers = #tpu.dot_dimension_numbers<[1], [0], [0], [1], [0, 0, 1, 1], [], []>} : vector<512x64xbf16>, vector<64x64xbf16>, vector<512x64xf32> -> vector<512x64xf32>
    %c3_28 = arith.constant 3 : index
    %c0_29 = arith.constant 0 : index
    %44 = vector.load %arg5[%c3_28, %c0_29] : memref<10x64xf32, #tpu.memory_space<vmem>>, vector<1x64xf32>
    %45 = vector.broadcast %44 : vector<1x64xf32> to vector<512x64xf32>
    %46 = arith.addf %43, %45 : vector<512x64xf32>
    %47 = arith.addf %28, %46 : vector<512x64xf32>
    %48 = vector.extract_strided_slice %6 {offsets = [0, 256], sizes = [512, 64], strides = [1, 1]} : vector<512x384xf32> to vector<512x64xf32>
    %49 = arith.addf %47, %48 : vector<512x64xf32>
    %cst_30 = arith.constant 0.000000e+00 : f32
    %50 = vector.broadcast %cst_30 : f32 to vector<512x64xf32>
    %51 = arith.maximumf %49, %50 : vector<512x64xf32>
    %52 = arith.truncf %51 : vector<512x64xf32> to vector<512x64xbf16>
    %c4 = arith.constant 4 : index
    %c0_31 = arith.constant 0 : index
    %c0_32 = arith.constant 0 : index
    %53 = vector.load %arg4[%c4, %c0_31, %c0_32] : memref<10x64x64xbf16, #tpu.memory_space<vmem>>, vector<1x64x64xbf16>
    %54 = vector.shape_cast %53 : vector<1x64x64xbf16> to vector<64x64xbf16>
    %cst_33 = arith.constant dense<0.000000e+00> : vector<512x64xf32>
    %55 = tpu.matmul %52, %54, %cst_33 {dimension_numbers = #tpu.dot_dimension_numbers<[1], [0], [0], [1], [0, 0, 1, 1], [], []>} : vector<512x64xbf16>, vector<64x64xbf16>, vector<512x64xf32> -> vector<512x64xf32>
    %c4_34 = arith.constant 4 : index
    %c0_35 = arith.constant 0 : index
    %56 = vector.load %arg5[%c4_34, %c0_35] : memref<10x64xf32, #tpu.memory_space<vmem>>, vector<1x64xf32>
    %57 = vector.broadcast %56 : vector<1x64xf32> to vector<512x64xf32>
    %58 = arith.addf %55, %57 : vector<512x64xf32>
    %cst_36 = arith.constant 0.000000e+00 : f32
    %59 = vector.broadcast %cst_36 : f32 to vector<512x64xf32>
    %60 = arith.maximumf %58, %59 : vector<512x64xf32>
    %61 = arith.truncf %60 : vector<512x64xf32> to vector<512x64xbf16>
    %c5 = arith.constant 5 : index
    %c0_37 = arith.constant 0 : index
    %c0_38 = arith.constant 0 : index
    %62 = vector.load %arg4[%c5, %c0_37, %c0_38] : memref<10x64x64xbf16, #tpu.memory_space<vmem>>, vector<1x64x64xbf16>
    %63 = vector.shape_cast %62 : vector<1x64x64xbf16> to vector<64x64xbf16>
    %cst_39 = arith.constant dense<0.000000e+00> : vector<512x64xf32>
    %64 = tpu.matmul %61, %63, %cst_39 {dimension_numbers = #tpu.dot_dimension_numbers<[1], [0], [0], [1], [0, 0, 1, 1], [], []>} : vector<512x64xbf16>, vector<64x64xbf16>, vector<512x64xf32> -> vector<512x64xf32>
    %c5_40 = arith.constant 5 : index
    %c0_41 = arith.constant 0 : index
    %65 = vector.load %arg5[%c5_40, %c0_41] : memref<10x64xf32, #tpu.memory_space<vmem>>, vector<1x64xf32>
    %66 = vector.broadcast %65 : vector<1x64xf32> to vector<512x64xf32>
    %67 = arith.addf %64, %66 : vector<512x64xf32>
    %68 = arith.addf %49, %67 : vector<512x64xf32>
    %cst_42 = arith.constant 0.000000e+00 : f32
    %69 = vector.broadcast %cst_42 : f32 to vector<512x64xf32>
    %70 = arith.maximumf %68, %69 : vector<512x64xf32>
    %71 = arith.truncf %70 : vector<512x64xf32> to vector<512x64xbf16>
    %c6 = arith.constant 6 : index
    %c0_43 = arith.constant 0 : index
    %c0_44 = arith.constant 0 : index
    %72 = vector.load %arg4[%c6, %c0_43, %c0_44] : memref<10x64x64xbf16, #tpu.memory_space<vmem>>, vector<1x64x64xbf16>
    %73 = vector.shape_cast %72 : vector<1x64x64xbf16> to vector<64x64xbf16>
    %cst_45 = arith.constant dense<0.000000e+00> : vector<512x64xf32>
    %74 = tpu.matmul %71, %73, %cst_45 {dimension_numbers = #tpu.dot_dimension_numbers<[1], [0], [0], [1], [0, 0, 1, 1], [], []>} : vector<512x64xbf16>, vector<64x64xbf16>, vector<512x64xf32> -> vector<512x64xf32>
    %c6_46 = arith.constant 6 : index
    %c0_47 = arith.constant 0 : index
    %75 = vector.load %arg5[%c6_46, %c0_47] : memref<10x64xf32, #tpu.memory_space<vmem>>, vector<1x64xf32>
    %76 = vector.broadcast %75 : vector<1x64xf32> to vector<512x64xf32>
    %77 = arith.addf %74, %76 : vector<512x64xf32>
    %cst_48 = arith.constant 0.000000e+00 : f32
    %78 = vector.broadcast %cst_48 : f32 to vector<512x64xf32>
    %79 = arith.maximumf %77, %78 : vector<512x64xf32>
    %80 = arith.truncf %79 : vector<512x64xf32> to vector<512x64xbf16>
    %c7 = arith.constant 7 : index
    %c0_49 = arith.constant 0 : index
    %c0_50 = arith.constant 0 : index
    %81 = vector.load %arg4[%c7, %c0_49, %c0_50] : memref<10x64x64xbf16, #tpu.memory_space<vmem>>, vector<1x64x64xbf16>
    %82 = vector.shape_cast %81 : vector<1x64x64xbf16> to vector<64x64xbf16>
    %cst_51 = arith.constant dense<0.000000e+00> : vector<512x64xf32>
    %83 = tpu.matmul %80, %82, %cst_51 {dimension_numbers = #tpu.dot_dimension_numbers<[1], [0], [0], [1], [0, 0, 1, 1], [], []>} : vector<512x64xbf16>, vector<64x64xbf16>, vector<512x64xf32> -> vector<512x64xf32>
    %c7_52 = arith.constant 7 : index
    %c0_53 = arith.constant 0 : index
    %84 = vector.load %arg5[%c7_52, %c0_53] : memref<10x64xf32, #tpu.memory_space<vmem>>, vector<1x64xf32>
    %85 = vector.broadcast %84 : vector<1x64xf32> to vector<512x64xf32>
    %86 = arith.addf %83, %85 : vector<512x64xf32>
    %87 = arith.addf %68, %86 : vector<512x64xf32>
    %cst_54 = arith.constant 0.000000e+00 : f32
    %88 = vector.broadcast %cst_54 : f32 to vector<512x64xf32>
    %89 = arith.maximumf %87, %88 : vector<512x64xf32>
    %90 = arith.truncf %89 : vector<512x64xf32> to vector<512x64xbf16>
    %c8 = arith.constant 8 : index
    %c0_55 = arith.constant 0 : index
    %c0_56 = arith.constant 0 : index
    %91 = vector.load %arg4[%c8, %c0_55, %c0_56] : memref<10x64x64xbf16, #tpu.memory_space<vmem>>, vector<1x64x64xbf16>
    %92 = vector.shape_cast %91 : vector<1x64x64xbf16> to vector<64x64xbf16>
    %cst_57 = arith.constant dense<0.000000e+00> : vector<512x64xf32>
    %93 = tpu.matmul %90, %92, %cst_57 {dimension_numbers = #tpu.dot_dimension_numbers<[1], [0], [0], [1], [0, 0, 1, 1], [], []>} : vector<512x64xbf16>, vector<64x64xbf16>, vector<512x64xf32> -> vector<512x64xf32>
    %c8_58 = arith.constant 8 : index
    %c0_59 = arith.constant 0 : index
    %94 = vector.load %arg5[%c8_58, %c0_59] : memref<10x64xf32, #tpu.memory_space<vmem>>, vector<1x64xf32>
    %95 = vector.broadcast %94 : vector<1x64xf32> to vector<512x64xf32>
    %96 = arith.addf %93, %95 : vector<512x64xf32>
    %cst_60 = arith.constant 0.000000e+00 : f32
    %97 = vector.broadcast %cst_60 : f32 to vector<512x64xf32>
    %98 = arith.maximumf %96, %97 : vector<512x64xf32>
    %99 = arith.truncf %98 : vector<512x64xf32> to vector<512x64xbf16>
    %c9 = arith.constant 9 : index
    %c0_61 = arith.constant 0 : index
    %c0_62 = arith.constant 0 : index
    %100 = vector.load %arg4[%c9, %c0_61, %c0_62] : memref<10x64x64xbf16, #tpu.memory_space<vmem>>, vector<1x64x64xbf16>
    %101 = vector.shape_cast %100 : vector<1x64x64xbf16> to vector<64x64xbf16>
    %cst_63 = arith.constant dense<0.000000e+00> : vector<512x64xf32>
    %102 = tpu.matmul %99, %101, %cst_63 {dimension_numbers = #tpu.dot_dimension_numbers<[1], [0], [0], [1], [0, 0, 1, 1], [], []>} : vector<512x64xbf16>, vector<64x64xbf16>, vector<512x64xf32> -> vector<512x64xf32>
    %c9_64 = arith.constant 9 : index
    %c0_65 = arith.constant 0 : index
    %103 = vector.load %arg5[%c9_64, %c0_65] : memref<10x64xf32, #tpu.memory_space<vmem>>, vector<1x64xf32>
    %104 = vector.broadcast %103 : vector<1x64xf32> to vector<512x64xf32>
    %105 = arith.addf %102, %104 : vector<512x64xf32>
    %106 = arith.addf %87, %105 : vector<512x64xf32>
    %cst_66 = arith.constant 0.000000e+00 : f32
    %107 = vector.broadcast %cst_66 : f32 to vector<512x64xf32>
    %108 = arith.maximumf %106, %107 : vector<512x64xf32>
    %109 = arith.truncf %108 : vector<512x64xf32> to vector<512x64xbf16>
    %c0_67 = arith.constant 0 : index
    %c0_68 = arith.constant 0 : index
    %110 = vector.load %arg6[%c0_67, %c0_68] : memref<64x128xbf16, #tpu.memory_space<vmem>>, vector<64x128xbf16>
    %cst_69 = arith.constant dense<0.000000e+00> : vector<512x128xf32>
    %111 = tpu.matmul %109, %110, %cst_69 {dimension_numbers = #tpu.dot_dimension_numbers<[1], [0], [0], [1], [0, 0, 1, 1], [], []>} : vector<512x64xbf16>, vector<64x128xbf16>, vector<512x128xf32> -> vector<512x128xf32>
    %c0_70 = arith.constant 0 : index
    %c0_71 = arith.constant 0 : index
    %112 = vector.load %arg7[%c0_70, %c0_71] : memref<1x128xf32, #tpu.memory_space<vmem>>, vector<1x128xf32>
    %113 = vector.broadcast %112 : vector<1x128xf32> to vector<512x128xf32>
    %114 = arith.addf %111, %113 : vector<512x128xf32>
    %cst_72 = arith.constant 1.000000e+02 : f32
    %115 = vector.broadcast %cst_72 : f32 to vector<512x128xf32>
    %116 = arith.mulf %115, %114 : vector<512x128xf32>
    %cst_73 = arith.constant 2.000000e+01 : f32
    %117 = vector.broadcast %cst_73 : f32 to vector<512x128xf32>
    %118 = arith.cmpf ogt, %116, %117 : vector<512x128xf32>
    %cst_74 = arith.constant 2.000000e+01 : f32
    %119 = vector.broadcast %cst_74 : f32 to vector<512x128xf32>
    %120 = arith.minimumf %116, %119 : vector<512x128xf32>
    %121 = math.exp %120 : vector<512x128xf32>
    %122 = math.log1p %121 : vector<512x128xf32>
    %cst_75 = arith.constant 0.00999999977 : f32
    %123 = vector.broadcast %cst_75 : f32 to vector<512x128xf32>
    %124 = arith.mulf %122, %123 : vector<512x128xf32>
    %125 = arith.select %118, %114, %124 : vector<512x128xi1>, vector<512x128xf32>
    %126 = arith.truncf %125 : vector<512x128xf32> to vector<512x128xbf16>
    %c0_76 = arith.constant 0 : index
    %c0_77 = arith.constant 0 : index
    %127 = vector.load %arg8[%c0_76, %c0_77] : memref<128x128xbf16, #tpu.memory_space<vmem>>, vector<128x128xbf16>
    %cst_78 = arith.constant dense<0.000000e+00> : vector<512x128xf32>
    %128 = tpu.matmul %126, %127, %cst_78 {dimension_numbers = #tpu.dot_dimension_numbers<[1], [0], [0], [1], [0, 0, 1, 1], [], []>} : vector<512x128xbf16>, vector<128x128xbf16>, vector<512x128xf32> -> vector<512x128xf32>
    %c0_79 = arith.constant 0 : index
    %c0_80 = arith.constant 0 : index
    %129 = vector.load %arg9[%c0_79, %c0_80] : memref<1x128xf32, #tpu.memory_space<vmem>>, vector<1x128xf32>
    %130 = vector.broadcast %129 : vector<1x128xf32> to vector<512x128xf32>
    %131 = arith.addf %128, %130 : vector<512x128xf32>
    %132 = tpu.iota {dimensions = array<i32: 1>} : vector<512x128xi32>
    %133 = arith.addf %131, %0 : vector<512x128xf32>
    %134 = arith.negf %131 : vector<512x128xf32>
    %135 = math.exp %134 : vector<512x128xf32>
    %cst_81 = arith.constant 1.000000e+00 : f32
    %136 = vector.broadcast %cst_81 : f32 to vector<512x128xf32>
    %137 = arith.addf %136, %135 : vector<512x128xf32>
    %138 = arith.divf %136, %137 : vector<512x128xf32>
    %139 = math.exp %131 : vector<512x128xf32>
    %cst_82 = arith.constant 5.000000e-02 : f32
    %140 = vector.broadcast %cst_82 : f32 to vector<512x128xf32>
    %141 = arith.minimumf %139, %140 : vector<512x128xf32>
    %c7_i32 = arith.constant 7 : i32
    %142 = vector.broadcast %c7_i32 : i32 to vector<512x128xi32>
    %143 = arith.cmpi sge, %132, %142 : vector<512x128xi32>
    %c11_i32 = arith.constant 11 : i32
    %144 = vector.broadcast %c11_i32 : i32 to vector<512x128xi32>
    %145 = arith.cmpi slt, %132, %144 : vector<512x128xi32>
    %146 = arith.andi %143, %145 : vector<512x128xi1>
    %147 = arith.mulf %131, %131 : vector<512x128xf32>
    %cst_83 = arith.constant 0.000000e+00 : f32
    %148 = vector.broadcast %cst_83 : f32 to vector<512x128xf32>
    %149 = arith.select %146, %147, %148 : vector<512x128xi1>, vector<512x128xf32>
    %cst_84 = arith.constant dense<0.000000e+00> : vector<512xf32>
    %150 = vector.multi_reduction <add>, %149, %cst_84 [1] : vector<512x128xf32> to vector<512xf32>
    %151 = vector.shape_cast %150 : vector<512xf32> to vector<512x1xf32>
    %cst_85 = arith.constant 1.000000e-24 : f32
    %152 = vector.broadcast %cst_85 : f32 to vector<512x1xf32>
    %153 = arith.maximumf %151, %152 : vector<512x1xf32>
    %154 = math.rsqrt %153 : vector<512x1xf32>
    %155 = vector.broadcast %154 : vector<512x1xf32> to vector<512x128xf32>
    %156 = arith.mulf %131, %155 : vector<512x128xf32>
    %c3_i32 = arith.constant 3 : i32
    %157 = vector.broadcast %c3_i32 : i32 to vector<512x128xi32>
    %158 = arith.cmpi slt, %132, %157 : vector<512x128xi32>
    %c4_i32 = arith.constant 4 : i32
    %159 = vector.broadcast %c4_i32 : i32 to vector<512x128xi32>
    %160 = arith.cmpi slt, %132, %159 : vector<512x128xi32>
    %c7_i32_86 = arith.constant 7 : i32
    %161 = vector.broadcast %c7_i32_86 : i32 to vector<512x128xi32>
    %162 = arith.cmpi slt, %132, %161 : vector<512x128xi32>
    %c11_i32_87 = arith.constant 11 : i32
    %163 = vector.broadcast %c11_i32_87 : i32 to vector<512x128xi32>
    %164 = arith.cmpi slt, %132, %163 : vector<512x128xi32>
    %165 = arith.select %164, %156, %131 : vector<512x128xi1>, vector<512x128xf32>
    %166 = arith.select %162, %141, %165 : vector<512x128xi1>, vector<512x128xf32>
    %167 = arith.select %160, %138, %166 : vector<512x128xi1>, vector<512x128xf32>
    %168 = arith.select %158, %133, %167 : vector<512x128xi1>, vector<512x128xf32>
    %c0_88 = arith.constant 0 : index
    %c0_89 = arith.constant 0 : index
    %169 = vector.load %arg10[%c0_88, %c0_89] : memref<512x128xf32, #tpu.memory_space<vmem>>, vector<512x128xf32>
    tpu.vector_store %arg10[%c0_88, %c0_89], %168 {strides = array<i32>} : memref<512x128xf32, #tpu.memory_space<vmem>>, vector<512x128xf32>,
    return
  }
  func.func @transform_0(%arg0: i32) -> (i32, i32) {
    %c0_i32 = arith.constant 0 : i32
    %c0_i32_0 = arith.constant 0 : i32
    return %arg0, %c0_i32 : i32, i32
  }
  func.func @transform_1(%arg0: i32) -> (i32, i32) {
    %c0_i32 = arith.constant 0 : i32
    %c0_i32_0 = arith.constant 0 : i32
    %c0_i32_1 = arith.constant 0 : i32
    return %c0_i32, %c0_i32_0 : i32, i32
  }
  func.func @transform_2(%arg0: i32) -> (i32, i32) {
    %c0_i32 = arith.constant 0 : i32
    %c0_i32_0 = arith.constant 0 : i32
    %c0_i32_1 = arith.constant 0 : i32
    return %c0_i32, %c0_i32_0 : i32, i32
  }
  func.func @transform_3(%arg0: i32) -> (i32, i32, i32) {
    %c0_i32 = arith.constant 0 : i32
    %c0_i32_0 = arith.constant 0 : i32
    %c0_i32_1 = arith.constant 0 : i32
    %c0_i32_2 = arith.constant 0 : i32
    return %c0_i32, %c0_i32_0, %c0_i32_1 : i32, i32, i32
  }
  func.func @transform_4(%arg0: i32) -> (i32, i32) {
    %c0_i32 = arith.constant 0 : i32
    %c0_i32_0 = arith.constant 0 : i32
    %c0_i32_1 = arith.constant 0 : i32
    return %c0_i32, %c0_i32_0 : i32, i32
  }
  func.func @transform_5(%arg0: i32) -> (i32, i32) {
    %c0_i32 = arith.constant 0 : i32
    %c0_i32_0 = arith.constant 0 : i32
    %c0_i32_1 = arith.constant 0 : i32
    return %c0_i32, %c0_i32_0 : i32, i32
  }
  func.func @transform_6(%arg0: i32) -> (i32, i32) {
    %c0_i32 = arith.constant 0 : i32
    %c0_i32_0 = arith.constant 0 : i32
    %c0_i32_1 = arith.constant 0 : i32
    return %c0_i32, %c0_i32_0 : i32, i32
  }
  func.func @transform_7(%arg0: i32) -> (i32, i32) {
    %c0_i32 = arith.constant 0 : i32
    %c0_i32_0 = arith.constant 0 : i32
    %c0_i32_1 = arith.constant 0 : i32
    return %c0_i32, %c0_i32_0 : i32, i32
  }
  func.func @transform_8(%arg0: i32) -> (i32, i32) {
    %c0_i32 = arith.constant 0 : i32
    %c0_i32_0 = arith.constant 0 : i32
    %c0_i32_1 = arith.constant 0 : i32
    return %c0_i32, %c0_i32_0 : i32, i32
  }
  func.func @transform_9(%arg0: i32) -> (i32, i32) {
    %c0_i32 = arith.constant 0 : i32
    %c0_i32_0 = arith.constant 0 : i32
    return %arg0, %c0_i32 : i32, i32
  }
}

</mosaic_0001>

<llo_original>
// kernel: gs_embed_forward.1
$region0: #{gs_embed_forward.1}
  #allocation0 [shape = 'u32[]', space=smem, size = 0x4, offset = 0x4, fixed_abs, tag = 'smem constant byte address 0x4 - core index']
  #allocation1 [shape = 'u32[144,128]{1,0:T(1,128)}', space=vmem, size = 0x12000, scoped, tag = 'internal scratch']
  %s0 = inlined_call_operand.vmem [shape: f32[1024,128], index: 0, kind: input, shape index: {}]
  %s1 = inlined_call_operand.vmem [shape: bf16[128,384], index: 1, kind: input, shape index: {}]
  %s2 = inlined_call_operand.vmem [shape: f32[1,384], index: 2, kind: input, shape index: {}]
  %s3 = inlined_call_operand.vmem [shape: bf16[10,64,64], index: 3, kind: input, shape index: {}]
  %s4 = inlined_call_operand.vmem [shape: f32[10,64], index: 4, kind: input, shape index: {}]
  %s5 = inlined_call_operand.vmem [shape: bf16[64,128], index: 5, kind: input, shape index: {}]
  %s6 = inlined_call_operand.vmem [shape: f32[1,128], index: 6, kind: input, shape index: {}]
  %s7 = inlined_call_operand.vmem [shape: bf16[128,128], index: 7, kind: input, shape index: {}]
  %s8 = inlined_call_operand.vmem [shape: f32[1,128], index: 8, kind: input, shape index: {}]
  %s9 = inlined_call_operand.vmem [shape: f32[1024,128], index: 9, kind: output, shape index: {}]
  %s10 = sld [smem:[#allocation0]]
  $region69: #{gs_embed_forward.1} parent=0
    _
  %s12 = ssub.s32 1, %s10
  %s13 = scalar_select 0, %s12, %s10
  loop: start=0, step=1, limit=4
  $region2: #{gs_embed_forward.1} parent=0 // loop_pre_header
    _
  $region3: #{gs_embed_forward.1} parent=0 // loop_header
    %s15 = sphi 0, %s19
    %p16 = scmp.ge.s32.totalorder %s15, 4
    %s25 = sphi 0, %s27
    %s28 = sphi 0, %s25
    %s29 = sphi 0, %s28
    %s45 = sphi 0, %s29
    %s49 = sphi 0, %s49
    %s51 = sphi 0, %s49
    %s52 = sphi 0, %s51
    %s66 = sphi 0, %s52
    %s70 = sphi 0, %s70
    %s72 = sphi 0, %s70
    %s73 = sphi 0, %s72
    %s87 = sphi 0, %s73
    %s91 = sphi 0, %s91
    %s93 = sphi 0, %s91
    %s94 = sphi 0, %s93
    %s108 = sphi 0, %s94
    %s112 = sphi 0, %s112
    %s114 = sphi 0, %s112
    %s115 = sphi 0, %s114
    %s129 = sphi 0, %s115
    %s133 = sphi 0, %s133
    %s135 = sphi 0, %s133
    %s136 = sphi 0, %s135
    %s150 = sphi 0, %s136
    %s154 = sphi 0, %s154
    %s156 = sphi 0, %s154
    %s157 = sphi 0, %s156
    %s171 = sphi 0, %s157
    %s175 = sphi 0, %s175
    %s177 = sphi 0, %s175
    %s178 = sphi 0, %s177
    %s192 = sphi 0, %s178
    %s196 = sphi 0, %s196
    %s198 = sphi 0, %s196
    %s199 = sphi 0, %s198
    %s213 = sphi 0, %s199
    %s219 = sphi 0, %s221
    %s222 = sphi 0, %s219
    %s223 = sphi 0, %s222
    %s239 = sphi 0, %s223
  $region4: #{gs_embed_forward.1} parent=0 // loop_header_branch
    %18 = sbr.rel (%p16) target = $region8
  $region5: #{gs_embed_forward.1} parent=0 // loop_body
    %s20 = ssub.s32 %s15, 1
    %s21 = ssub.s32 %s15, 2
    %s22 = sadd.s32 %s15, 1
    %s23 = ssub.s32 %s15, %s22
    %p24 = scmp.eq.s32.totalorder %s23, 0
    %s26 = sadd.s32 %s25, 1
    %s27 = scalar_select %p24, %s25, %s26
    %p30 = pneg %p24
    %p31 = scmp.eq.s32.totalorder %s15, 1
    %p32 = por %p30, %p31
    %p33 = scmp.ne.s32.totalorder %s25, %s28
    %p34 = scmp.eq.s32.totalorder %s15, 0
    %p35 = por %p33, %p34
    %p36 = scmp.ne.s32.totalorder %s25, %s28
    %p37 = scmp.eq.s32.totalorder %s20, 1
    %p38 = por %p36, %p37
    %p39 = scmp.ne.s32.totalorder %s28, %s29
    %p40 = scmp.eq.s32.totalorder %s20, 0
    %p41 = por %p39, %p40
    %p42 = scmp.ne.s32.totalorder %s28, %s29
    %p43 = scmp.eq.s32.totalorder %s21, 1
    %p44 = por %p42, %p43
    %p46 = scmp.ne.s32.totalorder %s29, %s45
    %p47 = scmp.eq.s32.totalorder %s21, 0
    %p48 = por %p46, %p47
    %s50 = sadd.s32 %s49, 1
    %p53 = scmp.eq.s32.totalorder %s15, 1
    %p54 = scmp.ne.s32.totalorder %s49, %s51
    %p55 = scmp.eq.s32.totalorder %s15, 0
    %p56 = por %p54, %p55
    %p57 = scmp.ne.s32.totalorder %s49, %s51
    %p58 = scmp.eq.s32.totalorder %s20, 1
    %p59 = por %p57, %p58
    %p60 = scmp.ne.s32.totalorder %s51, %s52
    %p61 = scmp.eq.s32.totalorder %s20, 0
    %p62 = por %p60, %p61
    %p63 = scmp.ne.s32.totalorder %s51, %s52
    %p64 = scmp.eq.s32.totalorder %s21, 1
    %p65 = por %p63, %p64
    %p67 = scmp.ne.s32.totalorder %s52, %s66
    %p68 = scmp.eq.s32.totalorder %s21, 0
    %p69 = por %p67, %p68
    %s71 = sadd.s32 %s70, 1
    %p74 = scmp.eq.s32.totalorder %s15, 1
    %p75 = scmp.ne.s32.totalorder %s70, %s72
    %p76 = scmp.eq.s32.totalorder %s15, 0
    %p77 = por %p75, %p76
    %p78 = scmp.ne.s32.totalorder %s70, %s72
    %p79 = scmp.eq.s32.totalorder %s20, 1
    %p80 = por %p78, %p79
    %p81 = scmp.ne.s32.totalorder %s72, %s73
    %p82 = scmp.eq.s32.totalorder %s20, 0
    %p83 = por %p81, %p82
    %p84 = scmp.ne.s32.totalorder %s72, %s73
    %p85 = scmp.eq.s32.totalorder %s21, 1
    %p86 = por %p84, %p85
    %p88 = scmp.ne.s32.totalorder %s73, %s87
    %p89 = scmp.eq.s32.totalorder %s21, 0
    %p90 = por %p88, %p89
    %s92 = sadd.s32 %s91, 1
    %p95 = scmp.eq.s32.totalorder %s15, 1
    %p96 = scmp.ne.s32.totalorder %s91, %s93
    %p97 = scmp.eq.s32.totalorder %s15, 0
    %p98 = por %p96, %p97
    %p99 = scmp.ne.s32.totalorder %s91, %s93
    %p100 = scmp.eq.s32.totalorder %s20, 1
    %p101 = por %p99, %p100
    %p102 = scmp.ne.s32.totalorder %s93, %s94
    %p103 = scmp.eq.s32.totalorder %s20, 0
    %p104 = por %p102, %p103
    %p105 = scmp.ne.s32.totalorder %s93, %s94
    %p106 = scmp.eq.s32.totalorder %s21, 1
    %p107 = por %p105, %p106
    %p109 = scmp.ne.s32.totalorder %s94, %s108
    %p110 = scmp.eq.s32.totalorder %s21, 0
    %p111 = por %p109, %p110
    %s113 = sadd.s32 %s112, 1
    %p116 = scmp.eq.s32.totalorder %s15, 1
    %p117 = scmp.ne.s32.totalorder %s112, %s114
    %p118 = scmp.eq.s32.totalorder %s15, 0
    %p119 = por %p117, %p118
    %p120 = scmp.ne.s32.totalorder %s112, %s114
    %p121 = scmp.eq.s32.totalorder %s20, 1
    %p122 = por %p120, %p121
    %p123 = scmp.ne.s32.totalorder %s114, %s115
    %p124 = scmp.eq.s32.totalorder %s20, 0
    %p125 = por %p123, %p124
    %p126 = scmp.ne.s32.totalorder %s114, %s115
    %p127 = scmp.eq.s32.totalorder %s21, 1
    %p128 = por %p126, %p127
    %p130 = scmp.ne.s32.totalorder %s115, %s129
    %p131 = scmp.eq.s32.totalorder %s21, 0
    %p132 = por %p130, %p131
    %s134 = sadd.s32 %s133, 1
    %p137 = scmp.eq.s32.totalorder %s15, 1
    %p138 = scmp.ne.s32.totalorder %s133, %s135
    %p139 = scmp.eq.s32.totalorder %s15, 0
    %p140 = por %p138, %p139
    %p141 = scmp.ne.s32.totalorder %s133, %s135
    %p142 = scmp.eq.s32.totalorder %s20, 1
    %p143 = por %p141, %p142
    %p144 = scmp.ne.s32.totalorder %s135, %s136
    %p145 = scmp.eq.s32.totalorder %s20, 0
    %p146 = por %p144, %p145
    %p147 = scmp.ne.s32.totalorder %s135, %s136
    %p148 = scmp.eq.s32.totalorder %s21, 1
    %p149 = por %p147, %p148
    %p151 = scmp.ne.s32.totalorder %s136, %s150
    %p152 = scmp.eq.s32.totalorder %s21, 0
    %p153 = por %p151, %p152
    %s155 = sadd.s32 %s154, 1
    %p158 = scmp.eq.s32.totalorder %s15, 1
    %p159 = scmp.ne.s32.totalorder %s154, %s156
    %p160 = scmp.eq.s32.totalorder %s15, 0
    %p161 = por %p159, %p160
    %p162 = scmp.ne.s32.totalorder %s154, %s156
    %p163 = scmp.eq.s32.totalorder %s20, 1
    %p164 = por %p162, %p163
    %p165 = scmp.ne.s32.totalorder %s156, %s157
    %p166 = scmp.eq.s32.totalorder %s20, 0
    %p167 = por %p165, %p166
    %p168 = scmp.ne.s32.totalorder %s156, %s157
    %p169 = scmp.eq.s32.totalorder %s21, 1
    %p170 = por %p168, %p169
    %p172 = scmp.ne.s32.totalorder %s157, %s171
    %p173 = scmp.eq.s32.totalorder %s21, 0
    %p174 = por %p172, %p173
    %s176 = sadd.s32 %s175, 1
    %p179 = scmp.eq.s32.totalorder %s15, 1
    %p180 = scmp.ne.s32.totalorder %s175, %s177
    %p181 = scmp.eq.s32.totalorder %s15, 0
    %p182 = por %p180, %p181
    %p183 = scmp.ne.s32.totalorder %s175, %s177
    %p184 = scmp.eq.s32.totalorder %s20, 1
    %p185 = por %p183, %p184
    %p186 = scmp.ne.s32.totalorder %s177, %s178
    %p187 = scmp.eq.s32.totalorder %s20, 0
    %p188 = por %p186, %p187
    %p189 = scmp.ne.s32.totalorder %s177, %s178
    %p190 = scmp.eq.s32.totalorder %s21, 1
    %p191 = por %p189, %p190
    %p193 = scmp.ne.s32.totalorder %s178, %s192
    %p194 = scmp.eq.s32.totalorder %s21, 0
    %p195 = por %p193, %p194
    %s197 = sadd.s32 %s196, 1
    %p200 = scmp.eq.s32.totalorder %s15, 1
    %p201 = scmp.ne.s32.totalorder %s196, %s198
    %p202 = scmp.eq.s32.totalorder %s15, 0
    %p203 = por %p201, %p202
    %p204 = scmp.ne.s32.totalorder %s196, %s198
    %p205 = scmp.eq.s32.totalorder %s20, 1
    %p206 = por %p204, %p205
    %p207 = scmp.ne.s32.totalorder %s198, %s199
    %p208 = scmp.eq.s32.totalorder %s20, 0
    %p209 = por %p207, %p208
    %p210 = scmp.ne.s32.totalorder %s198, %s199
    %p211 = scmp.eq.s32.totalorder %s21, 1
    %p212 = por %p210, %p211
    %p214 = scmp.ne.s32.totalorder %s199, %s213
    %p215 = scmp.eq.s32.totalorder %s21, 0
    %p216 = por %p214, %p215
    %s217 = ssub.s32 %s15, %s22
    %p218 = scmp.eq.s32.totalorder %s217, 0
    %s220 = sadd.s32 %s219, 1
    %s221 = scalar_select %p218, %s219, %s220
    %p224 = pneg %p218
    %p225 = scmp.eq.s32.totalorder %s15, 1
    %p226 = por %p224, %p225
    %p227 = scmp.ne.s32.totalorder %s219, %s222
    %p228 = scmp.eq.s32.totalorder %s15, 0
    %p229 = por %p227, %p228
    %p230 = scmp.ne.s32.totalorder %s219, %s222
    %p231 = scmp.eq.s32.totalorder %s20, 1
    %p232 = por %p230, %p231
    %p233 = scmp.ne.s32.totalorder %s222, %s223
    %p234 = scmp.eq.s32.totalorder %s20, 0
    %p235 = por %p233, %p234
    %p236 = scmp.ne.s32.totalorder %s222, %s223
    %p237 = scmp.eq.s32.totalorder %s21, 1
    %p238 = por %p236, %p237
    %p240 = scmp.ne.s32.totalorder %s223, %s239
    %p241 = scmp.eq.s32.totalorder %s21, 0
    %p242 = por %p240, %p241
    %p243 = scmp.le.s32.totalorder 1, %s15
    %p244 = scmp.lt.s32.totalorder %s15, 3
    %p245 = pnand %p243, %p244
    %p246 = pneg %p245
    // Predicated region
    $region9: #{gs_embed_forward.1} parent=5 // pred_check
      _
    $region10: #{gs_embed_forward.1} parent=5 // pred_check_branch
      %248 = sbr.rel (%p245) target = $region12
    $region11: #{gs_embed_forward.1} parent=5 // pred_region
      %s249 = ssub.s32 %s15, 1
      // Predicated region
      $region13: #{gs_embed_forward.1} parent=11 // pred_check
        %p250 = pneg %p62
      $region14: #{gs_embed_forward.1} parent=11 // pred_check_branch
        %252 = sbr.rel (%p250) target = $region16
      $region15: #{gs_embed_forward.1} parent=11 // pred_region
        _
      $region16: #{gs_embed_forward.1} parent=11 // pred_fallthru
        _
      // Predicated region
      $region17: #{gs_embed_forward.1} parent=11 // pred_check
        %p253 = pneg %p83
      $region18: #{gs_embed_forward.1} parent=11 // pred_check_branch
        %255 = sbr.rel (%p253) target = $region20
      $region19: #{gs_embed_forward.1} parent=11 // pred_region
        _
      $region20: #{gs_embed_forward.1} parent=11 // pred_fallthru
        _
      // Predicated region
      $region21: #{gs_embed_forward.1} parent=11 // pred_check
        %p256 = pneg %p104
      $region22: #{gs_embed_forward.1} parent=11 // pred_check_branch
        %258 = sbr.rel (%p256) target = $region24
      $region23: #{gs_embed_forward.1} parent=11 // pred_region
        _
      $region24: #{gs_embed_forward.1} parent=11 // pred_fallthru
        _
      // Predicated region
      $region25: #{gs_embed_forward.1} parent=11 // pred_check
        %p259 = pneg %p125
      $region26: #{gs_embed_forward.1} parent=11 // pred_check_branch
        %261 = sbr.rel (%p259) target = $region28
      $region27: #{gs_embed_forward.1} parent=11 // pred_region
        _
      $region28: #{gs_embed_forward.1} parent=11 // pred_fallthru
        _
      // Predicated region
      $region29: #{gs_embed_forward.1} parent=11 // pred_check
        %p262 = pneg %p146
      $region30: #{gs_embed_forward.1} parent=11 // pred_check_branch
        %264 = sbr.rel (%p262) target = $region32
      $region31: #{gs_embed_forward.1} parent=11 // pred_region
        _
      $region32: #{gs_embed_forward.1} parent=11 // pred_fallthru
        _
      // Predicated region
      $region33: #{gs_embed_forward.1} parent=11 // pred_check
        %p265 = pneg %p167
      $region34: #{gs_embed_forward.1} parent=11 // pred_check_branch
        %267 = sbr.rel (%p265) target = $region36
      $region35: #{gs_embed_forward.1} parent=11 // pred_region
        _
      $region36: #{gs_embed_forward.1} parent=11 // pred_fallthru
        _
      // Predicated region
      $region37: #{gs_embed_forward.1} parent=11 // pred_check
        %p268 = pneg %p188
      $region38: #{gs_embed_forward.1} parent=11 // pred_check_branch
        %270 = sbr.rel (%p268) target = $region40
      $region39: #{gs_embed_forward.1} parent=11 // pred_region
        _
      $region40: #{gs_embed_forward.1} parent=11 // pred_fallthru
        _
      // Predicated region
      $region41: #{gs_embed_forward.1} parent=11 // pred_check
        %p271 = pneg %p209
      $region42: #{gs_embed_forward.1} parent=11 // pred_check_branch
        %273 = sbr.rel (%p271) target = $region44
      $region43: #{gs_embed_forward.1} parent=11 // pred_region
        _
      $region44: #{gs_embed_forward.1} parent=11 // pred_fallthru
        _
    $region12: #{gs_embed_forward.1} parent=5 // pred_fallthru
      _
    %p274 = scmp.lt.s32.totalorder %s15, 2
    // Predicated region
    $region45: #{gs_embed_forward.1} parent=5 // pred_check
      %p275 = pneg %p274
    $region46: #{gs_embed_forward.1} parent=5 // pred_check_branch
      %277 = sbr.rel (%p275) target = $region48
    $region47: #{gs_embed_forward.1} parent=5 // pred_region
      // Predicated region
      $region49: #{gs_embed_forward.1} parent=47 // pred_check
        %p278 = pneg %p35
      $region50: #{gs_embed_forward.1} parent=47 // pred_check_branch
        %280 = sbr.rel (%p278) target = $region52
      $region51: #{gs_embed_forward.1} parent=47 // pred_region
        %s281 = smul.u32 64, %s15
        %p282 = scmp.lt.s32.totalorder %s281, 127
        %s283 = scalar_select %p282, %s281, 127
        %s284 = smul.addr %s283, 8
        %s285 = scalar_lea.vmem %s0, %s284
        %s286 = smul.u32 64, %s15
      $region52: #{gs_embed_forward.1} parent=47 // pred_fallthru
        _
    $region48: #{gs_embed_forward.1} parent=5 // pred_fallthru
      _
    %p287 = scmp.le.s32.totalorder 1, %s15
    %p288 = scmp.lt.s32.totalorder %s15, 3
    %p289 = pnand %p287, %p288
    %p290 = pneg %p289
    // Predicated region
    $region53: #{gs_embed_forward.1} parent=5 // pred_check
      _
    $region54: #{gs_embed_forward.1} parent=5 // pred_check_branch
      %292 = sbr.rel (%p289) target = $region56
    $region55: #{gs_embed_forward.1} parent=5 // pred_region
      %s293 = ssub.s32 %s15, 1
      %s294 = smul.u32 64, %s20
      %p295 = scmp.lt.s32.totalorder %s294, 127
      %s296 = scalar_select %p295, %s294, 127
      %s297 = smul.addr %s296, 8
      %s298 = scalar_lea.vmem %s0, %s297
      %p299 = pneg %p41
      %p300 = pneg %p38
      %p301 = pneg %p62
      %p302 = pneg %p59
      %p303 = pneg %p83
      %p304 = pneg %p80
      %p305 = pneg %p104
      %p306 = pneg %p101
      %p307 = pneg %p125
      %p308 = pneg %p122
      %p309 = pneg %p146
      %p310 = pneg %p143
      %p311 = pneg %p167
      %p312 = pneg %p164
      %p313 = pneg %p188
      %p314 = pneg %p185
      %p315 = pneg %p209
      %p316 = pneg %p206
      %p317 = pneg %p235
      %p318 = pneg %p232
      %s319 = smul.u32 64, %s20
      %p320 = scmp.lt.s32.totalorder %s319, 127
      %s321 = scalar_select %p320, %s319, 127
      %s322 = smul.addr %s321, 8
      %s323 = scalar_lea.vmem %s9, %s322
      %s324 = smul.u32 64, %s20
      %p325 = scmp.lt.s32.totalorder %s324, 127
      %s326 = scalar_select %p325, %s324, 127
      %s327 = smul.addr %s326, 8
      %s328 = scalar_lea.vmem %s0, %s327
      %s329 = smul.u32 64, %s20
      %s330 = smul.u32 64, %s20
      %p331 = scmp.lt.s32.totalorder %s330, 127
      %s332 = scalar_select %p331, %s330, 127
      %s333 = smul.addr %s332, 8
      %s334 = scalar_lea.vmem %s9, %s333
      %s335 = smul.u32 64, %s20
      %v337 = vld [vmem:[%s328] sm:$0xff]
      %v338 = vld [vmem:[%s328 + $0x8] sm:$0xff]
      %v339 = vld [vmem:[%s328 + $0x10] sm:$0xff]
      %v340 = vld [vmem:[%s328 + $0x18] sm:$0xff]
      %v341 = vld [vmem:[%s328 + $0x20] sm:$0xff]
      %v342 = vld [vmem:[%s328 + $0x28] sm:$0xff]
      %v343 = vld [vmem:[%s328 + $0x30] sm:$0xff]
      %v344 = vld [vmem:[%s328 + $0x38] sm:$0xff]
      %v345 = vld [vmem:[%s328 + $0x40] sm:$0xff]
      %v346 = vld [vmem:[%s328 + $0x48] sm:$0xff]
      %v347 = vld [vmem:[%s328 + $0x50] sm:$0xff]
      %v348 = vld [vmem:[%s328 + $0x58] sm:$0xff]
      %v349 = vld [vmem:[%s328 + $0x60] sm:$0xff]
      %v350 = vld [vmem:[%s328 + $0x68] sm:$0xff]
      %v351 = vld [vmem:[%s328 + $0x70] sm:$0xff]
      %v352 = vld [vmem:[%s328 + $0x78] sm:$0xff]
      %v353 = vld [vmem:[%s328 + $0x80] sm:$0xff]
      %v354 = vld [vmem:[%s328 + $0x88] sm:$0xff]
      %v355 = vld [vmem:[%s328 + $0x90] sm:$0xff]
      %v356 = vld [vmem:[%s328 + $0x98] sm:$0xff]
      %v357 = vld [vmem:[%s328 + $0xa0] sm:$0xff]
      %v358 = vld [vmem:[%s328 + $0xa8] sm:$0xff]
      %v359 = vld [vmem:[%s328 + $0xb0] sm:$0xff]
      %v360 = vld [vmem:[%s328 + $0xb8] sm:$0xff]
      %v361 = vld [vmem:[%s328 + $0xc0] sm:$0xff]
      %v362 = vld [vmem:[%s328 + $0xc8] sm:$0xff]
      %v363 = vld [vmem:[%s328 + $0xd0] sm:$0xff]
      %v364 = vld [vmem:[%s328 + $0xd8] sm:$0xff]
      %v365 = vld [vmem:[%s328 + $0xe0] sm:$0xff]
      %v366 = vld [vmem:[%s328 + $0xe8] sm:$0xff]
      %v367 = vld [vmem:[%s328 + $0xf0] sm:$0xff]
      %v368 = vld [vmem:[%s328 + $0xf8] sm:$0xff]
      %v369 = vld [vmem:[%s328 + $0x100] sm:$0xff]
      %v370 = vld [vmem:[%s328 + $0x108] sm:$0xff]
      %v371 = vld [vmem:[%s328 + $0x110] sm:$0xff]
      %v372 = vld [vmem:[%s328 + $0x118] sm:$0xff]
      %v373 = vld [vmem:[%s328 + $0x120] sm:$0xff]
      %v374 = vld [vmem:[%s328 + $0x128] sm:$0xff]
      %v375 = vld [vmem:[%s328 + $0x130] sm:$0xff]
      %v376 = vld [vmem:[%s328 + $0x138] sm:$0xff]
      %v377 = vld [vmem:[%s328 + $0x140] sm:$0xff]
      %v378 = vld [vmem:[%s328 + $0x148] sm:$0xff]
      %v379 = vld [vmem:[%s328 + $0x150] sm:$0xff]
      %v380 = vld [vmem:[%s328 + $0x158] sm:$0xff]
      %v381 = vld [vmem:[%s328 + $0x160] sm:$0xff]
      %v382 = vld [vmem:[%s328 + $0x168] sm:$0xff]
      %v383 = vld [vmem:[%s328 + $0x170] sm:$0xff]
      %v384 = vld [vmem:[%s328 + $0x178] sm:$0xff]
      %v385 = vld [vmem:[%s328 + $0x180] sm:$0xff]
      %v386 = vld [vmem:[%s328 + $0x188] sm:$0xff]
      %v387 = vld [vmem:[%s328 + $0x190] sm:$0xff]
      %v388 = vld [vmem:[%s328 + $0x198] sm:$0xff]
      %v389 = vld [vmem:[%s328 + $0x1a0] sm:$0xff]
      %v390 = vld [vmem:[%s328 + $0x1a8] sm:$0xff]
      %v391 = vld [vmem:[%s328 + $0x1b0] sm:$0xff]
      %v392 = vld [vmem:[%s328 + $0x1b8] sm:$0xff]
      %v393 = vld [vmem:[%s328 + $0x1c0] sm:$0xff]
      %v394 = vld [vmem:[%s328 + $0x1c8] sm:$0xff]
      %v395 = vld [vmem:[%s328 + $0x1d0] sm:$0xff]
      %v396 = vld [vmem:[%s328 + $0x1d8] sm:$0xff]
      %v397 = vld [vmem:[%s328 + $0x1e0] sm:$0xff]
      %v398 = vld [vmem:[%s328 + $0x1e8] sm:$0xff]
      %v399 = vld [vmem:[%s328 + $0x1f0] sm:$0xff]
      %v400 = vld [vmem:[%s328 + $0x1f8] sm:$0xff]
      %v401 = vpack.c.bf16 %v338, %v337
      %v402 = vpack.c.bf16 %v340, %v339
      %v403 = vpack.c.bf16 %v342, %v341
      %v404 = vpack.c.bf16 %v344, %v343
      %v405 = vpack.c.bf16 %v346, %v345
      %v406 = vpack.c.bf16 %v348, %v347
      %v407 = vpack.c.bf16 %v350, %v349
      %v408 = vpack.c.bf16 %v352, %v351
      %v409 = vpack.c.bf16 %v354, %v353
      %v410 = vpack.c.bf16 %v356, %v355
      %v411 = vpack.c.bf16 %v358, %v357
      %v412 = vpack.c.bf16 %v360, %v359
      %v413 = vpack.c.bf16 %v362, %v361
      %v414 = vpack.c.bf16 %v364, %v363
      %v415 = vpack.c.bf16 %v366, %v365
      %v416 = vpack.c.bf16 %v368, %v367
      %v417 = vpack.c.bf16 %v370, %v369
      %v418 = vpack.c.bf16 %v372, %v371
      %v419 = vpack.c.bf16 %v374, %v373
      %v420 = vpack.c.bf16 %v376, %v375
      %v421 = vpack.c.bf16 %v378, %v377
      %v422 = vpack.c.bf16 %v380, %v379
      %v423 = vpack.c.bf16 %v382, %v381
      %v424 = vpack.c.bf16 %v384, %v383
      %v425 = vpack.c.bf16 %v386, %v385
      %v426 = vpack.c.bf16 %v388, %v387
      %v427 = vpack.c.bf16 %v390, %v389
      %v428 = vpack.c.bf16 %v392, %v391
      %v429 = vpack.c.bf16 %v394, %v393
      %v430 = vpack.c.bf16 %v396, %v395
      %v431 = vpack.c.bf16 %v398, %v397
      %v432 = vpack.c.bf16 %v400, %v399
      %v433 = vld [vmem:[%s1] sm:$0xff]
      %v434 = vld [vmem:[%s1 + $0x8] sm:$0xf]
      %v435 = vld [vmem:[%s1 + $0xc] sm:$0xff]
      %v436 = vld [vmem:[%s1 + $0x14] sm:$0xf]
      %v437 = vld [vmem:[%s1 + $0x18] sm:$0xff]
      %v438 = vld [vmem:[%s1 + $0x20] sm:$0xf]
      %v439 = vld [vmem:[%s1 + $0x24] sm:$0xff]
      %v440 = vld [vmem:[%s1 + $0x2c] sm:$0xf]
      %v441 = vld [vmem:[%s1 + $0x30] sm:$0xff]
      %v442 = vld [vmem:[%s1 + $0x38] sm:$0xf]
      %v443 = vld [vmem:[%s1 + $0x3c] sm:$0xff]
      %v444 = vld [vmem:[%s1 + $0x44] sm:$0xf]
      %v445 = vld [vmem:[%s1 + $0x48] sm:$0xff]
      %v446 = vld [vmem:[%s1 + $0x50] sm:$0xf]
      %v447 = vld [vmem:[%s1 + $0x54] sm:$0xff]
      %v448 = vld [vmem:[%s1 + $0x5c] sm:$0xf]
      %v449 = vld [vmem:[%s1 + $0x60] sm:$0xff]
      %v450 = vld [vmem:[%s1 + $0x68] sm:$0xf]
      %v451 = vld [vmem:[%s1 + $0x6c] sm:$0xff]
      %v452 = vld [vmem:[%s1 + $0x74] sm:$0xf]
      %v453 = vld [vmem:[%s1 + $0x78] sm:$0xff]
      %v454 = vld [vmem:[%s1 + $0x80] sm:$0xf]
      %v455 = vld [vmem:[%s1 + $0x84] sm:$0xff]
      %v456 = vld [vmem:[%s1 + $0x8c] sm:$0xf]
      %v457 = vld [vmem:[%s1 + $0x90] sm:$0xff]
      %v458 = vld [vmem:[%s1 + $0x98] sm:$0xf]
      %v459 = vld [vmem:[%s1 + $0x9c] sm:$0xff]
      %v460 = vld [vmem:[%s1 + $0xa4] sm:$0xf]
      %v461 = vld [vmem:[%s1 + $0xa8] sm:$0xff]
      %v462 = vld [vmem:[%s1 + $0xb0] sm:$0xf]
      %v463 = vld [vmem:[%s1 + $0xb4] sm:$0xff]
      %v464 = vld [vmem:[%s1 + $0xbc] sm:$0xf]
      %v465 = vld [vmem:[%s2] sm:$0x7]
      %v467 = vlaneseq
      %v468 = vshrl.u32 %v467, 7
      %v469 = vsub.s32 0, %v468
      %v470 = vrot.slane %v465, %v469
      %v471 = vlaneseq
      %v472 = vshrl.u32 %v471, 7
      %v473 = vsub.s32 1, %v472
      %v474 = vrot.slane %v465, %v473
      %v475 = vlaneseq
      %v476 = vshrl.u32 %v475, 7
      %v477 = vsub.s32 2, %v476
      %v478 = vrot.slane %v465, %v477
      %v514 = vunpack.c.l.b16 %v433
      %v515 = vunpack.c.h.b16 %v433
      %v516 = vunpack.c.l.b16 %v434
      %v517 = vunpack.c.l.b16 %v435
      %v518 = vunpack.c.h.b16 %v435
      %v519 = vunpack.c.l.b16 %v436
      %v520 = vunpack.c.l.b16 %v437
      %v521 = vunpack.c.h.b16 %v437
      %v522 = vunpack.c.l.b16 %v438
      %v523 = vunpack.c.l.b16 %v439
      %v524 = vunpack.c.h.b16 %v439
      %v525 = vunpack.c.l.b16 %v440
      %v526 = vunpack.c.l.b16 %v441
      %v527 = vunpack.c.h.b16 %v441
      %v528 = vunpack.c.l.b16 %v442
      %v529 = vunpack.c.l.b16 %v443
      %v530 = vunpack.c.h.b16 %v443
      %v531 = vunpack.c.l.b16 %v444
      %v532 = vunpack.c.l.b16 %v445
      %v533 = vunpack.c.h.b16 %v445
      %v534 = vunpack.c.l.b16 %v446
      %v535 = vunpack.c.l.b16 %v447
      %v536 = vunpack.c.h.b16 %v447
      %v537 = vunpack.c.l.b16 %v448
      %v538 = vunpack.c.l.b16 %v449
      %v539 = vunpack.c.h.b16 %v449
      %v540 = vunpack.c.l.b16 %v450
      %v541 = vunpack.c.l.b16 %v451
      %v542 = vunpack.c.h.b16 %v451
      %v543 = vunpack.c.l.b16 %v452
      %v544 = vunpack.c.l.b16 %v453
      %v545 = vunpack.c.h.b16 %v453
      %v546 = vunpack.c.l.b16 %v454
      %v547 = vunpack.c.l.b16 %v455
      %v548 = vunpack.c.h.b16 %v455
      %v549 = vunpack.c.l.b16 %v456
      %v550 = vunpack.c.l.b16 %v457
      %v551 = vunpack.c.h.b16 %v457
      %v552 = vunpack.c.l.b16 %v458
      %v553 = vunpack.c.l.b16 %v459
      %v554 = vunpack.c.h.b16 %v459
      %v555 = vunpack.c.l.b16 %v460
      %v556 = vunpack.c.l.b16 %v461
      %v557 = vunpack.c.h.b16 %v461
      %v558 = vunpack.c.l.b16 %v462
      %v559 = vunpack.c.l.b16 %v463
      %v560 = vunpack.c.h.b16 %v463
      %v561 = vunpack.c.l.b16 %v464
      %v562 = vpack.c.b16 %v517, %v514
      %v563 = vpack.c.b16 %v518, %v515
      %v564 = vpack.c.b16 %v519, %v516
      %v565 = vpack.c.b16 %v523, %v520
      %v566 = vpack.c.b16 %v524, %v521
      %v567 = vpack.c.b16 %v525, %v522
      %v568 = vpack.c.b16 %v529, %v526
      %v569 = vpack.c.b16 %v530, %v527
      %v570 = vpack.c.b16 %v531, %v528
      %v571 = vpack.c.b16 %v535, %v532
      %v572 = vpack.c.b16 %v536, %v533
      %v573 = vpack.c.b16 %v537, %v534
      %v574 = vpack.c.b16 %v541, %v538
      %v575 = vpack.c.b16 %v542, %v539
      %v576 = vpack.c.b16 %v543, %v540
      %v577 = vpack.c.b16 %v547, %v544
      %v578 = vpack.c.b16 %v548, %v545
      %v579 = vpack.c.b16 %v549, %v546
      %v580 = vpack.c.b16 %v553, %v550
      %v581 = vpack.c.b16 %v554, %v551
      %v582 = vpack.c.b16 %v555, %v552
      %v583 = vpack.c.b16 %v559, %v556
      %v584 = vpack.c.b16 %v560, %v557
      %v585 = vpack.c.b16 %v561, %v558
      %610 = vmatprep.subr.bf16.mxu0 %v563
      %611 = vmatpush1.bf16.msra.mxu0 %v562
      %612 = vmatprep.subr.bf16.mxu0 %v566
      %613 = vmatpush1.bf16.msra.mxu0 %v565
      %614 = vmatprep.subr.bf16.mxu0 %v569
      %615 = vmatpush1.bf16.msra.mxu0 %v568
      %616 = vmatprep.subr.bf16.mxu0 %v572
      %617 = vmatpush1.bf16.msra.mxu0 %v571
      %618 = vmatprep.subr.bf16.mxu0 %v575
      %619 = vmatpush1.bf16.msra.mxu0 %v574
      %620 = vmatprep.subr.bf16.mxu0 %v578
      %621 = vmatpush1.bf16.msra.mxu0 %v577
      %622 = vmatprep.subr.bf16.mxu0 %v581
      %623 = vmatpush1.bf16.msra.mxu0 %v580
      %624 = vmatprep.subr.bf16.mxu0 %v584
      %625 = vmatpush1.bf16.msra.mxu0 %v583
      %626 = vmatprep.subr.bf16.mxu0 0
      %627 = vmatpush1.bf16.msra.mxu0 0
      %628 = vmatprep.subr.bf16.mxu0 0
      %629 = vmatpush1.bf16.msra.mxu0 0
      %630 = vmatprep.subr.bf16.mxu0 0
      %631 = vmatpush1.bf16.msra.mxu0 0
      %632 = vmatprep.subr.bf16.mxu0 0
      %633 = vmatpush1.bf16.msra.mxu0 0
      %634 = vmatprep.subr.bf16.mxu0 0
      %635 = vmatpush1.bf16.msra.mxu0 0
      %636 = vmatprep.subr.bf16.mxu0 0
      %637 = vmatpush1.bf16.msra.mxu0 0
      %638 = vmatprep.subr.bf16.mxu0 0
      %639 = vmatpush1.bf16.msra.mxu0 0
      %640 = vmatprep.subr.bf16.mxu0 0
      %641 = vmatpush1.bf16.msra.mxu0 0
      %642 = vmatprep.mubr.bf16.mxu0 0
      %643 = vmatmul.mubr.bf16.gmra.mrb[0].mxu0 %v401
      %v644 = vpop.f32.mrb[0].mxu0
      %v645 = vadd.f32 %v470, %v644
      %v646 = vpop.f32.mrb[0].mxu0
      %v647 = vadd.f32 %v474, %v646
      %v648 = vpop.f32.mrb[0].mxu0
      %v649 = vadd.f32 %v470, %v648
      %v650 = vpop.f32.mrb[0].mxu0
      %v651 = vadd.f32 %v474, %v650
      %652 = vmatprep.mubr.bf16.mxu0 0
      %653 = vmatmul.mubr.bf16.gmra.mrb[0].mxu0 %v402
      %v654 = vpop.f32.mrb[0].mxu0
      %v655 = vadd.f32 %v470, %v654
      %v656 = vpop.f32.mrb[0].mxu0
      %v657 = vadd.f32 %v474, %v656
      %v658 = vpop.f32.mrb[0].mxu0
      %v659 = vadd.f32 %v470, %v658
      %v660 = vpop.f32.mrb[0].mxu0
      %v661 = vadd.f32 %v474, %v660
      %662 = vmatprep.mubr.bf16.mxu0 0
      %663 = vmatmul.mubr.bf16.gmra.mrb[0].mxu0 %v403
      %v664 = vpop.f32.mrb[0].mxu0
      %v665 = vadd.f32 %v470, %v664
      %v666 = vpop.f32.mrb[0].mxu0
      %v667 = vadd.f32 %v474, %v666
      %v668 = vpop.f32.mrb[0].mxu0
      %v669 = vadd.f32 %v470, %v668
      %v670 = vpop.f32.mrb[0].mxu0
      %v671 = vadd.f32 %v474, %v670
      %672 = vmatprep.mubr.bf16.mxu0 0
      %673 = vmatmul.mubr.bf16.gmra.mrb[0].mxu0 %v404
      %v674 = vpop.f32.mrb[0].mxu0
      %v675 = vadd.f32 %v470, %v674
      %v676 = vpop.f32.mrb[0].mxu0
      %v677 = vadd.f32 %v474, %v676
      %v678 = vpop.f32.mrb[0].mxu0
      %v679 = vadd.f32 %v470, %v678
      %v680 = vpop.f32.mrb[0].mxu0
      %v681 = vadd.f32 %v474, %v680
      %682 = vmatprep.mubr.bf16.mxu0 0
      %683 = vmatmul.mubr.bf16.gmra.mrb[0].mxu0 %v405
      %v684 = vpop.f32.mrb[0].mxu0
      %v685 = vadd.f32 %v470, %v684
      %v686 = vpop.f32.mrb[0].mxu0
      %v687 = vadd.f32 %v474, %v686
      %v688 = vpop.f32.mrb[0].mxu0
      %v689 = vadd.f32 %v470, %v688
      %v690 = vpop.f32.mrb[0].mxu0
      %v691 = vadd.f32 %v474, %v690
      %692 = vmatprep.mubr.bf16.mxu0 0
      %693 = vmatmul.mubr.bf16.gmra.mrb[0].mxu0 %v406
      %v694 = vpop.f32.mrb[0].mxu0
      %v695 = vadd.f32 %v470, %v694
      %v696 = vpop.f32.mrb[0].mxu0
      %v697 = vadd.f32 %v474, %v696
      %v698 = vpop.f32.mrb[0].mxu0
      %v699 = vadd.f32 %v470, %v698
      %v700 = vpop.f32.mrb[0].mxu0
      %v701 = vadd.f32 %v474, %v700
      %702 = vmatprep.mubr.bf16.mxu0 0
      %703 = vmatmul.mubr.bf16.gmra.mrb[0].mxu0 %v407
      %v704 = vpop.f32.mrb[0].mxu0
      %v705 = vadd.f32 %v470, %v704
      %v706 = vpop.f32.mrb[0].mxu0
      %v707 = vadd.f32 %v474, %v706
      %v708 = vpop.f32.mrb[0].mxu0
      %v709 = vadd.f32 %v470, %v708
      %v710 = vpop.f32.mrb[0].mxu0
      %v711 = vadd.f32 %v474, %v710
      %712 = vmatprep.mubr.bf16.mxu0 0
      %713 = vmatmul.mubr.bf16.gmra.mrb[0].mxu0 %v408
      %v714 = vpop.f32.mrb[0].mxu0
      %v715 = vadd.f32 %v470, %v714
      %v716 = vpop.f32.mrb[0].mxu0
      %v717 = vadd.f32 %v474, %v716
      %v718 = vpop.f32.mrb[0].mxu0
      %v719 = vadd.f32 %v470, %v718
      %v720 = vpop.f32.mrb[0].mxu0
      %v721 = vadd.f32 %v474, %v720
      %722 = vmatprep.mubr.bf16.mxu0 0
      %723 = vmatmul.mubr.bf16.gmra.mrb[0].mxu0 %v409
      %v724 = vpop.f32.mrb[0].mxu0
      %v725 = vadd.f32 %v470, %v724
      %v726 = vpop.f32.mrb[0].mxu0
      %v727 = vadd.f32 %v474, %v726
      %v728 = vpop.f32.mrb[0].mxu0
      %v729 = vadd.f32 %v470, %v728
      %v730 = vpop.f32.mrb[0].mxu0
      %v731 = vadd.f32 %v474, %v730
      %732 = vmatprep.mubr.bf16.mxu0 0
      %733 = vmatmul.mubr.bf16.gmra.mrb[0].mxu0 %v410
      %v734 = vpop.f32.mrb[0].mxu0
      %v735 = vadd.f32 %v470, %v734
      %v736 = vpop.f32.mrb[0].mxu0
      %v737 = vadd.f32 %v474, %v736
      %v738 = vpop.f32.mrb[0].mxu0
      %v739 = vadd.f32 %v470, %v738
      %v740 = vpop.f32.mrb[0].mxu0
      %v741 = vadd.f32 %v474, %v740
      %742 = vmatprep.mubr.bf16.mxu0 0
      %743 = vmatmul.mubr.bf16.gmra.mrb[0].mxu0 %v411
      %v744 = vpop.f32.mrb[0].mxu0
      %v745 = vadd.f32 %v470, %v744
      %v746 = vpop.f32.mrb[0].mxu0
      %v747 = vadd.f32 %v474, %v746
      %v748 = vpop.f32.mrb[0].mxu0
      %v749 = vadd.f32 %v470, %v748
      %v750 = vpop.f32.mrb[0].mxu0
      %v751 = vadd.f32 %v474, %v750
      %752 = vmatprep.mubr.bf16.mxu0 0
      %753 = vmatmul.mubr.bf16.gmra.mrb[0].mxu0 %v412
      %v754 = vpop.f32.mrb[0].mxu0
      %v755 = vadd.f32 %v470, %v754
      %v756 = vpop.f32.mrb[0].mxu0
      %v757 = vadd.f32 %v474, %v756
      %v758 = vpop.f32.mrb[0].mxu0
      %v759 = vadd.f32 %v470, %v758
      %v760 = vpop.f32.mrb[0].mxu0
      %v761 = vadd.f32 %v474, %v760
      %762 = vmatprep.mubr.bf16.mxu0 0
      %763 = vmatmul.mubr.bf16.gmra.mrb[0].mxu0 %v413
      %v764 = vpop.f32.mrb[0].mxu0
      %v765 = vadd.f32 %v470, %v764
      %v766 = vpop.f32.mrb[0].mxu0
      %v767 = vadd.f32 %v474, %v766
      %v768 = vpop.f32.mrb[0].mxu0
      %v769 = vadd.f32 %v470, %v768
      %v770 = vpop.f32.mrb[0].mxu0
      %v771 = vadd.f32 %v474, %v770
      %772 = vmatprep.mubr.bf16.mxu0 0
      %773 = vmatmul.mubr.bf16.gmra.mrb[0].mxu0 %v414
      %v774 = vpop.f32.mrb[0].mxu0
      %v775 = vadd.f32 %v470, %v774
      %v776 = vpop.f32.mrb[0].mxu0
      %v777 = vadd.f32 %v474, %v776
      %v778 = vpop.f32.mrb[0].mxu0
      %v779 = vadd.f32 %v470, %v778
      %v780 = vpop.f32.mrb[0].mxu0
      %v781 = vadd.f32 %v474, %v780
      %782 = vmatprep.mubr.bf16.mxu0 0
      %783 = vmatmul.mubr.bf16.gmra.mrb[0].mxu0 %v415
      %v784 = vpop.f32.mrb[0].mxu0
      %v785 = vadd.f32 %v470, %v784
      %v786 = vpop.f32.mrb[0].mxu0
      %v787 = vadd.f32 %v474, %v786
      %v788 = vpop.f32.mrb[0].mxu0
      %v789 = vadd.f32 %v470, %v788
      %v790 = vpop.f32.mrb[0].mxu0
      %v791 = vadd.f32 %v474, %v790
      %792 = vmatprep.mubr.bf16.mxu0 0
      %793 = vmatmul.mubr.bf16.gmra.mrb[0].mxu0 %v416
      %v794 = vpop.f32.mrb[0].mxu0
      %v795 = vadd.f32 %v470, %v794
      %v796 = vpop.f32.mrb[0].mxu0
      %v797 = vadd.f32 %v474, %v796
      %v798 = vpop.f32.mrb[0].mxu0
      %v799 = vadd.f32 %v470, %v798
      %v800 = vpop.f32.mrb[0].mxu0
      %v801 = vadd.f32 %v474, %v800
      %802 = vmatprep.mubr.bf16.mxu0 0
      %803 = vmatmul.mubr.bf16.gmra.mrb[0].mxu0 %v417
      %v804 = vpop.f32.mrb[0].mxu0
      %v805 = vadd.f32 %v470, %v804
      %v806 = vpop.f32.mrb[0].mxu0
      %v807 = vadd.f32 %v474, %v806
      %v808 = vpop.f32.mrb[0].mxu0
      %v809 = vadd.f32 %v470, %v808
      %v810 = vpop.f32.mrb[0].mxu0
      %v811 = vadd.f32 %v474, %v810
      %812 = vmatprep.mubr.bf16.mxu0 0
      %813 = vmatmul.mubr.bf16.gmra.mrb[0].mxu0 %v418
      %v814 = vpop.f32.mrb[0].mxu0
      %v815 = vadd.f32 %v470, %v814
      %v816 = vpop.f32.mrb[0].mxu0
      %v817 = vadd.f32 %v474, %v816
      %v818 = vpop.f32.mrb[0].mxu0
      %v819 = vadd.f32 %v470, %v818
      %v820 = vpop.f32.mrb[0].mxu0
      %v821 = vadd.f32 %v474, %v820
      %822 = vmatprep.mubr.bf16.mxu0 0
      %823 = vmatmul.mubr.bf16.gmra.mrb[0].mxu0 %v419
      %v824 = vpop.f32.mrb[0].mxu0
      %v825 = vadd.f32 %v470, %v824
      %v826 = vpop.f32.mrb[0].mxu0
      %v827 = vadd.f32 %v474, %v826
      %v828 = vpop.f32.mrb[0].mxu0
      %v829 = vadd.f32 %v470, %v828
      %v830 = vpop.f32.mrb[0].mxu0
      %v831 = vadd.f32 %v474, %v830
      %832 = vmatprep.mubr.bf16.mxu0 0
      %833 = vmatmul.mubr.bf16.gmra.mrb[0].mxu0 %v420
      %v834 = vpop.f32.mrb[0].mxu0
      %v835 = vadd.f32 %v470, %v834
      %v836 = vpop.f32.mrb[0].mxu0
      %v837 = vadd.f32 %v474, %v836
      %v838 = vpop.f32.mrb[0].mxu0
      %v839 = vadd.f32 %v470, %v838
      %v840 = vpop.f32.mrb[0].mxu0
      %v841 = vadd.f32 %v474, %v840
      %842 = vmatprep.mubr.bf16.mxu0 0
      %843 = vmatmul.mubr.bf16.gmra.mrb[0].mxu0 %v421
      %v844 = vpop.f32.mrb[0].mxu0
      %v845 = vadd.f32 %v470, %v844
      %v846 = vpop.f32.mrb[0].mxu0
      %v847 = vadd.f32 %v474, %v846
      %v848 = vpop.f32.mrb[0].mxu0
      %v849 = vadd.f32 %v470, %v848
      %v850 = vpop.f32.mrb[0].mxu0
      %v851 = vadd.f32 %v474, %v850
      %852 = vmatprep.mubr.bf16.mxu0 0
      %853 = vmatmul.mubr.bf16.gmra.mrb[0].mxu0 %v422
      %v854 = vpop.f32.mrb[0].mxu0
      %v855 = vadd.f32 %v470, %v854
      %v856 = vpop.f32.mrb[0].mxu0
      %v857 = vadd.f32 %v474, %v856
      %v858 = vpop.f32.mrb[0].mxu0
      %v859 = vadd.f32 %v470, %v858
      %v860 = vpop.f32.mrb[0].mxu0
      %v861 = vadd.f32 %v474, %v860
      %862 = vmatprep.mubr.bf16.mxu0 0
      %863 = vmatmul.mubr.bf16.gmra.mrb[0].mxu0 %v423
      %v864 = vpop.f32.mrb[0].mxu0
      %v865 = vadd.f32 %v470, %v864
      %v866 = vpop.f32.mrb[0].mxu0
      %v867 = vadd.f32 %v474, %v866
      %v868 = vpop.f32.mrb[0].mxu0
      %v869 = vadd.f32 %v470, %v868
      %v870 = vpop.f32.mrb[0].mxu0
      %v871 = vadd.f32 %v474, %v870
      %872 = vmatprep.mubr.bf16.mxu0 0
      %873 = vmatmul.mubr.bf16.gmra.mrb[0].mxu0 %v424
      %v874 = vpop.f32.mrb[0].mxu0
      %v875 = vadd.f32 %v470, %v874
      %v876 = vpop.f32.mrb[0].mxu0
      %v877 = vadd.f32 %v474, %v876
      %v878 = vpop.f32.mrb[0].mxu0
      %v879 = vadd.f32 %v470, %v878
      %v880 = vpop.f32.mrb[0].mxu0
      %v881 = vadd.f32 %v474, %v880
      %882 = vmatprep.mubr.bf16.mxu0 0
      %883 = vmatmul.mubr.bf16.gmra.mrb[0].mxu0 %v425
      %v884 = vpop.f32.mrb[0].mxu0
      %v885 = vadd.f32 %v470, %v884
      %v886 = vpop.f32.mrb[0].mxu0
      %v887 = vadd.f32 %v474, %v886
      %v888 = vpop.f32.mrb[0].mxu0
      %v889 = vadd.f32 %v470, %v888
      %v890 = vpop.f32.mrb[0].mxu0
      %v891 = vadd.f32 %v474, %v890
      %892 = vmatprep.mubr.bf16.mxu0 0
      %893 = vmatmul.mubr.bf16.gmra.mrb[0].mxu0 %v426
      %v894 = vpop.f32.mrb[0].mxu0
      %v895 = vadd.f32 %v470, %v894
      %v896 = vpop.f32.mrb[0].mxu0
      %v897 = vadd.f32 %v474, %v896
      %v898 = vpop.f32.mrb[0].mxu0
      %v899 = vadd.f32 %v470, %v898
      %v900 = vpop.f32.mrb[0].mxu0
      %v901 = vadd.f32 %v474, %v900
      %902 = vmatprep.mubr.bf16.mxu0 0
      %903 = vmatmul.mubr.bf16.gmra.mrb[0].mxu0 %v427
      %v904 = vpop.f32.mrb[0].mxu0
      %v905 = vadd.f32 %v470, %v904
      %v906 = vpop.f32.mrb[0].mxu0
      %v907 = vadd.f32 %v474, %v906
      %v908 = vpop.f32.mrb[0].mxu0
      %v909 = vadd.f32 %v470, %v908
      %v910 = vpop.f32.mrb[0].mxu0
      %v911 = vadd.f32 %v474, %v910
      %912 = vmatprep.mubr.bf16.mxu0 0
      %913 = vmatmul.mubr.bf16.gmra.mrb[0].mxu0 %v428
      %v914 = vpop.f32.mrb[0].mxu0
      %v915 = vadd.f32 %v470, %v914
      %v916 = vpop.f32.mrb[0].mxu0
      %v917 = vadd.f32 %v474, %v916
      %v918 = vpop.f32.mrb[0].mxu0
      %v919 = vadd.f32 %v470, %v918
      %v920 = vpop.f32.mrb[0].mxu0
      %v921 = vadd.f32 %v474, %v920
      %922 = vmatprep.mubr.bf16.mxu0 0
      %923 = vmatmul.mubr.bf16.gmra.mrb[0].mxu0 %v429
      %v924 = vpop.f32.mrb[0].mxu0
      %v925 = vadd.f32 %v470, %v924
      %v926 = vpop.f32.mrb[0].mxu0
      %v927 = vadd.f32 %v474, %v926
      %v928 = vpop.f32.mrb[0].mxu0
      %v929 = vadd.f32 %v470, %v928
      %v930 = vpop.f32.mrb[0].mxu0
      %v931 = vadd.f32 %v474, %v930
      %932 = vmatprep.mubr.bf16.mxu0 0
      %933 = vmatmul.mubr.bf16.gmra.mrb[0].mxu0 %v430
      %v934 = vpop.f32.mrb[0].mxu0
      %v935 = vadd.f32 %v470, %v934
      %v936 = vpop.f32.mrb[0].mxu0
      %v937 = vadd.f32 %v474, %v936
      %v938 = vpop.f32.mrb[0].mxu0
      %v939 = vadd.f32 %v470, %v938
      %v940 = vpop.f32.mrb[0].mxu0
      %v941 = vadd.f32 %v474, %v940
      %942 = vmatprep.mubr.bf16.mxu0 0
      %943 = vmatmul.mubr.bf16.gmra.mrb[0].mxu0 %v431
      %v944 = vpop.f32.mrb[0].mxu0
      %v945 = vadd.f32 %v470, %v944
      %v946 = vpop.f32.mrb[0].mxu0
      %v947 = vadd.f32 %v474, %v946
      %v948 = vpop.f32.mrb[0].mxu0
      %v949 = vadd.f32 %v470, %v948
      %v950 = vpop.f32.mrb[0].mxu0
      %v951 = vadd.f32 %v474, %v950
      %952 = vmatprep.mubr.bf16.mxu0 0
      %953 = vmatmul.mubr.bf16.gmra.mrb[0].mxu0 %v432
      %v954 = vpop.f32.mrb[0].mxu0
      %v955 = vadd.f32 %v470, %v954
      %v956 = vpop.f32.mrb[0].mxu0
      %v957 = vadd.f32 %v474, %v956
      %v958 = vpop.f32.mrb[0].mxu0
      %v959 = vadd.f32 %v470, %v958
      %v960 = vpop.f32.mrb[0].mxu0
      %v961 = vadd.f32 %v474, %v960
      %962 = vdwg.mxu0
      %963 = vmatprep.subr.bf16.mxu0 0
      %964 = vmatpush1.bf16.msra.mxu0 %v564
      %965 = vmatprep.subr.bf16.mxu0 0
      %966 = vmatpush1.bf16.msra.mxu0 %v567
      %967 = vmatprep.subr.bf16.mxu0 0
      %968 = vmatpush1.bf16.msra.mxu0 %v570
      %969 = vmatprep.subr.bf16.mxu0 0
      %970 = vmatpush1.bf16.msra.mxu0 %v573
      %971 = vmatprep.subr.bf16.mxu0 0
      %972 = vmatpush1.bf16.msra.mxu0 %v576
      %973 = vmatprep.subr.bf16.mxu0 0
      %974 = vmatpush1.bf16.msra.mxu0 %v579
      %975 = vmatprep.subr.bf16.mxu0 0
      %976 = vmatpush1.bf16.msra.mxu0 %v582
      %977 = vmatprep.subr.bf16.mxu0 0
      %978 = vmatpush1.bf16.msra.mxu0 %v585
      %979 = vmatprep.subr.bf16.mxu0 0
      %980 = vmatpush1.bf16.msra.mxu0 0
      %981 = vmatprep.subr.bf16.mxu0 0
      %982 = vmatpush1.bf16.msra.mxu0 0
      %983 = vmatprep.subr.bf16.mxu0 0
      %984 = vmatpush1.bf16.msra.mxu0 0
      %985 = vmatprep.subr.bf16.mxu0 0
      %986 = vmatpush1.bf16.msra.mxu0 0
      %987 = vmatprep.subr.bf16.mxu0 0
      %988 = vmatpush1.bf16.msra.mxu0 0
      %989 = vmatprep.subr.bf16.mxu0 0
      %990 = vmatpush1.bf16.msra.mxu0 0
      %991 = vmatprep.subr.bf16.mxu0 0
      %992 = vmatpush1.bf16.msra.mxu0 0
      %993 = vmatprep.subr.bf16.mxu0 0
      %994 = vmatpush1.bf16.msra.mxu0 0
      %995 = vmatprep.mubr.bf16.mxu0 0
      %996 = vmatmul.mubr.bf16.gmra.mrb[0].mxu0 %v401
      %v997 = vpop.f32.mrb[0].mxu0
      %v998 = vadd.f32 %v478, %v997
      %v999 = vpop.f32.mrb[0].mxu0
      %v1000 = vpop.f32.mrb[0].mxu0
      %v1001 = vadd.f32 %v478, %v1000
      %v1002 = vpop.f32.mrb[0].mxu0
      %1003 = vmatprep.mubr.bf16.mxu0 0
      %1004 = vmatmul.mubr.bf16.gmra.mrb[0].mxu0 %v402
      %v1005 = vpop.f32.mrb[0].mxu0
      %v1006 = vadd.f32 %v478, %v1005
      %v1007 = vpop.f32.mrb[0].mxu0
      %v1008 = vpop.f32.mrb[0].mxu0
      %v1009 = vadd.f32 %v478, %v1008
      %v1010 = vpop.f32.mrb[0].mxu0
      %1011 = vmatprep.mubr.bf16.mxu0 0
      %1012 = vmatmul.mubr.bf16.gmra.mrb[0].mxu0 %v403
      %v1013 = vpop.f32.mrb[0].mxu0
      %v1014 = vadd.f32 %v478, %v1013
      %v1015 = vpop.f32.mrb[0].mxu0
      %v1016 = vpop.f32.mrb[0].mxu0
      %v1017 = vadd.f32 %v478, %v1016
      %v1018 = vpop.f32.mrb[0].mxu0
      %1019 = vmatprep.mubr.bf16.mxu0 0
      %1020 = vmatmul.mubr.bf16.gmra.mrb[0].mxu0 %v404
      %v1021 = vpop.f32.mrb[0].mxu0
      %v1022 = vadd.f32 %v478, %v1021
      %v1023 = vpop.f32.mrb[0].mxu0
      %v1024 = vpop.f32.mrb[0].mxu0
      %v1025 = vadd.f32 %v478, %v1024
      %v1026 = vpop.f32.mrb[0].mxu0
      %1027 = vmatprep.mubr.bf16.mxu0 0
      %1028 = vmatmul.mubr.bf16.gmra.mrb[0].mxu0 %v405
      %v1029 = vpop.f32.mrb[0].mxu0
      %v1030 = vadd.f32 %v478, %v1029
      %v1031 = vpop.f32.mrb[0].mxu0
      %v1032 = vpop.f32.mrb[0].mxu0
      %v1033 = vadd.f32 %v478, %v1032
      %v1034 = vpop.f32.mrb[0].mxu0
      %1035 = vmatprep.mubr.bf16.mxu0 0
      %1036 = vmatmul.mubr.bf16.gmra.mrb[0].mxu0 %v406
      %v1037 = vpop.f32.mrb[0].mxu0
      %v1038 = vadd.f32 %v478, %v1037
      %v1039 = vpop.f32.mrb[0].mxu0
      %v1040 = vpop.f32.mrb[0].mxu0
      %v1041 = vadd.f32 %v478, %v1040
      %v1042 = vpop.f32.mrb[0].mxu0
      %1043 = vmatprep.mubr.bf16.mxu0 0
      %1044 = vmatmul.mubr.bf16.gmra.mrb[0].mxu0 %v407
      %v1045 = vpop.f32.mrb[0].mxu0
      %v1046 = vadd.f32 %v478, %v1045
      %v1047 = vpop.f32.mrb[0].mxu0
      %v1048 = vpop.f32.mrb[0].mxu0
      %v1049 = vadd.f32 %v478, %v1048
      %v1050 = vpop.f32.mrb[0].mxu0
      %1051 = vmatprep.mubr.bf16.mxu0 0
      %1052 = vmatmul.mubr.bf16.gmra.mrb[0].mxu0 %v408
      %v1053 = vpop.f32.mrb[0].mxu0
      %v1054 = vadd.f32 %v478, %v1053
      %v1055 = vpop.f32.mrb[0].mxu0
      %v1056 = vpop.f32.mrb[0].mxu0
      %v1057 = vadd.f32 %v478, %v1056
      %v1058 = vpop.f32.mrb[0].mxu0
      %1059 = vmatprep.mubr.bf16.mxu0 0
      %1060 = vmatmul.mubr.bf16.gmra.mrb[0].mxu0 %v409
      %v1061 = vpop.f32.mrb[0].mxu0
      %v1062 = vadd.f32 %v478, %v1061
      %v1063 = vpop.f32.mrb[0].mxu0
      %v1064 = vpop.f32.mrb[0].mxu0
      %v1065 = vadd.f32 %v478, %v1064
      %v1066 = vpop.f32.mrb[0].mxu0
      %1067 = vmatprep.mubr.bf16.mxu0 0
      %1068 = vmatmul.mubr.bf16.gmra.mrb[0].mxu0 %v410
      %v1069 = vpop.f32.mrb[0].mxu0
      %v1070 = vadd.f32 %v478, %v1069
      %v1071 = vpop.f32.mrb[0].mxu0
      %v1072 = vpop.f32.mrb[0].mxu0
      %v1073 = vadd.f32 %v478, %v1072
      %v1074 = vpop.f32.mrb[0].mxu0
      %1075 = vmatprep.mubr.bf16.mxu0 0
      %1076 = vmatmul.mubr.bf16.gmra.mrb[0].mxu0 %v411
      %v1077 = vpop.f32.mrb[0].mxu0
      %v1078 = vadd.f32 %v478, %v1077
      %v1079 = vpop.f32.mrb[0].mxu0
      %v1080 = vpop.f32.mrb[0].mxu0
      %v1081 = vadd.f32 %v478, %v1080
      %v1082 = vpop.f32.mrb[0].mxu0
      %1083 = vmatprep.mubr.bf16.mxu0 0
      %1084 = vmatmul.mubr.bf16.gmra.mrb[0].mxu0 %v412
      %v1085 = vpop.f32.mrb[0].mxu0
      %v1086 = vadd.f32 %v478, %v1085
      %v1087 = vpop.f32.mrb[0].mxu0
      %v1088 = vpop.f32.mrb[0].mxu0
      %v1089 = vadd.f32 %v478, %v1088
      %v1090 = vpop.f32.mrb[0].mxu0
      %1091 = vmatprep.mubr.bf16.mxu0 0
      %1092 = vmatmul.mubr.bf16.gmra.mrb[0].mxu0 %v413
      %v1093 = vpop.f32.mrb[0].mxu0
      %v1094 = vadd.f32 %v478, %v1093
      %v1095 = vpop.f32.mrb[0].mxu0
      %v1096 = vpop.f32.mrb[0].mxu0
      %v1097 = vadd.f32 %v478, %v1096
      %v1098 = vpop.f32.mrb[0].mxu0
      %1099 = vmatprep.mubr.bf16.mxu0 0
      %1100 = vmatmul.mubr.bf16.gmra.mrb[0].mxu0 %v414
      %v1101 = vpop.f32.mrb[0].mxu0
      %v1102 = vadd.f32 %v478, %v1101
      %v1103 = vpop.f32.mrb[0].mxu0
      %v1104 = vpop.f32.mrb[0].mxu0
      %v1105 = vadd.f32 %v478, %v1104
      %v1106 = vpop.f32.mrb[0].mxu0
      %1107 = vmatprep.mubr.bf16.mxu0 0
      %1108 = vmatmul.mubr.bf16.gmra.mrb[0].mxu0 %v415
      %v1109 = vpop.f32.mrb[0].mxu0
      %v1110 = vadd.f32 %v478, %v1109
      %v1111 = vpop.f32.mrb[0].mxu0
      %v1112 = vpop.f32.mrb[0].mxu0
      %v1113 = vadd.f32 %v478, %v1112
      %v1114 = vpop.f32.mrb[0].mxu0
      %1115 = vmatprep.mubr.bf16.mxu0 0
      %1116 = vmatmul.mubr.bf16.gmra.mrb[0].mxu0 %v416
      %v1117 = vpop.f32.mrb[0].mxu0
      %v1118 = vadd.f32 %v478, %v1117
      %v1119 = vpop.f32.mrb[0].mxu0
      %v1120 = vpop.f32.mrb[0].mxu0
      %v1121 = vadd.f32 %v478, %v1120
      %v1122 = vpop.f32.mrb[0].mxu0
      %1123 = vmatprep.mubr.bf16.mxu0 0
      %1124 = vmatmul.mubr.bf16.gmra.mrb[0].mxu0 %v417
      %v1125 = vpop.f32.mrb[0].mxu0
      %v1126 = vadd.f32 %v478, %v1125
      %v1127 = vpop.f32.mrb[0].mxu0
      %v1128 = vpop.f32.mrb[0].mxu0
      %v1129 = vadd.f32 %v478, %v1128
      %v1130 = vpop.f32.mrb[0].mxu0
      %1131 = vmatprep.mubr.bf16.mxu0 0
      %1132 = vmatmul.mubr.bf16.gmra.mrb[0].mxu0 %v418
      %v1133 = vpop.f32.mrb[0].mxu0
      %v1134 = vadd.f32 %v478, %v1133
      %v1135 = vpop.f32.mrb[0].mxu0
      %v1136 = vpop.f32.mrb[0].mxu0
      %v1137 = vadd.f32 %v478, %v1136
      %v1138 = vpop.f32.mrb[0].mxu0
      %1139 = vmatprep.mubr.bf16.mxu0 0
      %1140 = vmatmul.mubr.bf16.gmra.mrb[0].mxu0 %v419
      %v1141 = vpop.f32.mrb[0].mxu0
      %v1142 = vadd.f32 %v478, %v1141
      %v1143 = vpop.f32.mrb[0].mxu0
      %v1144 = vpop.f32.mrb[0].mxu0
      %v1145 = vadd.f32 %v478, %v1144
      %v1146 = vpop.f32.mrb[0].mxu0
      %1147 = vmatprep.mubr.bf16.mxu0 0
      %1148 = vmatmul.mubr.bf16.gmra.mrb[0].mxu0 %v420
      %v1149 = vpop.f32.mrb[0].mxu0
      %v1150 = vadd.f32 %v478, %v1149
      %v1151 = vpop.f32.mrb[0].mxu0
      %v1152 = vpop.f32.mrb[0].mxu0
      %v1153 = vadd.f32 %v478, %v1152
      %v1154 = vpop.f32.mrb[0].mxu0
      %1155 = vmatprep.mubr.bf16.mxu0 0
      %1156 = vmatmul.mubr.bf16.gmra.mrb[0].mxu0 %v421
      %v1157 = vpop.f32.mrb[0].mxu0
      %v1158 = vadd.f32 %v478, %v1157
      %v1159 = vpop.f32.mrb[0].mxu0
      %v1160 = vpop.f32.mrb[0].mxu0
      %v1161 = vadd.f32 %v478, %v1160
      %v1162 = vpop.f32.mrb[0].mxu0
      %1163 = vmatprep.mubr.bf16.mxu0 0
      %1164 = vmatmul.mubr.bf16.gmra.mrb[0].mxu0 %v422
      %v1165 = vpop.f32.mrb[0].mxu0
      %v1166 = vadd.f32 %v478, %v1165
      %v1167 = vpop.f32.mrb[0].mxu0
      %v1168 = vpop.f32.mrb[0].mxu0
      %v1169 = vadd.f32 %v478, %v1168
      %v1170 = vpop.f32.mrb[0].mxu0
      %1171 = vmatprep.mubr.bf16.mxu0 0
      %1172 = vmatmul.mubr.bf16.gmra.mrb[0].mxu0 %v423
      %v1173 = vpop.f32.mrb[0].mxu0
      %v1174 = vadd.f32 %v478, %v1173
      %v1175 = vpop.f32.mrb[0].mxu0
      %v1176 = vpop.f32.mrb[0].mxu0
      %v1177 = vadd.f32 %v478, %v1176
      %v1178 = vpop.f32.mrb[0].mxu0
      %1179 = vmatprep.mubr.bf16.mxu0 0
      %1180 = vmatmul.mubr.bf16.gmra.mrb[0].mxu0 %v424
      %v1181 = vpop.f32.mrb[0].mxu0
      %v1182 = vadd.f32 %v478, %v1181
      %v1183 = vpop.f32.mrb[0].mxu0
      %v1184 = vpop.f32.mrb[0].mxu0
      %v1185 = vadd.f32 %v478, %v1184
      %v1186 = vpop.f32.mrb[0].mxu0
      %1187 = vmatprep.mubr.bf16.mxu0 0
      %1188 = vmatmul.mubr.bf16.gmra.mrb[0].mxu0 %v425
      %v1189 = vpop.f32.mrb[0].mxu0
      %v1190 = vadd.f32 %v478, %v1189
      %v1191 = vpop.f32.mrb[0].mxu0
      %v1192 = vpop.f32.mrb[0].mxu0
      %v1193 = vadd.f32 %v478, %v1192
      %v1194 = vpop.f32.mrb[0].mxu0
      %1195 = vmatprep.mubr.bf16.mxu0 0
      %1196 = vmatmul.mubr.bf16.gmra.mrb[0].mxu0 %v426
      %v1197 = vpop.f32.mrb[0].mxu0
      %v1198 = vadd.f32 %v478, %v1197
      %v1199 = vpop.f32.mrb[0].mxu0
      %v1200 = vpop.f32.mrb[0].mxu0
      %v1201 = vadd.f32 %v478, %v1200
      %v1202 = vpop.f32.mrb[0].mxu0
      %1203 = vmatprep.mubr.bf16.mxu0 0
      %1204 = vmatmul.mubr.bf16.gmra.mrb[0].mxu0 %v427
      %v1205 = vpop.f32.mrb[0].mxu0
      %v1206 = vadd.f32 %v478, %v1205
      %v1207 = vpop.f32.mrb[0].mxu0
      %v1208 = vpop.f32.mrb[0].mxu0
      %v1209 = vadd.f32 %v478, %v1208
      %v1210 = vpop.f32.mrb[0].mxu0
      %1211 = vmatprep.mubr.bf16.mxu0 0
      %1212 = vmatmul.mubr.bf16.gmra.mrb[0].mxu0 %v428
      %v1213 = vpop.f32.mrb[0].mxu0
      %v1214 = vadd.f32 %v478, %v1213
      %v1215 = vpop.f32.mrb[0].mxu0
      %v1216 = vpop.f32.mrb[0].mxu0
      %v1217 = vadd.f32 %v478, %v1216
      %v1218 = vpop.f32.mrb[0].mxu0
      %1219 = vmatprep.mubr.bf16.mxu0 0
      %1220 = vmatmul.mubr.bf16.gmra.mrb[0].mxu0 %v429
      %v1221 = vpop.f32.mrb[0].mxu0
      %v1222 = vadd.f32 %v478, %v1221
      %v1223 = vpop.f32.mrb[0].mxu0
      %v1224 = vpop.f32.mrb[0].mxu0
      %v1225 = vadd.f32 %v478, %v1224
      %v1226 = vpop.f32.mrb[0].mxu0
      %1227 = vmatprep.mubr.bf16.mxu0 0
      %1228 = vmatmul.mubr.bf16.gmra.mrb[0].mxu0 %v430
      %v1229 = vpop.f32.mrb[0].mxu0
      %v1230 = vadd.f32 %v478, %v1229
      %v1231 = vpop.f32.mrb[0].mxu0
      %v1232 = vpop.f32.mrb[0].mxu0
      %v1233 = vadd.f32 %v478, %v1232
      %v1234 = vpop.f32.mrb[0].mxu0
      %1235 = vmatprep.mubr.bf16.mxu0 0
      %1236 = vmatmul.mubr.bf16.gmra.mrb[0].mxu0 %v431
      %v1237 = vpop.f32.mrb[0].mxu0
      %v1238 = vadd.f32 %v478, %v1237
      %v1239 = vpop.f32.mrb[0].mxu0
      %v1240 = vpop.f32.mrb[0].mxu0
      %v1241 = vadd.f32 %v478, %v1240
      %v1242 = vpop.f32.mrb[0].mxu0
      %1243 = vmatprep.mubr.bf16.mxu0 0
      %1244 = vmatmul.mubr.bf16.gmra.mrb[0].mxu0 %v432
      %v1245 = vpop.f32.mrb[0].mxu0
      %v1246 = vadd.f32 %v478, %v1245
      %v1247 = vpop.f32.mrb[0].mxu0
      %v1248 = vpop.f32.mrb[0].mxu0
      %v1249 = vadd.f32 %v478, %v1248
      %v1250 = vpop.f32.mrb[0].mxu0
      %1251 = vdwg.mxu0
      %v1252 = vmax.f32 %v645, 0.0
      %v1253 = vmax.f32 %v649, 0.0
      %v1254 = vmax.f32 %v655, 0.0
      %v1255 = vmax.f32 %v659, 0.0
      %v1256 = vmax.f32 %v665, 0.0
      %v1257 = vmax.f32 %v669, 0.0
      %v1258 = vmax.f32 %v675, 0.0
      %v1259 = vmax.f32 %v679, 0.0
      %v1260 = vmax.f32 %v685, 0.0
      %v1261 = vmax.f32 %v689, 0.0
      %v1262 = vmax.f32 %v695, 0.0
      %v1263 = vmax.f32 %v699, 0.0
      %v1264 = vmax.f32 %v705, 0.0
      %v1265 = vmax.f32 %v709, 0.0
      %v1266 = vmax.f32 %v715, 0.0
      %v1267 = vmax.f32 %v719, 0.0
      %v1268 = vmax.f32 %v725, 0.0
      %v1269 = vmax.f32 %v729, 0.0
      %v1270 = vmax.f32 %v735, 0.0
      %v1271 = vmax.f32 %v739, 0.0
      %v1272 = vmax.f32 %v745, 0.0
      %v1273 = vmax.f32 %v749, 0.0
      %v1274 = vmax.f32 %v755, 0.0
      %v1275 = vmax.f32 %v759, 0.0
      %v1276 = vmax.f32 %v765, 0.0
      %v1277 = vmax.f32 %v769, 0.0
      %v1278 = vmax.f32 %v775, 0.0
      %v1279 = vmax.f32 %v779, 0.0
      %v1280 = vmax.f32 %v785, 0.0
      %v1281 = vmax.f32 %v789, 0.0
      %v1282 = vmax.f32 %v795, 0.0
      %v1283 = vmax.f32 %v799, 0.0
      %v1284 = vmax.f32 %v805, 0.0
      %v1285 = vmax.f32 %v809, 0.0
      %v1286 = vmax.f32 %v815, 0.0
      %v1287 = vmax.f32 %v819, 0.0
      %v1288 = vmax.f32 %v825, 0.0
      %v1289 = vmax.f32 %v829, 0.0
      %v1290 = vmax.f32 %v835, 0.0
      %v1291 = vmax.f32 %v839, 0.0
      %v1292 = vmax.f32 %v845, 0.0
      %v1293 = vmax.f32 %v849, 0.0
      %v1294 = vmax.f32 %v855, 0.0
      %v1295 = vmax.f32 %v859, 0.0
      %v1296 = vmax.f32 %v865, 0.0
      %v1297 = vmax.f32 %v869, 0.0
      %v1298 = vmax.f32 %v875, 0.0
      %v1299 = vmax.f32 %v879, 0.0
      %v1300 = vmax.f32 %v885, 0.0
      %v1301 = vmax.f32 %v889, 0.0
      %v1302 = vmax.f32 %v895, 0.0
      %v1303 = vmax.f32 %v899, 0.0
      %v1304 = vmax.f32 %v905, 0.0
      %v1305 = vmax.f32 %v909, 0.0
      %v1306 = vmax.f32 %v915, 0.0
      %v1307 = vmax.f32 %v919, 0.0
      %v1308 = vmax.f32 %v925, 0.0
      %v1309 = vmax.f32 %v929, 0.0
      %v1310 = vmax.f32 %v935, 0.0
      %v1311 = vmax.f32 %v939, 0.0
      %v1312 = vmax.f32 %v945, 0.0
      %v1313 = vmax.f32 %v949, 0.0
      %v1314 = vmax.f32 %v955, 0.0
      %v1315 = vmax.f32 %v959, 0.0
      %v1316 = vpack.c.bf16 %v1253, %v1252
      %v1317 = vpack.c.bf16 %v1255, %v1254
      %v1318 = vpack.c.bf16 %v1257, %v1256
      %v1319 = vpack.c.bf16 %v1259, %v1258
      %v1320 = vpack.c.bf16 %v1261, %v1260
      %v1321 = vpack.c.bf16 %v1263, %v1262
      %v1322 = vpack.c.bf16 %v1265, %v1264
      %v1323 = vpack.c.bf16 %v1267, %v1266
      %v1324 = vpack.c.bf16 %v1269, %v1268
      %v1325 = vpack.c.bf16 %v1271, %v1270
      %v1326 = vpack.c.bf16 %v1273, %v1272
      %v1327 = vpack.c.bf16 %v1275, %v1274
      %v1328 = vpack.c.bf16 %v1277, %v1276
      %v1329 = vpack.c.bf16 %v1279, %v1278
      %v1330 = vpack.c.bf16 %v1281, %v1280
      %v1331 = vpack.c.bf16 %v1283, %v1282
      %v1332 = vpack.c.bf16 %v1285, %v1284
      %v1333 = vpack.c.bf16 %v1287, %v1286
      %v1334 = vpack.c.bf16 %v1289, %v1288
      %v1335 = vpack.c.bf16 %v1291, %v1290
      %v1336 = vpack.c.bf16 %v1293, %v1292
      %v1337 = vpack.c.bf16 %v1295, %v1294
      %v1338 = vpack.c.bf16 %v1297, %v1296
      %v1339 = vpack.c.bf16 %v1299, %v1298
      %v1340 = vpack.c.bf16 %v1301, %v1300
      %v1341 = vpack.c.bf16 %v1303, %v1302
      %v1342 = vpack.c.bf16 %v1305, %v1304
      %v1343 = vpack.c.bf16 %v1307, %v1306
      %v1344 = vpack.c.bf16 %v1309, %v1308
      %v1345 = vpack.c.bf16 %v1311, %v1310
      %v1346 = vpack.c.bf16 %v1313, %v1312
      %v1347 = vpack.c.bf16 %v1315, %v1314
      %v1348 = vld [vmem:[%s3] sm:$0xf]
      %v1349 = vld [vmem:[%s3 + $0x4] sm:$0xf]
      %v1350 = vld [vmem:[%s3 + $0x8] sm:$0xf]
      %v1351 = vld [vmem:[%s3 + $0xc] sm:$0xf]
      %v1352 = vld [vmem:[%s3 + $0x10] sm:$0xf]
      %v1353 = vld [vmem:[%s3 + $0x14] sm:$0xf]
      %v1354 = vld [vmem:[%s3 + $0x18] sm:$0xf]
      %v1355 = vld [vmem:[%s3 + $0x1c] sm:$0xf]
      %v1356 = vld [vmem:[%s4] sm:$0x1]
      %v1357 = vlaneseq
      %v1358 = vshrl.u32 %v1357, 7
      %v1359 = vsub.s32 0, %v1358
      %v1360 = vrot.slane %v1356, %v1359
      %v1369 = vunpack.c.l.b16 %v1348
      %v1370 = vunpack.c.l.b16 %v1349
      %v1371 = vunpack.c.l.b16 %v1350
      %v1372 = vunpack.c.l.b16 %v1351
      %v1373 = vunpack.c.l.b16 %v1352
      %v1374 = vunpack.c.l.b16 %v1353
      %v1375 = vunpack.c.l.b16 %v1354
      %v1376 = vunpack.c.l.b16 %v1355
      %v1377 = vpack.c.b16 %v1370, %v1369
      %v1378 = vpack.c.b16 %v1372, %v1371
      %v1379 = vpack.c.b16 %v1374, %v1373
      %v1380 = vpack.c.b16 %v1376, %v1375
      %vm1385 = vcmask 523264
      %v1387 = vsel %vm1385, %v1316, 0
      %v1390 = vsel %vm1385, %v1317, 0
      %v1393 = vsel %vm1385, %v1318, 0
      %v1396 = vsel %vm1385, %v1319, 0
      %v1399 = vsel %vm1385, %v1320, 0
      %v1402 = vsel %vm1385, %v1321, 0
      %v1405 = vsel %vm1385, %v1322, 0
      %v1408 = vsel %vm1385, %v1323, 0
      %v1411 = vsel %vm1385, %v1324, 0
      %v1414 = vsel %vm1385, %v1325, 0
      %v1417 = vsel %vm1385, %v1326, 0
      %v1420 = vsel %vm1385, %v1327, 0
      %v1423 = vsel %vm1385, %v1328, 0
      %v1426 = vsel %vm1385, %v1329, 0
      %v1429 = vsel %vm1385, %v1330, 0
      %v1432 = vsel %vm1385, %v1331, 0
      %v1435 = vsel %vm1385, %v1332, 0
      %v1438 = vsel %vm1385, %v1333, 0
      %v1441 = vsel %vm1385, %v1334, 0
      %v1444 = vsel %vm1385, %v1335, 0
      %v1447 = vsel %vm1385, %v1336, 0
      %v1450 = vsel %vm1385, %v1337, 0
      %v1453 = vsel %vm1385, %v1338, 0
      %v1456 = vsel %vm1385, %v1339, 0
      %v1459 = vsel %vm1385, %v1340, 0
      %v1462 = vsel %vm1385, %v1341, 0
      %v1465 = vsel %vm1385, %v1342, 0
      %v1468 = vsel %vm1385, %v1343, 0
      %v1471 = vsel %vm1385, %v1344, 0
      %v1474 = vsel %vm1385, %v1345, 0
      %v1477 = vsel %vm1385, %v1346, 0
      %v1480 = vsel %vm1385, %v1347, 0
      %1482 = vmatprep.subr.bf16.mxu0 0
      %1483 = vmatpush1.bf16.msra.mxu0 %v1377
      %1484 = vmatprep.subr.bf16.mxu0 0
      %1485 = vmatpush1.bf16.msra.mxu0 %v1378
      %1486 = vmatprep.subr.bf16.mxu0 0
      %1487 = vmatpush1.bf16.msra.mxu0 %v1379
      %1488 = vmatprep.subr.bf16.mxu0 0
      %1489 = vmatpush1.bf16.msra.mxu0 %v1380
      %1490 = vmatprep.subr.bf16.mxu0 0
      %1491 = vmatpush1.bf16.msra.mxu0 0
      %1492 = vmatprep.subr.bf16.mxu0 0
      %1493 = vmatpush1.bf16.msra.mxu0 0
      %1494 = vmatprep.subr.bf16.mxu0 0
      %1495 = vmatpush1.bf16.msra.mxu0 0
      %1496 = vmatprep.subr.bf16.mxu0 0
      %1497 = vmatpush1.bf16.msra.mxu0 0
      %1498 = vmatprep.subr.bf16.mxu0 0
      %1499 = vmatpush1.bf16.msra.mxu0 0
      %1500 = vmatprep.subr.bf16.mxu0 0
      %1501 = vmatpush1.bf16.msra.mxu0 0
      %1502 = vmatprep.subr.bf16.mxu0 0
      %1503 = vmatpush1.bf16.msra.mxu0 0
      %1504 = vmatprep.subr.bf16.mxu0 0
      %1505 = vmatpush1.bf16.msra.mxu0 0
      %1506 = vmatprep.subr.bf16.mxu0 0
      %1507 = vmatpush1.bf16.msra.mxu0 0
      %1508 = vmatprep.subr.bf16.mxu0 0
      %1509 = vmatpush1.bf16.msra.mxu0 0
      %1510 = vmatprep.subr.bf16.mxu0 0
      %1511 = vmatpush1.bf16.msra.mxu0 0
      %1512 = vmatprep.subr.bf16.mxu0 0
      %1513 = vmatpush1.bf16.msra.mxu0 0
      %1514 = vmatprep.mubr.bf16.mxu0 0
      %1515 = vmatmul.mubr.bf16.gmra.mrb[0].mxu0 %v1387
      %v1516 = vpop.f32.mrb[0].mxu0
      %v1517 = vadd.f32 %v1360, %v1516
      %v1518 = vpop.f32.mrb[0].mxu0
      %v1519 = vpop.f32.mrb[0].mxu0
      %v1520 = vadd.f32 %v1360, %v1519
      %v1521 = vpop.f32.mrb[0].mxu0
      %1522 = vmatprep.mubr.bf16.mxu0 0
      %1523 = vmatmul.mubr.bf16.gmra.mrb[0].mxu0 %v1390
      %v1524 = vpop.f32.mrb[0].mxu0
      %v1525 = vadd.f32 %v1360, %v1524
      %v1526 = vpop.f32.mrb[0].mxu0
      %v1527 = vpop.f32.mrb[0].mxu0
      %v1528 = vadd.f32 %v1360, %v1527
      %v1529 = vpop.f32.mrb[0].mxu0
      %1530 = vmatprep.mubr.bf16.mxu0 0
      %1531 = vmatmul.mubr.bf16.gmra.mrb[0].mxu0 %v1393
      %v1532 = vpop.f32.mrb[0].mxu0
      %v1533 = vadd.f32 %v1360, %v1532
      %v1534 = vpop.f32.mrb[0].mxu0
      %v1535 = vpop.f32.mrb[0].mxu0
      %v1536 = vadd.f32 %v1360, %v1535
      %v1537 = vpop.f32.mrb[0].mxu0
      %1538 = vmatprep.mubr.bf16.mxu0 0
      %1539 = vmatmul.mubr.bf16.gmra.mrb[0].mxu0 %v1396
      %v1540 = vpop.f32.mrb[0].mxu0
      %v1541 = vadd.f32 %v1360, %v1540
      %v1542 = vpop.f32.mrb[0].mxu0
      %v1543 = vpop.f32.mrb[0].mxu0
      %v1544 = vadd.f32 %v1360, %v1543
      %v1545 = vpop.f32.mrb[0].mxu0
      %1546 = vmatprep.mubr.bf16.mxu0 0
      %1547 = vmatmul.mubr.bf16.gmra.mrb[0].mxu0 %v1399
      %v1548 = vpop.f32.mrb[0].mxu0
      %v1549 = vadd.f32 %v1360, %v1548
      %v1550 = vpop.f32.mrb[0].mxu0
      %v1551 = vpop.f32.mrb[0].mxu0
      %v1552 = vadd.f32 %v1360, %v1551
      %v1553 = vpop.f32.mrb[0].mxu0
      %1554 = vmatprep.mubr.bf16.mxu0 0
      %1555 = vmatmul.mubr.bf16.gmra.mrb[0].mxu0 %v1402
      %v1556 = vpop.f32.mrb[0].mxu0
      %v1557 = vadd.f32 %v1360, %v1556
      %v1558 = vpop.f32.mrb[0].mxu0
      %v1559 = vpop.f32.mrb[0].mxu0
      %v1560 = vadd.f32 %v1360, %v1559
      %v1561 = vpop.f32.mrb[0].mxu0
      %1562 = vmatprep.mubr.bf16.mxu0 0
      %1563 = vmatmul.mubr.bf16.gmra.mrb[0].mxu0 %v1405
      %v1564 = vpop.f32.mrb[0].mxu0
      %v1565 = vadd.f32 %v1360, %v1564
      %v1566 = vpop.f32.mrb[0].mxu0
      %v1567 = vpop.f32.mrb[0].mxu0
      %v1568 = vadd.f32 %v1360, %v1567
      %v1569 = vpop.f32.mrb[0].mxu0
      %1570 = vmatprep.mubr.bf16.mxu0 0
      %1571 = vmatmul.mubr.bf16.gmra.mrb[0].mxu0 %v1408
      %v1572 = vpop.f32.mrb[0].mxu0
      %v1573 = vadd.f32 %v1360, %v1572
      %v1574 = vpop.f32.mrb[0].mxu0
      %v1575 = vpop.f32.mrb[0].mxu0
      %v1576 = vadd.f32 %v1360, %v1575
      %v1577 = vpop.f32.mrb[0].mxu0
      %1578 = vmatprep.mubr.bf16.mxu0 0
      %1579 = vmatmul.mubr.bf16.gmra.mrb[0].mxu0 %v1411
      %v1580 = vpop.f32.mrb[0].mxu0
      %v1581 = vadd.f32 %v1360, %v1580
      %v1582 = vpop.f32.mrb[0].mxu0
      %v1583 = vpop.f32.mrb[0].mxu0
      %v1584 = vadd.f32 %v1360, %v1583
      %v1585 = vpop.f32.mrb[0].mxu0
      %1586 = vmatprep.mubr.bf16.mxu0 0
      %1587 = vmatmul.mubr.bf16.gmra.mrb[0].mxu0 %v1414
      %v1588 = vpop.f32.mrb[0].mxu0
      %v1589 = vadd.f32 %v1360, %v1588
      %v1590 = vpop.f32.mrb[0].mxu0
      %v1591 = vpop.f32.mrb[0].mxu0
      %v1592 = vadd.f32 %v1360, %v1591
      %v1593 = vpop.f32.mrb[0].mxu0
      %1594 = vmatprep.mubr.bf16.mxu0 0
      %1595 = vmatmul.mubr.bf16.gmra.mrb[0].mxu0 %v1417
      %v1596 = vpop.f32.mrb[0].mxu0
      %v1597 = vadd.f32 %v1360, %v1596
      %v1598 = vpop.f32.mrb[0].mxu0
      %v1599 = vpop.f32.mrb[0].mxu0
      %v1600 = vadd.f32 %v1360, %v1599
      %v1601 = vpop.f32.mrb[0].mxu0
      %1602 = vmatprep.mubr.bf16.mxu0 0
      %1603 = vmatmul.mubr.bf16.gmra.mrb[0].mxu0 %v1420
      %v1604 = vpop.f32.mrb[0].mxu0
      %v1605 = vadd.f32 %v1360, %v1604
      %v1606 = vpop.f32.mrb[0].mxu0
      %v1607 = vpop.f32.mrb[0].mxu0
      %v1608 = vadd.f32 %v1360, %v1607
      %v1609 = vpop.f32.mrb[0].mxu0
      %1610 = vmatprep.mubr.bf16.mxu0 0
      %1611 = vmatmul.mubr.bf16.gmra.mrb[0].mxu0 %v1423
      %v1612 = vpop.f32.mrb[0].mxu0
      %v1613 = vadd.f32 %v1360, %v1612
      %v1614 = vpop.f32.mrb[0].mxu0
      %v1615 = vpop.f32.mrb[0].mxu0
      %v1616 = vadd.f32 %v1360, %v1615
      %v1617 = vpop.f32.mrb[0].mxu0
      %1618 = vmatprep.mubr.bf16.mxu0 0
      %1619 = vmatmul.mubr.bf16.gmra.mrb[0].mxu0 %v1426
      %v1620 = vpop.f32.mrb[0].mxu0
      %v1621 = vadd.f32 %v1360, %v1620
      %v1622 = vpop.f32.mrb[0].mxu0
      %v1623 = vpop.f32.mrb[0].mxu0
      %v1624 = vadd.f32 %v1360, %v1623
      %v1625 = vpop.f32.mrb[0].mxu0
      %1626 = vmatprep.mubr.bf16.mxu0 0
      %1627 = vmatmul.mubr.bf16.gmra.mrb[0].mxu0 %v1429
      %v1628 = vpop.f32.mrb[0].mxu0
      %v1629 = vadd.f32 %v1360, %v1628
      %v1630 = vpop.f32.mrb[0].mxu0
      %v1631 = vpop.f32.mrb[0].mxu0
      %v1632 = vadd.f32 %v1360, %v1631
      %v1633 = vpop.f32.mrb[0].mxu0
      %1634 = vmatprep.mubr.bf16.mxu0 0
      %1635 = vmatmul.mubr.bf16.gmra.mrb[0].mxu0 %v1432
      %v1636 = vpop.f32.mrb[0].mxu0
      %v1637 = vadd.f32 %v1360, %v1636
      %v1638 = vpop.f32.mrb[0].mxu0
      %v1639 = vpop.f32.mrb[0].mxu0
      %v1640 = vadd.f32 %v1360, %v1639
      %v1641 = vpop.f32.mrb[0].mxu0
      %1642 = vmatprep.mubr.bf16.mxu0 0
      %1643 = vmatmul.mubr.bf16.gmra.mrb[0].mxu0 %v1435
      %v1644 = vpop.f32.mrb[0].mxu0
      %v1645 = vadd.f32 %v1360, %v1644
      %v1646 = vpop.f32.mrb[0].mxu0
      %v1647 = vpop.f32.mrb[0].mxu0
      %v1648 = vadd.f32 %v1360, %v1647
      %v1649 = vpop.f32.mrb[0].mxu0
      %1650 = vmatprep.mubr.bf16.mxu0 0
      %1651 = vmatmul.mubr.bf16.gmra.mrb[0].mxu0 %v1438
      %v1652 = vpop.f32.mrb[0].mxu0
      %v1653 = vadd.f32 %v1360, %v1652
      %v1654 = vpop.f32.mrb[0].mxu0
      %v1655 = vpop.f32.mrb[0].mxu0
      %v1656 = vadd.f32 %v1360, %v1655
      %v1657 = vpop.f32.mrb[0].mxu0
      %1658 = vmatprep.mubr.bf16.mxu0 0
      %1659 = vmatmul.mubr.bf16.gmra.mrb[0].mxu0 %v1441
      %v1660 = vpop.f32.mrb[0].mxu0
      %v1661 = vadd.f32 %v1360, %v1660
      %v1662 = vpop.f32.mrb[0].mxu0
      %v1663 = vpop.f32.mrb[0].mxu0
      %v1664 = vadd.f32 %v1360, %v1663
      %v1665 = vpop.f32.mrb[0].mxu0
      %1666 = vmatprep.mubr.bf16.mxu0 0
      %1667 = vmatmul.mubr.bf16.gmra.mrb[0].mxu0 %v1444
      %v1668 = vpop.f32.mrb[0].mxu0
      %v1669 = vadd.f32 %v1360, %v1668
      %v1670 = vpop.f32.mrb[0].mxu0
      %v1671 = vpop.f32.mrb[0].mxu0
      %v1672 = vadd.f32 %v1360, %v1671
      %v1673 = vpop.f32.mrb[0].mxu0
      %1674 = vmatprep.mubr.bf16.mxu0 0
      %1675 = vmatmul.mubr.bf16.gmra.mrb[0].mxu0 %v1447
      %v1676 = vpop.f32.mrb[0].mxu0
      %v1677 = vadd.f32 %v1360, %v1676
      %v1678 = vpop.f32.mrb[0].mxu0
      %v1679 = vpop.f32.mrb[0].mxu0
      %v1680 = vadd.f32 %v1360, %v1679
      %v1681 = vpop.f32.mrb[0].mxu0
      %1682 = vmatprep.mubr.bf16.mxu0 0
      %1683 = vmatmul.mubr.bf16.gmra.mrb[0].mxu0 %v1450
      %v1684 = vpop.f32.mrb[0].mxu0
      %v1685 = vadd.f32 %v1360, %v1684
      %v1686 = vpop.f32.mrb[0].mxu0
      %v1687 = vpop.f32.mrb[0].mxu0
      %v1688 = vadd.f32 %v1360, %v1687
      %v1689 = vpop.f32.mrb[0].mxu0
      %1690 = vmatprep.mubr.bf16.mxu0 0
      %1691 = vmatmul.mubr.bf16.gmra.mrb[0].mxu0 %v1453
      %v1692 = vpop.f32.mrb[0].mxu0
      %v1693 = vadd.f32 %v1360, %v1692
      %v1694 = vpop.f32.mrb[0].mxu0
      %v1695 = vpop.f32.mrb[0].mxu0
      %v1696 = vadd.f32 %v1360, %v1695
      %v1697 = vpop.f32.mrb[0].mxu0
      %1698 = vmatprep.mubr.bf16.mxu0 0
      %1699 = vmatmul.mubr.bf16.gmra.mrb[0].mxu0 %v1456
      %v1700 = vpop.f32.mrb[0].mxu0
      %v1701 = vadd.f32 %v1360, %v1700
      %v1702 = vpop.f32.mrb[0].mxu0
      %v1703 = vpop.f32.mrb[0].mxu0
      %v1704 = vadd.f32 %v1360, %v1703
      %v1705 = vpop.f32.mrb[0].mxu0
      %1706 = vmatprep.mubr.bf16.mxu0 0
      %1707 = vmatmul.mubr.bf16.gmra.mrb[0].mxu0 %v1459
      %v1708 = vpop.f32.mrb[0].mxu0
      %v1709 = vadd.f32 %v1360, %v1708
      %v1710 = vpop.f32.mrb[0].mxu0
      %v1711 = vpop.f32.mrb[0].mxu0
      %v1712 = vadd.f32 %v1360, %v1711
      %v1713 = vpop.f32.mrb[0].mxu0
      %1714 = vmatprep.mubr.bf16.mxu0 0
      %1715 = vmatmul.mubr.bf16.gmra.mrb[0].mxu0 %v1462
      %v1716 = vpop.f32.mrb[0].mxu0
      %v1717 = vadd.f32 %v1360, %v1716
      %v1718 = vpop.f32.mrb[0].mxu0
      %v1719 = vpop.f32.mrb[0].mxu0
      %v1720 = vadd.f32 %v1360, %v1719
      %v1721 = vpop.f32.mrb[0].mxu0
      %1722 = vmatprep.mubr.bf16.mxu0 0
      %1723 = vmatmul.mubr.bf16.gmra.mrb[0].mxu0 %v1465
      %v1724 = vpop.f32.mrb[0].mxu0
      %v1725 = vadd.f32 %v1360, %v1724
      %v1726 = vpop.f32.mrb[0].mxu0
      %v1727 = vpop.f32.mrb[0].mxu0
      %v1728 = vadd.f32 %v1360, %v1727
      %v1729 = vpop.f32.mrb[0].mxu0
      %1730 = vmatprep.mubr.bf16.mxu0 0
      %1731 = vmatmul.mubr.bf16.gmra.mrb[0].mxu0 %v1468
      %v1732 = vpop.f32.mrb[0].mxu0
      %v1733 = vadd.f32 %v1360, %v1732
      %v1734 = vpop.f32.mrb[0].mxu0
      %v1735 = vpop.f32.mrb[0].mxu0
      %v1736 = vadd.f32 %v1360, %v1735
      %v1737 = vpop.f32.mrb[0].mxu0
      %1738 = vmatprep.mubr.bf16.mxu0 0
      %1739 = vmatmul.mubr.bf16.gmra.mrb[0].mxu0 %v1471
      %v1740 = vpop.f32.mrb[0].mxu0
      %v1741 = vadd.f32 %v1360, %v1740
      %v1742 = vpop.f32.mrb[0].mxu0
      %v1743 = vpop.f32.mrb[0].mxu0
      %v1744 = vadd.f32 %v1360, %v1743
      %v1745 = vpop.f32.mrb[0].mxu0
      %1746 = vmatprep.mubr.bf16.mxu0 0
      %1747 = vmatmul.mubr.bf16.gmra.mrb[0].mxu0 %v1474
      %v1748 = vpop.f32.mrb[0].mxu0
      %v1749 = vadd.f32 %v1360, %v1748
      %v1750 = vpop.f32.mrb[0].mxu0
      %v1751 = vpop.f32.mrb[0].mxu0
      %v1752 = vadd.f32 %v1360, %v1751
      %v1753 = vpop.f32.mrb[0].mxu0
      %1754 = vmatprep.mubr.bf16.mxu0 0
      %1755 = vmatmul.mubr.bf16.gmra.mrb[0].mxu0 %v1477
      %v1756 = vpop.f32.mrb[0].mxu0
      %v1757 = vadd.f32 %v1360, %v1756
      %v1758 = vpop.f32.mrb[0].mxu0
      %v1759 = vpop.f32.mrb[0].mxu0
      %v1760 = vadd.f32 %v1360, %v1759
      %v1761 = vpop.f32.mrb[0].mxu0
      %1762 = vmatprep.mubr.bf16.mxu0 0
      %1763 = vmatmul.mubr.bf16.gmra.mrb[0].mxu0 %v1480
      %v1764 = vpop.f32.mrb[0].mxu0
      %v1765 = vadd.f32 %v1360, %v1764
      %v1766 = vpop.f32.mrb[0].mxu0
      %v1767 = vpop.f32.mrb[0].mxu0
      %v1768 = vadd.f32 %v1360, %v1767
      %v1769 = vpop.f32.mrb[0].mxu0
      %1770 = vdwg.mxu0
      %v1771 = vmax.f32 %v1517, 0.0
      %v1772 = vmax.f32 %v1520, 0.0
      %v1773 = vmax.f32 %v1525, 0.0
      %v1774 = vmax.f32 %v1528, 0.0
      %v1775 = vmax.f32 %v1533, 0.0
      %v1776 = vmax.f32 %v1536, 0.0
      %v1777 = vmax.f32 %v1541, 0.0
      %v1778 = vmax.f32 %v1544, 0.0
      %v1779 = vmax.f32 %v1549, 0.0
      %v1780 = vmax.f32 %v1552, 0.0
      %v1781 = vmax.f32 %v1557, 0.0
      %v1782 = vmax.f32 %v1560, 0.0
      %v1783 = vmax.f32 %v1565, 0.0
      %v1784 = vmax.f32 %v1568, 0.0
      %v1785 = vmax.f32 %v1573, 0.0
      %v1786 = vmax.f32 %v1576, 0.0
      %v1787 = vmax.f32 %v1581, 0.0
      %v1788 = vmax.f32 %v1584, 0.0
      %v1789 = vmax.f32 %v1589, 0.0
      %v1790 = vmax.f32 %v1592, 0.0
      %v1791 = vmax.f32 %v1597, 0.0
      %v1792 = vmax.f32 %v1600, 0.0
      %v1793 = vmax.f32 %v1605, 0.0
      %v1794 = vmax.f32 %v1608, 0.0
      %v1795 = vmax.f32 %v1613, 0.0
      %v1796 = vmax.f32 %v1616, 0.0
      %v1797 = vmax.f32 %v1621, 0.0
      %v1798 = vmax.f32 %v1624, 0.0
      %v1799 = vmax.f32 %v1629, 0.0
      %v1800 = vmax.f32 %v1632, 0.0
      %v1801 = vmax.f32 %v1637, 0.0
      %v1802 = vmax.f32 %v1640, 0.0
      %v1803 = vmax.f32 %v1645, 0.0
      %v1804 = vmax.f32 %v1648, 0.0
      %v1805 = vmax.f32 %v1653, 0.0
      %v1806 = vmax.f32 %v1656, 0.0
      %v1807 = vmax.f32 %v1661, 0.0
      %v1808 = vmax.f32 %v1664, 0.0
      %v1809 = vmax.f32 %v1669, 0.0
      %v1810 = vmax.f32 %v1672, 0.0
      %v1811 = vmax.f32 %v1677, 0.0
      %v1812 = vmax.f32 %v1680, 0.0
      %v1813 = vmax.f32 %v1685, 0.0
      %v1814 = vmax.f32 %v1688, 0.0
      %v1815 = vmax.f32 %v1693, 0.0
      %v1816 = vmax.f32 %v1696, 0.0
      %v1817 = vmax.f32 %v1701, 0.0
      %v1818 = vmax.f32 %v1704, 0.0
      %v1819 = vmax.f32 %v1709, 0.0
      %v1820 = vmax.f32 %v1712, 0.0
      %v1821 = vmax.f32 %v1717, 0.0
      %v1822 = vmax.f32 %v1720, 0.0
      %v1823 = vmax.f32 %v1725, 0.0
      %v1824 = vmax.f32 %v1728, 0.0
      %v1825 = vmax.f32 %v1733, 0.0
      %v1826 = vmax.f32 %v1736, 0.0
      %v1827 = vmax.f32 %v1741, 0.0
      %v1828 = vmax.f32 %v1744, 0.0
      %v1829 = vmax.f32 %v1749, 0.0
      %v1830 = vmax.f32 %v1752, 0.0
      %v1831 = vmax.f32 %v1757, 0.0
      %v1832 = vmax.f32 %v1760, 0.0
      %v1833 = vmax.f32 %v1765, 0.0
      %v1834 = vmax.f32 %v1768, 0.0
      %v1835 = vpack.c.bf16 %v1772, %v1771
      %v1836 = vpack.c.bf16 %v1774, %v1773
      %v1837 = vpack.c.bf16 %v1776, %v1775
      %v1838 = vpack.c.bf16 %v1778, %v1777
      %v1839 = vpack.c.bf16 %v1780, %v1779
      %v1840 = vpack.c.bf16 %v1782, %v1781
      %v1841 = vpack.c.bf16 %v1784, %v1783
      %v1842 = vpack.c.bf16 %v1786, %v1785
      %v1843 = vpack.c.bf16 %v1788, %v1787
      %v1844 = vpack.c.bf16 %v1790, %v1789
      %v1845 = vpack.c.bf16 %v1792, %v1791
      %v1846 = vpack.c.bf16 %v1794, %v1793
      %v1847 = vpack.c.bf16 %v1796, %v1795
      %v1848 = vpack.c.bf16 %v1798, %v1797
      %v1849 = vpack.c.bf16 %v1800, %v1799
      %v1850 = vpack.c.bf16 %v1802, %v1801
      %v1851 = vpack.c.bf16 %v1804, %v1803
      %v1852 = vpack.c.bf16 %v1806, %v1805
      %v1853 = vpack.c.bf16 %v1808, %v1807
      %v1854 = vpack.c.bf16 %v1810, %v1809
      %v1855 = vpack.c.bf16 %v1812, %v1811
      %v1856 = vpack.c.bf16 %v1814, %v1813
      %v1857 = vpack.c.bf16 %v1816, %v1815
      %v1858 = vpack.c.bf16 %v1818, %v1817
      %v1859 = vpack.c.bf16 %v1820, %v1819
      %v1860 = vpack.c.bf16 %v1822, %v1821
      %v1861 = vpack.c.bf16 %v1824, %v1823
      %v1862 = vpack.c.bf16 %v1826, %v1825
      %v1863 = vpack.c.bf16 %v1828, %v1827
      %v1864 = vpack.c.bf16 %v1830, %v1829
      %v1865 = vpack.c.bf16 %v1832, %v1831
      %v1866 = vpack.c.bf16 %v1834, %v1833
      %s1867 = scalar_lea.vmem %s3, 32
      %v1868 = vld [vmem:[%s1867] sm:$0xf]
      %v1869 = vld [vmem:[%s1867 + $0x4] sm:$0xf]
      %v1870 = vld [vmem:[%s1867 + $0x8] sm:$0xf]
      %v1871 = vld [vmem:[%s1867 + $0xc] sm:$0xf]
      %v1872 = vld [vmem:[%s1867 + $0x10] sm:$0xf]
      %v1873 = vld [vmem:[%s1867 + $0x14] sm:$0xf]
      %v1874 = vld [vmem:[%s1867 + $0x18] sm:$0xf]
      %v1875 = vld [vmem:[%s1867 + $0x1c] sm:$0xf]
      %v1876 = vld [vmem:[%s4 + $0x1] sm:$0x1]
      %v1877 = vlaneseq
      %v1878 = vshrl.u32 %v1877, 7
      %v1879 = vsub.s32 0, %v1878
      %v1880 = vrot.slane %v1876, %v1879
      %v1889 = vunpack.c.l.b16 %v1868
      %v1890 = vunpack.c.l.b16 %v1869
      %v1891 = vunpack.c.l.b16 %v1870
      %v1892 = vunpack.c.l.b16 %v1871
      %v1893 = vunpack.c.l.b16 %v1872
      %v1894 = vunpack.c.l.b16 %v1873
      %v1895 = vunpack.c.l.b16 %v1874
      %v1896 = vunpack.c.l.b16 %v1875
      %v1897 = vpack.c.b16 %v1890, %v1889
      %v1898 = vpack.c.b16 %v1892, %v1891
      %v1899 = vpack.c.b16 %v1894, %v1893
      %v1900 = vpack.c.b16 %v1896, %v1895
      %v1906 = vsel %vm1385, %v1835, 0
      %v1909 = vsel %vm1385, %v1836, 0
      %v1912 = vsel %vm1385, %v1837, 0
      %v1915 = vsel %vm1385, %v1838, 0
      %v1918 = vsel %vm1385, %v1839, 0
      %v1921 = vsel %vm1385, %v1840, 0
      %v1924 = vsel %vm1385, %v1841, 0
      %v1927 = vsel %vm1385, %v1842, 0
      %v1930 = vsel %vm1385, %v1843, 0
      %v1933 = vsel %vm1385, %v1844, 0
      %v1936 = vsel %vm1385, %v1845, 0
      %v1939 = vsel %vm1385, %v1846, 0
      %v1942 = vsel %vm1385, %v1847, 0
      %v1945 = vsel %vm1385, %v1848, 0
      %v1948 = vsel %vm1385, %v1849, 0
      %v1951 = vsel %vm1385, %v1850, 0
      %v1954 = vsel %vm1385, %v1851, 0
      %v1957 = vsel %vm1385, %v1852, 0
      %v1960 = vsel %vm1385, %v1853, 0
      %v1963 = vsel %vm1385, %v1854, 0
      %v1966 = vsel %vm1385, %v1855, 0
      %v1969 = vsel %vm1385, %v1856, 0
      %v1972 = vsel %vm1385, %v1857, 0
      %v1975 = vsel %vm1385, %v1858, 0
      %v1978 = vsel %vm1385, %v1859, 0
      %v1981 = vsel %vm1385, %v1860, 0
      %v1984 = vsel %vm1385, %v1861, 0
      %v1987 = vsel %vm1385, %v1862, 0
      %v1990 = vsel %vm1385, %v1863, 0
      %v1993 = vsel %vm1385, %v1864, 0
      %v1996 = vsel %vm1385, %v1865, 0
      %v1999 = vsel %vm1385, %v1866, 0
      %2001 = vmatprep.subr.bf16.mxu0 0
      %2002 = vmatpush1.bf16.msra.mxu0 %v1897
      %2003 = vmatprep.subr.bf16.mxu0 0
      %2004 = vmatpush1.bf16.msra.mxu0 %v1898
      %2005 = vmatprep.subr.bf16.mxu0 0
      %2006 = vmatpush1.bf16.msra.mxu0 %v1899
      %2007 = vmatprep.subr.bf16.mxu0 0
      %2008 = vmatpush1.bf16.msra.mxu0 %v1900
      %2009 = vmatprep.subr.bf16.mxu0 0
      %2010 = vmatpush1.bf16.msra.mxu0 0
      %2011 = vmatprep.subr.bf16.mxu0 0
      %2012 = vmatpush1.bf16.msra.mxu0 0
      %2013 = vmatprep.subr.bf16.mxu0 0
      %2014 = vmatpush1.bf16.msra.mxu0 0
      %2015 = vmatprep.subr.bf16.mxu0 0
      %2016 = vmatpush1.bf16.msra.mxu0 0
      %2017 = vmatprep.subr.bf16.mxu0 0
      %2018 = vmatpush1.bf16.msra.mxu0 0
      %2019 = vmatprep.subr.bf16.mxu0 0
      %2020 = vmatpush1.bf16.msra.mxu0 0
      %2021 = vmatprep.subr.bf16.mxu0 0
      %2022 = vmatpush1.bf16.msra.mxu0 0
      %2023 = vmatprep.subr.bf16.mxu0 0
      %2024 = vmatpush1.bf16.msra.mxu0 0
      %2025 = vmatprep.subr.bf16.mxu0 0
      %2026 = vmatpush1.bf16.msra.mxu0 0
      %2027 = vmatprep.subr.bf16.mxu0 0
      %2028 = vmatpush1.bf16.msra.mxu0 0
      %2029 = vmatprep.subr.bf16.mxu0 0
      %2030 = vmatpush1.bf16.msra.mxu0 0
      %2031 = vmatprep.subr.bf16.mxu0 0
      %2032 = vmatpush1.bf16.msra.mxu0 0
      %2033 = vmatprep.mubr.bf16.mxu0 0
      %2034 = vmatmul.mubr.bf16.gmra.mrb[0].mxu0 %v1906
      %v2035 = vpop.f32.mrb[0].mxu0
      %v2036 = vadd.f32 %v1880, %v2035
      %v2037 = vpop.f32.mrb[0].mxu0
      %v2038 = vpop.f32.mrb[0].mxu0
      %v2039 = vadd.f32 %v1880, %v2038
      %v2040 = vpop.f32.mrb[0].mxu0
      %2041 = vmatprep.mubr.bf16.mxu0 0
      %2042 = vmatmul.mubr.bf16.gmra.mrb[0].mxu0 %v1909
      %v2043 = vpop.f32.mrb[0].mxu0
      %v2044 = vadd.f32 %v1880, %v2043
      %v2045 = vpop.f32.mrb[0].mxu0
      %v2046 = vpop.f32.mrb[0].mxu0
      %v2047 = vadd.f32 %v1880, %v2046
      %v2048 = vpop.f32.mrb[0].mxu0
      %2049 = vmatprep.mubr.bf16.mxu0 0
      %2050 = vmatmul.mubr.bf16.gmra.mrb[0].mxu0 %v1912
      %v2051 = vpop.f32.mrb[0].mxu0
      %v2052 = vadd.f32 %v1880, %v2051
      %v2053 = vpop.f32.mrb[0].mxu0
      %v2054 = vpop.f32.mrb[0].mxu0
      %v2055 = vadd.f32 %v1880, %v2054
      %v2056 = vpop.f32.mrb[0].mxu0
      %2057 = vmatprep.mubr.bf16.mxu0 0
      %2058 = vmatmul.mubr.bf16.gmra.mrb[0].mxu0 %v1915
      %v2059 = vpop.f32.mrb[0].mxu0
      %v2060 = vadd.f32 %v1880, %v2059
      %v2061 = vpop.f32.mrb[0].mxu0
      %v2062 = vpop.f32.mrb[0].mxu0
      %v2063 = vadd.f32 %v1880, %v2062
      %v2064 = vpop.f32.mrb[0].mxu0
      %2065 = vmatprep.mubr.bf16.mxu0 0
      %2066 = vmatmul.mubr.bf16.gmra.mrb[0].mxu0 %v1918
      %v2067 = vpop.f32.mrb[0].mxu0
      %v2068 = vadd.f32 %v1880, %v2067
      %v2069 = vpop.f32.mrb[0].mxu0
      %v2070 = vpop.f32.mrb[0].mxu0
      %v2071 = vadd.f32 %v1880, %v2070
      %v2072 = vpop.f32.mrb[0].mxu0
      %2073 = vmatprep.mubr.bf16.mxu0 0
      %2074 = vmatmul.mubr.bf16.gmra.mrb[0].mxu0 %v1921
      %v2075 = vpop.f32.mrb[0].mxu0
      %v2076 = vadd.f32 %v1880, %v2075
      %v2077 = vpop.f32.mrb[0].mxu0
      %v2078 = vpop.f32.mrb[0].mxu0
      %v2079 = vadd.f32 %v1880, %v2078
      %v2080 = vpop.f32.mrb[0].mxu0
      %2081 = vmatprep.mubr.bf16.mxu0 0
      %2082 = vmatmul.mubr.bf16.gmra.mrb[0].mxu0 %v1924
      %v2083 = vpop.f32.mrb[0].mxu0
      %v2084 = vadd.f32 %v1880, %v2083
      %v2085 = vpop.f32.mrb[0].mxu0
      %v2086 = vpop.f32.mrb[0].mxu0
      %v2087 = vadd.f32 %v1880, %v2086
      %v2088 = vpop.f32.mrb[0].mxu0
      %2089 = vmatprep.mubr.bf16.mxu0 0
      %2090 = vmatmul.mubr.bf16.gmra.mrb[0].mxu0 %v1927
      %v2091 = vpop.f32.mrb[0].mxu0
      %v2092 = vadd.f32 %v1880, %v2091
      %v2093 = vpop.f32.mrb[0].mxu0
      %v2094 = vpop.f32.mrb[0].mxu0
      %v2095 = vadd.f32 %v1880, %v2094
      %v2096 = vpop.f32.mrb[0].mxu0
      %2097 = vmatprep.mubr.bf16.mxu0 0
      %2098 = vmatmul.mubr.bf16.gmra.mrb[0].mxu0 %v1930
      %v2099 = vpop.f32.mrb[0].mxu0
      %v2100 = vadd.f32 %v1880, %v2099
      %v2101 = vpop.f32.mrb[0].mxu0
      %v2102 = vpop.f32.mrb[0].mxu0
      %v2103 = vadd.f32 %v1880, %v2102
      %v2104 = vpop.f32.mrb[0].mxu0
      %2105 = vmatprep.mubr.bf16.mxu0 0
      %2106 = vmatmul.mubr.bf16.gmra.mrb[0].mxu0 %v1933
      %v2107 = vpop.f32.mrb[0].mxu0
      %v2108 = vadd.f32 %v1880, %v2107
      %v2109 = vpop.f32.mrb[0].mxu0
      %v2110 = vpop.f32.mrb[0].mxu0
      %v2111 = vadd.f32 %v1880, %v2110
      %v2112 = vpop.f32.mrb[0].mxu0
      %2113 = vmatprep.mubr.bf16.mxu0 0
      %2114 = vmatmul.mubr.bf16.gmra.mrb[0].mxu0 %v1936
      %v2115 = vpop.f32.mrb[0].mxu0
      %v2116 = vadd.f32 %v1880, %v2115
      %v2117 = vpop.f32.mrb[0].mxu0
      %v2118 = vpop.f32.mrb[0].mxu0
      %v2119 = vadd.f32 %v1880, %v2118
      %v2120 = vpop.f32.mrb[0].mxu0
      %2121 = vmatprep.mubr.bf16.mxu0 0
      %2122 = vmatmul.mubr.bf16.gmra.mrb[0].mxu0 %v1939
      %v2123 = vpop.f32.mrb[0].mxu0
      %v2124 = vadd.f32 %v1880, %v2123
      %v2125 = vpop.f32.mrb[0].mxu0
      %v2126 = vpop.f32.mrb[0].mxu0
      %v2127 = vadd.f32 %v1880, %v2126
      %v2128 = vpop.f32.mrb[0].mxu0
      %2129 = vmatprep.mubr.bf16.mxu0 0
      %2130 = vmatmul.mubr.bf16.gmra.mrb[0].mxu0 %v1942
      %v2131 = vpop.f32.mrb[0].mxu0
      %v2132 = vadd.f32 %v1880, %v2131
      %v2133 = vpop.f32.mrb[0].mxu0
      %v2134 = vpop.f32.mrb[0].mxu0
      %v2135 = vadd.f32 %v1880, %v2134
      %v2136 = vpop.f32.mrb[0].mxu0
      %2137 = vmatprep.mubr.bf16.mxu0 0
      %2138 = vmatmul.mubr.bf16.gmra.mrb[0].mxu0 %v1945
      %v2139 = vpop.f32.mrb[0].mxu0
      %v2140 = vadd.f32 %v1880, %v2139
      %v2141 = vpop.f32.mrb[0].mxu0
      %v2142 = vpop.f32.mrb[0].mxu0
      %v2143 = vadd.f32 %v1880, %v2142
      %v2144 = vpop.f32.mrb[0].mxu0
      %2145 = vmatprep.mubr.bf16.mxu0 0
      %2146 = vmatmul.mubr.bf16.gmra.mrb[0].mxu0 %v1948
      %v2147 = vpop.f32.mrb[0].mxu0
      %v2148 = vadd.f32 %v1880, %v2147
      %v2149 = vpop.f32.mrb[0].mxu0
      %v2150 = vpop.f32.mrb[0].mxu0
      %v2151 = vadd.f32 %v1880, %v2150
      %v2152 = vpop.f32.mrb[0].mxu0
      %2153 = vmatprep.mubr.bf16.mxu0 0
      %2154 = vmatmul.mubr.bf16.gmra.mrb[0].mxu0 %v1951
      %v2155 = vpop.f32.mrb[0].mxu0
      %v2156 = vadd.f32 %v1880, %v2155
      %v2157 = vpop.f32.mrb[0].mxu0
      %v2158 = vpop.f32.mrb[0].mxu0
      %v2159 = vadd.f32 %v1880, %v2158
      %v2160 = vpop.f32.mrb[0].mxu0
      %2161 = vmatprep.mubr.bf16.mxu0 0
      %2162 = vmatmul.mubr.bf16.gmra.mrb[0].mxu0 %v1954
      %v2163 = vpop.f32.mrb[0].mxu0
      %v2164 = vadd.f32 %v1880, %v2163
      %v2165 = vpop.f32.mrb[0].mxu0
      %v2166 = vpop.f32.mrb[0].mxu0
      %v2167 = vadd.f32 %v1880, %v2166
      %v2168 = vpop.f32.mrb[0].mxu0
      %2169 = vmatprep.mubr.bf16.mxu0 0
      %2170 = vmatmul.mubr.bf16.gmra.mrb[0].mxu0 %v1957
      %v2171 = vpop.f32.mrb[0].mxu0
      %v2172 = vadd.f32 %v1880, %v2171
      %v2173 = vpop.f32.mrb[0].mxu0
      %v2174 = vpop.f32.mrb[0].mxu0
      %v2175 = vadd.f32 %v1880, %v2174
      %v2176 = vpop.f32.mrb[0].mxu0
      %2177 = vmatprep.mubr.bf16.mxu0 0
      %2178 = vmatmul.mubr.bf16.gmra.mrb[0].mxu0 %v1960
      %v2179 = vpop.f32.mrb[0].mxu0
      %v2180 = vadd.f32 %v1880, %v2179
      %v2181 = vpop.f32.mrb[0].mxu0
      %v2182 = vpop.f32.mrb[0].mxu0
      %v2183 = vadd.f32 %v1880, %v2182
      %v2184 = vpop.f32.mrb[0].mxu0
      %2185 = vmatprep.mubr.bf16.mxu0 0
      %2186 = vmatmul.mubr.bf16.gmra.mrb[0].mxu0 %v1963
      %v2187 = vpop.f32.mrb[0].mxu0
      %v2188 = vadd.f32 %v1880, %v2187
      %v2189 = vpop.f32.mrb[0].mxu0
      %v2190 = vpop.f32.mrb[0].mxu0
      %v2191 = vadd.f32 %v1880, %v2190
      %v2192 = vpop.f32.mrb[0].mxu0
      %2193 = vmatprep.mubr.bf16.mxu0 0
      %2194 = vmatmul.mubr.bf16.gmra.mrb[0].mxu0 %v1966
      %v2195 = vpop.f32.mrb[0].mxu0
      %v2196 = vadd.f32 %v1880, %v2195
      %v2197 = vpop.f32.mrb[0].mxu0
      %v2198 = vpop.f32.mrb[0].mxu0
      %v2199 = vadd.f32 %v1880, %v2198
      %v2200 = vpop.f32.mrb[0].mxu0
      %2201 = vmatprep.mubr.bf16.mxu0 0
      %2202 = vmatmul.mubr.bf16.gmra.mrb[0].mxu0 %v1969
      %v2203 = vpop.f32.mrb[0].mxu0
      %v2204 = vadd.f32 %v1880, %v2203
      %v2205 = vpop.f32.mrb[0].mxu0
      %v2206 = vpop.f32.mrb[0].mxu0
      %v2207 = vadd.f32 %v1880, %v2206
      %v2208 = vpop.f32.mrb[0].mxu0
      %2209 = vmatprep.mubr.bf16.mxu0 0
      %2210 = vmatmul.mubr.bf16.gmra.mrb[0].mxu0 %v1972
      %v2211 = vpop.f32.mrb[0].mxu0
      %v2212 = vadd.f32 %v1880, %v2211
      %v2213 = vpop.f32.mrb[0].mxu0
      %v2214 = vpop.f32.mrb[0].mxu0
      %v2215 = vadd.f32 %v1880, %v2214
      %v2216 = vpop.f32.mrb[0].mxu0
      %2217 = vmatprep.mubr.bf16.mxu0 0
      %2218 = vmatmul.mubr.bf16.gmra.mrb[0].mxu0 %v1975
      %v2219 = vpop.f32.mrb[0].mxu0
      %v2220 = vadd.f32 %v1880, %v2219
      %v2221 = vpop.f32.mrb[0].mxu0
      %v2222 = vpop.f32.mrb[0].mxu0
      %v2223 = vadd.f32 %v1880, %v2222
      %v2224 = vpop.f32.mrb[0].mxu0
      %2225 = vmatprep.mubr.bf16.mxu0 0
      %2226 = vmatmul.mubr.bf16.gmra.mrb[0].mxu0 %v1978
      %v2227 = vpop.f32.mrb[0].mxu0
      %v2228 = vadd.f32 %v1880, %v2227
      %v2229 = vpop.f32.mrb[0].mxu0
      %v2230 = vpop.f32.mrb[0].mxu0
      %v2231 = vadd.f32 %v1880, %v2230
      %v2232 = vpop.f32.mrb[0].mxu0
      %2233 = vmatprep.mubr.bf16.mxu0 0
      %2234 = vmatmul.mubr.bf16.gmra.mrb[0].mxu0 %v1981
      %v2235 = vpop.f32.mrb[0].mxu0
      %v2236 = vadd.f32 %v1880, %v2235
      %v2237 = vpop.f32.mrb[0].mxu0
      %v2238 = vpop.f32.mrb[0].mxu0
      %v2239 = vadd.f32 %v1880, %v2238
      %v2240 = vpop.f32.mrb[0].mxu0
      %2241 = vmatprep.mubr.bf16.mxu0 0
      %2242 = vmatmul.mubr.bf16.gmra.mrb[0].mxu0 %v1984
      %v2243 = vpop.f32.mrb[0].mxu0
      %v2244 = vadd.f32 %v1880, %v2243
      %v2245 = vpop.f32.mrb[0].mxu0
      %v2246 = vpop.f32.mrb[0].mxu0
      %v2247 = vadd.f32 %v1880, %v2246
      %v2248 = vpop.f32.mrb[0].mxu0
      %2249 = vmatprep.mubr.bf16.mxu0 0
      %2250 = vmatmul.mubr.bf16.gmra.mrb[0].mxu0 %v1987
      %v2251 = vpop.f32.mrb[0].mxu0
      %v2252 = vadd.f32 %v1880, %v2251
      %v2253 = vpop.f32.mrb[0].mxu0
      %v2254 = vpop.f32.mrb[0].mxu0
      %v2255 = vadd.f32 %v1880, %v2254
      %v2256 = vpop.f32.mrb[0].mxu0
      %2257 = vmatprep.mubr.bf16.mxu0 0
      %2258 = vmatmul.mubr.bf16.gmra.mrb[0].mxu0 %v1990
      %v2259 = vpop.f32.mrb[0].mxu0
      %v2260 = vadd.f32 %v1880, %v2259
      %v2261 = vpop.f32.mrb[0].mxu0
      %v2262 = vpop.f32.mrb[0].mxu0
      %v2263 = vadd.f32 %v1880, %v2262
      %v2264 = vpop.f32.mrb[0].mxu0
      %2265 = vmatprep.mubr.bf16.mxu0 0
      %2266 = vmatmul.mubr.bf16.gmra.mrb[0].mxu0 %v1993
      %v2267 = vpop.f32.mrb[0].mxu0
      %v2268 = vadd.f32 %v1880, %v2267
      %v2269 = vpop.f32.mrb[0].mxu0
      %v2270 = vpop.f32.mrb[0].mxu0
      %v2271 = vadd.f32 %v1880, %v2270
      %v2272 = vpop.f32.mrb[0].mxu0
      %2273 = vmatprep.mubr.bf16.mxu0 0
      %2274 = vmatmul.mubr.bf16.gmra.mrb[0].mxu0 %v1996
      %v2275 = vpop.f32.mrb[0].mxu0
      %v2276 = vadd.f32 %v1880, %v2275
      %v2277 = vpop.f32.mrb[0].mxu0
      %v2278 = vpop.f32.mrb[0].mxu0
      %v2279 = vadd.f32 %v1880, %v2278
      %v2280 = vpop.f32.mrb[0].mxu0
      %2281 = vmatprep.mubr.bf16.mxu0 0
      %2282 = vmatmul.mubr.bf16.gmra.mrb[0].mxu0 %v1999
      %v2283 = vpop.f32.mrb[0].mxu0
      %v2284 = vadd.f32 %v1880, %v2283
      %v2285 = vpop.f32.mrb[0].mxu0
      %v2286 = vpop.f32.mrb[0].mxu0
      %v2287 = vadd.f32 %v1880, %v2286
      %v2288 = vpop.f32.mrb[0].mxu0
      %2289 = vdwg.mxu0
      %v2290 = vadd.f32 %v645, %v2036
      %v2291 = vadd.f32 %v649, %v2039
      %v2292 = vadd.f32 %v655, %v2044
      %v2293 = vadd.f32 %v659, %v2047
      %v2294 = vadd.f32 %v665, %v2052
      %v2295 = vadd.f32 %v669, %v2055
      %v2296 = vadd.f32 %v675, %v2060
      %v2297 = vadd.f32 %v679, %v2063
      %v2298 = vadd.f32 %v685, %v2068
      %v2299 = vadd.f32 %v689, %v2071
      %v2300 = vadd.f32 %v695, %v2076
      %v2301 = vadd.f32 %v699, %v2079
      %v2302 = vadd.f32 %v705, %v2084
      %v2303 = vadd.f32 %v709, %v2087
      %v2304 = vadd.f32 %v715, %v2092
      %v2305 = vadd.f32 %v719, %v2095
      %v2306 = vadd.f32 %v725, %v2100
      %v2307 = vadd.f32 %v729, %v2103
      %v2308 = vadd.f32 %v735, %v2108
      %v2309 = vadd.f32 %v739, %v2111
      %v2310 = vadd.f32 %v745, %v2116
      %v2311 = vadd.f32 %v749, %v2119
      %v2312 = vadd.f32 %v755, %v2124
      %v2313 = vadd.f32 %v759, %v2127
      %v2314 = vadd.f32 %v765, %v2132
      %v2315 = vadd.f32 %v769, %v2135
      %v2316 = vadd.f32 %v775, %v2140
      %v2317 = vadd.f32 %v779, %v2143
      %v2318 = vadd.f32 %v785, %v2148
      %v2319 = vadd.f32 %v789, %v2151
      %v2320 = vadd.f32 %v795, %v2156
      %v2321 = vadd.f32 %v799, %v2159
      %v2322 = vadd.f32 %v805, %v2164
      %v2323 = vadd.f32 %v809, %v2167
      %v2324 = vadd.f32 %v815, %v2172
      %v2325 = vadd.f32 %v819, %v2175
      %v2326 = vadd.f32 %v825, %v2180
      %v2327 = vadd.f32 %v829, %v2183
      %v2328 = vadd.f32 %v835, %v2188
      %v2329 = vadd.f32 %v839, %v2191
      %v2330 = vadd.f32 %v845, %v2196
      %v2331 = vadd.f32 %v849, %v2199
      %v2332 = vadd.f32 %v855, %v2204
      %v2333 = vadd.f32 %v859, %v2207
      %v2334 = vadd.f32 %v865, %v2212
      %v2335 = vadd.f32 %v869, %v2215
      %v2336 = vadd.f32 %v875, %v2220
      %v2337 = vadd.f32 %v879, %v2223
      %v2338 = vadd.f32 %v885, %v2228
      %v2339 = vadd.f32 %v889, %v2231
      %v2340 = vadd.f32 %v895, %v2236
      %v2341 = vadd.f32 %v899, %v2239
      %v2342 = vadd.f32 %v905, %v2244
      %v2343 = vadd.f32 %v909, %v2247
      %v2344 = vadd.f32 %v915, %v2252
      %v2345 = vadd.f32 %v919, %v2255
      %v2346 = vadd.f32 %v925, %v2260
      %v2347 = vadd.f32 %v929, %v2263
      %v2348 = vadd.f32 %v935, %v2268
      %v2349 = vadd.f32 %v939, %v2271
      %v2350 = vadd.f32 %v945, %v2276
      %v2351 = vadd.f32 %v949, %v2279
      %v2352 = vadd.f32 %v955, %v2284
      %v2353 = vadd.f32 %v959, %v2287
      %v2354 = vadd.f32 %v2290, %v647
      %v2355 = vadd.f32 %v2291, %v651
      %v2356 = vadd.f32 %v2292, %v657
      %v2357 = vadd.f32 %v2293, %v661
      %v2358 = vadd.f32 %v2294, %v667
      %v2359 = vadd.f32 %v2295, %v671
      %v2360 = vadd.f32 %v2296, %v677
      %v2361 = vadd.f32 %v2297, %v681
      %v2362 = vadd.f32 %v2298, %v687
      %v2363 = vadd.f32 %v2299, %v691
      %v2364 = vadd.f32 %v2300, %v697
      %v2365 = vadd.f32 %v2301, %v701
      %v2366 = vadd.f32 %v2302, %v707
      %v2367 = vadd.f32 %v2303, %v711
      %v2368 = vadd.f32 %v2304, %v717
      %v2369 = vadd.f32 %v2305, %v721
      %v2370 = vadd.f32 %v2306, %v727
      %v2371 = vadd.f32 %v2307, %v731
      %v2372 = vadd.f32 %v2308, %v737
      %v2373 = vadd.f32 %v2309, %v741
      %v2374 = vadd.f32 %v2310, %v747
      %v2375 = vadd.f32 %v2311, %v751
      %v2376 = vadd.f32 %v2312, %v757
      %v2377 = vadd.f32 %v2313, %v761
      %v2378 = vadd.f32 %v2314, %v767
      %v2379 = vadd.f32 %v2315, %v771
      %v2380 = vadd.f32 %v2316, %v777
      %v2381 = vadd.f32 %v2317, %v781
      %v2382 = vadd.f32 %v2318, %v787
      %v2383 = vadd.f32 %v2319, %v791
      %v2384 = vadd.f32 %v2320, %v797
      %v2385 = vadd.f32 %v2321, %v801
      %v2386 = vadd.f32 %v2322, %v807
      %v2387 = vadd.f32 %v2323, %v811
      %v2388 = vadd.f32 %v2324, %v817
      %v2389 = vadd.f32 %v2325, %v821
      %v2390 = vadd.f32 %v2326, %v827
      %v2391 = vadd.f32 %v2327, %v831
      %v2392 = vadd.f32 %v2328, %v837
      %v2393 = vadd.f32 %v2329, %v841
      %v2394 = vadd.f32 %v2330, %v847
      %v2395 = vadd.f32 %v2331, %v851
      %v2396 = vadd.f32 %v2332, %v857
      %v2397 = vadd.f32 %v2333, %v861
      %v2398 = vadd.f32 %v2334, %v867
      %v2399 = vadd.f32 %v2335, %v871
      %v2400 = vadd.f32 %v2336, %v877
      %v2401 = vadd.f32 %v2337, %v881
      %v2402 = vadd.f32 %v2338, %v887
      %v2403 = vadd.f32 %v2339, %v891
      %v2404 = vadd.f32 %v2340, %v897
      %v2405 = vadd.f32 %v2341, %v901
      %v2406 = vadd.f32 %v2342, %v907
      %v2407 = vadd.f32 %v2343, %v911
      %v2408 = vadd.f32 %v2344, %v917
      %v2409 = vadd.f32 %v2345, %v921
      %v2410 = vadd.f32 %v2346, %v927
      %v2411 = vadd.f32 %v2347, %v931
      %v2412 = vadd.f32 %v2348, %v937
      %v2413 = vadd.f32 %v2349, %v941
      %v2414 = vadd.f32 %v2350, %v947
      %v2415 = vadd.f32 %v2351, %v951
      %v2416 = vadd.f32 %v2352, %v957
      %v2417 = vadd.f32 %v2353, %v961
      %v2418 = vmax.f32 %v2354, 0.0
      %v2419 = vmax.f32 %v2355, 0.0
      %v2420 = vmax.f32 %v2356, 0.0
      %v2421 = vmax.f32 %v2357, 0.0
      %v2422 = vmax.f32 %v2358, 0.0
      %v2423 = vmax.f32 %v2359, 0.0
      %v2424 = vmax.f32 %v2360, 0.0
      %v2425 = vmax.f32 %v2361, 0.0
      %v2426 = vmax.f32 %v2362, 0.0
      %v2427 = vmax.f32 %v2363, 0.0
      %v2428 = vmax.f32 %v2364, 0.0
      %v2429 = vmax.f32 %v2365, 0.0
      %v2430 = vmax.f32 %v2366, 0.0
      %v2431 = vmax.f32 %v2367, 0.0
      %v2432 = vmax.f32 %v2368, 0.0
      %v2433 = vmax.f32 %v2369, 0.0
      %v2434 = vmax.f32 %v2370, 0.0
      %v2435 = vmax.f32 %v2371, 0.0
      %v2436 = vmax.f32 %v2372, 0.0
      %v2437 = vmax.f32 %v2373, 0.0
      %v2438 = vmax.f32 %v2374, 0.0
      %v2439 = vmax.f32 %v2375, 0.0
      %v2440 = vmax.f32 %v2376, 0.0
      %v2441 = vmax.f32 %v2377, 0.0
      %v2442 = vmax.f32 %v2378, 0.0
      %v2443 = vmax.f32 %v2379, 0.0
      %v2444 = vmax.f32 %v2380, 0.0
      %v2445 = vmax.f32 %v2381, 0.0
      %v2446 = vmax.f32 %v2382, 0.0
      %v2447 = vmax.f32 %v2383, 0.0
      %v2448 = vmax.f32 %v2384, 0.0
      %v2449 = vmax.f32 %v2385, 0.0
      %v2450 = vmax.f32 %v2386, 0.0
      %v2451 = vmax.f32 %v2387, 0.0
      %v2452 = vmax.f32 %v2388, 0.0
      %v2453 = vmax.f32 %v2389, 0.0
      %v2454 = vmax.f32 %v2390, 0.0
      %v2455 = vmax.f32 %v2391, 0.0
      %v2456 = vmax.f32 %v2392, 0.0
      %v2457 = vmax.f32 %v2393, 0.0
      %v2458 = vmax.f32 %v2394, 0.0
      %v2459 = vmax.f32 %v2395, 0.0
      %v2460 = vmax.f32 %v2396, 0.0
      %v2461 = vmax.f32 %v2397, 0.0
      %v2462 = vmax.f32 %v2398, 0.0
      %v2463 = vmax.f32 %v2399, 0.0
      %v2464 = vmax.f32 %v2400, 0.0
      %v2465 = vmax.f32 %v2401, 0.0
      %v2466 = vmax.f32 %v2402, 0.0
      %v2467 = vmax.f32 %v2403, 0.0
      %v2468 = vmax.f32 %v2404, 0.0
      %v2469 = vmax.f32 %v2405, 0.0
      %v2470 = vmax.f32 %v2406, 0.0
      %v2471 = vmax.f32 %v2407, 0.0
      %v2472 = vmax.f32 %v2408, 0.0
      %v2473 = vmax.f32 %v2409, 0.0
      %v2474 = vmax.f32 %v2410, 0.0
      %v2475 = vmax.f32 %v2411, 0.0
      %v2476 = vmax.f32 %v2412, 0.0
      %v2477 = vmax.f32 %v2413, 0.0
      %v2478 = vmax.f32 %v2414, 0.0
      %v2479 = vmax.f32 %v2415, 0.0
      %v2480 = vmax.f32 %v2416, 0.0
      %v2481 = vmax.f32 %v2417, 0.0
      %v2482 = vpack.c.bf16 %v2419, %v2418
      %v2483 = vpack.c.bf16 %v2421, %v2420
      %v2484 = vpack.c.bf16 %v2423, %v2422
      %v2485 = vpack.c.bf16 %v2425, %v2424
      %v2486 = vpack.c.bf16 %v2427, %v2426
      %v2487 = vpack.c.bf16 %v2429, %v2428
      %v2488 = vpack.c.bf16 %v2431, %v2430
      %v2489 = vpack.c.bf16 %v2433, %v2432
      %v2490 = vpack.c.bf16 %v2435, %v2434
      %v2491 = vpack.c.bf16 %v2437, %v2436
      %v2492 = vpack.c.bf16 %v2439, %v2438
      %v2493 = vpack.c.bf16 %v2441, %v2440
      %v2494 = vpack.c.bf16 %v2443, %v2442
      %v2495 = vpack.c.bf16 %v2445, %v2444
      %v2496 = vpack.c.bf16 %v2447, %v2446
      %v2497 = vpack.c.bf16 %v2449, %v2448
      %v2498 = vpack.c.bf16 %v2451, %v2450
      %v2499 = vpack.c.bf16 %v2453, %v2452
      %v2500 = vpack.c.bf16 %v2455, %v2454
      %v2501 = vpack.c.bf16 %v2457, %v2456
      %v2502 = vpack.c.bf16 %v2459, %v2458
      %v2503 = vpack.c.bf16 %v2461, %v2460
      %v2504 = vpack.c.bf16 %v2463, %v2462
      %v2505 = vpack.c.bf16 %v2465, %v2464
      %v2506 = vpack.c.bf16 %v2467, %v2466
      %v2507 = vpack.c.bf16 %v2469, %v2468
      %v2508 = vpack.c.bf16 %v2471, %v2470
      %v2509 = vpack.c.bf16 %v2473, %v2472
      %v2510 = vpack.c.bf16 %v2475, %v2474
      %v2511 = vpack.c.bf16 %v2477, %v2476
      %v2512 = vpack.c.bf16 %v2479, %v2478
      %v2513 = vpack.c.bf16 %v2481, %v2480
      %s2514 = scalar_lea.vmem %s3, 64
      %v2515 = vld [vmem:[%s2514] sm:$0xf]
      %v2516 = vld [vmem:[%s2514 + $0x4] sm:$0xf]
      %v2517 = vld [vmem:[%s2514 + $0x8] sm:$0xf]
      %v2518 = vld [vmem:[%s2514 + $0xc] sm:$0xf]
      %v2519 = vld [vmem:[%s2514 + $0x10] sm:$0xf]
      %v2520 = vld [vmem:[%s2514 + $0x14] sm:$0xf]
      %v2521 = vld [vmem:[%s2514 + $0x18] sm:$0xf]
      %v2522 = vld [vmem:[%s2514 + $0x1c] sm:$0xf]
      %v2523 = vld [vmem:[%s4 + $0x2] sm:$0x1]
      %v2524 = vlaneseq
      %v2525 = vshrl.u32 %v2524, 7
      %v2526 = vsub.s32 0, %v2525
      %v2527 = vrot.slane %v2523, %v2526
      %v2536 = vunpack.c.l.b16 %v2515
      %v2537 = vunpack.c.l.b16 %v2516
      %v2538 = vunpack.c.l.b16 %v2517
      %v2539 = vunpack.c.l.b16 %v2518
      %v2540 = vunpack.c.l.b16 %v2519
      %v2541 = vunpack.c.l.b16 %v2520
      %v2542 = vunpack.c.l.b16 %v2521
      %v2543 = vunpack.c.l.b16 %v2522
      %v2544 = vpack.c.b16 %v2537, %v2536
      %v2545 = vpack.c.b16 %v2539, %v2538
      %v2546 = vpack.c.b16 %v2541, %v2540
      %v2547 = vpack.c.b16 %v2543, %v2542
      %v2553 = vsel %vm1385, %v2482, 0
      %v2556 = vsel %vm1385, %v2483, 0
      %v2559 = vsel %vm1385, %v2484, 0
      %v2562 = vsel %vm1385, %v2485, 0
      %v2565 = vsel %vm1385, %v2486, 0
      %v2568 = vsel %vm1385, %v2487, 0
      %v2571 = vsel %vm1385, %v2488, 0
      %v2574 = vsel %vm1385, %v2489, 0
      %v2577 = vsel %vm1385, %v2490, 0
      %v2580 = vsel %vm1385, %v2491, 0
      %v2583 = vsel %vm1385, %v2492, 0
      %v2586 = vsel %vm1385, %v2493, 0
      %v2589 = vsel %vm1385, %v2494, 0
      %v2592 = vsel %vm1385, %v2495, 0
      %v2595 = vsel %vm1385, %v2496, 0
      %v2598 = vsel %vm1385, %v2497, 0
      %v2601 = vsel %vm1385, %v2498, 0
      %v2604 = vsel %vm1385, %v2499, 0
      %v2607 = vsel %vm1385, %v2500, 0
      %v2610 = vsel %vm1385, %v2501, 0
      %v2613 = vsel %vm1385, %v2502, 0
      %v2616 = vsel %vm1385, %v2503, 0
      %v2619 = vsel %vm1385, %v2504, 0
      %v2622 = vsel %vm1385, %v2505, 0
      %v2625 = vsel %vm1385, %v2506, 0
      %v2628 = vsel %vm1385, %v2507, 0
      %v2631 = vsel %vm1385, %v2508, 0
      %v2634 = vsel %vm1385, %v2509, 0
      %v2637 = vsel %vm1385, %v2510, 0
      %v2640 = vsel %vm1385, %v2511, 0
      %v2643 = vsel %vm1385, %v2512, 0
      %v2646 = vsel %vm1385, %v2513, 0
      %2648 = vmatprep.subr.bf16.mxu0 0
      %2649 = vmatpush1.bf16.msra.mxu0 %v2544
      %2650 = vmatprep.subr.bf16.mxu0 0
      %2651 = vmatpush1.bf16.msra.mxu0 %v2545
      %2652 = vmatprep.subr.bf16.mxu0 0
      %2653 = vmatpush1.bf16.msra.mxu0 %v2546
      %2654 = vmatprep.subr.bf16.mxu0 0
      %2655 = vmatpush1.bf16.msra.mxu0 %v2547
      %2656 = vmatprep.subr.bf16.mxu0 0
      %2657 = vmatpush1.bf16.msra.mxu0 0
      %2658 = vmatprep.subr.bf16.mxu0 0
      %2659 = vmatpush1.bf16.msra.mxu0 0
      %2660 = vmatprep.subr.bf16.mxu0 0
      %2661 = vmatpush1.bf16.msra.mxu0 0
      %2662 = vmatprep.subr.bf16.mxu0 0
      %2663 = vmatpush1.bf16.msra.mxu0 0
      %2664 = vmatprep.subr.bf16.mxu0 0
      %2665 = vmatpush1.bf16.msra.mxu0 0
      %2666 = vmatprep.subr.bf16.mxu0 0
      %2667 = vmatpush1.bf16.msra.mxu0 0
      %2668 = vmatprep.subr.bf16.mxu0 0
      %2669 = vmatpush1.bf16.msra.mxu0 0
      %2670 = vmatprep.subr.bf16.mxu0 0
      %2671 = vmatpush1.bf16.msra.mxu0 0
      %2672 = vmatprep.subr.bf16.mxu0 0
      %2673 = vmatpush1.bf16.msra.mxu0 0
      %2674 = vmatprep.subr.bf16.mxu0 0
      %2675 = vmatpush1.bf16.msra.mxu0 0
      %2676 = vmatprep.subr.bf16.mxu0 0
      %2677 = vmatpush1.bf16.msra.mxu0 0
      %2678 = vmatprep.subr.bf16.mxu0 0
      %2679 = vmatpush1.bf16.msra.mxu0 0
      %2680 = vmatprep.mubr.bf16.mxu0 0
      %2681 = vmatmul.mubr.bf16.gmra.mrb[0].mxu0 %v2553
      %v2682 = vpop.f32.mrb[0].mxu0
      %v2683 = vadd.f32 %v2527, %v2682
      %v2684 = vpop.f32.mrb[0].mxu0
      %v2685 = vpop.f32.mrb[0].mxu0
      %v2686 = vadd.f32 %v2527, %v2685
      %v2687 = vpop.f32.mrb[0].mxu0
      %2688 = vmatprep.mubr.bf16.mxu0 0
      %2689 = vmatmul.mubr.bf16.gmra.mrb[0].mxu0 %v2556
      %v2690 = vpop.f32.mrb[0].mxu0
      %v2691 = vadd.f32 %v2527, %v2690
      %v2692 = vpop.f32.mrb[0].mxu0
      %v2693 = vpop.f32.mrb[0].mxu0
      %v2694 = vadd.f32 %v2527, %v2693
      %v2695 = vpop.f32.mrb[0].mxu0
      %2696 = vmatprep.mubr.bf16.mxu0 0
      %2697 = vmatmul.mubr.bf16.gmra.mrb[0].mxu0 %v2559
      %v2698 = vpop.f32.mrb[0].mxu0
      %v2699 = vadd.f32 %v2527, %v2698
      %v2700 = vpop.f32.mrb[0].mxu0
      %v2701 = vpop.f32.mrb[0].mxu0
      %v2702 = vadd.f32 %v2527, %v2701
      %v2703 = vpop.f32.mrb[0].mxu0
      %2704 = vmatprep.mubr.bf16.mxu0 0
      %2705 = vmatmul.mubr.bf16.gmra.mrb[0].mxu0 %v2562
      %v2706 = vpop.f32.mrb[0].mxu0
      %v2707 = vadd.f32 %v2527, %v2706
      %v2708 = vpop.f32.mrb[0].mxu0
      %v2709 = vpop.f32.mrb[0].mxu0
      %v2710 = vadd.f32 %v2527, %v2709
      %v2711 = vpop.f32.mrb[0].mxu0
      %2712 = vmatprep.mubr.bf16.mxu0 0
      %2713 = vmatmul.mubr.bf16.gmra.mrb[0].mxu0 %v2565
      %v2714 = vpop.f32.mrb[0].mxu0
      %v2715 = vadd.f32 %v2527, %v2714
      %v2716 = vpop.f32.mrb[0].mxu0
      %v2717 = vpop.f32.mrb[0].mxu0
      %v2718 = vadd.f32 %v2527, %v2717
      %v2719 = vpop.f32.mrb[0].mxu0
      %2720 = vmatprep.mubr.bf16.mxu0 0
      %2721 = vmatmul.mubr.bf16.gmra.mrb[0].mxu0 %v2568
      %v2722 = vpop.f32.mrb[0].mxu0
      %v2723 = vadd.f32 %v2527, %v2722
      %v2724 = vpop.f32.mrb[0].mxu0
      %v2725 = vpop.f32.mrb[0].mxu0
      %v2726 = vadd.f32 %v2527, %v2725
      %v2727 = vpop.f32.mrb[0].mxu0
      %2728 = vmatprep.mubr.bf16.mxu0 0
      %2729 = vmatmul.mubr.bf16.gmra.mrb[0].mxu0 %v2571
      %v2730 = vpop.f32.mrb[0].mxu0
      %v2731 = vadd.f32 %v2527, %v2730
      %v2732 = vpop.f32.mrb[0].mxu0
      %v2733 = vpop.f32.mrb[0].mxu0
      %v2734 = vadd.f32 %v2527, %v2733
      %v2735 = vpop.f32.mrb[0].mxu0
      %2736 = vmatprep.mubr.bf16.mxu0 0
      %2737 = vmatmul.mubr.bf16.gmra.mrb[0].mxu0 %v2574
      %v2738 = vpop.f32.mrb[0].mxu0
      %v2739 = vadd.f32 %v2527, %v2738
      %v2740 = vpop.f32.mrb[0].mxu0
      %v2741 = vpop.f32.mrb[0].mxu0
      %v2742 = vadd.f32 %v2527, %v2741
      %v2743 = vpop.f32.mrb[0].mxu0
      %2744 = vmatprep.mubr.bf16.mxu0 0
      %2745 = vmatmul.mubr.bf16.gmra.mrb[0].mxu0 %v2577
      %v2746 = vpop.f32.mrb[0].mxu0
      %v2747 = vadd.f32 %v2527, %v2746
      %v2748 = vpop.f32.mrb[0].mxu0
      %v2749 = vpop.f32.mrb[0].mxu0
      %v2750 = vadd.f32 %v2527, %v2749
      %v2751 = vpop.f32.mrb[0].mxu0
      %2752 = vmatprep.mubr.bf16.mxu0 0
      %2753 = vmatmul.mubr.bf16.gmra.mrb[0].mxu0 %v2580
      %v2754 = vpop.f32.mrb[0].mxu0
      %v2755 = vadd.f32 %v2527, %v2754
      %v2756 = vpop.f32.mrb[0].mxu0
      %v2757 = vpop.f32.mrb[0].mxu0
      %v2758 = vadd.f32 %v2527, %v2757
      %v2759 = vpop.f32.mrb[0].mxu0
      %2760 = vmatprep.mubr.bf16.mxu0 0
      %2761 = vmatmul.mubr.bf16.gmra.mrb[0].mxu0 %v2583
      %v2762 = vpop.f32.mrb[0].mxu0
      %v2763 = vadd.f32 %v2527, %v2762
      %v2764 = vpop.f32.mrb[0].mxu0
      %v2765 = vpop.f32.mrb[0].mxu0
      %v2766 = vadd.f32 %v2527, %v2765
      %v2767 = vpop.f32.mrb[0].mxu0
      %2768 = vmatprep.mubr.bf16.mxu0 0
      %2769 = vmatmul.mubr.bf16.gmra.mrb[0].mxu0 %v2586
      %v2770 = vpop.f32.mrb[0].mxu0
      %v2771 = vadd.f32 %v2527, %v2770
      %v2772 = vpop.f32.mrb[0].mxu0
      %v2773 = vpop.f32.mrb[0].mxu0
      %v2774 = vadd.f32 %v2527, %v2773
      %v2775 = vpop.f32.mrb[0].mxu0
      %2776 = vmatprep.mubr.bf16.mxu0 0
      %2777 = vmatmul.mubr.bf16.gmra.mrb[0].mxu0 %v2589
      %v2778 = vpop.f32.mrb[0].mxu0
      %v2779 = vadd.f32 %v2527, %v2778
      %v2780 = vpop.f32.mrb[0].mxu0
      %v2781 = vpop.f32.mrb[0].mxu0
      %v2782 = vadd.f32 %v2527, %v2781
      %v2783 = vpop.f32.mrb[0].mxu0
      %2784 = vmatprep.mubr.bf16.mxu0 0
      %2785 = vmatmul.mubr.bf16.gmra.mrb[0].mxu0 %v2592
      %v2786 = vpop.f32.mrb[0].mxu0
      %v2787 = vadd.f32 %v2527, %v2786
      %v2788 = vpop.f32.mrb[0].mxu0
      %v2789 = vpop.f32.mrb[0].mxu0
      %v2790 = vadd.f32 %v2527, %v2789
      %v2791 = vpop.f32.mrb[0].mxu0
      %2792 = vmatprep.mubr.bf16.mxu0 0
      %2793 = vmatmul.mubr.bf16.gmra.mrb[0].mxu0 %v2595
      %v2794 = vpop.f32.mrb[0].mxu0
      %v2795 = vadd.f32 %v2527, %v2794
      %v2796 = vpop.f32.mrb[0].mxu0
      %v2797 = vpop.f32.mrb[0].mxu0
      %v2798 = vadd.f32 %v2527, %v2797
      %v2799 = vpop.f32.mrb[0].mxu0
      %2800 = vmatprep.mubr.bf16.mxu0 0
      %2801 = vmatmul.mubr.bf16.gmra.mrb[0].mxu0 %v2598
      %v2802 = vpop.f32.mrb[0].mxu0
      %v2803 = vadd.f32 %v2527, %v2802
      %v2804 = vpop.f32.mrb[0].mxu0
      %v2805 = vpop.f32.mrb[0].mxu0
      %v2806 = vadd.f32 %v2527, %v2805
      %v2807 = vpop.f32.mrb[0].mxu0
      %2808 = vmatprep.mubr.bf16.mxu0 0
      %2809 = vmatmul.mubr.bf16.gmra.mrb[0].mxu0 %v2601
      %v2810 = vpop.f32.mrb[0].mxu0
      %v2811 = vadd.f32 %v2527, %v2810
      %v2812 = vpop.f32.mrb[0].mxu0
      %v2813 = vpop.f32.mrb[0].mxu0
      %v2814 = vadd.f32 %v2527, %v2813
      %v2815 = vpop.f32.mrb[0].mxu0
      %2816 = vmatprep.mubr.bf16.mxu0 0
      %2817 = vmatmul.mubr.bf16.gmra.mrb[0].mxu0 %v2604
      %v2818 = vpop.f32.mrb[0].mxu0
      %v2819 = vadd.f32 %v2527, %v2818
      %v2820 = vpop.f32.mrb[0].mxu0
      %v2821 = vpop.f32.mrb[0].mxu0
      %v2822 = vadd.f32 %v2527, %v2821
      %v2823 = vpop.f32.mrb[0].mxu0
      %2824 = vmatprep.mubr.bf16.mxu0 0
      %2825 = vmatmul.mubr.bf16.gmra.mrb[0].mxu0 %v2607
      %v2826 = vpop.f32.mrb[0].mxu0
      %v2827 = vadd.f32 %v2527, %v2826
      %v2828 = vpop.f32.mrb[0].mxu0
      %v2829 = vpop.f32.mrb[0].mxu0
      %v2830 = vadd.f32 %v2527, %v2829
      %v2831 = vpop.f32.mrb[0].mxu0
      %2832 = vmatprep.mubr.bf16.mxu0 0
      %2833 = vmatmul.mubr.bf16.gmra.mrb[0].mxu0 %v2610
      %v2834 = vpop.f32.mrb[0].mxu0
      %v2835 = vadd.f32 %v2527, %v2834
      %v2836 = vpop.f32.mrb[0].mxu0
      %v2837 = vpop.f32.mrb[0].mxu0
      %v2838 = vadd.f32 %v2527, %v2837
      %v2839 = vpop.f32.mrb[0].mxu0
      %2840 = vmatprep.mubr.bf16.mxu0 0
      %2841 = vmatmul.mubr.bf16.gmra.mrb[0].mxu0 %v2613
      %v2842 = vpop.f32.mrb[0].mxu0
      %v2843 = vadd.f32 %v2527, %v2842
      %v2844 = vpop.f32.mrb[0].mxu0
      %v2845 = vpop.f32.mrb[0].mxu0
      %v2846 = vadd.f32 %v2527, %v2845
      %v2847 = vpop.f32.mrb[0].mxu0
      %2848 = vmatprep.mubr.bf16.mxu0 0
      %2849 = vmatmul.mubr.bf16.gmra.mrb[0].mxu0 %v2616
      %v2850 = vpop.f32.mrb[0].mxu0
      %v2851 = vadd.f32 %v2527, %v2850
      %v2852 = vpop.f32.mrb[0].mxu0
      %v2853 = vpop.f32.mrb[0].mxu0
      %v2854 = vadd.f32 %v2527, %v2853
      %v2855 = vpop.f32.mrb[0].mxu0
      %2856 = vmatprep.mubr.bf16.mxu0 0
      %2857 = vmatmul.mubr.bf16.gmra.mrb[0].mxu0 %v2619
      %v2858 = vpop.f32.mrb[0].mxu0
      %v2859 = vadd.f32 %v2527, %v2858
      %v2860 = vpop.f32.mrb[0].mxu0
      %v2861 = vpop.f32.mrb[0].mxu0
      %v2862 = vadd.f32 %v2527, %v2861
      %v2863 = vpop.f32.mrb[0].mxu0
      %2864 = vmatprep.mubr.bf16.mxu0 0
      %2865 = vmatmul.mubr.bf16.gmra.mrb[0].mxu0 %v2622
      %v2866 = vpop.f32.mrb[0].mxu0
      %v2867 = vadd.f32 %v2527, %v2866
      %v2868 = vpop.f32.mrb[0].mxu0
      %v2869 = vpop.f32.mrb[0].mxu0
      %v2870 = vadd.f32 %v2527, %v2869
      %v2871 = vpop.f32.mrb[0].mxu0
      %2872 = vmatprep.mubr.bf16.mxu0 0
      %2873 = vmatmul.mubr.bf16.gmra.mrb[0].mxu0 %v2625
      %v2874 = vpop.f32.mrb[0].mxu0
      %v2875 = vadd.f32 %v2527, %v2874
      %v2876 = vpop.f32.mrb[0].mxu0
      %v2877 = vpop.f32.mrb[0].mxu0
      %v2878 = vadd.f32 %v2527, %v2877
      %v2879 = vpop.f32.mrb[0].mxu0
      %2880 = vmatprep.mubr.bf16.mxu0 0
      %2881 = vmatmul.mubr.bf16.gmra.mrb[0].mxu0 %v2628
      %v2882 = vpop.f32.mrb[0].mxu0
      %v2883 = vadd.f32 %v2527, %v2882
      %v2884 = vpop.f32.mrb[0].mxu0
      %v2885 = vpop.f32.mrb[0].mxu0
      %v2886 = vadd.f32 %v2527, %v2885
      %v2887 = vpop.f32.mrb[0].mxu0
      %2888 = vmatprep.mubr.bf16.mxu0 0
      %2889 = vmatmul.mubr.bf16.gmra.mrb[0].mxu0 %v2631
      %v2890 = vpop.f32.mrb[0].mxu0
      %v2891 = vadd.f32 %v2527, %v2890
      %v2892 = vpop.f32.mrb[0].mxu0
      %v2893 = vpop.f32.mrb[0].mxu0
      %v2894 = vadd.f32 %v2527, %v2893
      %v2895 = vpop.f32.mrb[0].mxu0
      %2896 = vmatprep.mubr.bf16.mxu0 0
      %2897 = vmatmul.mubr.bf16.gmra.mrb[0].mxu0 %v2634
      %v2898 = vpop.f32.mrb[0].mxu0
      %v2899 = vadd.f32 %v2527, %v2898
      %v2900 = vpop.f32.mrb[0].mxu0
      %v2901 = vpop.f32.mrb[0].mxu0
      %v2902 = vadd.f32 %v2527, %v2901
      %v2903 = vpop.f32.mrb[0].mxu0
      %2904 = vmatprep.mubr.bf16.mxu0 0
      %2905 = vmatmul.mubr.bf16.gmra.mrb[0].mxu0 %v2637
      %v2906 = vpop.f32.mrb[0].mxu0
      %v2907 = vadd.f32 %v2527, %v2906
      %v2908 = vpop.f32.mrb[0].mxu0
      %v2909 = vpop.f32.mrb[0].mxu0
      %v2910 = vadd.f32 %v2527, %v2909
      %v2911 = vpop.f32.mrb[0].mxu0
      %2912 = vmatprep.mubr.bf16.mxu0 0
      %2913 = vmatmul.mubr.bf16.gmra.mrb[0].mxu0 %v2640
      %v2914 = vpop.f32.mrb[0].mxu0
      %v2915 = vadd.f32 %v2527, %v2914
      %v2916 = vpop.f32.mrb[0].mxu0
      %v2917 = vpop.f32.mrb[0].mxu0
      %v2918 = vadd.f32 %v2527, %v2917
      %v2919 = vpop.f32.mrb[0].mxu0
      %2920 = vmatprep.mubr.bf16.mxu0 0
      %2921 = vmatmul.mubr.bf16.gmra.mrb[0].mxu0 %v2643
      %v2922 = vpop.f32.mrb[0].mxu0
      %v2923 = vadd.f32 %v2527, %v2922
      %v2924 = vpop.f32.mrb[0].mxu0
      %v2925 = vpop.f32.mrb[0].mxu0
      %v2926 = vadd.f32 %v2527, %v2925
      %v2927 = vpop.f32.mrb[0].mxu0
      %2928 = vmatprep.mubr.bf16.mxu0 0
      %2929 = vmatmul.mubr.bf16.gmra.mrb[0].mxu0 %v2646
      %v2930 = vpop.f32.mrb[0].mxu0
      %v2931 = vadd.f32 %v2527, %v2930
      %v2932 = vpop.f32.mrb[0].mxu0
      %v2933 = vpop.f32.mrb[0].mxu0
      %v2934 = vadd.f32 %v2527, %v2933
      %v2935 = vpop.f32.mrb[0].mxu0
      %2936 = vdwg.mxu0
      %v2937 = vmax.f32 %v2683, 0.0
      %v2938 = vmax.f32 %v2686, 0.0
      %v2939 = vmax.f32 %v2691, 0.0
      %v2940 = vmax.f32 %v2694, 0.0
      %v2941 = vmax.f32 %v2699, 0.0
      %v2942 = vmax.f32 %v2702, 0.0
      %v2943 = vmax.f32 %v2707, 0.0
      %v2944 = vmax.f32 %v2710, 0.0
      %v2945 = vmax.f32 %v2715, 0.0
      %v2946 = vmax.f32 %v2718, 0.0
      %v2947 = vmax.f32 %v2723, 0.0
      %v2948 = vmax.f32 %v2726, 0.0
      %v2949 = vmax.f32 %v2731, 0.0
      %v2950 = vmax.f32 %v2734, 0.0
      %v2951 = vmax.f32 %v2739, 0.0
      %v2952 = vmax.f32 %v2742, 0.0
      %v2953 = vmax.f32 %v2747, 0.0
      %v2954 = vmax.f32 %v2750, 0.0
      %v2955 = vmax.f32 %v2755, 0.0
      %v2956 = vmax.f32 %v2758, 0.0
      %v2957 = vmax.f32 %v2763, 0.0
      %v2958 = vmax.f32 %v2766, 0.0
      %v2959 = vmax.f32 %v2771, 0.0
      %v2960 = vmax.f32 %v2774, 0.0
      %v2961 = vmax.f32 %v2779, 0.0
      %v2962 = vmax.f32 %v2782, 0.0
      %v2963 = vmax.f32 %v2787, 0.0
      %v2964 = vmax.f32 %v2790, 0.0
      %v2965 = vmax.f32 %v2795, 0.0
      %v2966 = vmax.f32 %v2798, 0.0
      %v2967 = vmax.f32 %v2803, 0.0
      %v2968 = vmax.f32 %v2806, 0.0
      %v2969 = vmax.f32 %v2811, 0.0
      %v2970 = vmax.f32 %v2814, 0.0
      %v2971 = vmax.f32 %v2819, 0.0
      %v2972 = vmax.f32 %v2822, 0.0
      %v2973 = vmax.f32 %v2827, 0.0
      %v2974 = vmax.f32 %v2830, 0.0
      %v2975 = vmax.f32 %v2835, 0.0
      %v2976 = vmax.f32 %v2838, 0.0
      %v2977 = vmax.f32 %v2843, 0.0
      %v2978 = vmax.f32 %v2846, 0.0
      %v2979 = vmax.f32 %v2851, 0.0
      %v2980 = vmax.f32 %v2854, 0.0
      %v2981 = vmax.f32 %v2859, 0.0
      %v2982 = vmax.f32 %v2862, 0.0
      %v2983 = vmax.f32 %v2867, 0.0
      %v2984 = vmax.f32 %v2870, 0.0
      %v2985 = vmax.f32 %v2875, 0.0
      %v2986 = vmax.f32 %v2878, 0.0
      %v2987 = vmax.f32 %v2883, 0.0
      %v2988 = vmax.f32 %v2886, 0.0
      %v2989 = vmax.f32 %v2891, 0.0
      %v2990 = vmax.f32 %v2894, 0.0
      %v2991 = vmax.f32 %v2899, 0.0
      %v2992 = vmax.f32 %v2902, 0.0
      %v2993 = vmax.f32 %v2907, 0.0
      %v2994 = vmax.f32 %v2910, 0.0
      %v2995 = vmax.f32 %v2915, 0.0
      %v2996 = vmax.f32 %v2918, 0.0
      %v2997 = vmax.f32 %v2923, 0.0
      %v2998 = vmax.f32 %v2926, 0.0
      %v2999 = vmax.f32 %v2931, 0.0
      %v3000 = vmax.f32 %v2934, 0.0
      %v3001 = vpack.c.bf16 %v2938, %v2937
      %v3002 = vpack.c.bf16 %v2940, %v2939
      %v3003 = vpack.c.bf16 %v2942, %v2941
      %v3004 = vpack.c.bf16 %v2944, %v2943
      %v3005 = vpack.c.bf16 %v2946, %v2945
      %v3006 = vpack.c.bf16 %v2948, %v2947
      %v3007 = vpack.c.bf16 %v2950, %v2949
      %v3008 = vpack.c.bf16 %v2952, %v2951
      %v3009 = vpack.c.bf16 %v2954, %v2953
      %v3010 = vpack.c.bf16 %v2956, %v2955
      %v3011 = vpack.c.bf16 %v2958, %v2957
      %v3012 = vpack.c.bf16 %v2960, %v2959
      %v3013 = vpack.c.bf16 %v2962, %v2961
      %v3014 = vpack.c.bf16 %v2964, %v2963
      %v3015 = vpack.c.bf16 %v2966, %v2965
      %v3016 = vpack.c.bf16 %v2968, %v2967
      %v3017 = vpack.c.bf16 %v2970, %v2969
      %v3018 = vpack.c.bf16 %v2972, %v2971
      %v3019 = vpack.c.bf16 %v2974, %v2973
      %v3020 = vpack.c.bf16 %v2976, %v2975
      %v3021 = vpack.c.bf16 %v2978, %v2977
      %v3022 = vpack.c.bf16 %v2980, %v2979
      %v3023 = vpack.c.bf16 %v2982, %v2981
      %v3024 = vpack.c.bf16 %v2984, %v2983
      %v3025 = vpack.c.bf16 %v2986, %v2985
      %v3026 = vpack.c.bf16 %v2988, %v2987
      %v3027 = vpack.c.bf16 %v2990, %v2989
      %v3028 = vpack.c.bf16 %v2992, %v2991
      %v3029 = vpack.c.bf16 %v2994, %v2993
      %v3030 = vpack.c.bf16 %v2996, %v2995
      %v3031 = vpack.c.bf16 %v2998, %v2997
      %v3032 = vpack.c.bf16 %v3000, %v2999
      %s3033 = scalar_lea.vmem %s3, 96
      %v3034 = vld [vmem:[%s3033] sm:$0xf]
      %v3035 = vld [vmem:[%s3033 + $0x4] sm:$0xf]
      %v3036 = vld [vmem:[%s3033 + $0x8] sm:$0xf]
      %v3037 = vld [vmem:[%s3033 + $0xc] sm:$0xf]
      %v3038 = vld [vmem:[%s3033 + $0x10] sm:$0xf]
      %v3039 = vld [vmem:[%s3033 + $0x14] sm:$0xf]
      %v3040 = vld [vmem:[%s3033 + $0x18] sm:$0xf]
      %v3041 = vld [vmem:[%s3033 + $0x1c] sm:$0xf]
      %v3042 = vld [vmem:[%s4 + $0x3] sm:$0x1]
      %v3043 = vlaneseq
      %v3044 = vshrl.u32 %v3043, 7
      %v3045 = vsub.s32 0, %v3044
      %v3046 = vrot.slane %v3042, %v3045
      %v3055 = vunpack.c.l.b16 %v3034
      %v3056 = vunpack.c.l.b16 %v3035
      %v3057 = vunpack.c.l.b16 %v3036
      %v3058 = vunpack.c.l.b16 %v3037
      %v3059 = vunpack.c.l.b16 %v3038
      %v3060 = vunpack.c.l.b16 %v3039
      %v3061 = vunpack.c.l.b16 %v3040
      %v3062 = vunpack.c.l.b16 %v3041
      %v3063 = vpack.c.b16 %v3056, %v3055
      %v3064 = vpack.c.b16 %v3058, %v3057
      %v3065 = vpack.c.b16 %v3060, %v3059
      %v3066 = vpack.c.b16 %v3062, %v3061
      %v3072 = vsel %vm1385, %v3001, 0
      %v3075 = vsel %vm1385, %v3002, 0
      %v3078 = vsel %vm1385, %v3003, 0
      %v3081 = vsel %vm1385, %v3004, 0
      %v3084 = vsel %vm1385, %v3005, 0
      %v3087 = vsel %vm1385, %v3006, 0
      %v3090 = vsel %vm1385, %v3007, 0
      %v3093 = vsel %vm1385, %v3008, 0
      %v3096 = vsel %vm1385, %v3009, 0
      %v3099 = vsel %vm1385, %v3010, 0
      %v3102 = vsel %vm1385, %v3011, 0
      %v3105 = vsel %vm1385, %v3012, 0
      %v3108 = vsel %vm1385, %v3013, 0
      %v3111 = vsel %vm1385, %v3014, 0
      %v3114 = vsel %vm1385, %v3015, 0
      %v3117 = vsel %vm1385, %v3016, 0
      %v3120 = vsel %vm1385, %v3017, 0
      %v3123 = vsel %vm1385, %v3018, 0
      %v3126 = vsel %vm1385, %v3019, 0
      %v3129 = vsel %vm1385, %v3020, 0
      %v3132 = vsel %vm1385, %v3021, 0
      %v3135 = vsel %vm1385, %v3022, 0
      %v3138 = vsel %vm1385, %v3023, 0
      %v3141 = vsel %vm1385, %v3024, 0
      %v3144 = vsel %vm1385, %v3025, 0
      %v3147 = vsel %vm1385, %v3026, 0
      %v3150 = vsel %vm1385, %v3027, 0
      %v3153 = vsel %vm1385, %v3028, 0
      %v3156 = vsel %vm1385, %v3029, 0
      %v3159 = vsel %vm1385, %v3030, 0
      %v3162 = vsel %vm1385, %v3031, 0
      %v3165 = vsel %vm1385, %v3032, 0
      %3167 = vmatprep.subr.bf16.mxu0 0
      %3168 = vmatpush1.bf16.msra.mxu0 %v3063
      %3169 = vmatprep.subr.bf16.mxu0 0
      %3170 = vmatpush1.bf16.msra.mxu0 %v3064
      %3171 = vmatprep.subr.bf16.mxu0 0
      %3172 = vmatpush1.bf16.msra.mxu0 %v3065
      %3173 = vmatprep.subr.bf16.mxu0 0
      %3174 = vmatpush1.bf16.msra.mxu0 %v3066
      %3175 = vmatprep.subr.bf16.mxu0 0
      %3176 = vmatpush1.bf16.msra.mxu0 0
      %3177 = vmatprep.subr.bf16.mxu0 0
      %3178 = vmatpush1.bf16.msra.mxu0 0
      %3179 = vmatprep.subr.bf16.mxu0 0
      %3180 = vmatpush1.bf16.msra.mxu0 0
      %3181 = vmatprep.subr.bf16.mxu0 0
      %3182 = vmatpush1.bf16.msra.mxu0 0
      %3183 = vmatprep.subr.bf16.mxu0 0
      %3184 = vmatpush1.bf16.msra.mxu0 0
      %3185 = vmatprep.subr.bf16.mxu0 0
      %3186 = vmatpush1.bf16.msra.mxu0 0
      %3187 = vmatprep.subr.bf16.mxu0 0
      %3188 = vmatpush1.bf16.msra.mxu0 0
      %3189 = vmatprep.subr.bf16.mxu0 0
      %3190 = vmatpush1.bf16.msra.mxu0 0
      %3191 = vmatprep.subr.bf16.mxu0 0
      %3192 = vmatpush1.bf16.msra.mxu0 0
      %3193 = vmatprep.subr.bf16.mxu0 0
      %3194 = vmatpush1.bf16.msra.mxu0 0
      %3195 = vmatprep.subr.bf16.mxu0 0
      %3196 = vmatpush1.bf16.msra.mxu0 0
      %3197 = vmatprep.subr.bf16.mxu0 0
      %3198 = vmatpush1.bf16.msra.mxu0 0
      %3199 = vmatprep.mubr.bf16.mxu0 0
      %3200 = vmatmul.mubr.bf16.gmra.mrb[0].mxu0 %v3072
      %v3201 = vpop.f32.mrb[0].mxu0
      %v3202 = vadd.f32 %v3046, %v3201
      %v3203 = vpop.f32.mrb[0].mxu0
      %v3204 = vpop.f32.mrb[0].mxu0
      %v3205 = vadd.f32 %v3046, %v3204
      %v3206 = vpop.f32.mrb[0].mxu0
      %3207 = vmatprep.mubr.bf16.mxu0 0
      %3208 = vmatmul.mubr.bf16.gmra.mrb[0].mxu0 %v3075
      %v3209 = vpop.f32.mrb[0].mxu0
      %v3210 = vadd.f32 %v3046, %v3209
      %v3211 = vpop.f32.mrb[0].mxu0
      %v3212 = vpop.f32.mrb[0].mxu0
      %v3213 = vadd.f32 %v3046, %v3212
      %v3214 = vpop.f32.mrb[0].mxu0
      %3215 = vmatprep.mubr.bf16.mxu0 0
      %3216 = vmatmul.mubr.bf16.gmra.mrb[0].mxu0 %v3078
      %v3217 = vpop.f32.mrb[0].mxu0
      %v3218 = vadd.f32 %v3046, %v3217
      %v3219 = vpop.f32.mrb[0].mxu0
      %v3220 = vpop.f32.mrb[0].mxu0
      %v3221 = vadd.f32 %v3046, %v3220
      %v3222 = vpop.f32.mrb[0].mxu0
      %3223 = vmatprep.mubr.bf16.mxu0 0
      %3224 = vmatmul.mubr.bf16.gmra.mrb[0].mxu0 %v3081
      %v3225 = vpop.f32.mrb[0].mxu0
      %v3226 = vadd.f32 %v3046, %v3225
      %v3227 = vpop.f32.mrb[0].mxu0
      %v3228 = vpop.f32.mrb[0].mxu0
      %v3229 = vadd.f32 %v3046, %v3228
      %v3230 = vpop.f32.mrb[0].mxu0
      %3231 = vmatprep.mubr.bf16.mxu0 0
      %3232 = vmatmul.mubr.bf16.gmra.mrb[0].mxu0 %v3084
      %v3233 = vpop.f32.mrb[0].mxu0
      %v3234 = vadd.f32 %v3046, %v3233
      %v3235 = vpop.f32.mrb[0].mxu0
      %v3236 = vpop.f32.mrb[0].mxu0
      %v3237 = vadd.f32 %v3046, %v3236
      %v3238 = vpop.f32.mrb[0].mxu0
      %3239 = vmatprep.mubr.bf16.mxu0 0
      %3240 = vmatmul.mubr.bf16.gmra.mrb[0].mxu0 %v3087
      %v3241 = vpop.f32.mrb[0].mxu0
      %v3242 = vadd.f32 %v3046, %v3241
      %v3243 = vpop.f32.mrb[0].mxu0
      %v3244 = vpop.f32.mrb[0].mxu0
      %v3245 = vadd.f32 %v3046, %v3244
      %v3246 = vpop.f32.mrb[0].mxu0
      %3247 = vmatprep.mubr.bf16.mxu0 0
      %3248 = vmatmul.mubr.bf16.gmra.mrb[0].mxu0 %v3090
      %v3249 = vpop.f32.mrb[0].mxu0
      %v3250 = vadd.f32 %v3046, %v3249
      %v3251 = vpop.f32.mrb[0].mxu0
      %v3252 = vpop.f32.mrb[0].mxu0
      %v3253 = vadd.f32 %v3046, %v3252
      %v3254 = vpop.f32.mrb[0].mxu0
      %3255 = vmatprep.mubr.bf16.mxu0 0
      %3256 = vmatmul.mubr.bf16.gmra.mrb[0].mxu0 %v3093
      %v3257 = vpop.f32.mrb[0].mxu0
      %v3258 = vadd.f32 %v3046, %v3257
      %v3259 = vpop.f32.mrb[0].mxu0
      %v3260 = vpop.f32.mrb[0].mxu0
      %v3261 = vadd.f32 %v3046, %v3260
      %v3262 = vpop.f32.mrb[0].mxu0
      %3263 = vmatprep.mubr.bf16.mxu0 0
      %3264 = vmatmul.mubr.bf16.gmra.mrb[0].mxu0 %v3096
      %v3265 = vpop.f32.mrb[0].mxu0
      %v3266 = vadd.f32 %v3046, %v3265
      %v3267 = vpop.f32.mrb[0].mxu0
      %v3268 = vpop.f32.mrb[0].mxu0
      %v3269 = vadd.f32 %v3046, %v3268
      %v3270 = vpop.f32.mrb[0].mxu0
      %3271 = vmatprep.mubr.bf16.mxu0 0
      %3272 = vmatmul.mubr.bf16.gmra.mrb[0].mxu0 %v3099
      %v3273 = vpop.f32.mrb[0].mxu0
      %v3274 = vadd.f32 %v3046, %v3273
      %v3275 = vpop.f32.mrb[0].mxu0
      %v3276 = vpop.f32.mrb[0].mxu0
      %v3277 = vadd.f32 %v3046, %v3276
      %v3278 = vpop.f32.mrb[0].mxu0
      %3279 = vmatprep.mubr.bf16.mxu0 0
      %3280 = vmatmul.mubr.bf16.gmra.mrb[0].mxu0 %v3102
      %v3281 = vpop.f32.mrb[0].mxu0
      %v3282 = vadd.f32 %v3046, %v3281
      %v3283 = vpop.f32.mrb[0].mxu0
      %v3284 = vpop.f32.mrb[0].mxu0
      %v3285 = vadd.f32 %v3046, %v3284
      %v3286 = vpop.f32.mrb[0].mxu0
      %3287 = vmatprep.mubr.bf16.mxu0 0
      %3288 = vmatmul.mubr.bf16.gmra.mrb[0].mxu0 %v3105
      %v3289 = vpop.f32.mrb[0].mxu0
      %v3290 = vadd.f32 %v3046, %v3289
      %v3291 = vpop.f32.mrb[0].mxu0
      %v3292 = vpop.f32.mrb[0].mxu0
      %v3293 = vadd.f32 %v3046, %v3292
      %v3294 = vpop.f32.mrb[0].mxu0
      %3295 = vmatprep.mubr.bf16.mxu0 0
      %3296 = vmatmul.mubr.bf16.gmra.mrb[0].mxu0 %v3108
      %v3297 = vpop.f32.mrb[0].mxu0
      %v3298 = vadd.f32 %v3046, %v3297
      %v3299 = vpop.f32.mrb[0].mxu0
      %v3300 = vpop.f32.mrb[0].mxu0
      %v3301 = vadd.f32 %v3046, %v3300
      %v3302 = vpop.f32.mrb[0].mxu0
      %3303 = vmatprep.mubr.bf16.mxu0 0
      %3304 = vmatmul.mubr.bf16.gmra.mrb[0].mxu0 %v3111
      %v3305 = vpop.f32.mrb[0].mxu0
      %v3306 = vadd.f32 %v3046, %v3305
      %v3307 = vpop.f32.mrb[0].mxu0
      %v3308 = vpop.f32.mrb[0].mxu0
      %v3309 = vadd.f32 %v3046, %v3308
      %v3310 = vpop.f32.mrb[0].mxu0
      %3311 = vmatprep.mubr.bf16.mxu0 0
      %3312 = vmatmul.mubr.bf16.gmra.mrb[0].mxu0 %v3114
      %v3313 = vpop.f32.mrb[0].mxu0
      %v3314 = vadd.f32 %v3046, %v3313
      %v3315 = vpop.f32.mrb[0].mxu0
      %v3316 = vpop.f32.mrb[0].mxu0
      %v3317 = vadd.f32 %v3046, %v3316
      %v3318 = vpop.f32.mrb[0].mxu0
      %3319 = vmatprep.mubr.bf16.mxu0 0
      %3320 = vmatmul.mubr.bf16.gmra.mrb[0].mxu0 %v3117
      %v3321 = vpop.f32.mrb[0].mxu0
      %v3322 = vadd.f32 %v3046, %v3321
      %v3323 = vpop.f32.mrb[0].mxu0
      %v3324 = vpop.f32.mrb[0].mxu0
      %v3325 = vadd.f32 %v3046, %v3324
      %v3326 = vpop.f32.mrb[0].mxu0
      %3327 = vmatprep.mubr.bf16.mxu0 0
      %3328 = vmatmul.mubr.bf16.gmra.mrb[0].mxu0 %v3120
      %v3329 = vpop.f32.mrb[0].mxu0
      %v3330 = vadd.f32 %v3046, %v3329
      %v3331 = vpop.f32.mrb[0].mxu0
      %v3332 = vpop.f32.mrb[0].mxu0
      %v3333 = vadd.f32 %v3046, %v3332
      %v3334 = vpop.f32.mrb[0].mxu0
      %3335 = vmatprep.mubr.bf16.mxu0 0
      %3336 = vmatmul.mubr.bf16.gmra.mrb[0].mxu0 %v3123
      %v3337 = vpop.f32.mrb[0].mxu0
      %v3338 = vadd.f32 %v3046, %v3337
      %v3339 = vpop.f32.mrb[0].mxu0
      %v3340 = vpop.f32.mrb[0].mxu0
      %v3341 = vadd.f32 %v3046, %v3340
      %v3342 = vpop.f32.mrb[0].mxu0
      %3343 = vmatprep.mubr.bf16.mxu0 0
      %3344 = vmatmul.mubr.bf16.gmra.mrb[0].mxu0 %v3126
      %v3345 = vpop.f32.mrb[0].mxu0
      %v3346 = vadd.f32 %v3046, %v3345
      %v3347 = vpop.f32.mrb[0].mxu0
      %v3348 = vpop.f32.mrb[0].mxu0
      %v3349 = vadd.f32 %v3046, %v3348
      %v3350 = vpop.f32.mrb[0].mxu0
      %3351 = vmatprep.mubr.bf16.mxu0 0
      %3352 = vmatmul.mubr.bf16.gmra.mrb[0].mxu0 %v3129
      %v3353 = vpop.f32.mrb[0].mxu0
      %v3354 = vadd.f32 %v3046, %v3353
      %v3355 = vpop.f32.mrb[0].mxu0
      %v3356 = vpop.f32.mrb[0].mxu0
      %v3357 = vadd.f32 %v3046, %v3356
      %v3358 = vpop.f32.mrb[0].mxu0
      %3359 = vmatprep.mubr.bf16.mxu0 0
      %3360 = vmatmul.mubr.bf16.gmra.mrb[0].mxu0 %v3132
      %v3361 = vpop.f32.mrb[0].mxu0
      %v3362 = vadd.f32 %v3046, %v3361
      %v3363 = vpop.f32.mrb[0].mxu0
      %v3364 = vpop.f32.mrb[0].mxu0
      %v3365 = vadd.f32 %v3046, %v3364
      %v3366 = vpop.f32.mrb[0].mxu0
      %3367 = vmatprep.mubr.bf16.mxu0 0
      %3368 = vmatmul.mubr.bf16.gmra.mrb[0].mxu0 %v3135
      %v3369 = vpop.f32.mrb[0].mxu0
      %v3370 = vadd.f32 %v3046, %v3369
      %v3371 = vpop.f32.mrb[0].mxu0
      %v3372 = vpop.f32.mrb[0].mxu0
      %v3373 = vadd.f32 %v3046, %v3372
      %v3374 = vpop.f32.mrb[0].mxu0
      %3375 = vmatprep.mubr.bf16.mxu0 0
      %3376 = vmatmul.mubr.bf16.gmra.mrb[0].mxu0 %v3138
      %v3377 = vpop.f32.mrb[0].mxu0
      %v3378 = vadd.f32 %v3046, %v3377
      %v3379 = vpop.f32.mrb[0].mxu0
      %v3380 = vpop.f32.mrb[0].mxu0
      %v3381 = vadd.f32 %v3046, %v3380
      %v3382 = vpop.f32.mrb[0].mxu0
      %3383 = vmatprep.mubr.bf16.mxu0 0
      %3384 = vmatmul.mubr.bf16.gmra.mrb[0].mxu0 %v3141
      %v3385 = vpop.f32.mrb[0].mxu0
      %v3386 = vadd.f32 %v3046, %v3385
      %v3387 = vpop.f32.mrb[0].mxu0
      %v3388 = vpop.f32.mrb[0].mxu0
      %v3389 = vadd.f32 %v3046, %v3388
      %v3390 = vpop.f32.mrb[0].mxu0
      %3391 = vmatprep.mubr.bf16.mxu0 0
      %3392 = vmatmul.mubr.bf16.gmra.mrb[0].mxu0 %v3144
      %v3393 = vpop.f32.mrb[0].mxu0
      %v3394 = vadd.f32 %v3046, %v3393
      %v3395 = vpop.f32.mrb[0].mxu0
      %v3396 = vpop.f32.mrb[0].mxu0
      %v3397 = vadd.f32 %v3046, %v3396
      %v3398 = vpop.f32.mrb[0].mxu0
      %3399 = vmatprep.mubr.bf16.mxu0 0
      %3400 = vmatmul.mubr.bf16.gmra.mrb[0].mxu0 %v3147
      %v3401 = vpop.f32.mrb[0].mxu0
      %v3402 = vadd.f32 %v3046, %v3401
      %v3403 = vpop.f32.mrb[0].mxu0
      %v3404 = vpop.f32.mrb[0].mxu0
      %v3405 = vadd.f32 %v3046, %v3404
      %v3406 = vpop.f32.mrb[0].mxu0
      %3407 = vmatprep.mubr.bf16.mxu0 0
      %3408 = vmatmul.mubr.bf16.gmra.mrb[0].mxu0 %v3150
      %v3409 = vpop.f32.mrb[0].mxu0
      %v3410 = vadd.f32 %v3046, %v3409
      %v3411 = vpop.f32.mrb[0].mxu0
      %v3412 = vpop.f32.mrb[0].mxu0
      %v3413 = vadd.f32 %v3046, %v3412
      %v3414 = vpop.f32.mrb[0].mxu0
      %3415 = vmatprep.mubr.bf16.mxu0 0
      %3416 = vmatmul.mubr.bf16.gmra.mrb[0].mxu0 %v3153
      %v3417 = vpop.f32.mrb[0].mxu0
      %v3418 = vadd.f32 %v3046, %v3417
      %v3419 = vpop.f32.mrb[0].mxu0
      %v3420 = vpop.f32.mrb[0].mxu0
      %v3421 = vadd.f32 %v3046, %v3420
      %v3422 = vpop.f32.mrb[0].mxu0
      %3423 = vmatprep.mubr.bf16.mxu0 0
      %3424 = vmatmul.mubr.bf16.gmra.mrb[0].mxu0 %v3156
      %v3425 = vpop.f32.mrb[0].mxu0
      %v3426 = vadd.f32 %v3046, %v3425
      %v3427 = vpop.f32.mrb[0].mxu0
      %v3428 = vpop.f32.mrb[0].mxu0
      %v3429 = vadd.f32 %v3046, %v3428
      %v3430 = vpop.f32.mrb[0].mxu0
      %3431 = vmatprep.mubr.bf16.mxu0 0
      %3432 = vmatmul.mubr.bf16.gmra.mrb[0].mxu0 %v3159
      %v3433 = vpop.f32.mrb[0].mxu0
      %v3434 = vadd.f32 %v3046, %v3433
      %v3435 = vpop.f32.mrb[0].mxu0
      %v3436 = vpop.f32.mrb[0].mxu0
      %v3437 = vadd.f32 %v3046, %v3436
      %v3438 = vpop.f32.mrb[0].mxu0
      %3439 = vmatprep.mubr.bf16.mxu0 0
      %3440 = vmatmul.mubr.bf16.gmra.mrb[0].mxu0 %v3162
      %v3441 = vpop.f32.mrb[0].mxu0
      %v3442 = vadd.f32 %v3046, %v3441
      %v3443 = vpop.f32.mrb[0].mxu0
      %v3444 = vpop.f32.mrb[0].mxu0
      %v3445 = vadd.f32 %v3046, %v3444
      %v3446 = vpop.f32.mrb[0].mxu0
      %3447 = vmatprep.mubr.bf16.mxu0 0
      %3448 = vmatmul.mubr.bf16.gmra.mrb[0].mxu0 %v3165
      %v3449 = vpop.f32.mrb[0].mxu0
      %v3450 = vadd.f32 %v3046, %v3449
      %v3451 = vpop.f32.mrb[0].mxu0
      %v3452 = vpop.f32.mrb[0].mxu0
      %v3453 = vadd.f32 %v3046, %v3452
      %v3454 = vpop.f32.mrb[0].mxu0
      %3455 = vdwg.mxu0
      %v3456 = vadd.f32 %v2354, %v3202
      %v3457 = vadd.f32 %v2355, %v3205
      %v3458 = vadd.f32 %v2356, %v3210
      %v3459 = vadd.f32 %v2357, %v3213
      %v3460 = vadd.f32 %v2358, %v3218
      %v3461 = vadd.f32 %v2359, %v3221
      %v3462 = vadd.f32 %v2360, %v3226
      %v3463 = vadd.f32 %v2361, %v3229
      %v3464 = vadd.f32 %v2362, %v3234
      %v3465 = vadd.f32 %v2363, %v3237
      %v3466 = vadd.f32 %v2364, %v3242
      %v3467 = vadd.f32 %v2365, %v3245
      %v3468 = vadd.f32 %v2366, %v3250
      %v3469 = vadd.f32 %v2367, %v3253
      %v3470 = vadd.f32 %v2368, %v3258
      %v3471 = vadd.f32 %v2369, %v3261
      %v3472 = vadd.f32 %v2370, %v3266
      %v3473 = vadd.f32 %v2371, %v3269
      %v3474 = vadd.f32 %v2372, %v3274
      %v3475 = vadd.f32 %v2373, %v3277
      %v3476 = vadd.f32 %v2374, %v3282
      %v3477 = vadd.f32 %v2375, %v3285
      %v3478 = vadd.f32 %v2376, %v3290
      %v3479 = vadd.f32 %v2377, %v3293
      %v3480 = vadd.f32 %v2378, %v3298
      %v3481 = vadd.f32 %v2379, %v3301
      %v3482 = vadd.f32 %v2380, %v3306
      %v3483 = vadd.f32 %v2381, %v3309
      %v3484 = vadd.f32 %v2382, %v3314
      %v3485 = vadd.f32 %v2383, %v3317
      %v3486 = vadd.f32 %v2384, %v3322
      %v3487 = vadd.f32 %v2385, %v3325
      %v3488 = vadd.f32 %v2386, %v3330
      %v3489 = vadd.f32 %v2387, %v3333
      %v3490 = vadd.f32 %v2388, %v3338
      %v3491 = vadd.f32 %v2389, %v3341
      %v3492 = vadd.f32 %v2390, %v3346
      %v3493 = vadd.f32 %v2391, %v3349
      %v3494 = vadd.f32 %v2392, %v3354
      %v3495 = vadd.f32 %v2393, %v3357
      %v3496 = vadd.f32 %v2394, %v3362
      %v3497 = vadd.f32 %v2395, %v3365
      %v3498 = vadd.f32 %v2396, %v3370
      %v3499 = vadd.f32 %v2397, %v3373
      %v3500 = vadd.f32 %v2398, %v3378
      %v3501 = vadd.f32 %v2399, %v3381
      %v3502 = vadd.f32 %v2400, %v3386
      %v3503 = vadd.f32 %v2401, %v3389
      %v3504 = vadd.f32 %v2402, %v3394
      %v3505 = vadd.f32 %v2403, %v3397
      %v3506 = vadd.f32 %v2404, %v3402
      %v3507 = vadd.f32 %v2405, %v3405
      %v3508 = vadd.f32 %v2406, %v3410
      %v3509 = vadd.f32 %v2407, %v3413
      %v3510 = vadd.f32 %v2408, %v3418
      %v3511 = vadd.f32 %v2409, %v3421
      %v3512 = vadd.f32 %v2410, %v3426
      %v3513 = vadd.f32 %v2411, %v3429
      %v3514 = vadd.f32 %v2412, %v3434
      %v3515 = vadd.f32 %v2413, %v3437
      %v3516 = vadd.f32 %v2414, %v3442
      %v3517 = vadd.f32 %v2415, %v3445
      %v3518 = vadd.f32 %v2416, %v3450
      %v3519 = vadd.f32 %v2417, %v3453
      %v3520 = vadd.f32 %v3456, %v998
      %v3521 = vadd.f32 %v3457, %v1001
      %v3522 = vadd.f32 %v3458, %v1006
      %v3523 = vadd.f32 %v3459, %v1009
      %v3524 = vadd.f32 %v3460, %v1014
      %v3525 = vadd.f32 %v3461, %v1017
      %v3526 = vadd.f32 %v3462, %v1022
      %v3527 = vadd.f32 %v3463, %v1025
      %v3528 = vadd.f32 %v3464, %v1030
      %v3529 = vadd.f32 %v3465, %v1033
      %v3530 = vadd.f32 %v3466, %v1038
      %v3531 = vadd.f32 %v3467, %v1041
      %v3532 = vadd.f32 %v3468, %v1046
      %v3533 = vadd.f32 %v3469, %v1049
      %v3534 = vadd.f32 %v3470, %v1054
      %v3535 = vadd.f32 %v3471, %v1057
      %v3536 = vadd.f32 %v3472, %v1062
      %v3537 = vadd.f32 %v3473, %v1065
      %v3538 = vadd.f32 %v3474, %v1070
      %v3539 = vadd.f32 %v3475, %v1073
      %v3540 = vadd.f32 %v3476, %v1078
      %v3541 = vadd.f32 %v3477, %v1081
      %v3542 = vadd.f32 %v3478, %v1086
      %v3543 = vadd.f32 %v3479, %v1089
      %v3544 = vadd.f32 %v3480, %v1094
      %v3545 = vadd.f32 %v3481, %v1097
      %v3546 = vadd.f32 %v3482, %v1102
      %v3547 = vadd.f32 %v3483, %v1105
      %v3548 = vadd.f32 %v3484, %v1110
      %v3549 = vadd.f32 %v3485, %v1113
      %v3550 = vadd.f32 %v3486, %v1118
      %v3551 = vadd.f32 %v3487, %v1121
      %v3552 = vadd.f32 %v3488, %v1126
      %v3553 = vadd.f32 %v3489, %v1129
      %v3554 = vadd.f32 %v3490, %v1134
      %v3555 = vadd.f32 %v3491, %v1137
      %v3556 = vadd.f32 %v3492, %v1142
      %v3557 = vadd.f32 %v3493, %v1145
      %v3558 = vadd.f32 %v3494, %v1150
      %v3559 = vadd.f32 %v3495, %v1153
      %v3560 = vadd.f32 %v3496, %v1158
      %v3561 = vadd.f32 %v3497, %v1161
      %v3562 = vadd.f32 %v3498, %v1166
      %v3563 = vadd.f32 %v3499, %v1169
      %v3564 = vadd.f32 %v3500, %v1174
      %v3565 = vadd.f32 %v3501, %v1177
      %v3566 = vadd.f32 %v3502, %v1182
      %v3567 = vadd.f32 %v3503, %v1185
      %v3568 = vadd.f32 %v3504, %v1190
      %v3569 = vadd.f32 %v3505, %v1193
      %v3570 = vadd.f32 %v3506, %v1198
      %v3571 = vadd.f32 %v3507, %v1201
      %v3572 = vadd.f32 %v3508, %v1206
      %v3573 = vadd.f32 %v3509, %v1209
      %v3574 = vadd.f32 %v3510, %v1214
      %v3575 = vadd.f32 %v3511, %v1217
      %v3576 = vadd.f32 %v3512, %v1222
      %v3577 = vadd.f32 %v3513, %v1225
      %v3578 = vadd.f32 %v3514, %v1230
      %v3579 = vadd.f32 %v3515, %v1233
      %v3580 = vadd.f32 %v3516, %v1238
      %v3581 = vadd.f32 %v3517, %v1241
      %v3582 = vadd.f32 %v3518, %v1246
      %v3583 = vadd.f32 %v3519, %v1249
      %v3584 = vmax.f32 %v3520, 0.0
      %v3585 = vmax.f32 %v3521, 0.0
      %v3586 = vmax.f32 %v3522, 0.0
      %v3587 = vmax.f32 %v3523, 0.0
      %v3588 = vmax.f32 %v3524, 0.0
      %v3589 = vmax.f32 %v3525, 0.0
      %v3590 = vmax.f32 %v3526, 0.0
      %v3591 = vmax.f32 %v3527, 0.0
      %v3592 = vmax.f32 %v3528, 0.0
      %v3593 = vmax.f32 %v3529, 0.0
      %v3594 = vmax.f32 %v3530, 0.0
      %v3595 = vmax.f32 %v3531, 0.0
      %v3596 = vmax.f32 %v3532, 0.0
      %v3597 = vmax.f32 %v3533, 0.0
      %v3598 = vmax.f32 %v3534, 0.0
      %v3599 = vmax.f32 %v3535, 0.0
      %v3600 = vmax.f32 %v3536, 0.0
      %v3601 = vmax.f32 %v3537, 0.0
      %v3602 = vmax.f32 %v3538, 0.0
      %v3603 = vmax.f32 %v3539, 0.0
      %v3604 = vmax.f32 %v3540, 0.0
      %v3605 = vmax.f32 %v3541, 0.0
      %v3606 = vmax.f32 %v3542, 0.0
      %v3607 = vmax.f32 %v3543, 0.0
      %v3608 = vmax.f32 %v3544, 0.0
      %v3609 = vmax.f32 %v3545, 0.0
      %v3610 = vmax.f32 %v3546, 0.0
      %v3611 = vmax.f32 %v3547, 0.0
      %v3612 = vmax.f32 %v3548, 0.0
      %v3613 = vmax.f32 %v3549, 0.0
      %v3614 = vmax.f32 %v3550, 0.0
      %v3615 = vmax.f32 %v3551, 0.0
      %v3616 = vmax.f32 %v3552, 0.0
      %v3617 = vmax.f32 %v3553, 0.0
      %v3618 = vmax.f32 %v3554, 0.0
      %v3619 = vmax.f32 %v3555, 0.0
      %v3620 = vmax.f32 %v3556, 0.0
      %v3621 = vmax.f32 %v3557, 0.0
      %v3622 = vmax.f32 %v3558, 0.0
      %v3623 = vmax.f32 %v3559, 0.0
      %v3624 = vmax.f32 %v3560, 0.0
      %v3625 = vmax.f32 %v3561, 0.0
      %v3626 = vmax.f32 %v3562, 0.0
      %v3627 = vmax.f32 %v3563, 0.0
      %v3628 = vmax.f32 %v3564, 0.0
      %v3629 = vmax.f32 %v3565, 0.0
      %v3630 = vmax.f32 %v3566, 0.0
      %v3631 = vmax.f32 %v3567, 0.0
      %v3632 = vmax.f32 %v3568, 0.0
      %v3633 = vmax.f32 %v3569, 0.0
      %v3634 = vmax.f32 %v3570, 0.0
      %v3635 = vmax.f32 %v3571, 0.0
      %v3636 = vmax.f32 %v3572, 0.0
      %v3637 = vmax.f32 %v3573, 0.0
      %v3638 = vmax.f32 %v3574, 0.0
      %v3639 = vmax.f32 %v3575, 0.0
      %v3640 = vmax.f32 %v3576, 0.0
      %v3641 = vmax.f32 %v3577, 0.0
      %v3642 = vmax.f32 %v3578, 0.0
      %v3643 = vmax.f32 %v3579, 0.0
      %v3644 = vmax.f32 %v3580, 0.0
      %v3645 = vmax.f32 %v3581, 0.0
      %v3646 = vmax.f32 %v3582, 0.0
      %v3647 = vmax.f32 %v3583, 0.0
      %v3648 = vpack.c.bf16 %v3585, %v3584
      %v3649 = vpack.c.bf16 %v3587, %v3586
      %v3650 = vpack.c.bf16 %v3589, %v3588
      %v3651 = vpack.c.bf16 %v3591, %v3590
      %v3652 = vpack.c.bf16 %v3593, %v3592
      %v3653 = vpack.c.bf16 %v3595, %v3594
      %v3654 = vpack.c.bf16 %v3597, %v3596
      %v3655 = vpack.c.bf16 %v3599, %v3598
      %v3656 = vpack.c.bf16 %v3601, %v3600
      %v3657 = vpack.c.bf16 %v3603, %v3602
      %v3658 = vpack.c.bf16 %v3605, %v3604
      %v3659 = vpack.c.bf16 %v3607, %v3606
      %v3660 = vpack.c.bf16 %v3609, %v3608
      %v3661 = vpack.c.bf16 %v3611, %v3610
      %v3662 = vpack.c.bf16 %v3613, %v3612
      %v3663 = vpack.c.bf16 %v3615, %v3614
      %v3664 = vpack.c.bf16 %v3617, %v3616
      %v3665 = vpack.c.bf16 %v3619, %v3618
      %v3666 = vpack.c.bf16 %v3621, %v3620
      %v3667 = vpack.c.bf16 %v3623, %v3622
      %v3668 = vpack.c.bf16 %v3625, %v3624
      %v3669 = vpack.c.bf16 %v3627, %v3626
      %v3670 = vpack.c.bf16 %v3629, %v3628
      %v3671 = vpack.c.bf16 %v3631, %v3630
      %v3672 = vpack.c.bf16 %v3633, %v3632
      %v3673 = vpack.c.bf16 %v3635, %v3634
      %v3674 = vpack.c.bf16 %v3637, %v3636
      %v3675 = vpack.c.bf16 %v3639, %v3638
      %v3676 = vpack.c.bf16 %v3641, %v3640
      %v3677 = vpack.c.bf16 %v3643, %v3642
      %v3678 = vpack.c.bf16 %v3645, %v3644
      %v3679 = vpack.c.bf16 %v3647, %v3646
      %s3680 = scalar_lea.vmem %s3, 128
      %v3681 = vld [vmem:[%s3680] sm:$0xf]
      %v3682 = vld [vmem:[%s3680 + $0x4] sm:$0xf]
      %v3683 = vld [vmem:[%s3680 + $0x8] sm:$0xf]
      %v3684 = vld [vmem:[%s3680 + $0xc] sm:$0xf]
      %v3685 = vld [vmem:[%s3680 + $0x10] sm:$0xf]
      %v3686 = vld [vmem:[%s3680 + $0x14] sm:$0xf]
      %v3687 = vld [vmem:[%s3680 + $0x18] sm:$0xf]
      %v3688 = vld [vmem:[%s3680 + $0x1c] sm:$0xf]
      %v3689 = vld [vmem:[%s4 + $0x4] sm:$0x1]
      %v3690 = vlaneseq
      %v3691 = vshrl.u32 %v3690, 7
      %v3692 = vsub.s32 0, %v3691
      %v3693 = vrot.slane %v3689, %v3692
      %v3702 = vunpack.c.l.b16 %v3681
      %v3703 = vunpack.c.l.b16 %v3682
      %v3704 = vunpack.c.l.b16 %v3683
      %v3705 = vunpack.c.l.b16 %v3684
      %v3706 = vunpack.c.l.b16 %v3685
      %v3707 = vunpack.c.l.b16 %v3686
      %v3708 = vunpack.c.l.b16 %v3687
      %v3709 = vunpack.c.l.b16 %v3688
      %v3710 = vpack.c.b16 %v3703, %v3702
      %v3711 = vpack.c.b16 %v3705, %v3704
      %v3712 = vpack.c.b16 %v3707, %v3706
      %v3713 = vpack.c.b16 %v3709, %v3708
      %v3719 = vsel %vm1385, %v3648, 0
      %v3722 = vsel %vm1385, %v3649, 0
      %v3725 = vsel %vm1385, %v3650, 0
      %v3728 = vsel %vm1385, %v3651, 0
      %v3731 = vsel %vm1385, %v3652, 0
      %v3734 = vsel %vm1385, %v3653, 0
      %v3737 = vsel %vm1385, %v3654, 0
      %v3740 = vsel %vm1385, %v3655, 0
      %v3743 = vsel %vm1385, %v3656, 0
      %v3746 = vsel %vm1385, %v3657, 0
      %v3749 = vsel %vm1385, %v3658, 0
      %v3752 = vsel %vm1385, %v3659, 0
      %v3755 = vsel %vm1385, %v3660, 0
      %v3758 = vsel %vm1385, %v3661, 0
      %v3761 = vsel %vm1385, %v3662, 0
      %v3764 = vsel %vm1385, %v3663, 0
      %v3767 = vsel %vm1385, %v3664, 0
      %v3770 = vsel %vm1385, %v3665, 0
      %v3773 = vsel %vm1385, %v3666, 0
      %v3776 = vsel %vm1385, %v3667, 0
      %v3779 = vsel %vm1385, %v3668, 0
      %v3782 = vsel %vm1385, %v3669, 0
      %v3785 = vsel %vm1385, %v3670, 0
      %v3788 = vsel %vm1385, %v3671, 0
      %v3791 = vsel %vm1385, %v3672, 0
      %v3794 = vsel %vm1385, %v3673, 0
      %v3797 = vsel %vm1385, %v3674, 0
      %v3800 = vsel %vm1385, %v3675, 0
      %v3803 = vsel %vm1385, %v3676, 0
      %v3806 = vsel %vm1385, %v3677, 0
      %v3809 = vsel %vm1385, %v3678, 0
      %v3812 = vsel %vm1385, %v3679, 0
      %3814 = vmatprep.subr.bf16.mxu0 0
      %3815 = vmatpush1.bf16.msra.mxu0 %v3710
      %3816 = vmatprep.subr.bf16.mxu0 0
      %3817 = vmatpush1.bf16.msra.mxu0 %v3711
      %3818 = vmatprep.subr.bf16.mxu0 0
      %3819 = vmatpush1.bf16.msra.mxu0 %v3712
      %3820 = vmatprep.subr.bf16.mxu0 0
      %3821 = vmatpush1.bf16.msra.mxu0 %v3713
      %3822 = vmatprep.subr.bf16.mxu0 0
      %3823 = vmatpush1.bf16.msra.mxu0 0
      %3824 = vmatprep.subr.bf16.mxu0 0
      %3825 = vmatpush1.bf16.msra.mxu0 0
      %3826 = vmatprep.subr.bf16.mxu0 0
      %3827 = vmatpush1.bf16.msra.mxu0 0
      %3828 = vmatprep.subr.bf16.mxu0 0
      %3829 = vmatpush1.bf16.msra.mxu0 0
      %3830 = vmatprep.subr.bf16.mxu0 0
      %3831 = vmatpush1.bf16.msra.mxu0 0
      %3832 = vmatprep.subr.bf16.mxu0 0
      %3833 = vmatpush1.bf16.msra.mxu0 0
      %3834 = vmatprep.subr.bf16.mxu0 0
      %3835 = vmatpush1.bf16.msra.mxu0 0
      %3836 = vmatprep.subr.bf16.mxu0 0
      %3837 = vmatpush1.bf16.msra.mxu0 0
      %3838 = vmatprep.subr.bf16.mxu0 0
      %3839 = vmatpush1.bf16.msra.mxu0 0
      %3840 = vmatprep.subr.bf16.mxu0 0
      %3841 = vmatpush1.bf16.msra.mxu0 0
      %3842 = vmatprep.subr.bf16.mxu0 0
      %3843 = vmatpush1.bf16.msra.mxu0 0
      %3844 = vmatprep.subr.bf16.mxu0 0
      %3845 = vmatpush1.bf16.msra.mxu0 0
      %3846 = vmatprep.mubr.bf16.mxu0 0
      %3847 = vmatmul.mubr.bf16.gmra.mrb[0].mxu0 %v3719
      %v3848 = vpop.f32.mrb[0].mxu0
      %v3849 = vadd.f32 %v3693, %v3848
      %v3850 = vpop.f32.mrb[0].mxu0
      %v3851 = vpop.f32.mrb[0].mxu0
      %v3852 = vadd.f32 %v3693, %v3851
      %v3853 = vpop.f32.mrb[0].mxu0
      %3854 = vmatprep.mubr.bf16.mxu0 0
      %3855 = vmatmul.mubr.bf16.gmra.mrb[0].mxu0 %v3722
      %v3856 = vpop.f32.mrb[0].mxu0
      %v3857 = vadd.f32 %v3693, %v3856
      %v3858 = vpop.f32.mrb[0].mxu0
      %v3859 = vpop.f32.mrb[0].mxu0
      %v3860 = vadd.f32 %v3693, %v3859
      %v3861 = vpop.f32.mrb[0].mxu0
      %3862 = vmatprep.mubr.bf16.mxu0 0
      %3863 = vmatmul.mubr.bf16.gmra.mrb[0].mxu0 %v3725
      %v3864 = vpop.f32.mrb[0].mxu0
      %v3865 = vadd.f32 %v3693, %v3864
      %v3866 = vpop.f32.mrb[0].mxu0
      %v3867 = vpop.f32.mrb[0].mxu0
      %v3868 = vadd.f32 %v3693, %v3867
      %v3869 = vpop.f32.mrb[0].mxu0
      %3870 = vmatprep.mubr.bf16.mxu0 0
      %3871 = vmatmul.mubr.bf16.gmra.mrb[0].mxu0 %v3728
      %v3872 = vpop.f32.mrb[0].mxu0
      %v3873 = vadd.f32 %v3693, %v3872
      %v3874 = vpop.f32.mrb[0].mxu0
      %v3875 = vpop.f32.mrb[0].mxu0
      %v3876 = vadd.f32 %v3693, %v3875
      %v3877 = vpop.f32.mrb[0].mxu0
      %3878 = vmatprep.mubr.bf16.mxu0 0
      %3879 = vmatmul.mubr.bf16.gmra.mrb[0].mxu0 %v3731
      %v3880 = vpop.f32.mrb[0].mxu0
      %v3881 = vadd.f32 %v3693, %v3880
      %v3882 = vpop.f32.mrb[0].mxu0
      %v3883 = vpop.f32.mrb[0].mxu0
      %v3884 = vadd.f32 %v3693, %v3883
      %v3885 = vpop.f32.mrb[0].mxu0
      %3886 = vmatprep.mubr.bf16.mxu0 0
      %3887 = vmatmul.mubr.bf16.gmra.mrb[0].mxu0 %v3734
      %v3888 = vpop.f32.mrb[0].mxu0
      %v3889 = vadd.f32 %v3693, %v3888
      %v3890 = vpop.f32.mrb[0].mxu0
      %v3891 = vpop.f32.mrb[0].mxu0
      %v3892 = vadd.f32 %v3693, %v3891
      %v3893 = vpop.f32.mrb[0].mxu0
      %3894 = vmatprep.mubr.bf16.mxu0 0
      %3895 = vmatmul.mubr.bf16.gmra.mrb[0].mxu0 %v3737
      %v3896 = vpop.f32.mrb[0].mxu0
      %v3897 = vadd.f32 %v3693, %v3896
      %v3898 = vpop.f32.mrb[0].mxu0
      %v3899 = vpop.f32.mrb[0].mxu0
      %v3900 = vadd.f32 %v3693, %v3899
      %v3901 = vpop.f32.mrb[0].mxu0
      %3902 = vmatprep.mubr.bf16.mxu0 0
      %3903 = vmatmul.mubr.bf16.gmra.mrb[0].mxu0 %v3740
      %v3904 = vpop.f32.mrb[0].mxu0
      %v3905 = vadd.f32 %v3693, %v3904
      %v3906 = vpop.f32.mrb[0].mxu0
      %v3907 = vpop.f32.mrb[0].mxu0
      %v3908 = vadd.f32 %v3693, %v3907
      %v3909 = vpop.f32.mrb[0].mxu0
      %3910 = vmatprep.mubr.bf16.mxu0 0
      %3911 = vmatmul.mubr.bf16.gmra.mrb[0].mxu0 %v3743
      %v3912 = vpop.f32.mrb[0].mxu0
      %v3913 = vadd.f32 %v3693, %v3912
      %v3914 = vpop.f32.mrb[0].mxu0
      %v3915 = vpop.f32.mrb[0].mxu0
      %v3916 = vadd.f32 %v3693, %v3915
      %v3917 = vpop.f32.mrb[0].mxu0
      %3918 = vmatprep.mubr.bf16.mxu0 0
      %3919 = vmatmul.mubr.bf16.gmra.mrb[0].mxu0 %v3746
      %v3920 = vpop.f32.mrb[0].mxu0
      %v3921 = vadd.f32 %v3693, %v3920
      %v3922 = vpop.f32.mrb[0].mxu0
      %v3923 = vpop.f32.mrb[0].mxu0
      %v3924 = vadd.f32 %v3693, %v3923
      %v3925 = vpop.f32.mrb[0].mxu0
      %3926 = vmatprep.mubr.bf16.mxu0 0
      %3927 = vmatmul.mubr.bf16.gmra.mrb[0].mxu0 %v3749
      %v3928 = vpop.f32.mrb[0].mxu0
      %v3929 = vadd.f32 %v3693, %v3928
      %v3930 = vpop.f32.mrb[0].mxu0
      %v3931 = vpop.f32.mrb[0].mxu0
      %v3932 = vadd.f32 %v3693, %v3931
      %v3933 = vpop.f32.mrb[0].mxu0
      %3934 = vmatprep.mubr.bf16.mxu0 0
      %3935 = vmatmul.mubr.bf16.gmra.mrb[0].mxu0 %v3752
      %v3936 = vpop.f32.mrb[0].mxu0
      %v3937 = vadd.f32 %v3693, %v3936
      %v3938 = vpop.f32.mrb[0].mxu0
      %v3939 = vpop.f32.mrb[0].mxu0
      %v3940 = vadd.f32 %v3693, %v3939
      %v3941 = vpop.f32.mrb[0].mxu0
      %3942 = vmatprep.mubr.bf16.mxu0 0
      %3943 = vmatmul.mubr.bf16.gmra.mrb[0].mxu0 %v3755
      %v3944 = vpop.f32.mrb[0].mxu0
      %v3945 = vadd.f32 %v3693, %v3944
      %v3946 = vpop.f32.mrb[0].mxu0
      %v3947 = vpop.f32.mrb[0].mxu0
      %v3948 = vadd.f32 %v3693, %v3947
      %v3949 = vpop.f32.mrb[0].mxu0
      %3950 = vmatprep.mubr.bf16.mxu0 0
      %3951 = vmatmul.mubr.bf16.gmra.mrb[0].mxu0 %v3758
      %v3952 = vpop.f32.mrb[0].mxu0
      %v3953 = vadd.f32 %v3693, %v3952
      %v3954 = vpop.f32.mrb[0].mxu0
      %v3955 = vpop.f32.mrb[0].mxu0
      %v3956 = vadd.f32 %v3693, %v3955
      %v3957 = vpop.f32.mrb[0].mxu0
      %3958 = vmatprep.mubr.bf16.mxu0 0
      %3959 = vmatmul.mubr.bf16.gmra.mrb[0].mxu0 %v3761
      %v3960 = vpop.f32.mrb[0].mxu0
      %v3961 = vadd.f32 %v3693, %v3960
      %v3962 = vpop.f32.mrb[0].mxu0
      %v3963 = vpop.f32.mrb[0].mxu0
      %v3964 = vadd.f32 %v3693, %v3963
      %v3965 = vpop.f32.mrb[0].mxu0
      %3966 = vmatprep.mubr.bf16.mxu0 0
      %3967 = vmatmul.mubr.bf16.gmra.mrb[0].mxu0 %v3764
      %v3968 = vpop.f32.mrb[0].mxu0
      %v3969 = vadd.f32 %v3693, %v3968
      %v3970 = vpop.f32.mrb[0].mxu0
      %v3971 = vpop.f32.mrb[0].mxu0
      %v3972 = vadd.f32 %v3693, %v3971
      %v3973 = vpop.f32.mrb[0].mxu0
      %3974 = vmatprep.mubr.bf16.mxu0 0
      %3975 = vmatmul.mubr.bf16.gmra.mrb[0].mxu0 %v3767
      %v3976 = vpop.f32.mrb[0].mxu0
      %v3977 = vadd.f32 %v3693, %v3976
      %v3978 = vpop.f32.mrb[0].mxu0
      %v3979 = vpop.f32.mrb[0].mxu0
      %v3980 = vadd.f32 %v3693, %v3979
      %v3981 = vpop.f32.mrb[0].mxu0
      %3982 = vmatprep.mubr.bf16.mxu0 0
      %3983 = vmatmul.mubr.bf16.gmra.mrb[0].mxu0 %v3770
      %v3984 = vpop.f32.mrb[0].mxu0
      %v3985 = vadd.f32 %v3693, %v3984
      %v3986 = vpop.f32.mrb[0].mxu0
      %v3987 = vpop.f32.mrb[0].mxu0
      %v3988 = vadd.f32 %v3693, %v3987
      %v3989 = vpop.f32.mrb[0].mxu0
      %3990 = vmatprep.mubr.bf16.mxu0 0
      %3991 = vmatmul.mubr.bf16.gmra.mrb[0].mxu0 %v3773
      %v3992 = vpop.f32.mrb[0].mxu0
      %v3993 = vadd.f32 %v3693, %v3992
      %v3994 = vpop.f32.mrb[0].mxu0
      %v3995 = vpop.f32.mrb[0].mxu0
      %v3996 = vadd.f32 %v3693, %v3995
      %v3997 = vpop.f32.mrb[0].mxu0
      %3998 = vmatprep.mubr.bf16.mxu0 0
      %3999 = vmatmul.mubr.bf16.gmra.mrb[0].mxu0 %v3776
      %v4000 = vpop.f32.mrb[0].mxu0
      %v4001 = vadd.f32 %v3693, %v4000
      %v4002 = vpop.f32.mrb[0].mxu0
      %v4003 = vpop.f32.mrb[0].mxu0
      %v4004 = vadd.f32 %v3693, %v4003
      %v4005 = vpop.f32.mrb[0].mxu0
      %4006 = vmatprep.mubr.bf16.mxu0 0
      %4007 = vmatmul.mubr.bf16.gmra.mrb[0].mxu0 %v3779
      %v4008 = vpop.f32.mrb[0].mxu0
      %v4009 = vadd.f32 %v3693, %v4008
      %v4010 = vpop.f32.mrb[0].mxu0
      %v4011 = vpop.f32.mrb[0].mxu0
      %v4012 = vadd.f32 %v3693, %v4011
      %v4013 = vpop.f32.mrb[0].mxu0
      %4014 = vmatprep.mubr.bf16.mxu0 0
      %4015 = vmatmul.mubr.bf16.gmra.mrb[0].mxu0 %v3782
      %v4016 = vpop.f32.mrb[0].mxu0
      %v4017 = vadd.f32 %v3693, %v4016
      %v4018 = vpop.f32.mrb[0].mxu0
      %v4019 = vpop.f32.mrb[0].mxu0
      %v4020 = vadd.f32 %v3693, %v4019
      %v4021 = vpop.f32.mrb[0].mxu0
      %4022 = vmatprep.mubr.bf16.mxu0 0
      %4023 = vmatmul.mubr.bf16.gmra.mrb[0].mxu0 %v3785
      %v4024 = vpop.f32.mrb[0].mxu0
      %v4025 = vadd.f32 %v3693, %v4024
      %v4026 = vpop.f32.mrb[0].mxu0
      %v4027 = vpop.f32.mrb[0].mxu0
      %v4028 = vadd.f32 %v3693, %v4027
      %v4029 = vpop.f32.mrb[0].mxu0
      %4030 = vmatprep.mubr.bf16.mxu0 0
      %4031 = vmatmul.mubr.bf16.gmra.mrb[0].mxu0 %v3788
      %v4032 = vpop.f32.mrb[0].mxu0
      %v4033 = vadd.f32 %v3693, %v4032
      %v4034 = vpop.f32.mrb[0].mxu0
      %v4035 = vpop.f32.mrb[0].mxu0
      %v4036 = vadd.f32 %v3693, %v4035
      %v4037 = vpop.f32.mrb[0].mxu0
      %4038 = vmatprep.mubr.bf16.mxu0 0
      %4039 = vmatmul.mubr.bf16.gmra.mrb[0].mxu0 %v3791
      %v4040 = vpop.f32.mrb[0].mxu0
      %v4041 = vadd.f32 %v3693, %v4040
      %v4042 = vpop.f32.mrb[0].mxu0
      %v4043 = vpop.f32.mrb[0].mxu0
      %v4044 = vadd.f32 %v3693, %v4043
      %v4045 = vpop.f32.mrb[0].mxu0
      %4046 = vmatprep.mubr.bf16.mxu0 0
      %4047 = vmatmul.mubr.bf16.gmra.mrb[0].mxu0 %v3794
      %v4048 = vpop.f32.mrb[0].mxu0
      %v4049 = vadd.f32 %v3693, %v4048
      %v4050 = vpop.f32.mrb[0].mxu0
      %v4051 = vpop.f32.mrb[0].mxu0
      %v4052 = vadd.f32 %v3693, %v4051
      %v4053 = vpop.f32.mrb[0].mxu0
      %4054 = vmatprep.mubr.bf16.mxu0 0
      %4055 = vmatmul.mubr.bf16.gmra.mrb[0].mxu0 %v3797
      %v4056 = vpop.f32.mrb[0].mxu0
      %v4057 = vadd.f32 %v3693, %v4056
      %v4058 = vpop.f32.mrb[0].mxu0
      %v4059 = vpop.f32.mrb[0].mxu0
      %v4060 = vadd.f32 %v3693, %v4059
      %v4061 = vpop.f32.mrb[0].mxu0
      %4062 = vmatprep.mubr.bf16.mxu0 0
      %4063 = vmatmul.mubr.bf16.gmra.mrb[0].mxu0 %v3800
      %v4064 = vpop.f32.mrb[0].mxu0
      %v4065 = vadd.f32 %v3693, %v4064
      %v4066 = vpop.f32.mrb[0].mxu0
      %v4067 = vpop.f32.mrb[0].mxu0
      %v4068 = vadd.f32 %v3693, %v4067
      %v4069 = vpop.f32.mrb[0].mxu0
      %4070 = vmatprep.mubr.bf16.mxu0 0
      %4071 = vmatmul.mubr.bf16.gmra.mrb[0].mxu0 %v3803
      %v4072 = vpop.f32.mrb[0].mxu0
      %v4073 = vadd.f32 %v3693, %v4072
      %v4074 = vpop.f32.mrb[0].mxu0
      %v4075 = vpop.f32.mrb[0].mxu0
      %v4076 = vadd.f32 %v3693, %v4075
      %v4077 = vpop.f32.mrb[0].mxu0
      %4078 = vmatprep.mubr.bf16.mxu0 0
      %4079 = vmatmul.mubr.bf16.gmra.mrb[0].mxu0 %v3806
      %v4080 = vpop.f32.mrb[0].mxu0
      %v4081 = vadd.f32 %v3693, %v4080
      %v4082 = vpop.f32.mrb[0].mxu0
      %v4083 = vpop.f32.mrb[0].mxu0
      %v4084 = vadd.f32 %v3693, %v4083
      %v4085 = vpop.f32.mrb[0].mxu0
      %4086 = vmatprep.mubr.bf16.mxu0 0
      %4087 = vmatmul.mubr.bf16.gmra.mrb[0].mxu0 %v3809
      %v4088 = vpop.f32.mrb[0].mxu0
      %v4089 = vadd.f32 %v3693, %v4088
      %v4090 = vpop.f32.mrb[0].mxu0
      %v4091 = vpop.f32.mrb[0].mxu0
      %v4092 = vadd.f32 %v3693, %v4091
      %v4093 = vpop.f32.mrb[0].mxu0
      %4094 = vmatprep.mubr.bf16.mxu0 0
      %4095 = vmatmul.mubr.bf16.gmra.mrb[0].mxu0 %v3812
      %v4096 = vpop.f32.mrb[0].mxu0
      %v4097 = vadd.f32 %v3693, %v4096
      %v4098 = vpop.f32.mrb[0].mxu0
      %v4099 = vpop.f32.mrb[0].mxu0
      %v4100 = vadd.f32 %v3693, %v4099
      %v4101 = vpop.f32.mrb[0].mxu0
      %4102 = vdwg.mxu0
      %v4103 = vmax.f32 %v3849, 0.0
      %v4104 = vmax.f32 %v3852, 0.0
      %v4105 = vmax.f32 %v3857, 0.0
      %v4106 = vmax.f32 %v3860, 0.0
      %v4107 = vmax.f32 %v3865, 0.0
      %v4108 = vmax.f32 %v3868, 0.0
      %v4109 = vmax.f32 %v3873, 0.0
      %v4110 = vmax.f32 %v3876, 0.0
      %v4111 = vmax.f32 %v3881, 0.0
      %v4112 = vmax.f32 %v3884, 0.0
      %v4113 = vmax.f32 %v3889, 0.0
      %v4114 = vmax.f32 %v3892, 0.0
      %v4115 = vmax.f32 %v3897, 0.0
      %v4116 = vmax.f32 %v3900, 0.0
      %v4117 = vmax.f32 %v3905, 0.0
      %v4118 = vmax.f32 %v3908, 0.0
      %v4119 = vmax.f32 %v3913, 0.0
      %v4120 = vmax.f32 %v3916, 0.0
      %v4121 = vmax.f32 %v3921, 0.0
      %v4122 = vmax.f32 %v3924, 0.0
      %v4123 = vmax.f32 %v3929, 0.0
      %v4124 = vmax.f32 %v3932, 0.0
      %v4125 = vmax.f32 %v3937, 0.0
      %v4126 = vmax.f32 %v3940, 0.0
      %v4127 = vmax.f32 %v3945, 0.0
      %v4128 = vmax.f32 %v3948, 0.0
      %v4129 = vmax.f32 %v3953, 0.0
      %v4130 = vmax.f32 %v3956, 0.0
      %v4131 = vmax.f32 %v3961, 0.0
      %v4132 = vmax.f32 %v3964, 0.0
      %v4133 = vmax.f32 %v3969, 0.0
      %v4134 = vmax.f32 %v3972, 0.0
      %v4135 = vmax.f32 %v3977, 0.0
      %v4136 = vmax.f32 %v3980, 0.0
      %v4137 = vmax.f32 %v3985, 0.0
      %v4138 = vmax.f32 %v3988, 0.0
      %v4139 = vmax.f32 %v3993, 0.0
      %v4140 = vmax.f32 %v3996, 0.0
      %v4141 = vmax.f32 %v4001, 0.0
      %v4142 = vmax.f32 %v4004, 0.0
      %v4143 = vmax.f32 %v4009, 0.0
      %v4144 = vmax.f32 %v4012, 0.0
      %v4145 = vmax.f32 %v4017, 0.0
      %v4146 = vmax.f32 %v4020, 0.0
      %v4147 = vmax.f32 %v4025, 0.0
      %v4148 = vmax.f32 %v4028, 0.0
      %v4149 = vmax.f32 %v4033, 0.0
      %v4150 = vmax.f32 %v4036, 0.0
      %v4151 = vmax.f32 %v4041, 0.0
      %v4152 = vmax.f32 %v4044, 0.0
      %v4153 = vmax.f32 %v4049, 0.0
      %v4154 = vmax.f32 %v4052, 0.0
      %v4155 = vmax.f32 %v4057, 0.0
      %v4156 = vmax.f32 %v4060, 0.0
      %v4157 = vmax.f32 %v4065, 0.0
      %v4158 = vmax.f32 %v4068, 0.0
      %v4159 = vmax.f32 %v4073, 0.0
      %v4160 = vmax.f32 %v4076, 0.0
      %v4161 = vmax.f32 %v4081, 0.0
      %v4162 = vmax.f32 %v4084, 0.0
      %v4163 = vmax.f32 %v4089, 0.0
      %v4164 = vmax.f32 %v4092, 0.0
      %v4165 = vmax.f32 %v4097, 0.0
      %v4166 = vmax.f32 %v4100, 0.0
      %v4167 = vpack.c.bf16 %v4104, %v4103
      %v4168 = vpack.c.bf16 %v4106, %v4105
      %v4169 = vpack.c.bf16 %v4108, %v4107
      %v4170 = vpack.c.bf16 %v4110, %v4109
      %v4171 = vpack.c.bf16 %v4112, %v4111
      %v4172 = vpack.c.bf16 %v4114, %v4113
      %v4173 = vpack.c.bf16 %v4116, %v4115
      %v4174 = vpack.c.bf16 %v4118, %v4117
      %v4175 = vpack.c.bf16 %v4120, %v4119
      %v4176 = vpack.c.bf16 %v4122, %v4121
      %v4177 = vpack.c.bf16 %v4124, %v4123
      %v4178 = vpack.c.bf16 %v4126, %v4125
      %v4179 = vpack.c.bf16 %v4128, %v4127
      %v4180 = vpack.c.bf16 %v4130, %v4129
      %v4181 = vpack.c.bf16 %v4132, %v4131
      %v4182 = vpack.c.bf16 %v4134, %v4133
      %v4183 = vpack.c.bf16 %v4136, %v4135
      %v4184 = vpack.c.bf16 %v4138, %v4137
      %v4185 = vpack.c.bf16 %v4140, %v4139
      %v4186 = vpack.c.bf16 %v4142, %v4141
      %v4187 = vpack.c.bf16 %v4144, %v4143
      %v4188 = vpack.c.bf16 %v4146, %v4145
      %v4189 = vpack.c.bf16 %v4148, %v4147
      %v4190 = vpack.c.bf16 %v4150, %v4149
      %v4191 = vpack.c.bf16 %v4152, %v4151
      %v4192 = vpack.c.bf16 %v4154, %v4153
      %v4193 = vpack.c.bf16 %v4156, %v4155
      %v4194 = vpack.c.bf16 %v4158, %v4157
      %v4195 = vpack.c.bf16 %v4160, %v4159
      %v4196 = vpack.c.bf16 %v4162, %v4161
      %v4197 = vpack.c.bf16 %v4164, %v4163
      %v4198 = vpack.c.bf16 %v4166, %v4165
      %s4199 = scalar_lea.vmem %s3, 160
      %v4200 = vld [vmem:[%s4199] sm:$0xf]
      %v4201 = vld [vmem:[%s4199 + $0x4] sm:$0xf]
      %v4202 = vld [vmem:[%s4199 + $0x8] sm:$0xf]
      %v4203 = vld [vmem:[%s4199 + $0xc] sm:$0xf]
      %v4204 = vld [vmem:[%s4199 + $0x10] sm:$0xf]
      %v4205 = vld [vmem:[%s4199 + $0x14] sm:$0xf]
      %v4206 = vld [vmem:[%s4199 + $0x18] sm:$0xf]
      %v4207 = vld [vmem:[%s4199 + $0x1c] sm:$0xf]
      %v4208 = vld [vmem:[%s4 + $0x5] sm:$0x1]
      %v4209 = vlaneseq
      %v4210 = vshrl.u32 %v4209, 7
      %v4211 = vsub.s32 0, %v4210
      %v4212 = vrot.slane %v4208, %v4211
      %v4221 = vunpack.c.l.b16 %v4200
      %v4222 = vunpack.c.l.b16 %v4201
      %v4223 = vunpack.c.l.b16 %v4202
      %v4224 = vunpack.c.l.b16 %v4203
      %v4225 = vunpack.c.l.b16 %v4204
      %v4226 = vunpack.c.l.b16 %v4205
      %v4227 = vunpack.c.l.b16 %v4206
      %v4228 = vunpack.c.l.b16 %v4207
      %v4229 = vpack.c.b16 %v4222, %v4221
      %v4230 = vpack.c.b16 %v4224, %v4223
      %v4231 = vpack.c.b16 %v4226, %v4225
      %v4232 = vpack.c.b16 %v4228, %v4227
      %v4238 = vsel %vm1385, %v4167, 0
      %v4241 = vsel %vm1385, %v4168, 0
      %v4244 = vsel %vm1385, %v4169, 0
      %v4247 = vsel %vm1385, %v4170, 0
      %v4250 = vsel %vm1385, %v4171, 0
      %v4253 = vsel %vm1385, %v4172, 0
      %v4256 = vsel %vm1385, %v4173, 0
      %v4259 = vsel %vm1385, %v4174, 0
      %v4262 = vsel %vm1385, %v4175, 0
      %v4265 = vsel %vm1385, %v4176, 0
      %v4268 = vsel %vm1385, %v4177, 0
      %v4271 = vsel %vm1385, %v4178, 0
      %v4274 = vsel %vm1385, %v4179, 0
      %v4277 = vsel %vm1385, %v4180, 0
      %v4280 = vsel %vm1385, %v4181, 0
      %v4283 = vsel %vm1385, %v4182, 0
      %v4286 = vsel %vm1385, %v4183, 0
      %v4289 = vsel %vm1385, %v4184, 0
      %v4292 = vsel %vm1385, %v4185, 0
      %v4295 = vsel %vm1385, %v4186, 0
      %v4298 = vsel %vm1385, %v4187, 0
      %v4301 = vsel %vm1385, %v4188, 0
      %v4304 = vsel %vm1385, %v4189, 0
      %v4307 = vsel %vm1385, %v4190, 0
      %v4310 = vsel %vm1385, %v4191, 0
      %v4313 = vsel %vm1385, %v4192, 0
      %v4316 = vsel %vm1385, %v4193, 0
      %v4319 = vsel %vm1385, %v4194, 0
      %v4322 = vsel %vm1385, %v4195, 0
      %v4325 = vsel %vm1385, %v4196, 0
      %v4328 = vsel %vm1385, %v4197, 0
      %v4331 = vsel %vm1385, %v4198, 0
      %4333 = vmatprep.subr.bf16.mxu0 0
      %4334 = vmatpush1.bf16.msra.mxu0 %v4229
      %4335 = vmatprep.subr.bf16.mxu0 0
      %4336 = vmatpush1.bf16.msra.mxu0 %v4230
      %4337 = vmatprep.subr.bf16.mxu0 0
      %4338 = vmatpush1.bf16.msra.mxu0 %v4231
      %4339 = vmatprep.subr.bf16.mxu0 0
      %4340 = vmatpush1.bf16.msra.mxu0 %v4232
      %4341 = vmatprep.subr.bf16.mxu0 0
      %4342 = vmatpush1.bf16.msra.mxu0 0
      %4343 = vmatprep.subr.bf16.mxu0 0
      %4344 = vmatpush1.bf16.msra.mxu0 0
      %4345 = vmatprep.subr.bf16.mxu0 0
      %4346 = vmatpush1.bf16.msra.mxu0 0
      %4347 = vmatprep.subr.bf16.mxu0 0
      %4348 = vmatpush1.bf16.msra.mxu0 0
      %4349 = vmatprep.subr.bf16.mxu0 0
      %4350 = vmatpush1.bf16.msra.mxu0 0
      %4351 = vmatprep.subr.bf16.mxu0 0
      %4352 = vmatpush1.bf16.msra.mxu0 0
      %4353 = vmatprep.subr.bf16.mxu0 0
      %4354 = vmatpush1.bf16.msra.mxu0 0
      %4355 = vmatprep.subr.bf16.mxu0 0
      %4356 = vmatpush1.bf16.msra.mxu0 0
      %4357 = vmatprep.subr.bf16.mxu0 0
      %4358 = vmatpush1.bf16.msra.mxu0 0
      %4359 = vmatprep.subr.bf16.mxu0 0
      %4360 = vmatpush1.bf16.msra.mxu0 0
      %4361 = vmatprep.subr.bf16.mxu0 0
      %4362 = vmatpush1.bf16.msra.mxu0 0
      %4363 = vmatprep.subr.bf16.mxu0 0
      %4364 = vmatpush1.bf16.msra.mxu0 0
      %4365 = vmatprep.mubr.bf16.mxu0 0
      %4366 = vmatmul.mubr.bf16.gmra.mrb[0].mxu0 %v4238
      %v4367 = vpop.f32.mrb[0].mxu0
      %v4368 = vadd.f32 %v4212, %v4367
      %v4369 = vpop.f32.mrb[0].mxu0
      %v4370 = vpop.f32.mrb[0].mxu0
      %v4371 = vadd.f32 %v4212, %v4370
      %v4372 = vpop.f32.mrb[0].mxu0
      %4373 = vmatprep.mubr.bf16.mxu0 0
      %4374 = vmatmul.mubr.bf16.gmra.mrb[0].mxu0 %v4241
      %v4375 = vpop.f32.mrb[0].mxu0
      %v4376 = vadd.f32 %v4212, %v4375
      %v4377 = vpop.f32.mrb[0].mxu0
      %v4378 = vpop.f32.mrb[0].mxu0
      %v4379 = vadd.f32 %v4212, %v4378
      %v4380 = vpop.f32.mrb[0].mxu0
      %4381 = vmatprep.mubr.bf16.mxu0 0
      %4382 = vmatmul.mubr.bf16.gmra.mrb[0].mxu0 %v4244
      %v4383 = vpop.f32.mrb[0].mxu0
      %v4384 = vadd.f32 %v4212, %v4383
      %v4385 = vpop.f32.mrb[0].mxu0
      %v4386 = vpop.f32.mrb[0].mxu0
      %v4387 = vadd.f32 %v4212, %v4386
      %v4388 = vpop.f32.mrb[0].mxu0
      %4389 = vmatprep.mubr.bf16.mxu0 0
      %4390 = vmatmul.mubr.bf16.gmra.mrb[0].mxu0 %v4247
      %v4391 = vpop.f32.mrb[0].mxu0
      %v4392 = vadd.f32 %v4212, %v4391
      %v4393 = vpop.f32.mrb[0].mxu0
      %v4394 = vpop.f32.mrb[0].mxu0
      %v4395 = vadd.f32 %v4212, %v4394
      %v4396 = vpop.f32.mrb[0].mxu0
      %4397 = vmatprep.mubr.bf16.mxu0 0
      %4398 = vmatmul.mubr.bf16.gmra.mrb[0].mxu0 %v4250
      %v4399 = vpop.f32.mrb[0].mxu0
      %v4400 = vadd.f32 %v4212, %v4399
      %v4401 = vpop.f32.mrb[0].mxu0
      %v4402 = vpop.f32.mrb[0].mxu0
      %v4403 = vadd.f32 %v4212, %v4402
      %v4404 = vpop.f32.mrb[0].mxu0
      %4405 = vmatprep.mubr.bf16.mxu0 0
      %4406 = vmatmul.mubr.bf16.gmra.mrb[0].mxu0 %v4253
      %v4407 = vpop.f32.mrb[0].mxu0
      %v4408 = vadd.f32 %v4212, %v4407
      %v4409 = vpop.f32.mrb[0].mxu0
      %v4410 = vpop.f32.mrb[0].mxu0
      %v4411 = vadd.f32 %v4212, %v4410
      %v4412 = vpop.f32.mrb[0].mxu0
      %4413 = vmatprep.mubr.bf16.mxu0 0
      %4414 = vmatmul.mubr.bf16.gmra.mrb[0].mxu0 %v4256
      %v4415 = vpop.f32.mrb[0].mxu0
      %v4416 = vadd.f32 %v4212, %v4415
      %v4417 = vpop.f32.mrb[0].mxu0
      %v4418 = vpop.f32.mrb[0].mxu0
      %v4419 = vadd.f32 %v4212, %v4418
      %v4420 = vpop.f32.mrb[0].mxu0
      %4421 = vmatprep.mubr.bf16.mxu0 0
      %4422 = vmatmul.mubr.bf16.gmra.mrb[0].mxu0 %v4259
      %v4423 = vpop.f32.mrb[0].mxu0
      %v4424 = vadd.f32 %v4212, %v4423
      %v4425 = vpop.f32.mrb[0].mxu0
      %v4426 = vpop.f32.mrb[0].mxu0
      %v4427 = vadd.f32 %v4212, %v4426
      %v4428 = vpop.f32.mrb[0].mxu0
      %4429 = vmatprep.mubr.bf16.mxu0 0
      %4430 = vmatmul.mubr.bf16.gmra.mrb[0].mxu0 %v4262
      %v4431 = vpop.f32.mrb[0].mxu0
      %v4432 = vadd.f32 %v4212, %v4431
      %v4433 = vpop.f32.mrb[0].mxu0
      %v4434 = vpop.f32.mrb[0].mxu0
      %v4435 = vadd.f32 %v4212, %v4434
      %v4436 = vpop.f32.mrb[0].mxu0
      %4437 = vmatprep.mubr.bf16.mxu0 0
      %4438 = vmatmul.mubr.bf16.gmra.mrb[0].mxu0 %v4265
      %v4439 = vpop.f32.mrb[0].mxu0
      %v4440 = vadd.f32 %v4212, %v4439
      %v4441 = vpop.f32.mrb[0].mxu0
      %v4442 = vpop.f32.mrb[0].mxu0
      %v4443 = vadd.f32 %v4212, %v4442
      %v4444 = vpop.f32.mrb[0].mxu0
      %4445 = vmatprep.mubr.bf16.mxu0 0
      %4446 = vmatmul.mubr.bf16.gmra.mrb[0].mxu0 %v4268
      %v4447 = vpop.f32.mrb[0].mxu0
      %v4448 = vadd.f32 %v4212, %v4447
      %v4449 = vpop.f32.mrb[0].mxu0
      %v4450 = vpop.f32.mrb[0].mxu0
      %v4451 = vadd.f32 %v4212, %v4450
      %v4452 = vpop.f32.mrb[0].mxu0
      %4453 = vmatprep.mubr.bf16.mxu0 0
      %4454 = vmatmul.mubr.bf16.gmra.mrb[0].mxu0 %v4271
      %v4455 = vpop.f32.mrb[0].mxu0
      %v4456 = vadd.f32 %v4212, %v4455
      %v4457 = vpop.f32.mrb[0].mxu0
      %v4458 = vpop.f32.mrb[0].mxu0
      %v4459 = vadd.f32 %v4212, %v4458
      %v4460 = vpop.f32.mrb[0].mxu0
      %4461 = vmatprep.mubr.bf16.mxu0 0
      %4462 = vmatmul.mubr.bf16.gmra.mrb[0].mxu0 %v4274
      %v4463 = vpop.f32.mrb[0].mxu0
      %v4464 = vadd.f32 %v4212, %v4463
      %v4465 = vpop.f32.mrb[0].mxu0
      %v4466 = vpop.f32.mrb[0].mxu0
      %v4467 = vadd.f32 %v4212, %v4466
      %v4468 = vpop.f32.mrb[0].mxu0
      %4469 = vmatprep.mubr.bf16.mxu0 0
      %4470 = vmatmul.mubr.bf16.gmra.mrb[0].mxu0 %v4277
      %v4471 = vpop.f32.mrb[0].mxu0
      %v4472 = vadd.f32 %v4212, %v4471
      %v4473 = vpop.f32.mrb[0].mxu0
      %v4474 = vpop.f32.mrb[0].mxu0
      %v4475 = vadd.f32 %v4212, %v4474
      %v4476 = vpop.f32.mrb[0].mxu0
      %4477 = vmatprep.mubr.bf16.mxu0 0
      %4478 = vmatmul.mubr.bf16.gmra.mrb[0].mxu0 %v4280
      %v4479 = vpop.f32.mrb[0].mxu0
      %v4480 = vadd.f32 %v4212, %v4479
      %v4481 = vpop.f32.mrb[0].mxu0
      %v4482 = vpop.f32.mrb[0].mxu0
      %v4483 = vadd.f32 %v4212, %v4482
      %v4484 = vpop.f32.mrb[0].mxu0
      %4485 = vmatprep.mubr.bf16.mxu0 0
      %4486 = vmatmul.mubr.bf16.gmra.mrb[0].mxu0 %v4283
      %v4487 = vpop.f32.mrb[0].mxu0
      %v4488 = vadd.f32 %v4212, %v4487
      %v4489 = vpop.f32.mrb[0].mxu0
      %v4490 = vpop.f32.mrb[0].mxu0
      %v4491 = vadd.f32 %v4212, %v4490
      %v4492 = vpop.f32.mrb[0].mxu0
      %4493 = vmatprep.mubr.bf16.mxu0 0
      %4494 = vmatmul.mubr.bf16.gmra.mrb[0].mxu0 %v4286
      %v4495 = vpop.f32.mrb[0].mxu0
      %v4496 = vadd.f32 %v4212, %v4495
      %v4497 = vpop.f32.mrb[0].mxu0
      %v4498 = vpop.f32.mrb[0].mxu0
      %v4499 = vadd.f32 %v4212, %v4498
      %v4500 = vpop.f32.mrb[0].mxu0
      %4501 = vmatprep.mubr.bf16.mxu0 0
      %4502 = vmatmul.mubr.bf16.gmra.mrb[0].mxu0 %v4289
      %v4503 = vpop.f32.mrb[0].mxu0
      %v4504 = vadd.f32 %v4212, %v4503
      %v4505 = vpop.f32.mrb[0].mxu0
      %v4506 = vpop.f32.mrb[0].mxu0
      %v4507 = vadd.f32 %v4212, %v4506
      %v4508 = vpop.f32.mrb[0].mxu0
      %4509 = vmatprep.mubr.bf16.mxu0 0
      %4510 = vmatmul.mubr.bf16.gmra.mrb[0].mxu0 %v4292
      %v4511 = vpop.f32.mrb[0].mxu0
      %v4512 = vadd.f32 %v4212, %v4511
      %v4513 = vpop.f32.mrb[0].mxu0
      %v4514 = vpop.f32.mrb[0].mxu0
      %v4515 = vadd.f32 %v4212, %v4514
      %v4516 = vpop.f32.mrb[0].mxu0
      %4517 = vmatprep.mubr.bf16.mxu0 0
      %4518 = vmatmul.mubr.bf16.gmra.mrb[0].mxu0 %v4295
      %v4519 = vpop.f32.mrb[0].mxu0
      %v4520 = vadd.f32 %v4212, %v4519
      %v4521 = vpop.f32.mrb[0].mxu0
      %v4522 = vpop.f32.mrb[0].mxu0
      %v4523 = vadd.f32 %v4212, %v4522
      %v4524 = vpop.f32.mrb[0].mxu0
      %4525 = vmatprep.mubr.bf16.mxu0 0
      %4526 = vmatmul.mubr.bf16.gmra.mrb[0].mxu0 %v4298
      %v4527 = vpop.f32.mrb[0].mxu0
      %v4528 = vadd.f32 %v4212, %v4527
      %v4529 = vpop.f32.mrb[0].mxu0
      %v4530 = vpop.f32.mrb[0].mxu0
      %v4531 = vadd.f32 %v4212, %v4530
      %v4532 = vpop.f32.mrb[0].mxu0
      %4533 = vmatprep.mubr.bf16.mxu0 0
      %4534 = vmatmul.mubr.bf16.gmra.mrb[0].mxu0 %v4301
      %v4535 = vpop.f32.mrb[0].mxu0
      %v4536 = vadd.f32 %v4212, %v4535
      %v4537 = vpop.f32.mrb[0].mxu0
      %v4538 = vpop.f32.mrb[0].mxu0
      %v4539 = vadd.f32 %v4212, %v4538
      %v4540 = vpop.f32.mrb[0].mxu0
      %4541 = vmatprep.mubr.bf16.mxu0 0
      %4542 = vmatmul.mubr.bf16.gmra.mrb[0].mxu0 %v4304
      %v4543 = vpop.f32.mrb[0].mxu0
      %v4544 = vadd.f32 %v4212, %v4543
      %v4545 = vpop.f32.mrb[0].mxu0
      %v4546 = vpop.f32.mrb[0].mxu0
      %v4547 = vadd.f32 %v4212, %v4546
      %v4548 = vpop.f32.mrb[0].mxu0
      %4549 = vmatprep.mubr.bf16.mxu0 0
      %4550 = vmatmul.mubr.bf16.gmra.mrb[0].mxu0 %v4307
      %v4551 = vpop.f32.mrb[0].mxu0
      %v4552 = vadd.f32 %v4212, %v4551
      %v4553 = vpop.f32.mrb[0].mxu0
      %v4554 = vpop.f32.mrb[0].mxu0
      %v4555 = vadd.f32 %v4212, %v4554
      %v4556 = vpop.f32.mrb[0].mxu0
      %4557 = vmatprep.mubr.bf16.mxu0 0
      %4558 = vmatmul.mubr.bf16.gmra.mrb[0].mxu0 %v4310
      %v4559 = vpop.f32.mrb[0].mxu0
      %v4560 = vadd.f32 %v4212, %v4559
      %v4561 = vpop.f32.mrb[0].mxu0
      %v4562 = vpop.f32.mrb[0].mxu0
      %v4563 = vadd.f32 %v4212, %v4562
      %v4564 = vpop.f32.mrb[0].mxu0
      %4565 = vmatprep.mubr.bf16.mxu0 0
      %4566 = vmatmul.mubr.bf16.gmra.mrb[0].mxu0 %v4313
      %v4567 = vpop.f32.mrb[0].mxu0
      %v4568 = vadd.f32 %v4212, %v4567
      %v4569 = vpop.f32.mrb[0].mxu0
      %v4570 = vpop.f32.mrb[0].mxu0
      %v4571 = vadd.f32 %v4212, %v4570
      %v4572 = vpop.f32.mrb[0].mxu0
      %4573 = vmatprep.mubr.bf16.mxu0 0
      %4574 = vmatmul.mubr.bf16.gmra.mrb[0].mxu0 %v4316
      %v4575 = vpop.f32.mrb[0].mxu0
      %v4576 = vadd.f32 %v4212, %v4575
      %v4577 = vpop.f32.mrb[0].mxu0
      %v4578 = vpop.f32.mrb[0].mxu0
      %v4579 = vadd.f32 %v4212, %v4578
      %v4580 = vpop.f32.mrb[0].mxu0
      %4581 = vmatprep.mubr.bf16.mxu0 0
      %4582 = vmatmul.mubr.bf16.gmra.mrb[0].mxu0 %v4319
      %v4583 = vpop.f32.mrb[0].mxu0
      %v4584 = vadd.f32 %v4212, %v4583
      %v4585 = vpop.f32.mrb[0].mxu0
      %v4586 = vpop.f32.mrb[0].mxu0
      %v4587 = vadd.f32 %v4212, %v4586
      %v4588 = vpop.f32.mrb[0].mxu0
      %4589 = vmatprep.mubr.bf16.mxu0 0
      %4590 = vmatmul.mubr.bf16.gmra.mrb[0].mxu0 %v4322
      %v4591 = vpop.f32.mrb[0].mxu0
      %v4592 = vadd.f32 %v4212, %v4591
      %v4593 = vpop.f32.mrb[0].mxu0
      %v4594 = vpop.f32.mrb[0].mxu0
      %v4595 = vadd.f32 %v4212, %v4594
      %v4596 = vpop.f32.mrb[0].mxu0
      %4597 = vmatprep.mubr.bf16.mxu0 0
      %4598 = vmatmul.mubr.bf16.gmra.mrb[0].mxu0 %v4325
      %v4599 = vpop.f32.mrb[0].mxu0
      %v4600 = vadd.f32 %v4212, %v4599
      %v4601 = vpop.f32.mrb[0].mxu0
      %v4602 = vpop.f32.mrb[0].mxu0
      %v4603 = vadd.f32 %v4212, %v4602
      %v4604 = vpop.f32.mrb[0].mxu0
      %4605 = vmatprep.mubr.bf16.mxu0 0
      %4606 = vmatmul.mubr.bf16.gmra.mrb[0].mxu0 %v4328
      %v4607 = vpop.f32.mrb[0].mxu0
      %v4608 = vadd.f32 %v4212, %v4607
      %v4609 = vpop.f32.mrb[0].mxu0
      %v4610 = vpop.f32.mrb[0].mxu0
      %v4611 = vadd.f32 %v4212, %v4610
      %v4612 = vpop.f32.mrb[0].mxu0
      %4613 = vmatprep.mubr.bf16.mxu0 0
      %4614 = vmatmul.mubr.bf16.gmra.mrb[0].mxu0 %v4331
      %v4615 = vpop.f32.mrb[0].mxu0
      %v4616 = vadd.f32 %v4212, %v4615
      %v4617 = vpop.f32.mrb[0].mxu0
      %v4618 = vpop.f32.mrb[0].mxu0
      %v4619 = vadd.f32 %v4212, %v4618
      %v4620 = vpop.f32.mrb[0].mxu0
      %4621 = vdwg.mxu0
      %v4622 = vadd.f32 %v3520, %v4368
      %v4623 = vadd.f32 %v3521, %v4371
      %v4624 = vadd.f32 %v3522, %v4376
      %v4625 = vadd.f32 %v3523, %v4379
      %v4626 = vadd.f32 %v3524, %v4384
      %v4627 = vadd.f32 %v3525, %v4387
      %v4628 = vadd.f32 %v3526, %v4392
      %v4629 = vadd.f32 %v3527, %v4395
      %v4630 = vadd.f32 %v3528, %v4400
      %v4631 = vadd.f32 %v3529, %v4403
      %v4632 = vadd.f32 %v3530, %v4408
      %v4633 = vadd.f32 %v3531, %v4411
      %v4634 = vadd.f32 %v3532, %v4416
      %v4635 = vadd.f32 %v3533, %v4419
      %v4636 = vadd.f32 %v3534, %v4424
      %v4637 = vadd.f32 %v3535, %v4427
      %v4638 = vadd.f32 %v3536, %v4432
      %v4639 = vadd.f32 %v3537, %v4435
      %v4640 = vadd.f32 %v3538, %v4440
      %v4641 = vadd.f32 %v3539, %v4443
      %v4642 = vadd.f32 %v3540, %v4448
      %v4643 = vadd.f32 %v3541, %v4451
      %v4644 = vadd.f32 %v3542, %v4456
      %v4645 = vadd.f32 %v3543, %v4459
      %v4646 = vadd.f32 %v3544, %v4464
      %v4647 = vadd.f32 %v3545, %v4467
      %v4648 = vadd.f32 %v3546, %v4472
      %v4649 = vadd.f32 %v3547, %v4475
      %v4650 = vadd.f32 %v3548, %v4480
      %v4651 = vadd.f32 %v3549, %v4483
      %v4652 = vadd.f32 %v3550, %v4488
      %v4653 = vadd.f32 %v3551, %v4491
      %v4654 = vadd.f32 %v3552, %v4496
      %v4655 = vadd.f32 %v3553, %v4499
      %v4656 = vadd.f32 %v3554, %v4504
      %v4657 = vadd.f32 %v3555, %v4507
      %v4658 = vadd.f32 %v3556, %v4512
      %v4659 = vadd.f32 %v3557, %v4515
      %v4660 = vadd.f32 %v3558, %v4520
      %v4661 = vadd.f32 %v3559, %v4523
      %v4662 = vadd.f32 %v3560, %v4528
      %v4663 = vadd.f32 %v3561, %v4531
      %v4664 = vadd.f32 %v3562, %v4536
      %v4665 = vadd.f32 %v3563, %v4539
      %v4666 = vadd.f32 %v3564, %v4544
      %v4667 = vadd.f32 %v3565, %v4547
      %v4668 = vadd.f32 %v3566, %v4552
      %v4669 = vadd.f32 %v3567, %v4555
      %v4670 = vadd.f32 %v3568, %v4560
      %v4671 = vadd.f32 %v3569, %v4563
      %v4672 = vadd.f32 %v3570, %v4568
      %v4673 = vadd.f32 %v3571, %v4571
      %v4674 = vadd.f32 %v3572, %v4576
      %v4675 = vadd.f32 %v3573, %v4579
      %v4676 = vadd.f32 %v3574, %v4584
      %v4677 = vadd.f32 %v3575, %v4587
      %v4678 = vadd.f32 %v3576, %v4592
      %v4679 = vadd.f32 %v3577, %v4595
      %v4680 = vadd.f32 %v3578, %v4600
      %v4681 = vadd.f32 %v3579, %v4603
      %v4682 = vadd.f32 %v3580, %v4608
      %v4683 = vadd.f32 %v3581, %v4611
      %v4684 = vadd.f32 %v3582, %v4616
      %v4685 = vadd.f32 %v3583, %v4619
      %v4686 = vmax.f32 %v4622, 0.0
      %v4687 = vmax.f32 %v4623, 0.0
      %v4688 = vmax.f32 %v4624, 0.0
      %v4689 = vmax.f32 %v4625, 0.0
      %v4690 = vmax.f32 %v4626, 0.0
      %v4691 = vmax.f32 %v4627, 0.0
      %v4692 = vmax.f32 %v4628, 0.0
      %v4693 = vmax.f32 %v4629, 0.0
      %v4694 = vmax.f32 %v4630, 0.0
      %v4695 = vmax.f32 %v4631, 0.0
      %v4696 = vmax.f32 %v4632, 0.0
      %v4697 = vmax.f32 %v4633, 0.0
      %v4698 = vmax.f32 %v4634, 0.0
      %v4699 = vmax.f32 %v4635, 0.0
      %v4700 = vmax.f32 %v4636, 0.0
      %v4701 = vmax.f32 %v4637, 0.0
      %v4702 = vmax.f32 %v4638, 0.0
      %v4703 = vmax.f32 %v4639, 0.0
      %v4704 = vmax.f32 %v4640, 0.0
      %v4705 = vmax.f32 %v4641, 0.0
      %v4706 = vmax.f32 %v4642, 0.0
      %v4707 = vmax.f32 %v4643, 0.0
      %v4708 = vmax.f32 %v4644, 0.0
      %v4709 = vmax.f32 %v4645, 0.0
      %v4710 = vmax.f32 %v4646, 0.0
      %v4711 = vmax.f32 %v4647, 0.0
      %v4712 = vmax.f32 %v4648, 0.0
      %v4713 = vmax.f32 %v4649, 0.0
      %v4714 = vmax.f32 %v4650, 0.0
      %v4715 = vmax.f32 %v4651, 0.0
      %v4716 = vmax.f32 %v4652, 0.0
      %v4717 = vmax.f32 %v4653, 0.0
      %v4718 = vmax.f32 %v4654, 0.0
      %v4719 = vmax.f32 %v4655, 0.0
      %v4720 = vmax.f32 %v4656, 0.0
      %v4721 = vmax.f32 %v4657, 0.0
      %v4722 = vmax.f32 %v4658, 0.0
      %v4723 = vmax.f32 %v4659, 0.0
      %v4724 = vmax.f32 %v4660, 0.0
      %v4725 = vmax.f32 %v4661, 0.0
      %v4726 = vmax.f32 %v4662, 0.0
      %v4727 = vmax.f32 %v4663, 0.0
      %v4728 = vmax.f32 %v4664, 0.0
      %v4729 = vmax.f32 %v4665, 0.0
      %v4730 = vmax.f32 %v4666, 0.0
      %v4731 = vmax.f32 %v4667, 0.0
      %v4732 = vmax.f32 %v4668, 0.0
      %v4733 = vmax.f32 %v4669, 0.0
      %v4734 = vmax.f32 %v4670, 0.0
      %v4735 = vmax.f32 %v4671, 0.0
      %v4736 = vmax.f32 %v4672, 0.0
      %v4737 = vmax.f32 %v4673, 0.0
      %v4738 = vmax.f32 %v4674, 0.0
      %v4739 = vmax.f32 %v4675, 0.0
      %v4740 = vmax.f32 %v4676, 0.0
      %v4741 = vmax.f32 %v4677, 0.0
      %v4742 = vmax.f32 %v4678, 0.0
      %v4743 = vmax.f32 %v4679, 0.0
      %v4744 = vmax.f32 %v4680, 0.0
      %v4745 = vmax.f32 %v4681, 0.0
      %v4746 = vmax.f32 %v4682, 0.0
      %v4747 = vmax.f32 %v4683, 0.0
      %v4748 = vmax.f32 %v4684, 0.0
      %v4749 = vmax.f32 %v4685, 0.0
      %v4750 = vpack.c.bf16 %v4687, %v4686
      %v4751 = vpack.c.bf16 %v4689, %v4688
      %v4752 = vpack.c.bf16 %v4691, %v4690
      %v4753 = vpack.c.bf16 %v4693, %v4692
      %v4754 = vpack.c.bf16 %v4695, %v4694
      %v4755 = vpack.c.bf16 %v4697, %v4696
      %v4756 = vpack.c.bf16 %v4699, %v4698
      %v4757 = vpack.c.bf16 %v4701, %v4700
      %v4758 = vpack.c.bf16 %v4703, %v4702
      %v4759 = vpack.c.bf16 %v4705, %v4704
      %v4760 = vpack.c.bf16 %v4707, %v4706
      %v4761 = vpack.c.bf16 %v4709, %v4708
      %v4762 = vpack.c.bf16 %v4711, %v4710
      %v4763 = vpack.c.bf16 %v4713, %v4712
      %v4764 = vpack.c.bf16 %v4715, %v4714
      %v4765 = vpack.c.bf16 %v4717, %v4716
      %v4766 = vpack.c.bf16 %v4719, %v4718
      %v4767 = vpack.c.bf16 %v4721, %v4720
      %v4768 = vpack.c.bf16 %v4723, %v4722
      %v4769 = vpack.c.bf16 %v4725, %v4724
      %v4770 = vpack.c.bf16 %v4727, %v4726
      %v4771 = vpack.c.bf16 %v4729, %v4728
      %v4772 = vpack.c.bf16 %v4731, %v4730
      %v4773 = vpack.c.bf16 %v4733, %v4732
      %v4774 = vpack.c.bf16 %v4735, %v4734
      %v4775 = vpack.c.bf16 %v4737, %v4736
      %v4776 = vpack.c.bf16 %v4739, %v4738
      %v4777 = vpack.c.bf16 %v4741, %v4740
      %v4778 = vpack.c.bf16 %v4743, %v4742
      %v4779 = vpack.c.bf16 %v4745, %v4744
      %v4780 = vpack.c.bf16 %v4747, %v4746
      %v4781 = vpack.c.bf16 %v4749, %v4748
      %s4782 = scalar_lea.vmem %s3, 192
      %v4783 = vld [vmem:[%s4782] sm:$0xf]
      %v4784 = vld [vmem:[%s4782 + $0x4] sm:$0xf]
      %v4785 = vld [vmem:[%s4782 + $0x8] sm:$0xf]
      %v4786 = vld [vmem:[%s4782 + $0xc] sm:$0xf]
      %v4787 = vld [vmem:[%s4782 + $0x10] sm:$0xf]
      %v4788 = vld [vmem:[%s4782 + $0x14] sm:$0xf]
      %v4789 = vld [vmem:[%s4782 + $0x18] sm:$0xf]
      %v4790 = vld [vmem:[%s4782 + $0x1c] sm:$0xf]
      %v4791 = vld [vmem:[%s4 + $0x6] sm:$0x1]
      %v4792 = vlaneseq
      %v4793 = vshrl.u32 %v4792, 7
      %v4794 = vsub.s32 0, %v4793
      %v4795 = vrot.slane %v4791, %v4794
      %v4804 = vunpack.c.l.b16 %v4783
      %v4805 = vunpack.c.l.b16 %v4784
      %v4806 = vunpack.c.l.b16 %v4785
      %v4807 = vunpack.c.l.b16 %v4786
      %v4808 = vunpack.c.l.b16 %v4787
      %v4809 = vunpack.c.l.b16 %v4788
      %v4810 = vunpack.c.l.b16 %v4789
      %v4811 = vunpack.c.l.b16 %v4790
      %v4812 = vpack.c.b16 %v4805, %v4804
      %v4813 = vpack.c.b16 %v4807, %v4806
      %v4814 = vpack.c.b16 %v4809, %v4808
      %v4815 = vpack.c.b16 %v4811, %v4810
      %v4821 = vsel %vm1385, %v4750, 0
      %v4824 = vsel %vm1385, %v4751, 0
      %v4827 = vsel %vm1385, %v4752, 0
      %v4830 = vsel %vm1385, %v4753, 0
      %v4833 = vsel %vm1385, %v4754, 0
      %v4836 = vsel %vm1385, %v4755, 0
      %v4839 = vsel %vm1385, %v4756, 0
      %v4842 = vsel %vm1385, %v4757, 0
      %v4845 = vsel %vm1385, %v4758, 0
      %v4848 = vsel %vm1385, %v4759, 0
      %v4851 = vsel %vm1385, %v4760, 0
      %v4854 = vsel %vm1385, %v4761, 0
      %v4857 = vsel %vm1385, %v4762, 0
      %v4860 = vsel %vm1385, %v4763, 0
      %v4863 = vsel %vm1385, %v4764, 0
      %v4866 = vsel %vm1385, %v4765, 0
      %v4869 = vsel %vm1385, %v4766, 0
      %v4872 = vsel %vm1385, %v4767, 0
      %v4875 = vsel %vm1385, %v4768, 0
      %v4878 = vsel %vm1385, %v4769, 0
      %v4881 = vsel %vm1385, %v4770, 0
      %v4884 = vsel %vm1385, %v4771, 0
      %v4887 = vsel %vm1385, %v4772, 0
      %v4890 = vsel %vm1385, %v4773, 0
      %v4893 = vsel %vm1385, %v4774, 0
      %v4896 = vsel %vm1385, %v4775, 0
      %v4899 = vsel %vm1385, %v4776, 0
      %v4902 = vsel %vm1385, %v4777, 0
      %v4905 = vsel %vm1385, %v4778, 0
      %v4908 = vsel %vm1385, %v4779, 0
      %v4911 = vsel %vm1385, %v4780, 0
      %v4914 = vsel %vm1385, %v4781, 0
      %4916 = vmatprep.subr.bf16.mxu0 0
      %4917 = vmatpush1.bf16.msra.mxu0 %v4812
      %4918 = vmatprep.subr.bf16.mxu0 0
      %4919 = vmatpush1.bf16.msra.mxu0 %v4813
      %4920 = vmatprep.subr.bf16.mxu0 0
      %4921 = vmatpush1.bf16.msra.mxu0 %v4814
      %4922 = vmatprep.subr.bf16.mxu0 0
      %4923 = vmatpush1.bf16.msra.mxu0 %v4815
      %4924 = vmatprep.subr.bf16.mxu0 0
      %4925 = vmatpush1.bf16.msra.mxu0 0
      %4926 = vmatprep.subr.bf16.mxu0 0
      %4927 = vmatpush1.bf16.msra.mxu0 0
      %4928 = vmatprep.subr.bf16.mxu0 0
      %4929 = vmatpush1.bf16.msra.mxu0 0
      %4930 = vmatprep.subr.bf16.mxu0 0
      %4931 = vmatpush1.bf16.msra.mxu0 0
      %4932 = vmatprep.subr.bf16.mxu0 0
      %4933 = vmatpush1.bf16.msra.mxu0 0
      %4934 = vmatprep.subr.bf16.mxu0 0
      %4935 = vmatpush1.bf16.msra.mxu0 0
      %4936 = vmatprep.subr.bf16.mxu0 0
      %4937 = vmatpush1.bf16.msra.mxu0 0
      %4938 = vmatprep.subr.bf16.mxu0 0
      %4939 = vmatpush1.bf16.msra.mxu0 0
      %4940 = vmatprep.subr.bf16.mxu0 0
      %4941 = vmatpush1.bf16.msra.mxu0 0
      %4942 = vmatprep.subr.bf16.mxu0 0
      %4943 = vmatpush1.bf16.msra.mxu0 0
      %4944 = vmatprep.subr.bf16.mxu0 0
      %4945 = vmatpush1.bf16.msra.mxu0 0
      %4946 = vmatprep.subr.bf16.mxu0 0
      %4947 = vmatpush1.bf16.msra.mxu0 0
      %4948 = vmatprep.mubr.bf16.mxu0 0
      %4949 = vmatmul.mubr.bf16.gmra.mrb[0].mxu0 %v4821
      %v4950 = vpop.f32.mrb[0].mxu0
      %v4951 = vadd.f32 %v4795, %v4950
      %v4952 = vpop.f32.mrb[0].mxu0
      %v4953 = vpop.f32.mrb[0].mxu0
      %v4954 = vadd.f32 %v4795, %v4953
      %v4955 = vpop.f32.mrb[0].mxu0
      %4956 = vmatprep.mubr.bf16.mxu0 0
      %4957 = vmatmul.mubr.bf16.gmra.mrb[0].mxu0 %v4824
      %v4958 = vpop.f32.mrb[0].mxu0
      %v4959 = vadd.f32 %v4795, %v4958
      %v4960 = vpop.f32.mrb[0].mxu0
      %v4961 = vpop.f32.mrb[0].mxu0
      %v4962 = vadd.f32 %v4795, %v4961
      %v4963 = vpop.f32.mrb[0].mxu0
      %4964 = vmatprep.mubr.bf16.mxu0 0
      %4965 = vmatmul.mubr.bf16.gmra.mrb[0].mxu0 %v4827
      %v4966 = vpop.f32.mrb[0].mxu0
      %v4967 = vadd.f32 %v4795, %v4966
      %v4968 = vpop.f32.mrb[0].mxu0
      %v4969 = vpop.f32.mrb[0].mxu0
      %v4970 = vadd.f32 %v4795, %v4969
      %v4971 = vpop.f32.mrb[0].mxu0
      %4972 = vmatprep.mubr.bf16.mxu0 0
      %4973 = vmatmul.mubr.bf16.gmra.mrb[0].mxu0 %v4830
      %v4974 = vpop.f32.mrb[0].mxu0
      %v4975 = vadd.f32 %v4795, %v4974
      %v4976 = vpop.f32.mrb[0].mxu0
      %v4977 = vpop.f32.mrb[0].mxu0
      %v4978 = vadd.f32 %v4795, %v4977
      %v4979 = vpop.f32.mrb[0].mxu0
      %4980 = vmatprep.mubr.bf16.mxu0 0
      %4981 = vmatmul.mubr.bf16.gmra.mrb[0].mxu0 %v4833
      %v4982 = vpop.f32.mrb[0].mxu0
      %v4983 = vadd.f32 %v4795, %v4982
      %v4984 = vpop.f32.mrb[0].mxu0
      %v4985 = vpop.f32.mrb[0].mxu0
      %v4986 = vadd.f32 %v4795, %v4985
      %v4987 = vpop.f32.mrb[0].mxu0
      %4988 = vmatprep.mubr.bf16.mxu0 0
      %4989 = vmatmul.mubr.bf16.gmra.mrb[0].mxu0 %v4836
      %v4990 = vpop.f32.mrb[0].mxu0
      %v4991 = vadd.f32 %v4795, %v4990
      %v4992 = vpop.f32.mrb[0].mxu0
      %v4993 = vpop.f32.mrb[0].mxu0
      %v4994 = vadd.f32 %v4795, %v4993
      %v4995 = vpop.f32.mrb[0].mxu0
      %4996 = vmatprep.mubr.bf16.mxu0 0
      %4997 = vmatmul.mubr.bf16.gmra.mrb[0].mxu0 %v4839
      %v4998 = vpop.f32.mrb[0].mxu0
      %v4999 = vadd.f32 %v4795, %v4998
      %v5000 = vpop.f32.mrb[0].mxu0
      %v5001 = vpop.f32.mrb[0].mxu0
      %v5002 = vadd.f32 %v4795, %v5001
      %v5003 = vpop.f32.mrb[0].mxu0
      %5004 = vmatprep.mubr.bf16.mxu0 0
      %5005 = vmatmul.mubr.bf16.gmra.mrb[0].mxu0 %v4842
      %v5006 = vpop.f32.mrb[0].mxu0
      %v5007 = vadd.f32 %v4795, %v5006
      %v5008 = vpop.f32.mrb[0].mxu0
      %v5009 = vpop.f32.mrb[0].mxu0
      %v5010 = vadd.f32 %v4795, %v5009
      %v5011 = vpop.f32.mrb[0].mxu0
      %5012 = vmatprep.mubr.bf16.mxu0 0
      %5013 = vmatmul.mubr.bf16.gmra.mrb[0].mxu0 %v4845
      %v5014 = vpop.f32.mrb[0].mxu0
      %v5015 = vadd.f32 %v4795, %v5014
      %v5016 = vpop.f32.mrb[0].mxu0
      %v5017 = vpop.f32.mrb[0].mxu0
      %v5018 = vadd.f32 %v4795, %v5017
      %v5019 = vpop.f32.mrb[0].mxu0
      %5020 = vmatprep.mubr.bf16.mxu0 0
      %5021 = vmatmul.mubr.bf16.gmra.mrb[0].mxu0 %v4848
      %v5022 = vpop.f32.mrb[0].mxu0
      %v5023 = vadd.f32 %v4795, %v5022
      %v5024 = vpop.f32.mrb[0].mxu0
      %v5025 = vpop.f32.mrb[0].mxu0
      %v5026 = vadd.f32 %v4795, %v5025
      %v5027 = vpop.f32.mrb[0].mxu0
      %5028 = vmatprep.mubr.bf16.mxu0 0
      %5029 = vmatmul.mubr.bf16.gmra.mrb[0].mxu0 %v4851
      %v5030 = vpop.f32.mrb[0].mxu0
      %v5031 = vadd.f32 %v4795, %v5030
      %v5032 = vpop.f32.mrb[0].mxu0
      %v5033 = vpop.f32.mrb[0].mxu0
      %v5034 = vadd.f32 %v4795, %v5033
      %v5035 = vpop.f32.mrb[0].mxu0
      %5036 = vmatprep.mubr.bf16.mxu0 0
      %5037 = vmatmul.mubr.bf16.gmra.mrb[0].mxu0 %v4854
      %v5038 = vpop.f32.mrb[0].mxu0
      %v5039 = vadd.f32 %v4795, %v5038
      %v5040 = vpop.f32.mrb[0].mxu0
      %v5041 = vpop.f32.mrb[0].mxu0
      %v5042 = vadd.f32 %v4795, %v5041
      %v5043 = vpop.f32.mrb[0].mxu0
      %5044 = vmatprep.mubr.bf16.mxu0 0
      %5045 = vmatmul.mubr.bf16.gmra.mrb[0].mxu0 %v4857
      %v5046 = vpop.f32.mrb[0].mxu0
      %v5047 = vadd.f32 %v4795, %v5046
      %v5048 = vpop.f32.mrb[0].mxu0
      %v5049 = vpop.f32.mrb[0].mxu0
      %v5050 = vadd.f32 %v4795, %v5049
      %v5051 = vpop.f32.mrb[0].mxu0
      %5052 = vmatprep.mubr.bf16.mxu0 0
      %5053 = vmatmul.mubr.bf16.gmra.mrb[0].mxu0 %v4860
      %v5054 = vpop.f32.mrb[0].mxu0
      %v5055 = vadd.f32 %v4795, %v5054
      %v5056 = vpop.f32.mrb[0].mxu0
      %v5057 = vpop.f32.mrb[0].mxu0
      %v5058 = vadd.f32 %v4795, %v5057
      %v5059 = vpop.f32.mrb[0].mxu0
      %5060 = vmatprep.mubr.bf16.mxu0 0
      %5061 = vmatmul.mubr.bf16.gmra.mrb[0].mxu0 %v4863
      %v5062 = vpop.f32.mrb[0].mxu0
      %v5063 = vadd.f32 %v4795, %v5062
      %v5064 = vpop.f32.mrb[0].mxu0
      %v5065 = vpop.f32.mrb[0].mxu0
      %v5066 = vadd.f32 %v4795, %v5065
      %v5067 = vpop.f32.mrb[0].mxu0
      %5068 = vmatprep.mubr.bf16.mxu0 0
      %5069 = vmatmul.mubr.bf16.gmra.mrb[0].mxu0 %v4866
      %v5070 = vpop.f32.mrb[0].mxu0
      %v5071 = vadd.f32 %v4795, %v5070
      %v5072 = vpop.f32.mrb[0].mxu0
      %v5073 = vpop.f32.mrb[0].mxu0
      %v5074 = vadd.f32 %v4795, %v5073
      %v5075 = vpop.f32.mrb[0].mxu0
      %5076 = vmatprep.mubr.bf16.mxu0 0
      %5077 = vmatmul.mubr.bf16.gmra.mrb[0].mxu0 %v4869
      %v5078 = vpop.f32.mrb[0].mxu0
      %v5079 = vadd.f32 %v4795, %v5078
      %v5080 = vpop.f32.mrb[0].mxu0
      %v5081 = vpop.f32.mrb[0].mxu0
      %v5082 = vadd.f32 %v4795, %v5081
      %v5083 = vpop.f32.mrb[0].mxu0
      %5084 = vmatprep.mubr.bf16.mxu0 0
      %5085 = vmatmul.mubr.bf16.gmra.mrb[0].mxu0 %v4872
      %v5086 = vpop.f32.mrb[0].mxu0
      %v5087 = vadd.f32 %v4795, %v5086
      %v5088 = vpop.f32.mrb[0].mxu0
      %v5089 = vpop.f32.mrb[0].mxu0
      %v5090 = vadd.f32 %v4795, %v5089
      %v5091 = vpop.f32.mrb[0].mxu0
      %5092 = vmatprep.mubr.bf16.mxu0 0
      %5093 = vmatmul.mubr.bf16.gmra.mrb[0].mxu0 %v4875
      %v5094 = vpop.f32.mrb[0].mxu0
      %v5095 = vadd.f32 %v4795, %v5094
      %v5096 = vpop.f32.mrb[0].mxu0
      %v5097 = vpop.f32.mrb[0].mxu0
      %v5098 = vadd.f32 %v4795, %v5097
      %v5099 = vpop.f32.mrb[0].mxu0
      %5100 = vmatprep.mubr.bf16.mxu0 0
      %5101 = vmatmul.mubr.bf16.gmra.mrb[0].mxu0 %v4878
      %v5102 = vpop.f32.mrb[0].mxu0
      %v5103 = vadd.f32 %v4795, %v5102
      %v5104 = vpop.f32.mrb[0].mxu0
      %v5105 = vpop.f32.mrb[0].mxu0
      %v5106 = vadd.f32 %v4795, %v5105
      %v5107 = vpop.f32.mrb[0].mxu0
      %5108 = vmatprep.mubr.bf16.mxu0 0
      %5109 = vmatmul.mubr.bf16.gmra.mrb[0].mxu0 %v4881
      %v5110 = vpop.f32.mrb[0].mxu0
      %v5111 = vadd.f32 %v4795, %v5110
      %v5112 = vpop.f32.mrb[0].mxu0
      %v5113 = vpop.f32.mrb[0].mxu0
      %v5114 = vadd.f32 %v4795, %v5113
      %v5115 = vpop.f32.mrb[0].mxu0
      %5116 = vmatprep.mubr.bf16.mxu0 0
      %5117 = vmatmul.mubr.bf16.gmra.mrb[0].mxu0 %v4884
      %v5118 = vpop.f32.mrb[0].mxu0
      %v5119 = vadd.f32 %v4795, %v5118
      %v5120 = vpop.f32.mrb[0].mxu0
      %v5121 = vpop.f32.mrb[0].mxu0
      %v5122 = vadd.f32 %v4795, %v5121
      %v5123 = vpop.f32.mrb[0].mxu0
      %5124 = vmatprep.mubr.bf16.mxu0 0
      %5125 = vmatmul.mubr.bf16.gmra.mrb[0].mxu0 %v4887
      %v5126 = vpop.f32.mrb[0].mxu0
      %v5127 = vadd.f32 %v4795, %v5126
      %v5128 = vpop.f32.mrb[0].mxu0
      %v5129 = vpop.f32.mrb[0].mxu0
      %v5130 = vadd.f32 %v4795, %v5129
      %v5131 = vpop.f32.mrb[0].mxu0
      %5132 = vmatprep.mubr.bf16.mxu0 0
      %5133 = vmatmul.mubr.bf16.gmra.mrb[0].mxu0 %v4890
      %v5134 = vpop.f32.mrb[0].mxu0
      %v5135 = vadd.f32 %v4795, %v5134
      %v5136 = vpop.f32.mrb[0].mxu0
      %v5137 = vpop.f32.mrb[0].mxu0
      %v5138 = vadd.f32 %v4795, %v5137
      %v5139 = vpop.f32.mrb[0].mxu0
      %5140 = vmatprep.mubr.bf16.mxu0 0
      %5141 = vmatmul.mubr.bf16.gmra.mrb[0].mxu0 %v4893
      %v5142 = vpop.f32.mrb[0].mxu0
      %v5143 = vadd.f32 %v4795, %v5142
      %v5144 = vpop.f32.mrb[0].mxu0
      %v5145 = vpop.f32.mrb[0].mxu0
      %v5146 = vadd.f32 %v4795, %v5145
      %v5147 = vpop.f32.mrb[0].mxu0
      %5148 = vmatprep.mubr.bf16.mxu0 0
      %5149 = vmatmul.mubr.bf16.gmra.mrb[0].mxu0 %v4896
      %v5150 = vpop.f32.mrb[0].mxu0
      %v5151 = vadd.f32 %v4795, %v5150
      %v5152 = vpop.f32.mrb[0].mxu0
      %v5153 = vpop.f32.mrb[0].mxu0
      %v5154 = vadd.f32 %v4795, %v5153
      %v5155 = vpop.f32.mrb[0].mxu0
      %5156 = vmatprep.mubr.bf16.mxu0 0
      %5157 = vmatmul.mubr.bf16.gmra.mrb[0].mxu0 %v4899
      %v5158 = vpop.f32.mrb[0].mxu0
      %v5159 = vadd.f32 %v4795, %v5158
      %v5160 = vpop.f32.mrb[0].mxu0
      %v5161 = vpop.f32.mrb[0].mxu0
      %v5162 = vadd.f32 %v4795, %v5161
      %v5163 = vpop.f32.mrb[0].mxu0
      %5164 = vmatprep.mubr.bf16.mxu0 0
      %5165 = vmatmul.mubr.bf16.gmra.mrb[0].mxu0 %v4902
      %v5166 = vpop.f32.mrb[0].mxu0
      %v5167 = vadd.f32 %v4795, %v5166
      %v5168 = vpop.f32.mrb[0].mxu0
      %v5169 = vpop.f32.mrb[0].mxu0
      %v5170 = vadd.f32 %v4795, %v5169
      %v5171 = vpop.f32.mrb[0].mxu0
      %5172 = vmatprep.mubr.bf16.mxu0 0
      %5173 = vmatmul.mubr.bf16.gmra.mrb[0].mxu0 %v4905
      %v5174 = vpop.f32.mrb[0].mxu0
      %v5175 = vadd.f32 %v4795, %v5174
      %v5176 = vpop.f32.mrb[0].mxu0
      %v5177 = vpop.f32.mrb[0].mxu0
      %v5178 = vadd.f32 %v4795, %v5177
      %v5179 = vpop.f32.mrb[0].mxu0
      %5180 = vmatprep.mubr.bf16.mxu0 0
      %5181 = vmatmul.mubr.bf16.gmra.mrb[0].mxu0 %v4908
      %v5182 = vpop.f32.mrb[0].mxu0
      %v5183 = vadd.f32 %v4795, %v5182
      %v5184 = vpop.f32.mrb[0].mxu0
      %v5185 = vpop.f32.mrb[0].mxu0
      %v5186 = vadd.f32 %v4795, %v5185
      %v5187 = vpop.f32.mrb[0].mxu0
      %5188 = vmatprep.mubr.bf16.mxu0 0
      %5189 = vmatmul.mubr.bf16.gmra.mrb[0].mxu0 %v4911
      %v5190 = vpop.f32.mrb[0].mxu0
      %v5191 = vadd.f32 %v4795, %v5190
      %v5192 = vpop.f32.mrb[0].mxu0
      %v5193 = vpop.f32.mrb[0].mxu0
      %v5194 = vadd.f32 %v4795, %v5193
      %v5195 = vpop.f32.mrb[0].mxu0
      %5196 = vmatprep.mubr.bf16.mxu0 0
      %5197 = vmatmul.mubr.bf16.gmra.mrb[0].mxu0 %v4914
      %v5198 = vpop.f32.mrb[0].mxu0
      %v5199 = vadd.f32 %v4795, %v5198
      %v5200 = vpop.f32.mrb[0].mxu0
      %v5201 = vpop.f32.mrb[0].mxu0
      %v5202 = vadd.f32 %v4795, %v5201
      %v5203 = vpop.f32.mrb[0].mxu0
      %5204 = vdwg.mxu0
      %v5205 = vmax.f32 %v4951, 0.0
      %v5206 = vmax.f32 %v4954, 0.0
      %v5207 = vmax.f32 %v4959, 0.0
      %v5208 = vmax.f32 %v4962, 0.0
      %v5209 = vmax.f32 %v4967, 0.0
      %v5210 = vmax.f32 %v4970, 0.0
      %v5211 = vmax.f32 %v4975, 0.0
      %v5212 = vmax.f32 %v4978, 0.0
      %v5213 = vmax.f32 %v4983, 0.0
      %v5214 = vmax.f32 %v4986, 0.0
      %v5215 = vmax.f32 %v4991, 0.0
      %v5216 = vmax.f32 %v4994, 0.0
      %v5217 = vmax.f32 %v4999, 0.0
      %v5218 = vmax.f32 %v5002, 0.0
      %v5219 = vmax.f32 %v5007, 0.0
      %v5220 = vmax.f32 %v5010, 0.0
      %v5221 = vmax.f32 %v5015, 0.0
      %v5222 = vmax.f32 %v5018, 0.0
      %v5223 = vmax.f32 %v5023, 0.0
      %v5224 = vmax.f32 %v5026, 0.0
      %v5225 = vmax.f32 %v5031, 0.0
      %v5226 = vmax.f32 %v5034, 0.0
      %v5227 = vmax.f32 %v5039, 0.0
      %v5228 = vmax.f32 %v5042, 0.0
      %v5229 = vmax.f32 %v5047, 0.0
      %v5230 = vmax.f32 %v5050, 0.0
      %v5231 = vmax.f32 %v5055, 0.0
      %v5232 = vmax.f32 %v5058, 0.0
      %v5233 = vmax.f32 %v5063, 0.0
      %v5234 = vmax.f32 %v5066, 0.0
      %v5235 = vmax.f32 %v5071, 0.0
      %v5236 = vmax.f32 %v5074, 0.0
      %v5237 = vmax.f32 %v5079, 0.0
      %v5238 = vmax.f32 %v5082, 0.0
      %v5239 = vmax.f32 %v5087, 0.0
      %v5240 = vmax.f32 %v5090, 0.0
      %v5241 = vmax.f32 %v5095, 0.0
      %v5242 = vmax.f32 %v5098, 0.0
      %v5243 = vmax.f32 %v5103, 0.0
      %v5244 = vmax.f32 %v5106, 0.0
      %v5245 = vmax.f32 %v5111, 0.0
      %v5246 = vmax.f32 %v5114, 0.0
      %v5247 = vmax.f32 %v5119, 0.0
      %v5248 = vmax.f32 %v5122, 0.0
      %v5249 = vmax.f32 %v5127, 0.0
      %v5250 = vmax.f32 %v5130, 0.0
      %v5251 = vmax.f32 %v5135, 0.0
      %v5252 = vmax.f32 %v5138, 0.0
      %v5253 = vmax.f32 %v5143, 0.0
      %v5254 = vmax.f32 %v5146, 0.0
      %v5255 = vmax.f32 %v5151, 0.0
      %v5256 = vmax.f32 %v5154, 0.0
      %v5257 = vmax.f32 %v5159, 0.0
      %v5258 = vmax.f32 %v5162, 0.0
      %v5259 = vmax.f32 %v5167, 0.0
      %v5260 = vmax.f32 %v5170, 0.0
      %v5261 = vmax.f32 %v5175, 0.0
      %v5262 = vmax.f32 %v5178, 0.0
      %v5263 = vmax.f32 %v5183, 0.0
      %v5264 = vmax.f32 %v5186, 0.0
      %v5265 = vmax.f32 %v5191, 0.0
      %v5266 = vmax.f32 %v5194, 0.0
      %v5267 = vmax.f32 %v5199, 0.0
      %v5268 = vmax.f32 %v5202, 0.0
      %v5269 = vpack.c.bf16 %v5206, %v5205
      %v5270 = vpack.c.bf16 %v5208, %v5207
      %v5271 = vpack.c.bf16 %v5210, %v5209
      %v5272 = vpack.c.bf16 %v5212, %v5211
      %v5273 = vpack.c.bf16 %v5214, %v5213
      %v5274 = vpack.c.bf16 %v5216, %v5215
      %v5275 = vpack.c.bf16 %v5218, %v5217
      %v5276 = vpack.c.bf16 %v5220, %v5219
      %v5277 = vpack.c.bf16 %v5222, %v5221
      %v5278 = vpack.c.bf16 %v5224, %v5223
      %v5279 = vpack.c.bf16 %v5226, %v5225
      %v5280 = vpack.c.bf16 %v5228, %v5227
      %v5281 = vpack.c.bf16 %v5230, %v5229
      %v5282 = vpack.c.bf16 %v5232, %v5231
      %v5283 = vpack.c.bf16 %v5234, %v5233
      %v5284 = vpack.c.bf16 %v5236, %v5235
      %v5285 = vpack.c.bf16 %v5238, %v5237
      %v5286 = vpack.c.bf16 %v5240, %v5239
      %v5287 = vpack.c.bf16 %v5242, %v5241
      %v5288 = vpack.c.bf16 %v5244, %v5243
      %v5289 = vpack.c.bf16 %v5246, %v5245
      %v5290 = vpack.c.bf16 %v5248, %v5247
      %v5291 = vpack.c.bf16 %v5250, %v5249
      %v5292 = vpack.c.bf16 %v5252, %v5251
      %v5293 = vpack.c.bf16 %v5254, %v5253
      %v5294 = vpack.c.bf16 %v5256, %v5255
      %v5295 = vpack.c.bf16 %v5258, %v5257
      %v5296 = vpack.c.bf16 %v5260, %v5259
      %v5297 = vpack.c.bf16 %v5262, %v5261
      %v5298 = vpack.c.bf16 %v5264, %v5263
      %v5299 = vpack.c.bf16 %v5266, %v5265
      %v5300 = vpack.c.bf16 %v5268, %v5267
      %s5301 = scalar_lea.vmem %s3, 224
      %v5302 = vld [vmem:[%s5301] sm:$0xf]
      %v5303 = vld [vmem:[%s5301 + $0x4] sm:$0xf]
      %v5304 = vld [vmem:[%s5301 + $0x8] sm:$0xf]
      %v5305 = vld [vmem:[%s5301 + $0xc] sm:$0xf]
      %v5306 = vld [vmem:[%s5301 + $0x10] sm:$0xf]
      %v5307 = vld [vmem:[%s5301 + $0x14] sm:$0xf]
      %v5308 = vld [vmem:[%s5301 + $0x18] sm:$0xf]
      %v5309 = vld [vmem:[%s5301 + $0x1c] sm:$0xf]
      %v5310 = vld [vmem:[%s4 + $0x7] sm:$0x1]
      %v5311 = vlaneseq
      %v5312 = vshrl.u32 %v5311, 7
      %v5313 = vsub.s32 0, %v5312
      %v5314 = vrot.slane %v5310, %v5313
      %v5323 = vunpack.c.l.b16 %v5302
      %v5324 = vunpack.c.l.b16 %v5303
      %v5325 = vunpack.c.l.b16 %v5304
      %v5326 = vunpack.c.l.b16 %v5305
      %v5327 = vunpack.c.l.b16 %v5306
      %v5328 = vunpack.c.l.b16 %v5307
      %v5329 = vunpack.c.l.b16 %v5308
      %v5330 = vunpack.c.l.b16 %v5309
      %v5331 = vpack.c.b16 %v5324, %v5323
      %v5332 = vpack.c.b16 %v5326, %v5325
      %v5333 = vpack.c.b16 %v5328, %v5327
      %v5334 = vpack.c.b16 %v5330, %v5329
      %v5340 = vsel %vm1385, %v5269, 0
      %v5343 = vsel %vm1385, %v5270, 0
      %v5346 = vsel %vm1385, %v5271, 0
      %v5349 = vsel %vm1385, %v5272, 0
      %v5352 = vsel %vm1385, %v5273, 0
      %v5355 = vsel %vm1385, %v5274, 0
      %v5358 = vsel %vm1385, %v5275, 0
      %v5361 = vsel %vm1385, %v5276, 0
      %v5364 = vsel %vm1385, %v5277, 0
      %v5367 = vsel %vm1385, %v5278, 0
      %v5370 = vsel %vm1385, %v5279, 0
      %v5373 = vsel %vm1385, %v5280, 0
      %v5376 = vsel %vm1385, %v5281, 0
      %v5379 = vsel %vm1385, %v5282, 0
      %v5382 = vsel %vm1385, %v5283, 0
      %v5385 = vsel %vm1385, %v5284, 0
      %v5388 = vsel %vm1385, %v5285, 0
      %v5391 = vsel %vm1385, %v5286, 0
      %v5394 = vsel %vm1385, %v5287, 0
      %v5397 = vsel %vm1385, %v5288, 0
      %v5400 = vsel %vm1385, %v5289, 0
      %v5403 = vsel %vm1385, %v5290, 0
      %v5406 = vsel %vm1385, %v5291, 0
      %v5409 = vsel %vm1385, %v5292, 0
      %v5412 = vsel %vm1385, %v5293, 0
      %v5415 = vsel %vm1385, %v5294, 0
      %v5418 = vsel %vm1385, %v5295, 0
      %v5421 = vsel %vm1385, %v5296, 0
      %v5424 = vsel %vm1385, %v5297, 0
      %v5427 = vsel %vm1385, %v5298, 0
      %v5430 = vsel %vm1385, %v5299, 0
      %v5433 = vsel %vm1385, %v5300, 0
      %5435 = vmatprep.subr.bf16.mxu0 0
      %5436 = vmatpush1.bf16.msra.mxu0 %v5331
      %5437 = vmatprep.subr.bf16.mxu0 0
      %5438 = vmatpush1.bf16.msra.mxu0 %v5332
      %5439 = vmatprep.subr.bf16.mxu0 0
      %5440 = vmatpush1.bf16.msra.mxu0 %v5333
      %5441 = vmatprep.subr.bf16.mxu0 0
      %5442 = vmatpush1.bf16.msra.mxu0 %v5334
      %5443 = vmatprep.subr.bf16.mxu0 0
      %5444 = vmatpush1.bf16.msra.mxu0 0
      %5445 = vmatprep.subr.bf16.mxu0 0
      %5446 = vmatpush1.bf16.msra.mxu0 0
      %5447 = vmatprep.subr.bf16.mxu0 0
      %5448 = vmatpush1.bf16.msra.mxu0 0
      %5449 = vmatprep.subr.bf16.mxu0 0
      %5450 = vmatpush1.bf16.msra.mxu0 0
      %5451 = vmatprep.subr.bf16.mxu0 0
      %5452 = vmatpush1.bf16.msra.mxu0 0
      %5453 = vmatprep.subr.bf16.mxu0 0
      %5454 = vmatpush1.bf16.msra.mxu0 0
      %5455 = vmatprep.subr.bf16.mxu0 0
      %5456 = vmatpush1.bf16.msra.mxu0 0
      %5457 = vmatprep.subr.bf16.mxu0 0
      %5458 = vmatpush1.bf16.msra.mxu0 0
      %5459 = vmatprep.subr.bf16.mxu0 0
      %5460 = vmatpush1.bf16.msra.mxu0 0
      %5461 = vmatprep.subr.bf16.mxu0 0
      %5462 = vmatpush1.bf16.msra.mxu0 0
      %5463 = vmatprep.subr.bf16.mxu0 0
      %5464 = vmatpush1.bf16.msra.mxu0 0
      %5465 = vmatprep.subr.bf16.mxu0 0
      %5466 = vmatpush1.bf16.msra.mxu0 0
      %5467 = vmatprep.mubr.bf16.mxu0 0
      %5468 = vmatmul.mubr.bf16.gmra.mrb[0].mxu0 %v5340
      %v5469 = vpop.f32.mrb[0].mxu0
      %v5470 = vadd.f32 %v5314, %v5469
      %v5471 = vpop.f32.mrb[0].mxu0
      %v5472 = vpop.f32.mrb[0].mxu0
      %v5473 = vadd.f32 %v5314, %v5472
      %v5474 = vpop.f32.mrb[0].mxu0
      %5475 = vmatprep.mubr.bf16.mxu0 0
      %5476 = vmatmul.mubr.bf16.gmra.mrb[0].mxu0 %v5343
      %v5477 = vpop.f32.mrb[0].mxu0
      %v5478 = vadd.f32 %v5314, %v5477
      %v5479 = vpop.f32.mrb[0].mxu0
      %v5480 = vpop.f32.mrb[0].mxu0
      %v5481 = vadd.f32 %v5314, %v5480
      %v5482 = vpop.f32.mrb[0].mxu0
      %5483 = vmatprep.mubr.bf16.mxu0 0
      %5484 = vmatmul.mubr.bf16.gmra.mrb[0].mxu0 %v5346
      %v5485 = vpop.f32.mrb[0].mxu0
      %v5486 = vadd.f32 %v5314, %v5485
      %v5487 = vpop.f32.mrb[0].mxu0
      %v5488 = vpop.f32.mrb[0].mxu0
      %v5489 = vadd.f32 %v5314, %v5488
      %v5490 = vpop.f32.mrb[0].mxu0
      %5491 = vmatprep.mubr.bf16.mxu0 0
      %5492 = vmatmul.mubr.bf16.gmra.mrb[0].mxu0 %v5349
      %v5493 = vpop.f32.mrb[0].mxu0
      %v5494 = vadd.f32 %v5314, %v5493
      %v5495 = vpop.f32.mrb[0].mxu0
      %v5496 = vpop.f32.mrb[0].mxu0
      %v5497 = vadd.f32 %v5314, %v5496
      %v5498 = vpop.f32.mrb[0].mxu0
      %5499 = vmatprep.mubr.bf16.mxu0 0
      %5500 = vmatmul.mubr.bf16.gmra.mrb[0].mxu0 %v5352
      %v5501 = vpop.f32.mrb[0].mxu0
      %v5502 = vadd.f32 %v5314, %v5501
      %v5503 = vpop.f32.mrb[0].mxu0
      %v5504 = vpop.f32.mrb[0].mxu0
      %v5505 = vadd.f32 %v5314, %v5504
      %v5506 = vpop.f32.mrb[0].mxu0
      %5507 = vmatprep.mubr.bf16.mxu0 0
      %5508 = vmatmul.mubr.bf16.gmra.mrb[0].mxu0 %v5355
      %v5509 = vpop.f32.mrb[0].mxu0
      %v5510 = vadd.f32 %v5314, %v5509
      %v5511 = vpop.f32.mrb[0].mxu0
      %v5512 = vpop.f32.mrb[0].mxu0
      %v5513 = vadd.f32 %v5314, %v5512
      %v5514 = vpop.f32.mrb[0].mxu0
      %5515 = vmatprep.mubr.bf16.mxu0 0
      %5516 = vmatmul.mubr.bf16.gmra.mrb[0].mxu0 %v5358
      %v5517 = vpop.f32.mrb[0].mxu0
      %v5518 = vadd.f32 %v5314, %v5517
      %v5519 = vpop.f32.mrb[0].mxu0
      %v5520 = vpop.f32.mrb[0].mxu0
      %v5521 = vadd.f32 %v5314, %v5520
      %v5522 = vpop.f32.mrb[0].mxu0
      %5523 = vmatprep.mubr.bf16.mxu0 0
      %5524 = vmatmul.mubr.bf16.gmra.mrb[0].mxu0 %v5361
      %v5525 = vpop.f32.mrb[0].mxu0
      %v5526 = vadd.f32 %v5314, %v5525
      %v5527 = vpop.f32.mrb[0].mxu0
      %v5528 = vpop.f32.mrb[0].mxu0
      %v5529 = vadd.f32 %v5314, %v5528
      %v5530 = vpop.f32.mrb[0].mxu0
      %5531 = vmatprep.mubr.bf16.mxu0 0
      %5532 = vmatmul.mubr.bf16.gmra.mrb[0].mxu0 %v5364
      %v5533 = vpop.f32.mrb[0].mxu0
      %v5534 = vadd.f32 %v5314, %v5533
      %v5535 = vpop.f32.mrb[0].mxu0
      %v5536 = vpop.f32.mrb[0].mxu0
      %v5537 = vadd.f32 %v5314, %v5536
      %v5538 = vpop.f32.mrb[0].mxu0
      %5539 = vmatprep.mubr.bf16.mxu0 0
      %5540 = vmatmul.mubr.bf16.gmra.mrb[0].mxu0 %v5367
      %v5541 = vpop.f32.mrb[0].mxu0
      %v5542 = vadd.f32 %v5314, %v5541
      %v5543 = vpop.f32.mrb[0].mxu0
      %v5544 = vpop.f32.mrb[0].mxu0
      %v5545 = vadd.f32 %v5314, %v5544
      %v5546 = vpop.f32.mrb[0].mxu0
      %5547 = vmatprep.mubr.bf16.mxu0 0
      %5548 = vmatmul.mubr.bf16.gmra.mrb[0].mxu0 %v5370
      %v5549 = vpop.f32.mrb[0].mxu0
      %v5550 = vadd.f32 %v5314, %v5549
      %v5551 = vpop.f32.mrb[0].mxu0
      %v5552 = vpop.f32.mrb[0].mxu0
      %v5553 = vadd.f32 %v5314, %v5552
      %v5554 = vpop.f32.mrb[0].mxu0
      %5555 = vmatprep.mubr.bf16.mxu0 0
      %5556 = vmatmul.mubr.bf16.gmra.mrb[0].mxu0 %v5373
      %v5557 = vpop.f32.mrb[0].mxu0
      %v5558 = vadd.f32 %v5314, %v5557
      %v5559 = vpop.f32.mrb[0].mxu0
      %v5560 = vpop.f32.mrb[0].mxu0
      %v5561 = vadd.f32 %v5314, %v5560
      %v5562 = vpop.f32.mrb[0].mxu0
      %5563 = vmatprep.mubr.bf16.mxu0 0
      %5564 = vmatmul.mubr.bf16.gmra.mrb[0].mxu0 %v5376
      %v5565 = vpop.f32.mrb[0].mxu0
      %v5566 = vadd.f32 %v5314, %v5565
      %v5567 = vpop.f32.mrb[0].mxu0
      %v5568 = vpop.f32.mrb[0].mxu0
      %v5569 = vadd.f32 %v5314, %v5568
      %v5570 = vpop.f32.mrb[0].mxu0
      %5571 = vmatprep.mubr.bf16.mxu0 0
      %5572 = vmatmul.mubr.bf16.gmra.mrb[0].mxu0 %v5379
      %v5573 = vpop.f32.mrb[0].mxu0
      %v5574 = vadd.f32 %v5314, %v5573
      %v5575 = vpop.f32.mrb[0].mxu0
      %v5576 = vpop.f32.mrb[0].mxu0
      %v5577 = vadd.f32 %v5314, %v5576
      %v5578 = vpop.f32.mrb[0].mxu0
      %5579 = vmatprep.mubr.bf16.mxu0 0
      %5580 = vmatmul.mubr.bf16.gmra.mrb[0].mxu0 %v5382
      %v5581 = vpop.f32.mrb[0].mxu0
      %v5582 = vadd.f32 %v5314, %v5581
      %v5583 = vpop.f32.mrb[0].mxu0
      %v5584 = vpop.f32.mrb[0].mxu0
      %v5585 = vadd.f32 %v5314, %v5584
      %v5586 = vpop.f32.mrb[0].mxu0
      %5587 = vmatprep.mubr.bf16.mxu0 0
      %5588 = vmatmul.mubr.bf16.gmra.mrb[0].mxu0 %v5385
      %v5589 = vpop.f32.mrb[0].mxu0
      %v5590 = vadd.f32 %v5314, %v5589
      %v5591 = vpop.f32.mrb[0].mxu0
      %v5592 = vpop.f32.mrb[0].mxu0
      %v5593 = vadd.f32 %v5314, %v5592
      %v5594 = vpop.f32.mrb[0].mxu0
      %5595 = vmatprep.mubr.bf16.mxu0 0
      %5596 = vmatmul.mubr.bf16.gmra.mrb[0].mxu0 %v5388
      %v5597 = vpop.f32.mrb[0].mxu0
      %v5598 = vadd.f32 %v5314, %v5597
      %v5599 = vpop.f32.mrb[0].mxu0
      %v5600 = vpop.f32.mrb[0].mxu0
      %v5601 = vadd.f32 %v5314, %v5600
      %v5602 = vpop.f32.mrb[0].mxu0
      %5603 = vmatprep.mubr.bf16.mxu0 0
      %5604 = vmatmul.mubr.bf16.gmra.mrb[0].mxu0 %v5391
      %v5605 = vpop.f32.mrb[0].mxu0
      %v5606 = vadd.f32 %v5314, %v5605
      %v5607 = vpop.f32.mrb[0].mxu0
      %v5608 = vpop.f32.mrb[0].mxu0
      %v5609 = vadd.f32 %v5314, %v5608
      %v5610 = vpop.f32.mrb[0].mxu0
      %5611 = vmatprep.mubr.bf16.mxu0 0
      %5612 = vmatmul.mubr.bf16.gmra.mrb[0].mxu0 %v5394
      %v5613 = vpop.f32.mrb[0].mxu0
      %v5614 = vadd.f32 %v5314, %v5613
      %v5615 = vpop.f32.mrb[0].mxu0
      %v5616 = vpop.f32.mrb[0].mxu0
      %v5617 = vadd.f32 %v5314, %v5616
      %v5618 = vpop.f32.mrb[0].mxu0
      %5619 = vmatprep.mubr.bf16.mxu0 0
      %5620 = vmatmul.mubr.bf16.gmra.mrb[0].mxu0 %v5397
      %v5621 = vpop.f32.mrb[0].mxu0
      %v5622 = vadd.f32 %v5314, %v5621
      %v5623 = vpop.f32.mrb[0].mxu0
      %v5624 = vpop.f32.mrb[0].mxu0
      %v5625 = vadd.f32 %v5314, %v5624
      %v5626 = vpop.f32.mrb[0].mxu0
      %5627 = vmatprep.mubr.bf16.mxu0 0
      %5628 = vmatmul.mubr.bf16.gmra.mrb[0].mxu0 %v5400
      %v5629 = vpop.f32.mrb[0].mxu0
      %v5630 = vadd.f32 %v5314, %v5629
      %v5631 = vpop.f32.mrb[0].mxu0
      %v5632 = vpop.f32.mrb[0].mxu0
      %v5633 = vadd.f32 %v5314, %v5632
      %v5634 = vpop.f32.mrb[0].mxu0
      %5635 = vmatprep.mubr.bf16.mxu0 0
      %5636 = vmatmul.mubr.bf16.gmra.mrb[0].mxu0 %v5403
      %v5637 = vpop.f32.mrb[0].mxu0
      %v5638 = vadd.f32 %v5314, %v5637
      %v5639 = vpop.f32.mrb[0].mxu0
      %v5640 = vpop.f32.mrb[0].mxu0
      %v5641 = vadd.f32 %v5314, %v5640
      %v5642 = vpop.f32.mrb[0].mxu0
      %5643 = vmatprep.mubr.bf16.mxu0 0
      %5644 = vmatmul.mubr.bf16.gmra.mrb[0].mxu0 %v5406
      %v5645 = vpop.f32.mrb[0].mxu0
      %v5646 = vadd.f32 %v5314, %v5645
      %v5647 = vpop.f32.mrb[0].mxu0
      %v5648 = vpop.f32.mrb[0].mxu0
      %v5649 = vadd.f32 %v5314, %v5648
      %v5650 = vpop.f32.mrb[0].mxu0
      %5651 = vmatprep.mubr.bf16.mxu0 0
      %5652 = vmatmul.mubr.bf16.gmra.mrb[0].mxu0 %v5409
      %v5653 = vpop.f32.mrb[0].mxu0
      %v5654 = vadd.f32 %v5314, %v5653
      %v5655 = vpop.f32.mrb[0].mxu0
      %v5656 = vpop.f32.mrb[0].mxu0
      %v5657 = vadd.f32 %v5314, %v5656
      %v5658 = vpop.f32.mrb[0].mxu0
      %5659 = vmatprep.mubr.bf16.mxu0 0
      %5660 = vmatmul.mubr.bf16.gmra.mrb[0].mxu0 %v5412
      %v5661 = vpop.f32.mrb[0].mxu0
      %v5662 = vadd.f32 %v5314, %v5661
      %v5663 = vpop.f32.mrb[0].mxu0
      %v5664 = vpop.f32.mrb[0].mxu0
      %v5665 = vadd.f32 %v5314, %v5664
      %v5666 = vpop.f32.mrb[0].mxu0
      %5667 = vmatprep.mubr.bf16.mxu0 0
      %5668 = vmatmul.mubr.bf16.gmra.mrb[0].mxu0 %v5415
      %v5669 = vpop.f32.mrb[0].mxu0
      %v5670 = vadd.f32 %v5314, %v5669
      %v5671 = vpop.f32.mrb[0].mxu0
      %v5672 = vpop.f32.mrb[0].mxu0
      %v5673 = vadd.f32 %v5314, %v5672
      %v5674 = vpop.f32.mrb[0].mxu0
      %5675 = vmatprep.mubr.bf16.mxu0 0
      %5676 = vmatmul.mubr.bf16.gmra.mrb[0].mxu0 %v5418
      %v5677 = vpop.f32.mrb[0].mxu0
      %v5678 = vadd.f32 %v5314, %v5677
      %v5679 = vpop.f32.mrb[0].mxu0
      %v5680 = vpop.f32.mrb[0].mxu0
      %v5681 = vadd.f32 %v5314, %v5680
      %v5682 = vpop.f32.mrb[0].mxu0
      %5683 = vmatprep.mubr.bf16.mxu0 0
      %5684 = vmatmul.mubr.bf16.gmra.mrb[0].mxu0 %v5421
      %v5685 = vpop.f32.mrb[0].mxu0
      %v5686 = vadd.f32 %v5314, %v5685
      %v5687 = vpop.f32.mrb[0].mxu0
      %v5688 = vpop.f32.mrb[0].mxu0
      %v5689 = vadd.f32 %v5314, %v5688
      %v5690 = vpop.f32.mrb[0].mxu0
      %5691 = vmatprep.mubr.bf16.mxu0 0
      %5692 = vmatmul.mubr.bf16.gmra.mrb[0].mxu0 %v5424
      %v5693 = vpop.f32.mrb[0].mxu0
      %v5694 = vadd.f32 %v5314, %v5693
      %v5695 = vpop.f32.mrb[0].mxu0
      %v5696 = vpop.f32.mrb[0].mxu0
      %v5697 = vadd.f32 %v5314, %v5696
      %v5698 = vpop.f32.mrb[0].mxu0
      %5699 = vmatprep.mubr.bf16.mxu0 0
      %5700 = vmatmul.mubr.bf16.gmra.mrb[0].mxu0 %v5427
      %v5701 = vpop.f32.mrb[0].mxu0
      %v5702 = vadd.f32 %v5314, %v5701
      %v5703 = vpop.f32.mrb[0].mxu0
      %v5704 = vpop.f32.mrb[0].mxu0
      %v5705 = vadd.f32 %v5314, %v5704
      %v5706 = vpop.f32.mrb[0].mxu0
      %5707 = vmatprep.mubr.bf16.mxu0 0
      %5708 = vmatmul.mubr.bf16.gmra.mrb[0].mxu0 %v5430
      %v5709 = vpop.f32.mrb[0].mxu0
      %v5710 = vadd.f32 %v5314, %v5709
      %v5711 = vpop.f32.mrb[0].mxu0
      %v5712 = vpop.f32.mrb[0].mxu0
      %v5713 = vadd.f32 %v5314, %v5712
      %v5714 = vpop.f32.mrb[0].mxu0
      %5715 = vmatprep.mubr.bf16.mxu0 0
      %5716 = vmatmul.mubr.bf16.gmra.mrb[0].mxu0 %v5433
      %v5717 = vpop.f32.mrb[0].mxu0
      %v5718 = vadd.f32 %v5314, %v5717
      %v5719 = vpop.f32.mrb[0].mxu0
      %v5720 = vpop.f32.mrb[0].mxu0
      %v5721 = vadd.f32 %v5314, %v5720
      %v5722 = vpop.f32.mrb[0].mxu0
      %5723 = vdwg.mxu0
      %v5724 = vadd.f32 %v4622, %v5470
      %v5725 = vadd.f32 %v4623, %v5473
      %v5726 = vadd.f32 %v4624, %v5478
      %v5727 = vadd.f32 %v4625, %v5481
      %v5728 = vadd.f32 %v4626, %v5486
      %v5729 = vadd.f32 %v4627, %v5489
      %v5730 = vadd.f32 %v4628, %v5494
      %v5731 = vadd.f32 %v4629, %v5497
      %v5732 = vadd.f32 %v4630, %v5502
      %v5733 = vadd.f32 %v4631, %v5505
      %v5734 = vadd.f32 %v4632, %v5510
      %v5735 = vadd.f32 %v4633, %v5513
      %v5736 = vadd.f32 %v4634, %v5518
      %v5737 = vadd.f32 %v4635, %v5521
      %v5738 = vadd.f32 %v4636, %v5526
      %v5739 = vadd.f32 %v4637, %v5529
      %v5740 = vadd.f32 %v4638, %v5534
      %v5741 = vadd.f32 %v4639, %v5537
      %v5742 = vadd.f32 %v4640, %v5542
      %v5743 = vadd.f32 %v4641, %v5545
      %v5744 = vadd.f32 %v4642, %v5550
      %v5745 = vadd.f32 %v4643, %v5553
      %v5746 = vadd.f32 %v4644, %v5558
      %v5747 = vadd.f32 %v4645, %v5561
      %v5748 = vadd.f32 %v4646, %v5566
      %v5749 = vadd.f32 %v4647, %v5569
      %v5750 = vadd.f32 %v4648, %v5574
      %v5751 = vadd.f32 %v4649, %v5577
      %v5752 = vadd.f32 %v4650, %v5582
      %v5753 = vadd.f32 %v4651, %v5585
      %v5754 = vadd.f32 %v4652, %v5590
      %v5755 = vadd.f32 %v4653, %v5593
      %v5756 = vadd.f32 %v4654, %v5598
      %v5757 = vadd.f32 %v4655, %v5601
      %v5758 = vadd.f32 %v4656, %v5606
      %v5759 = vadd.f32 %v4657, %v5609
      %v5760 = vadd.f32 %v4658, %v5614
      %v5761 = vadd.f32 %v4659, %v5617
      %v5762 = vadd.f32 %v4660, %v5622
      %v5763 = vadd.f32 %v4661, %v5625
      %v5764 = vadd.f32 %v4662, %v5630
      %v5765 = vadd.f32 %v4663, %v5633
      %v5766 = vadd.f32 %v4664, %v5638
      %v5767 = vadd.f32 %v4665, %v5641
      %v5768 = vadd.f32 %v4666, %v5646
      %v5769 = vadd.f32 %v4667, %v5649
      %v5770 = vadd.f32 %v4668, %v5654
      %v5771 = vadd.f32 %v4669, %v5657
      %v5772 = vadd.f32 %v4670, %v5662
      %v5773 = vadd.f32 %v4671, %v5665
      %v5774 = vadd.f32 %v4672, %v5670
      %v5775 = vadd.f32 %v4673, %v5673
      %v5776 = vadd.f32 %v4674, %v5678
      %v5777 = vadd.f32 %v4675, %v5681
      %v5778 = vadd.f32 %v4676, %v5686
      %v5779 = vadd.f32 %v4677, %v5689
      %v5780 = vadd.f32 %v4678, %v5694
      %v5781 = vadd.f32 %v4679, %v5697
      %v5782 = vadd.f32 %v4680, %v5702
      %v5783 = vadd.f32 %v4681, %v5705
      %v5784 = vadd.f32 %v4682, %v5710
      %v5785 = vadd.f32 %v4683, %v5713
      %v5786 = vadd.f32 %v4684, %v5718
      %v5787 = vadd.f32 %v4685, %v5721
      %v5788 = vmax.f32 %v5724, 0.0
      %v5789 = vmax.f32 %v5725, 0.0
      %v5790 = vmax.f32 %v5726, 0.0
      %v5791 = vmax.f32 %v5727, 0.0
      %v5792 = vmax.f32 %v5728, 0.0
      %v5793 = vmax.f32 %v5729, 0.0
      %v5794 = vmax.f32 %v5730, 0.0
      %v5795 = vmax.f32 %v5731, 0.0
      %v5796 = vmax.f32 %v5732, 0.0
      %v5797 = vmax.f32 %v5733, 0.0
      %v5798 = vmax.f32 %v5734, 0.0
      %v5799 = vmax.f32 %v5735, 0.0
      %v5800 = vmax.f32 %v5736, 0.0
      %v5801 = vmax.f32 %v5737, 0.0
      %v5802 = vmax.f32 %v5738, 0.0
      %v5803 = vmax.f32 %v5739, 0.0
      %v5804 = vmax.f32 %v5740, 0.0
      %v5805 = vmax.f32 %v5741, 0.0
      %v5806 = vmax.f32 %v5742, 0.0
      %v5807 = vmax.f32 %v5743, 0.0
      %v5808 = vmax.f32 %v5744, 0.0
      %v5809 = vmax.f32 %v5745, 0.0
      %v5810 = vmax.f32 %v5746, 0.0
      %v5811 = vmax.f32 %v5747, 0.0
      %v5812 = vmax.f32 %v5748, 0.0
      %v5813 = vmax.f32 %v5749, 0.0
      %v5814 = vmax.f32 %v5750, 0.0
      %v5815 = vmax.f32 %v5751, 0.0
      %v5816 = vmax.f32 %v5752, 0.0
      %v5817 = vmax.f32 %v5753, 0.0
      %v5818 = vmax.f32 %v5754, 0.0
      %v5819 = vmax.f32 %v5755, 0.0
      %v5820 = vmax.f32 %v5756, 0.0
      %v5821 = vmax.f32 %v5757, 0.0
      %v5822 = vmax.f32 %v5758, 0.0
      %v5823 = vmax.f32 %v5759, 0.0
      %v5824 = vmax.f32 %v5760, 0.0
      %v5825 = vmax.f32 %v5761, 0.0
      %v5826 = vmax.f32 %v5762, 0.0
      %v5827 = vmax.f32 %v5763, 0.0
      %v5828 = vmax.f32 %v5764, 0.0
      %v5829 = vmax.f32 %v5765, 0.0
      %v5830 = vmax.f32 %v5766, 0.0
      %v5831 = vmax.f32 %v5767, 0.0
      %v5832 = vmax.f32 %v5768, 0.0
      %v5833 = vmax.f32 %v5769, 0.0
      %v5834 = vmax.f32 %v5770, 0.0
      %v5835 = vmax.f32 %v5771, 0.0
      %v5836 = vmax.f32 %v5772, 0.0
      %v5837 = vmax.f32 %v5773, 0.0
      %v5838 = vmax.f32 %v5774, 0.0
      %v5839 = vmax.f32 %v5775, 0.0
      %v5840 = vmax.f32 %v5776, 0.0
      %v5841 = vmax.f32 %v5777, 0.0
      %v5842 = vmax.f32 %v5778, 0.0
      %v5843 = vmax.f32 %v5779, 0.0
      %v5844 = vmax.f32 %v5780, 0.0
      %v5845 = vmax.f32 %v5781, 0.0
      %v5846 = vmax.f32 %v5782, 0.0
      %v5847 = vmax.f32 %v5783, 0.0
      %v5848 = vmax.f32 %v5784, 0.0
      %v5849 = vmax.f32 %v5785, 0.0
      %v5850 = vmax.f32 %v5786, 0.0
      %v5851 = vmax.f32 %v5787, 0.0
      %v5852 = vpack.c.bf16 %v5789, %v5788
      %v5853 = vpack.c.bf16 %v5791, %v5790
      %v5854 = vpack.c.bf16 %v5793, %v5792
      %v5855 = vpack.c.bf16 %v5795, %v5794
      %v5856 = vpack.c.bf16 %v5797, %v5796
      %v5857 = vpack.c.bf16 %v5799, %v5798
      %v5858 = vpack.c.bf16 %v5801, %v5800
      %v5859 = vpack.c.bf16 %v5803, %v5802
      %v5860 = vpack.c.bf16 %v5805, %v5804
      %v5861 = vpack.c.bf16 %v5807, %v5806
      %v5862 = vpack.c.bf16 %v5809, %v5808
      %v5863 = vpack.c.bf16 %v5811, %v5810
      %v5864 = vpack.c.bf16 %v5813, %v5812
      %v5865 = vpack.c.bf16 %v5815, %v5814
      %v5866 = vpack.c.bf16 %v5817, %v5816
      %v5867 = vpack.c.bf16 %v5819, %v5818
      %v5868 = vpack.c.bf16 %v5821, %v5820
      %v5869 = vpack.c.bf16 %v5823, %v5822
      %v5870 = vpack.c.bf16 %v5825, %v5824
      %v5871 = vpack.c.bf16 %v5827, %v5826
      %v5872 = vpack.c.bf16 %v5829, %v5828
      %v5873 = vpack.c.bf16 %v5831, %v5830
      %v5874 = vpack.c.bf16 %v5833, %v5832
      %v5875 = vpack.c.bf16 %v5835, %v5834
      %v5876 = vpack.c.bf16 %v5837, %v5836
      %v5877 = vpack.c.bf16 %v5839, %v5838
      %v5878 = vpack.c.bf16 %v5841, %v5840
      %v5879 = vpack.c.bf16 %v5843, %v5842
      %v5880 = vpack.c.bf16 %v5845, %v5844
      %v5881 = vpack.c.bf16 %v5847, %v5846
      %v5882 = vpack.c.bf16 %v5849, %v5848
      %v5883 = vpack.c.bf16 %v5851, %v5850
      %s5884 = scalar_lea.vmem %s3, 256
      %v5885 = vld [vmem:[%s5884] sm:$0xf]
      %v5886 = vld [vmem:[%s5884 + $0x4] sm:$0xf]
      %v5887 = vld [vmem:[%s5884 + $0x8] sm:$0xf]
      %v5888 = vld [vmem:[%s5884 + $0xc] sm:$0xf]
      %v5889 = vld [vmem:[%s5884 + $0x10] sm:$0xf]
      %v5890 = vld [vmem:[%s5884 + $0x14] sm:$0xf]
      %v5891 = vld [vmem:[%s5884 + $0x18] sm:$0xf]
      %v5892 = vld [vmem:[%s5884 + $0x1c] sm:$0xf]
      %v5893 = vld [vmem:[%s4 + $0x8] sm:$0x1]
      %v5894 = vlaneseq
      %v5895 = vshrl.u32 %v5894, 7
      %v5896 = vsub.s32 0, %v5895
      %v5897 = vrot.slane %v5893, %v5896
      %v5906 = vunpack.c.l.b16 %v5885
      %v5907 = vunpack.c.l.b16 %v5886
      %v5908 = vunpack.c.l.b16 %v5887
      %v5909 = vunpack.c.l.b16 %v5888
      %v5910 = vunpack.c.l.b16 %v5889
      %v5911 = vunpack.c.l.b16 %v5890
      %v5912 = vunpack.c.l.b16 %v5891
      %v5913 = vunpack.c.l.b16 %v5892
      %v5914 = vpack.c.b16 %v5907, %v5906
      %v5915 = vpack.c.b16 %v5909, %v5908
      %v5916 = vpack.c.b16 %v5911, %v5910
      %v5917 = vpack.c.b16 %v5913, %v5912
      %v5923 = vsel %vm1385, %v5852, 0
      %v5926 = vsel %vm1385, %v5853, 0
      %v5929 = vsel %vm1385, %v5854, 0
      %v5932 = vsel %vm1385, %v5855, 0
      %v5935 = vsel %vm1385, %v5856, 0
      %v5938 = vsel %vm1385, %v5857, 0
      %v5941 = vsel %vm1385, %v5858, 0
      %v5944 = vsel %vm1385, %v5859, 0
      %v5947 = vsel %vm1385, %v5860, 0
      %v5950 = vsel %vm1385, %v5861, 0
      %v5953 = vsel %vm1385, %v5862, 0
      %v5956 = vsel %vm1385, %v5863, 0
      %v5959 = vsel %vm1385, %v5864, 0
      %v5962 = vsel %vm1385, %v5865, 0
      %v5965 = vsel %vm1385, %v5866, 0
      %v5968 = vsel %vm1385, %v5867, 0
      %v5971 = vsel %vm1385, %v5868, 0
      %v5974 = vsel %vm1385, %v5869, 0
      %v5977 = vsel %vm1385, %v5870, 0
      %v5980 = vsel %vm1385, %v5871, 0
      %v5983 = vsel %vm1385, %v5872, 0
      %v5986 = vsel %vm1385, %v5873, 0
      %v5989 = vsel %vm1385, %v5874, 0
      %v5992 = vsel %vm1385, %v5875, 0
      %v5995 = vsel %vm1385, %v5876, 0
      %v5998 = vsel %vm1385, %v5877, 0
      %v6001 = vsel %vm1385, %v5878, 0
      %v6004 = vsel %vm1385, %v5879, 0
      %v6007 = vsel %vm1385, %v5880, 0
      %v6010 = vsel %vm1385, %v5881, 0
      %v6013 = vsel %vm1385, %v5882, 0
      %v6016 = vsel %vm1385, %v5883, 0
      %6018 = vmatprep.subr.bf16.mxu0 0
      %6019 = vmatpush1.bf16.msra.mxu0 %v5914
      %6020 = vmatprep.subr.bf16.mxu0 0
      %6021 = vmatpush1.bf16.msra.mxu0 %v5915
      %6022 = vmatprep.subr.bf16.mxu0 0
      %6023 = vmatpush1.bf16.msra.mxu0 %v5916
      %6024 = vmatprep.subr.bf16.mxu0 0
      %6025 = vmatpush1.bf16.msra.mxu0 %v5917
      %6026 = vmatprep.subr.bf16.mxu0 0
      %6027 = vmatpush1.bf16.msra.mxu0 0
      %6028 = vmatprep.subr.bf16.mxu0 0
      %6029 = vmatpush1.bf16.msra.mxu0 0
      %6030 = vmatprep.subr.bf16.mxu0 0
      %6031 = vmatpush1.bf16.msra.mxu0 0
      %6032 = vmatprep.subr.bf16.mxu0 0
      %6033 = vmatpush1.bf16.msra.mxu0 0
      %6034 = vmatprep.subr.bf16.mxu0 0
      %6035 = vmatpush1.bf16.msra.mxu0 0
      %6036 = vmatprep.subr.bf16.mxu0 0
      %6037 = vmatpush1.bf16.msra.mxu0 0
      %6038 = vmatprep.subr.bf16.mxu0 0
      %6039 = vmatpush1.bf16.msra.mxu0 0
      %6040 = vmatprep.subr.bf16.mxu0 0
      %6041 = vmatpush1.bf16.msra.mxu0 0
      %6042 = vmatprep.subr.bf16.mxu0 0
      %6043 = vmatpush1.bf16.msra.mxu0 0
      %6044 = vmatprep.subr.bf16.mxu0 0
      %6045 = vmatpush1.bf16.msra.mxu0 0
      %6046 = vmatprep.subr.bf16.mxu0 0
      %6047 = vmatpush1.bf16.msra.mxu0 0
      %6048 = vmatprep.subr.bf16.mxu0 0
      %6049 = vmatpush1.bf16.msra.mxu0 0
      %6050 = vmatprep.mubr.bf16.mxu0 0
      %6051 = vmatmul.mubr.bf16.gmra.mrb[0].mxu0 %v5923
      %v6052 = vpop.f32.mrb[0].mxu0
      %v6053 = vadd.f32 %v5897, %v6052
      %v6054 = vpop.f32.mrb[0].mxu0
      %v6055 = vpop.f32.mrb[0].mxu0
      %v6056 = vadd.f32 %v5897, %v6055
      %v6057 = vpop.f32.mrb[0].mxu0
      %6058 = vmatprep.mubr.bf16.mxu0 0
      %6059 = vmatmul.mubr.bf16.gmra.mrb[0].mxu0 %v5926
      %v6060 = vpop.f32.mrb[0].mxu0
      %v6061 = vadd.f32 %v5897, %v6060
      %v6062 = vpop.f32.mrb[0].mxu0
      %v6063 = vpop.f32.mrb[0].mxu0
      %v6064 = vadd.f32 %v5897, %v6063
      %v6065 = vpop.f32.mrb[0].mxu0
      %6066 = vmatprep.mubr.bf16.mxu0 0
      %6067 = vmatmul.mubr.bf16.gmra.mrb[0].mxu0 %v5929
      %v6068 = vpop.f32.mrb[0].mxu0
      %v6069 = vadd.f32 %v5897, %v6068
      %v6070 = vpop.f32.mrb[0].mxu0
      %v6071 = vpop.f32.mrb[0].mxu0
      %v6072 = vadd.f32 %v5897, %v6071
      %v6073 = vpop.f32.mrb[0].mxu0
      %6074 = vmatprep.mubr.bf16.mxu0 0
      %6075 = vmatmul.mubr.bf16.gmra.mrb[0].mxu0 %v5932
      %v6076 = vpop.f32.mrb[0].mxu0
      %v6077 = vadd.f32 %v5897, %v6076
      %v6078 = vpop.f32.mrb[0].mxu0
      %v6079 = vpop.f32.mrb[0].mxu0
      %v6080 = vadd.f32 %v5897, %v6079
      %v6081 = vpop.f32.mrb[0].mxu0
      %6082 = vmatprep.mubr.bf16.mxu0 0
      %6083 = vmatmul.mubr.bf16.gmra.mrb[0].mxu0 %v5935
      %v6084 = vpop.f32.mrb[0].mxu0
      %v6085 = vadd.f32 %v5897, %v6084
      %v6086 = vpop.f32.mrb[0].mxu0
      %v6087 = vpop.f32.mrb[0].mxu0
      %v6088 = vadd.f32 %v5897, %v6087
      %v6089 = vpop.f32.mrb[0].mxu0
      %6090 = vmatprep.mubr.bf16.mxu0 0
      %6091 = vmatmul.mubr.bf16.gmra.mrb[0].mxu0 %v5938
      %v6092 = vpop.f32.mrb[0].mxu0
      %v6093 = vadd.f32 %v5897, %v6092
      %v6094 = vpop.f32.mrb[0].mxu0
      %v6095 = vpop.f32.mrb[0].mxu0
      %v6096 = vadd.f32 %v5897, %v6095
      %v6097 = vpop.f32.mrb[0].mxu0
      %6098 = vmatprep.mubr.bf16.mxu0 0
      %6099 = vmatmul.mubr.bf16.gmra.mrb[0].mxu0 %v5941
      %v6100 = vpop.f32.mrb[0].mxu0
      %v6101 = vadd.f32 %v5897, %v6100
      %v6102 = vpop.f32.mrb[0].mxu0
      %v6103 = vpop.f32.mrb[0].mxu0
      %v6104 = vadd.f32 %v5897, %v6103
      %v6105 = vpop.f32.mrb[0].mxu0
      %6106 = vmatprep.mubr.bf16.mxu0 0
      %6107 = vmatmul.mubr.bf16.gmra.mrb[0].mxu0 %v5944
      %v6108 = vpop.f32.mrb[0].mxu0
      %v6109 = vadd.f32 %v5897, %v6108
      %v6110 = vpop.f32.mrb[0].mxu0
      %v6111 = vpop.f32.mrb[0].mxu0
      %v6112 = vadd.f32 %v5897, %v6111
      %v6113 = vpop.f32.mrb[0].mxu0
      %6114 = vmatprep.mubr.bf16.mxu0 0
      %6115 = vmatmul.mubr.bf16.gmra.mrb[0].mxu0 %v5947
      %v6116 = vpop.f32.mrb[0].mxu0
      %v6117 = vadd.f32 %v5897, %v6116
      %v6118 = vpop.f32.mrb[0].mxu0
      %v6119 = vpop.f32.mrb[0].mxu0
      %v6120 = vadd.f32 %v5897, %v6119
      %v6121 = vpop.f32.mrb[0].mxu0
      %6122 = vmatprep.mubr.bf16.mxu0 0
      %6123 = vmatmul.mubr.bf16.gmra.mrb[0].mxu0 %v5950
      %v6124 = vpop.f32.mrb[0].mxu0
      %v6125 = vadd.f32 %v5897, %v6124
      %v6126 = vpop.f32.mrb[0].mxu0
      %v6127 = vpop.f32.mrb[0].mxu0
      %v6128 = vadd.f32 %v5897, %v6127
      %v6129 = vpop.f32.mrb[0].mxu0
      %6130 = vmatprep.mubr.bf16.mxu0 0
      %6131 = vmatmul.mubr.bf16.gmra.mrb[0].mxu0 %v5953
      %v6132 = vpop.f32.mrb[0].mxu0
      %v6133 = vadd.f32 %v5897, %v6132
      %v6134 = vpop.f32.mrb[0].mxu0
      %v6135 = vpop.f32.mrb[0].mxu0
      %v6136 = vadd.f32 %v5897, %v6135
      %v6137 = vpop.f32.mrb[0].mxu0
      %6138 = vmatprep.mubr.bf16.mxu0 0
      %6139 = vmatmul.mubr.bf16.gmra.mrb[0].mxu0 %v5956
      %v6140 = vpop.f32.mrb[0].mxu0
      %v6141 = vadd.f32 %v5897, %v6140
      %v6142 = vpop.f32.mrb[0].mxu0
      %v6143 = vpop.f32.mrb[0].mxu0
      %v6144 = vadd.f32 %v5897, %v6143
      %v6145 = vpop.f32.mrb[0].mxu0
      %6146 = vmatprep.mubr.bf16.mxu0 0
      %6147 = vmatmul.mubr.bf16.gmra.mrb[0].mxu0 %v5959
      %v6148 = vpop.f32.mrb[0].mxu0
      %v6149 = vadd.f32 %v5897, %v6148
      %v6150 = vpop.f32.mrb[0].mxu0
      %v6151 = vpop.f32.mrb[0].mxu0
      %v6152 = vadd.f32 %v5897, %v6151
      %v6153 = vpop.f32.mrb[0].mxu0
      %6154 = vmatprep.mubr.bf16.mxu0 0
      %6155 = vmatmul.mubr.bf16.gmra.mrb[0].mxu0 %v5962
      %v6156 = vpop.f32.mrb[0].mxu0
      %v6157 = vadd.f32 %v5897, %v6156
      %v6158 = vpop.f32.mrb[0].mxu0
      %v6159 = vpop.f32.mrb[0].mxu0
      %v6160 = vadd.f32 %v5897, %v6159
      %v6161 = vpop.f32.mrb[0].mxu0
      %6162 = vmatprep.mubr.bf16.mxu0 0
      %6163 = vmatmul.mubr.bf16.gmra.mrb[0].mxu0 %v5965
      %v6164 = vpop.f32.mrb[0].mxu0
      %v6165 = vadd.f32 %v5897, %v6164
      %v6166 = vpop.f32.mrb[0].mxu0
      %v6167 = vpop.f32.mrb[0].mxu0
      %v6168 = vadd.f32 %v5897, %v6167
      %v6169 = vpop.f32.mrb[0].mxu0
      %6170 = vmatprep.mubr.bf16.mxu0 0
      %6171 = vmatmul.mubr.bf16.gmra.mrb[0].mxu0 %v5968
      %v6172 = vpop.f32.mrb[0].mxu0
      %v6173 = vadd.f32 %v5897, %v6172
      %v6174 = vpop.f32.mrb[0].mxu0
      %v6175 = vpop.f32.mrb[0].mxu0
      %v6176 = vadd.f32 %v5897, %v6175
      %v6177 = vpop.f32.mrb[0].mxu0
      %6178 = vmatprep.mubr.bf16.mxu0 0
      %6179 = vmatmul.mubr.bf16.gmra.mrb[0].mxu0 %v5971
      %v6180 = vpop.f32.mrb[0].mxu0
      %v6181 = vadd.f32 %v5897, %v6180
      %v6182 = vpop.f32.mrb[0].mxu0
      %v6183 = vpop.f32.mrb[0].mxu0
      %v6184 = vadd.f32 %v5897, %v6183
      %v6185 = vpop.f32.mrb[0].mxu0
      %6186 = vmatprep.mubr.bf16.mxu0 0
      %6187 = vmatmul.mubr.bf16.gmra.mrb[0].mxu0 %v5974
      %v6188 = vpop.f32.mrb[0].mxu0
      %v6189 = vadd.f32 %v5897, %v6188
      %v6190 = vpop.f32.mrb[0].mxu0
      %v6191 = vpop.f32.mrb[0].mxu0
      %v6192 = vadd.f32 %v5897, %v6191
      %v6193 = vpop.f32.mrb[0].mxu0
      %6194 = vmatprep.mubr.bf16.mxu0 0
      %6195 = vmatmul.mubr.bf16.gmra.mrb[0].mxu0 %v5977
      %v6196 = vpop.f32.mrb[0].mxu0
      %v6197 = vadd.f32 %v5897, %v6196
      %v6198 = vpop.f32.mrb[0].mxu0
      %v6199 = vpop.f32.mrb[0].mxu0
      %v6200 = vadd.f32 %v5897, %v6199
      %v6201 = vpop.f32.mrb[0].mxu0
      %6202 = vmatprep.mubr.bf16.mxu0 0
      %6203 = vmatmul.mubr.bf16.gmra.mrb[0].mxu0 %v5980
      %v6204 = vpop.f32.mrb[0].mxu0
      %v6205 = vadd.f32 %v5897, %v6204
      %v6206 = vpop.f32.mrb[0].mxu0
      %v6207 = vpop.f32.mrb[0].mxu0
      %v6208 = vadd.f32 %v5897, %v6207
      %v6209 = vpop.f32.mrb[0].mxu0
      %6210 = vmatprep.mubr.bf16.mxu0 0
      %6211 = vmatmul.mubr.bf16.gmra.mrb[0].mxu0 %v5983
      %v6212 = vpop.f32.mrb[0].mxu0
      %v6213 = vadd.f32 %v5897, %v6212
      %v6214 = vpop.f32.mrb[0].mxu0
      %v6215 = vpop.f32.mrb[0].mxu0
      %v6216 = vadd.f32 %v5897, %v6215
      %v6217 = vpop.f32.mrb[0].mxu0
      %6218 = vmatprep.mubr.bf16.mxu0 0
      %6219 = vmatmul.mubr.bf16.gmra.mrb[0].mxu0 %v5986
      %v6220 = vpop.f32.mrb[0].mxu0
      %v6221 = vadd.f32 %v5897, %v6220
      %v6222 = vpop.f32.mrb[0].mxu0
      %v6223 = vpop.f32.mrb[0].mxu0
      %v6224 = vadd.f32 %v5897, %v6223
      %v6225 = vpop.f32.mrb[0].mxu0
      %6226 = vmatprep.mubr.bf16.mxu0 0
      %6227 = vmatmul.mubr.bf16.gmra.mrb[0].mxu0 %v5989
      %v6228 = vpop.f32.mrb[0].mxu0
      %v6229 = vadd.f32 %v5897, %v6228
      %v6230 = vpop.f32.mrb[0].mxu0
      %v6231 = vpop.f32.mrb[0].mxu0
      %v6232 = vadd.f32 %v5897, %v6231
      %v6233 = vpop.f32.mrb[0].mxu0
      %6234 = vmatprep.mubr.bf16.mxu0 0
      %6235 = vmatmul.mubr.bf16.gmra.mrb[0].mxu0 %v5992
      %v6236 = vpop.f32.mrb[0].mxu0
      %v6237 = vadd.f32 %v5897, %v6236
      %v6238 = vpop.f32.mrb[0].mxu0
      %v6239 = vpop.f32.mrb[0].mxu0
      %v6240 = vadd.f32 %v5897, %v6239
      %v6241 = vpop.f32.mrb[0].mxu0
      %6242 = vmatprep.mubr.bf16.mxu0 0
      %6243 = vmatmul.mubr.bf16.gmra.mrb[0].mxu0 %v5995
      %v6244 = vpop.f32.mrb[0].mxu0
      %v6245 = vadd.f32 %v5897, %v6244
      %v6246 = vpop.f32.mrb[0].mxu0
      %v6247 = vpop.f32.mrb[0].mxu0
      %v6248 = vadd.f32 %v5897, %v6247
      %v6249 = vpop.f32.mrb[0].mxu0
      %6250 = vmatprep.mubr.bf16.mxu0 0
      %6251 = vmatmul.mubr.bf16.gmra.mrb[0].mxu0 %v5998
      %v6252 = vpop.f32.mrb[0].mxu0
      %v6253 = vadd.f32 %v5897, %v6252
      %v6254 = vpop.f32.mrb[0].mxu0
      %v6255 = vpop.f32.mrb[0].mxu0
      %v6256 = vadd.f32 %v5897, %v6255
      %v6257 = vpop.f32.mrb[0].mxu0
      %6258 = vmatprep.mubr.bf16.mxu0 0
      %6259 = vmatmul.mubr.bf16.gmra.mrb[0].mxu0 %v6001
      %v6260 = vpop.f32.mrb[0].mxu0
      %v6261 = vadd.f32 %v5897, %v6260
      %v6262 = vpop.f32.mrb[0].mxu0
      %v6263 = vpop.f32.mrb[0].mxu0
      %v6264 = vadd.f32 %v5897, %v6263
      %v6265 = vpop.f32.mrb[0].mxu0
      %6266 = vmatprep.mubr.bf16.mxu0 0
      %6267 = vmatmul.mubr.bf16.gmra.mrb[0].mxu0 %v6004
      %v6268 = vpop.f32.mrb[0].mxu0
      %v6269 = vadd.f32 %v5897, %v6268
      %v6270 = vpop.f32.mrb[0].mxu0
      %v6271 = vpop.f32.mrb[0].mxu0
      %v6272 = vadd.f32 %v5897, %v6271
      %v6273 = vpop.f32.mrb[0].mxu0
      %6274 = vmatprep.mubr.bf16.mxu0 0
      %6275 = vmatmul.mubr.bf16.gmra.mrb[0].mxu0 %v6007
      %v6276 = vpop.f32.mrb[0].mxu0
      %v6277 = vadd.f32 %v5897, %v6276
      %v6278 = vpop.f32.mrb[0].mxu0
      %v6279 = vpop.f32.mrb[0].mxu0
      %v6280 = vadd.f32 %v5897, %v6279
      %v6281 = vpop.f32.mrb[0].mxu0
      %6282 = vmatprep.mubr.bf16.mxu0 0
      %6283 = vmatmul.mubr.bf16.gmra.mrb[0].mxu0 %v6010
      %v6284 = vpop.f32.mrb[0].mxu0
      %v6285 = vadd.f32 %v5897, %v6284
      %v6286 = vpop.f32.mrb[0].mxu0
      %v6287 = vpop.f32.mrb[0].mxu0
      %v6288 = vadd.f32 %v5897, %v6287
      %v6289 = vpop.f32.mrb[0].mxu0
      %6290 = vmatprep.mubr.bf16.mxu0 0
      %6291 = vmatmul.mubr.bf16.gmra.mrb[0].mxu0 %v6013
      %v6292 = vpop.f32.mrb[0].mxu0
      %v6293 = vadd.f32 %v5897, %v6292
      %v6294 = vpop.f32.mrb[0].mxu0
      %v6295 = vpop.f32.mrb[0].mxu0
      %v6296 = vadd.f32 %v5897, %v6295
      %v6297 = vpop.f32.mrb[0].mxu0
      %6298 = vmatprep.mubr.bf16.mxu0 0
      %6299 = vmatmul.mubr.bf16.gmra.mrb[0].mxu0 %v6016
      %v6300 = vpop.f32.mrb[0].mxu0
      %v6301 = vadd.f32 %v5897, %v6300
      %v6302 = vpop.f32.mrb[0].mxu0
      %v6303 = vpop.f32.mrb[0].mxu0
      %v6304 = vadd.f32 %v5897, %v6303
      %v6305 = vpop.f32.mrb[0].mxu0
      %6306 = vdwg.mxu0
      %v6307 = vmax.f32 %v6053, 0.0
      %v6308 = vmax.f32 %v6056, 0.0
      %v6309 = vmax.f32 %v6061, 0.0
      %v6310 = vmax.f32 %v6064, 0.0
      %v6311 = vmax.f32 %v6069, 0.0
      %v6312 = vmax.f32 %v6072, 0.0
      %v6313 = vmax.f32 %v6077, 0.0
      %v6314 = vmax.f32 %v6080, 0.0
      %v6315 = vmax.f32 %v6085, 0.0
      %v6316 = vmax.f32 %v6088, 0.0
      %v6317 = vmax.f32 %v6093, 0.0
      %v6318 = vmax.f32 %v6096, 0.0
      %v6319 = vmax.f32 %v6101, 0.0
      %v6320 = vmax.f32 %v6104, 0.0
      %v6321 = vmax.f32 %v6109, 0.0
      %v6322 = vmax.f32 %v6112, 0.0
      %v6323 = vmax.f32 %v6117, 0.0
      %v6324 = vmax.f32 %v6120, 0.0
      %v6325 = vmax.f32 %v6125, 0.0
      %v6326 = vmax.f32 %v6128, 0.0
      %v6327 = vmax.f32 %v6133, 0.0
      %v6328 = vmax.f32 %v6136, 0.0
      %v6329 = vmax.f32 %v6141, 0.0
      %v6330 = vmax.f32 %v6144, 0.0
      %v6331 = vmax.f32 %v6149, 0.0
      %v6332 = vmax.f32 %v6152, 0.0
      %v6333 = vmax.f32 %v6157, 0.0
      %v6334 = vmax.f32 %v6160, 0.0
      %v6335 = vmax.f32 %v6165, 0.0
      %v6336 = vmax.f32 %v6168, 0.0
      %v6337 = vmax.f32 %v6173, 0.0
      %v6338 = vmax.f32 %v6176, 0.0
      %v6339 = vmax.f32 %v6181, 0.0
      %v6340 = vmax.f32 %v6184, 0.0
      %v6341 = vmax.f32 %v6189, 0.0
      %v6342 = vmax.f32 %v6192, 0.0
      %v6343 = vmax.f32 %v6197, 0.0
      %v6344 = vmax.f32 %v6200, 0.0
      %v6345 = vmax.f32 %v6205, 0.0
      %v6346 = vmax.f32 %v6208, 0.0
      %v6347 = vmax.f32 %v6213, 0.0
      %v6348 = vmax.f32 %v6216, 0.0
      %v6349 = vmax.f32 %v6221, 0.0
      %v6350 = vmax.f32 %v6224, 0.0
      %v6351 = vmax.f32 %v6229, 0.0
      %v6352 = vmax.f32 %v6232, 0.0
      %v6353 = vmax.f32 %v6237, 0.0
      %v6354 = vmax.f32 %v6240, 0.0
      %v6355 = vmax.f32 %v6245, 0.0
      %v6356 = vmax.f32 %v6248, 0.0
      %v6357 = vmax.f32 %v6253, 0.0
      %v6358 = vmax.f32 %v6256, 0.0
      %v6359 = vmax.f32 %v6261, 0.0
      %v6360 = vmax.f32 %v6264, 0.0
      %v6361 = vmax.f32 %v6269, 0.0
      %v6362 = vmax.f32 %v6272, 0.0
      %v6363 = vmax.f32 %v6277, 0.0
      %v6364 = vmax.f32 %v6280, 0.0
      %v6365 = vmax.f32 %v6285, 0.0
      %v6366 = vmax.f32 %v6288, 0.0
      %v6367 = vmax.f32 %v6293, 0.0
      %v6368 = vmax.f32 %v6296, 0.0
      %v6369 = vmax.f32 %v6301, 0.0
      %v6370 = vmax.f32 %v6304, 0.0
      %v6371 = vpack.c.bf16 %v6308, %v6307
      %v6372 = vpack.c.bf16 %v6310, %v6309
      %v6373 = vpack.c.bf16 %v6312, %v6311
      %v6374 = vpack.c.bf16 %v6314, %v6313
      %v6375 = vpack.c.bf16 %v6316, %v6315
      %v6376 = vpack.c.bf16 %v6318, %v6317
      %v6377 = vpack.c.bf16 %v6320, %v6319
      %v6378 = vpack.c.bf16 %v6322, %v6321
      %v6379 = vpack.c.bf16 %v6324, %v6323
      %v6380 = vpack.c.bf16 %v6326, %v6325
      %v6381 = vpack.c.bf16 %v6328, %v6327
      %v6382 = vpack.c.bf16 %v6330, %v6329
      %v6383 = vpack.c.bf16 %v6332, %v6331
      %v6384 = vpack.c.bf16 %v6334, %v6333
      %v6385 = vpack.c.bf16 %v6336, %v6335
      %v6386 = vpack.c.bf16 %v6338, %v6337
      %v6387 = vpack.c.bf16 %v6340, %v6339
      %v6388 = vpack.c.bf16 %v6342, %v6341
      %v6389 = vpack.c.bf16 %v6344, %v6343
      %v6390 = vpack.c.bf16 %v6346, %v6345
      %v6391 = vpack.c.bf16 %v6348, %v6347
      %v6392 = vpack.c.bf16 %v6350, %v6349
      %v6393 = vpack.c.bf16 %v6352, %v6351
      %v6394 = vpack.c.bf16 %v6354, %v6353
      %v6395 = vpack.c.bf16 %v6356, %v6355
      %v6396 = vpack.c.bf16 %v6358, %v6357
      %v6397 = vpack.c.bf16 %v6360, %v6359
      %v6398 = vpack.c.bf16 %v6362, %v6361
      %v6399 = vpack.c.bf16 %v6364, %v6363
      %v6400 = vpack.c.bf16 %v6366, %v6365
      %v6401 = vpack.c.bf16 %v6368, %v6367
      %v6402 = vpack.c.bf16 %v6370, %v6369
      %s6403 = scalar_lea.vmem %s3, 288
      %v6404 = vld [vmem:[%s6403] sm:$0xf]
      %v6405 = vld [vmem:[%s6403 + $0x4] sm:$0xf]
      %v6406 = vld [vmem:[%s6403 + $0x8] sm:$0xf]
      %v6407 = vld [vmem:[%s6403 + $0xc] sm:$0xf]
      %v6408 = vld [vmem:[%s6403 + $0x10] sm:$0xf]
      %v6409 = vld [vmem:[%s6403 + $0x14] sm:$0xf]
      %v6410 = vld [vmem:[%s6403 + $0x18] sm:$0xf]
      %v6411 = vld [vmem:[%s6403 + $0x1c] sm:$0xf]
      %v6412 = vld [vmem:[%s4 + $0x9] sm:$0x1]
      %v6413 = vlaneseq
      %v6414 = vshrl.u32 %v6413, 7
      %v6415 = vsub.s32 0, %v6414
      %v6416 = vrot.slane %v6412, %v6415
      %v6425 = vunpack.c.l.b16 %v6404
      %v6426 = vunpack.c.l.b16 %v6405
      %v6427 = vunpack.c.l.b16 %v6406
      %v6428 = vunpack.c.l.b16 %v6407
      %v6429 = vunpack.c.l.b16 %v6408
      %v6430 = vunpack.c.l.b16 %v6409
      %v6431 = vunpack.c.l.b16 %v6410
      %v6432 = vunpack.c.l.b16 %v6411
      %v6433 = vpack.c.b16 %v6426, %v6425
      %v6434 = vpack.c.b16 %v6428, %v6427
      %v6435 = vpack.c.b16 %v6430, %v6429
      %v6436 = vpack.c.b16 %v6432, %v6431
      %v6442 = vsel %vm1385, %v6371, 0
      %v6445 = vsel %vm1385, %v6372, 0
      %v6448 = vsel %vm1385, %v6373, 0
      %v6451 = vsel %vm1385, %v6374, 0
      %v6454 = vsel %vm1385, %v6375, 0
      %v6457 = vsel %vm1385, %v6376, 0
      %v6460 = vsel %vm1385, %v6377, 0
      %v6463 = vsel %vm1385, %v6378, 0
      %v6466 = vsel %vm1385, %v6379, 0
      %v6469 = vsel %vm1385, %v6380, 0
      %v6472 = vsel %vm1385, %v6381, 0
      %v6475 = vsel %vm1385, %v6382, 0
      %v6478 = vsel %vm1385, %v6383, 0
      %v6481 = vsel %vm1385, %v6384, 0
      %v6484 = vsel %vm1385, %v6385, 0
      %v6487 = vsel %vm1385, %v6386, 0
      %v6490 = vsel %vm1385, %v6387, 0
      %v6493 = vsel %vm1385, %v6388, 0
      %v6496 = vsel %vm1385, %v6389, 0
      %v6499 = vsel %vm1385, %v6390, 0
      %v6502 = vsel %vm1385, %v6391, 0
      %v6505 = vsel %vm1385, %v6392, 0
      %v6508 = vsel %vm1385, %v6393, 0
      %v6511 = vsel %vm1385, %v6394, 0
      %v6514 = vsel %vm1385, %v6395, 0
      %v6517 = vsel %vm1385, %v6396, 0
      %v6520 = vsel %vm1385, %v6397, 0
      %v6523 = vsel %vm1385, %v6398, 0
      %v6526 = vsel %vm1385, %v6399, 0
      %v6529 = vsel %vm1385, %v6400, 0
      %v6532 = vsel %vm1385, %v6401, 0
      %v6535 = vsel %vm1385, %v6402, 0
      %6537 = vmatprep.subr.bf16.mxu0 0
      %6538 = vmatpush1.bf16.msra.mxu0 %v6433
      %6539 = vmatprep.subr.bf16.mxu0 0
      %6540 = vmatpush1.bf16.msra.mxu0 %v6434
      %6541 = vmatprep.subr.bf16.mxu0 0
      %6542 = vmatpush1.bf16.msra.mxu0 %v6435
      %6543 = vmatprep.subr.bf16.mxu0 0
      %6544 = vmatpush1.bf16.msra.mxu0 %v6436
      %6545 = vmatprep.subr.bf16.mxu0 0
      %6546 = vmatpush1.bf16.msra.mxu0 0
      %6547 = vmatprep.subr.bf16.mxu0 0
      %6548 = vmatpush1.bf16.msra.mxu0 0
      %6549 = vmatprep.subr.bf16.mxu0 0
      %6550 = vmatpush1.bf16.msra.mxu0 0
      %6551 = vmatprep.subr.bf16.mxu0 0
      %6552 = vmatpush1.bf16.msra.mxu0 0
      %6553 = vmatprep.subr.bf16.mxu0 0
      %6554 = vmatpush1.bf16.msra.mxu0 0
      %6555 = vmatprep.subr.bf16.mxu0 0
      %6556 = vmatpush1.bf16.msra.mxu0 0
      %6557 = vmatprep.subr.bf16.mxu0 0
      %6558 = vmatpush1.bf16.msra.mxu0 0
      %6559 = vmatprep.subr.bf16.mxu0 0
      %6560 = vmatpush1.bf16.msra.mxu0 0
      %6561 = vmatprep.subr.bf16.mxu0 0
      %6562 = vmatpush1.bf16.msra.mxu0 0
      %6563 = vmatprep.subr.bf16.mxu0 0
      %6564 = vmatpush1.bf16.msra.mxu0 0
      %6565 = vmatprep.subr.bf16.mxu0 0
      %6566 = vmatpush1.bf16.msra.mxu0 0
      %6567 = vmatprep.subr.bf16.mxu0 0
      %6568 = vmatpush1.bf16.msra.mxu0 0
      %6569 = vmatprep.mubr.bf16.mxu0 0
      %6570 = vmatmul.mubr.bf16.gmra.mrb[0].mxu0 %v6442
      %v6571 = vpop.f32.mrb[0].mxu0
      %v6572 = vadd.f32 %v6416, %v6571
      %v6573 = vpop.f32.mrb[0].mxu0
      %v6574 = vpop.f32.mrb[0].mxu0
      %v6575 = vadd.f32 %v6416, %v6574
      %v6576 = vpop.f32.mrb[0].mxu0
      %6577 = vmatprep.mubr.bf16.mxu0 0
      %6578 = vmatmul.mubr.bf16.gmra.mrb[0].mxu0 %v6445
      %v6579 = vpop.f32.mrb[0].mxu0
      %v6580 = vadd.f32 %v6416, %v6579
      %v6581 = vpop.f32.mrb[0].mxu0
      %v6582 = vpop.f32.mrb[0].mxu0
      %v6583 = vadd.f32 %v6416, %v6582
      %v6584 = vpop.f32.mrb[0].mxu0
      %6585 = vmatprep.mubr.bf16.mxu0 0
      %6586 = vmatmul.mubr.bf16.gmra.mrb[0].mxu0 %v6448
      %v6587 = vpop.f32.mrb[0].mxu0
      %v6588 = vadd.f32 %v6416, %v6587
      %v6589 = vpop.f32.mrb[0].mxu0
      %v6590 = vpop.f32.mrb[0].mxu0
      %v6591 = vadd.f32 %v6416, %v6590
      %v6592 = vpop.f32.mrb[0].mxu0
      %6593 = vmatprep.mubr.bf16.mxu0 0
      %6594 = vmatmul.mubr.bf16.gmra.mrb[0].mxu0 %v6451
      %v6595 = vpop.f32.mrb[0].mxu0
      %v6596 = vadd.f32 %v6416, %v6595
      %v6597 = vpop.f32.mrb[0].mxu0
      %v6598 = vpop.f32.mrb[0].mxu0
      %v6599 = vadd.f32 %v6416, %v6598
      %v6600 = vpop.f32.mrb[0].mxu0
      %6601 = vmatprep.mubr.bf16.mxu0 0
      %6602 = vmatmul.mubr.bf16.gmra.mrb[0].mxu0 %v6454
      %v6603 = vpop.f32.mrb[0].mxu0
      %v6604 = vadd.f32 %v6416, %v6603
      %v6605 = vpop.f32.mrb[0].mxu0
      %v6606 = vpop.f32.mrb[0].mxu0
      %v6607 = vadd.f32 %v6416, %v6606
      %v6608 = vpop.f32.mrb[0].mxu0
      %6609 = vmatprep.mubr.bf16.mxu0 0
      %6610 = vmatmul.mubr.bf16.gmra.mrb[0].mxu0 %v6457
      %v6611 = vpop.f32.mrb[0].mxu0
      %v6612 = vadd.f32 %v6416, %v6611
      %v6613 = vpop.f32.mrb[0].mxu0
      %v6614 = vpop.f32.mrb[0].mxu0
      %v6615 = vadd.f32 %v6416, %v6614
      %v6616 = vpop.f32.mrb[0].mxu0
      %6617 = vmatprep.mubr.bf16.mxu0 0
      %6618 = vmatmul.mubr.bf16.gmra.mrb[0].mxu0 %v6460
      %v6619 = vpop.f32.mrb[0].mxu0
      %v6620 = vadd.f32 %v6416, %v6619
      %v6621 = vpop.f32.mrb[0].mxu0
      %v6622 = vpop.f32.mrb[0].mxu0
      %v6623 = vadd.f32 %v6416, %v6622
      %v6624 = vpop.f32.mrb[0].mxu0
      %6625 = vmatprep.mubr.bf16.mxu0 0
      %6626 = vmatmul.mubr.bf16.gmra.mrb[0].mxu0 %v6463
      %v6627 = vpop.f32.mrb[0].mxu0
      %v6628 = vadd.f32 %v6416, %v6627
      %v6629 = vpop.f32.mrb[0].mxu0
      %v6630 = vpop.f32.mrb[0].mxu0
      %v6631 = vadd.f32 %v6416, %v6630
      %v6632 = vpop.f32.mrb[0].mxu0
      %6633 = vmatprep.mubr.bf16.mxu0 0
      %6634 = vmatmul.mubr.bf16.gmra.mrb[0].mxu0 %v6466
      %v6635 = vpop.f32.mrb[0].mxu0
      %v6636 = vadd.f32 %v6416, %v6635
      %v6637 = vpop.f32.mrb[0].mxu0
      %v6638 = vpop.f32.mrb[0].mxu0
      %v6639 = vadd.f32 %v6416, %v6638
      %v6640 = vpop.f32.mrb[0].mxu0
      %6641 = vmatprep.mubr.bf16.mxu0 0
      %6642 = vmatmul.mubr.bf16.gmra.mrb[0].mxu0 %v6469
      %v6643 = vpop.f32.mrb[0].mxu0
      %v6644 = vadd.f32 %v6416, %v6643
      %v6645 = vpop.f32.mrb[0].mxu0
      %v6646 = vpop.f32.mrb[0].mxu0
      %v6647 = vadd.f32 %v6416, %v6646
      %v6648 = vpop.f32.mrb[0].mxu0
      %6649 = vmatprep.mubr.bf16.mxu0 0
      %6650 = vmatmul.mubr.bf16.gmra.mrb[0].mxu0 %v6472
      %v6651 = vpop.f32.mrb[0].mxu0
      %v6652 = vadd.f32 %v6416, %v6651
      %v6653 = vpop.f32.mrb[0].mxu0
      %v6654 = vpop.f32.mrb[0].mxu0
      %v6655 = vadd.f32 %v6416, %v6654
      %v6656 = vpop.f32.mrb[0].mxu0
      %6657 = vmatprep.mubr.bf16.mxu0 0
      %6658 = vmatmul.mubr.bf16.gmra.mrb[0].mxu0 %v6475
      %v6659 = vpop.f32.mrb[0].mxu0
      %v6660 = vadd.f32 %v6416, %v6659
      %v6661 = vpop.f32.mrb[0].mxu0
      %v6662 = vpop.f32.mrb[0].mxu0
      %v6663 = vadd.f32 %v6416, %v6662
      %v6664 = vpop.f32.mrb[0].mxu0
      %6665 = vmatprep.mubr.bf16.mxu0 0
      %6666 = vmatmul.mubr.bf16.gmra.mrb[0].mxu0 %v6478
      %v6667 = vpop.f32.mrb[0].mxu0
      %v6668 = vadd.f32 %v6416, %v6667
      %v6669 = vpop.f32.mrb[0].mxu0
      %v6670 = vpop.f32.mrb[0].mxu0
      %v6671 = vadd.f32 %v6416, %v6670
      %v6672 = vpop.f32.mrb[0].mxu0
      %6673 = vmatprep.mubr.bf16.mxu0 0
      %6674 = vmatmul.mubr.bf16.gmra.mrb[0].mxu0 %v6481
      %v6675 = vpop.f32.mrb[0].mxu0
      %v6676 = vadd.f32 %v6416, %v6675
      %v6677 = vpop.f32.mrb[0].mxu0
      %v6678 = vpop.f32.mrb[0].mxu0
      %v6679 = vadd.f32 %v6416, %v6678
      %v6680 = vpop.f32.mrb[0].mxu0
      %6681 = vmatprep.mubr.bf16.mxu0 0
      %6682 = vmatmul.mubr.bf16.gmra.mrb[0].mxu0 %v6484
      %v6683 = vpop.f32.mrb[0].mxu0
      %v6684 = vadd.f32 %v6416, %v6683
      %v6685 = vpop.f32.mrb[0].mxu0
      %v6686 = vpop.f32.mrb[0].mxu0
      %v6687 = vadd.f32 %v6416, %v6686
      %v6688 = vpop.f32.mrb[0].mxu0
      %6689 = vmatprep.mubr.bf16.mxu0 0
      %6690 = vmatmul.mubr.bf16.gmra.mrb[0].mxu0 %v6487
      %v6691 = vpop.f32.mrb[0].mxu0
      %v6692 = vadd.f32 %v6416, %v6691
      %v6693 = vpop.f32.mrb[0].mxu0
      %v6694 = vpop.f32.mrb[0].mxu0
      %v6695 = vadd.f32 %v6416, %v6694
      %v6696 = vpop.f32.mrb[0].mxu0
      %6697 = vmatprep.mubr.bf16.mxu0 0
      %6698 = vmatmul.mubr.bf16.gmra.mrb[0].mxu0 %v6490
      %v6699 = vpop.f32.mrb[0].mxu0
      %v6700 = vadd.f32 %v6416, %v6699
      %v6701 = vpop.f32.mrb[0].mxu0
      %v6702 = vpop.f32.mrb[0].mxu0
      %v6703 = vadd.f32 %v6416, %v6702
      %v6704 = vpop.f32.mrb[0].mxu0
      %6705 = vmatprep.mubr.bf16.mxu0 0
      %6706 = vmatmul.mubr.bf16.gmra.mrb[0].mxu0 %v6493
      %v6707 = vpop.f32.mrb[0].mxu0
      %v6708 = vadd.f32 %v6416, %v6707
      %v6709 = vpop.f32.mrb[0].mxu0
      %v6710 = vpop.f32.mrb[0].mxu0
      %v6711 = vadd.f32 %v6416, %v6710
      %v6712 = vpop.f32.mrb[0].mxu0
      %6713 = vmatprep.mubr.bf16.mxu0 0
      %6714 = vmatmul.mubr.bf16.gmra.mrb[0].mxu0 %v6496
      %v6715 = vpop.f32.mrb[0].mxu0
      %v6716 = vadd.f32 %v6416, %v6715
      %v6717 = vpop.f32.mrb[0].mxu0
      %v6718 = vpop.f32.mrb[0].mxu0
      %v6719 = vadd.f32 %v6416, %v6718
      %v6720 = vpop.f32.mrb[0].mxu0
      %6721 = vmatprep.mubr.bf16.mxu0 0
      %6722 = vmatmul.mubr.bf16.gmra.mrb[0].mxu0 %v6499
      %v6723 = vpop.f32.mrb[0].mxu0
      %v6724 = vadd.f32 %v6416, %v6723
      %v6725 = vpop.f32.mrb[0].mxu0
      %v6726 = vpop.f32.mrb[0].mxu0
      %v6727 = vadd.f32 %v6416, %v6726
      %v6728 = vpop.f32.mrb[0].mxu0
      %6729 = vmatprep.mubr.bf16.mxu0 0
      %6730 = vmatmul.mubr.bf16.gmra.mrb[0].mxu0 %v6502
      %v6731 = vpop.f32.mrb[0].mxu0
      %v6732 = vadd.f32 %v6416, %v6731
      %v6733 = vpop.f32.mrb[0].mxu0
      %v6734 = vpop.f32.mrb[0].mxu0
      %v6735 = vadd.f32 %v6416, %v6734
      %v6736 = vpop.f32.mrb[0].mxu0
      %6737 = vmatprep.mubr.bf16.mxu0 0
      %6738 = vmatmul.mubr.bf16.gmra.mrb[0].mxu0 %v6505
      %v6739 = vpop.f32.mrb[0].mxu0
      %v6740 = vadd.f32 %v6416, %v6739
      %v6741 = vpop.f32.mrb[0].mxu0
      %v6742 = vpop.f32.mrb[0].mxu0
      %v6743 = vadd.f32 %v6416, %v6742
      %v6744 = vpop.f32.mrb[0].mxu0
      %6745 = vmatprep.mubr.bf16.mxu0 0
      %6746 = vmatmul.mubr.bf16.gmra.mrb[0].mxu0 %v6508
      %v6747 = vpop.f32.mrb[0].mxu0
      %v6748 = vadd.f32 %v6416, %v6747
      %v6749 = vpop.f32.mrb[0].mxu0
      %v6750 = vpop.f32.mrb[0].mxu0
      %v6751 = vadd.f32 %v6416, %v6750
      %v6752 = vpop.f32.mrb[0].mxu0
      %6753 = vmatprep.mubr.bf16.mxu0 0
      %6754 = vmatmul.mubr.bf16.gmra.mrb[0].mxu0 %v6511
      %v6755 = vpop.f32.mrb[0].mxu0
      %v6756 = vadd.f32 %v6416, %v6755
      %v6757 = vpop.f32.mrb[0].mxu0
      %v6758 = vpop.f32.mrb[0].mxu0
      %v6759 = vadd.f32 %v6416, %v6758
      %v6760 = vpop.f32.mrb[0].mxu0
      %6761 = vmatprep.mubr.bf16.mxu0 0
      %6762 = vmatmul.mubr.bf16.gmra.mrb[0].mxu0 %v6514
      %v6763 = vpop.f32.mrb[0].mxu0
      %v6764 = vadd.f32 %v6416, %v6763
      %v6765 = vpop.f32.mrb[0].mxu0
      %v6766 = vpop.f32.mrb[0].mxu0
      %v6767 = vadd.f32 %v6416, %v6766
      %v6768 = vpop.f32.mrb[0].mxu0
      %6769 = vmatprep.mubr.bf16.mxu0 0
      %6770 = vmatmul.mubr.bf16.gmra.mrb[0].mxu0 %v6517
      %v6771 = vpop.f32.mrb[0].mxu0
      %v6772 = vadd.f32 %v6416, %v6771
      %v6773 = vpop.f32.mrb[0].mxu0
      %v6774 = vpop.f32.mrb[0].mxu0
      %v6775 = vadd.f32 %v6416, %v6774
      %v6776 = vpop.f32.mrb[0].mxu0
      %6777 = vmatprep.mubr.bf16.mxu0 0
      %6778 = vmatmul.mubr.bf16.gmra.mrb[0].mxu0 %v6520
      %v6779 = vpop.f32.mrb[0].mxu0
      %v6780 = vadd.f32 %v6416, %v6779
      %v6781 = vpop.f32.mrb[0].mxu0
      %v6782 = vpop.f32.mrb[0].mxu0
      %v6783 = vadd.f32 %v6416, %v6782
      %v6784 = vpop.f32.mrb[0].mxu0
      %6785 = vmatprep.mubr.bf16.mxu0 0
      %6786 = vmatmul.mubr.bf16.gmra.mrb[0].mxu0 %v6523
      %v6787 = vpop.f32.mrb[0].mxu0
      %v6788 = vadd.f32 %v6416, %v6787
      %v6789 = vpop.f32.mrb[0].mxu0
      %v6790 = vpop.f32.mrb[0].mxu0
      %v6791 = vadd.f32 %v6416, %v6790
      %v6792 = vpop.f32.mrb[0].mxu0
      %6793 = vmatprep.mubr.bf16.mxu0 0
      %6794 = vmatmul.mubr.bf16.gmra.mrb[0].mxu0 %v6526
      %v6795 = vpop.f32.mrb[0].mxu0
      %v6796 = vadd.f32 %v6416, %v6795
      %v6797 = vpop.f32.mrb[0].mxu0
      %v6798 = vpop.f32.mrb[0].mxu0
      %v6799 = vadd.f32 %v6416, %v6798
      %v6800 = vpop.f32.mrb[0].mxu0
      %6801 = vmatprep.mubr.bf16.mxu0 0
      %6802 = vmatmul.mubr.bf16.gmra.mrb[0].mxu0 %v6529
      %v6803 = vpop.f32.mrb[0].mxu0
      %v6804 = vadd.f32 %v6416, %v6803
      %v6805 = vpop.f32.mrb[0].mxu0
      %v6806 = vpop.f32.mrb[0].mxu0
      %v6807 = vadd.f32 %v6416, %v6806
      %v6808 = vpop.f32.mrb[0].mxu0
      %6809 = vmatprep.mubr.bf16.mxu0 0
      %6810 = vmatmul.mubr.bf16.gmra.mrb[0].mxu0 %v6532
      %v6811 = vpop.f32.mrb[0].mxu0
      %v6812 = vadd.f32 %v6416, %v6811
      %v6813 = vpop.f32.mrb[0].mxu0
      %v6814 = vpop.f32.mrb[0].mxu0
      %v6815 = vadd.f32 %v6416, %v6814
      %v6816 = vpop.f32.mrb[0].mxu0
      %6817 = vmatprep.mubr.bf16.mxu0 0
      %6818 = vmatmul.mubr.bf16.gmra.mrb[0].mxu0 %v6535
      %v6819 = vpop.f32.mrb[0].mxu0
      %v6820 = vadd.f32 %v6416, %v6819
      %v6821 = vpop.f32.mrb[0].mxu0
      %v6822 = vpop.f32.mrb[0].mxu0
      %v6823 = vadd.f32 %v6416, %v6822
      %v6824 = vpop.f32.mrb[0].mxu0
      %6825 = vdwg.mxu0
      %v6826 = vadd.f32 %v5724, %v6572
      %v6827 = vadd.f32 %v5725, %v6575
      %v6828 = vadd.f32 %v5726, %v6580
      %v6829 = vadd.f32 %v5727, %v6583
      %v6830 = vadd.f32 %v5728, %v6588
      %v6831 = vadd.f32 %v5729, %v6591
      %v6832 = vadd.f32 %v5730, %v6596
      %v6833 = vadd.f32 %v5731, %v6599
      %v6834 = vadd.f32 %v5732, %v6604
      %v6835 = vadd.f32 %v5733, %v6607
      %v6836 = vadd.f32 %v5734, %v6612
      %v6837 = vadd.f32 %v5735, %v6615
      %v6838 = vadd.f32 %v5736, %v6620
      %v6839 = vadd.f32 %v5737, %v6623
      %v6840 = vadd.f32 %v5738, %v6628
      %v6841 = vadd.f32 %v5739, %v6631
      %v6842 = vadd.f32 %v5740, %v6636
      %v6843 = vadd.f32 %v5741, %v6639
      %v6844 = vadd.f32 %v5742, %v6644
      %v6845 = vadd.f32 %v5743, %v6647
      %v6846 = vadd.f32 %v5744, %v6652
      %v6847 = vadd.f32 %v5745, %v6655
      %v6848 = vadd.f32 %v5746, %v6660
      %v6849 = vadd.f32 %v5747, %v6663
      %v6850 = vadd.f32 %v5748, %v6668
      %v6851 = vadd.f32 %v5749, %v6671
      %v6852 = vadd.f32 %v5750, %v6676
      %v6853 = vadd.f32 %v5751, %v6679
      %v6854 = vadd.f32 %v5752, %v6684
      %v6855 = vadd.f32 %v5753, %v6687
      %v6856 = vadd.f32 %v5754, %v6692
      %v6857 = vadd.f32 %v5755, %v6695
      %v6858 = vadd.f32 %v5756, %v6700
      %v6859 = vadd.f32 %v5757, %v6703
      %v6860 = vadd.f32 %v5758, %v6708
      %v6861 = vadd.f32 %v5759, %v6711
      %v6862 = vadd.f32 %v5760, %v6716
      %v6863 = vadd.f32 %v5761, %v6719
      %v6864 = vadd.f32 %v5762, %v6724
      %v6865 = vadd.f32 %v5763, %v6727
      %v6866 = vadd.f32 %v5764, %v6732
      %v6867 = vadd.f32 %v5765, %v6735
      %v6868 = vadd.f32 %v5766, %v6740
      %v6869 = vadd.f32 %v5767, %v6743
      %v6870 = vadd.f32 %v5768, %v6748
      %v6871 = vadd.f32 %v5769, %v6751
      %v6872 = vadd.f32 %v5770, %v6756
      %v6873 = vadd.f32 %v5771, %v6759
      %v6874 = vadd.f32 %v5772, %v6764
      %v6875 = vadd.f32 %v5773, %v6767
      %v6876 = vadd.f32 %v5774, %v6772
      %v6877 = vadd.f32 %v5775, %v6775
      %v6878 = vadd.f32 %v5776, %v6780
      %v6879 = vadd.f32 %v5777, %v6783
      %v6880 = vadd.f32 %v5778, %v6788
      %v6881 = vadd.f32 %v5779, %v6791
      %v6882 = vadd.f32 %v5780, %v6796
      %v6883 = vadd.f32 %v5781, %v6799
      %v6884 = vadd.f32 %v5782, %v6804
      %v6885 = vadd.f32 %v5783, %v6807
      %v6886 = vadd.f32 %v5784, %v6812
      %v6887 = vadd.f32 %v5785, %v6815
      %v6888 = vadd.f32 %v5786, %v6820
      %v6889 = vadd.f32 %v5787, %v6823
      %v6890 = vmax.f32 %v6826, 0.0
      %v6891 = vmax.f32 %v6827, 0.0
      %v6892 = vmax.f32 %v6828, 0.0
      %v6893 = vmax.f32 %v6829, 0.0
      %v6894 = vmax.f32 %v6830, 0.0
      %v6895 = vmax.f32 %v6831, 0.0
      %v6896 = vmax.f32 %v6832, 0.0
      %v6897 = vmax.f32 %v6833, 0.0
      %v6898 = vmax.f32 %v6834, 0.0
      %v6899 = vmax.f32 %v6835, 0.0
      %v6900 = vmax.f32 %v6836, 0.0
      %v6901 = vmax.f32 %v6837, 0.0
      %v6902 = vmax.f32 %v6838, 0.0
      %v6903 = vmax.f32 %v6839, 0.0
      %v6904 = vmax.f32 %v6840, 0.0
      %v6905 = vmax.f32 %v6841, 0.0
      %v6906 = vmax.f32 %v6842, 0.0
      %v6907 = vmax.f32 %v6843, 0.0
      %v6908 = vmax.f32 %v6844, 0.0
      %v6909 = vmax.f32 %v6845, 0.0
      %v6910 = vmax.f32 %v6846, 0.0
      %v6911 = vmax.f32 %v6847, 0.0
      %v6912 = vmax.f32 %v6848, 0.0
      %v6913 = vmax.f32 %v6849, 0.0
      %v6914 = vmax.f32 %v6850, 0.0
      %v6915 = vmax.f32 %v6851, 0.0
      %v6916 = vmax.f32 %v6852, 0.0
      %v6917 = vmax.f32 %v6853, 0.0
      %v6918 = vmax.f32 %v6854, 0.0
      %v6919 = vmax.f32 %v6855, 0.0
      %v6920 = vmax.f32 %v6856, 0.0
      %v6921 = vmax.f32 %v6857, 0.0
      %v6922 = vmax.f32 %v6858, 0.0
      %v6923 = vmax.f32 %v6859, 0.0
      %v6924 = vmax.f32 %v6860, 0.0
      %v6925 = vmax.f32 %v6861, 0.0
      %v6926 = vmax.f32 %v6862, 0.0
      %v6927 = vmax.f32 %v6863, 0.0
      %v6928 = vmax.f32 %v6864, 0.0
      %v6929 = vmax.f32 %v6865, 0.0
      %v6930 = vmax.f32 %v6866, 0.0
      %v6931 = vmax.f32 %v6867, 0.0
      %v6932 = vmax.f32 %v6868, 0.0
      %v6933 = vmax.f32 %v6869, 0.0
      %v6934 = vmax.f32 %v6870, 0.0
      %v6935 = vmax.f32 %v6871, 0.0
      %v6936 = vmax.f32 %v6872, 0.0
      %v6937 = vmax.f32 %v6873, 0.0
      %v6938 = vmax.f32 %v6874, 0.0
      %v6939 = vmax.f32 %v6875, 0.0
      %v6940 = vmax.f32 %v6876, 0.0
      %v6941 = vmax.f32 %v6877, 0.0
      %v6942 = vmax.f32 %v6878, 0.0
      %v6943 = vmax.f32 %v6879, 0.0
      %v6944 = vmax.f32 %v6880, 0.0
      %v6945 = vmax.f32 %v6881, 0.0
      %v6946 = vmax.f32 %v6882, 0.0
      %v6947 = vmax.f32 %v6883, 0.0
      %v6948 = vmax.f32 %v6884, 0.0
      %v6949 = vmax.f32 %v6885, 0.0
      %v6950 = vmax.f32 %v6886, 0.0
      %v6951 = vmax.f32 %v6887, 0.0
      %v6952 = vmax.f32 %v6888, 0.0
      %v6953 = vmax.f32 %v6889, 0.0
      %v6954 = vpack.c.bf16 %v6891, %v6890
      %v6955 = vpack.c.bf16 %v6893, %v6892
      %v6956 = vpack.c.bf16 %v6895, %v6894
      %v6957 = vpack.c.bf16 %v6897, %v6896
      %v6958 = vpack.c.bf16 %v6899, %v6898
      %v6959 = vpack.c.bf16 %v6901, %v6900
      %v6960 = vpack.c.bf16 %v6903, %v6902
      %v6961 = vpack.c.bf16 %v6905, %v6904
      %v6962 = vpack.c.bf16 %v6907, %v6906
      %v6963 = vpack.c.bf16 %v6909, %v6908
      %v6964 = vpack.c.bf16 %v6911, %v6910
      %v6965 = vpack.c.bf16 %v6913, %v6912
      %v6966 = vpack.c.bf16 %v6915, %v6914
      %v6967 = vpack.c.bf16 %v6917, %v6916
      %v6968 = vpack.c.bf16 %v6919, %v6918
      %v6969 = vpack.c.bf16 %v6921, %v6920
      %v6970 = vpack.c.bf16 %v6923, %v6922
      %v6971 = vpack.c.bf16 %v6925, %v6924
      %v6972 = vpack.c.bf16 %v6927, %v6926
      %v6973 = vpack.c.bf16 %v6929, %v6928
      %v6974 = vpack.c.bf16 %v6931, %v6930
      %v6975 = vpack.c.bf16 %v6933, %v6932
      %v6976 = vpack.c.bf16 %v6935, %v6934
      %v6977 = vpack.c.bf16 %v6937, %v6936
      %v6978 = vpack.c.bf16 %v6939, %v6938
      %v6979 = vpack.c.bf16 %v6941, %v6940
      %v6980 = vpack.c.bf16 %v6943, %v6942
      %v6981 = vpack.c.bf16 %v6945, %v6944
      %v6982 = vpack.c.bf16 %v6947, %v6946
      %v6983 = vpack.c.bf16 %v6949, %v6948
      %v6984 = vpack.c.bf16 %v6951, %v6950
      %v6985 = vpack.c.bf16 %v6953, %v6952
      %v6986 = vld [vmem:[%s5] sm:$0xf]
      %v6987 = vld [vmem:[%s5 + $0x4] sm:$0xf]
      %v6988 = vld [vmem:[%s5 + $0x8] sm:$0xf]
      %v6989 = vld [vmem:[%s5 + $0xc] sm:$0xf]
      %v6990 = vld [vmem:[%s5 + $0x10] sm:$0xf]
      %v6991 = vld [vmem:[%s5 + $0x14] sm:$0xf]
      %v6992 = vld [vmem:[%s5 + $0x18] sm:$0xf]
      %v6993 = vld [vmem:[%s5 + $0x1c] sm:$0xf]
      %v6994 = vld [vmem:[%s6] sm:$0x1]
      %v6996 = vlaneseq
      %v6997 = vshrl.u32 %v6996, 7
      %v6998 = vsub.s32 0, %v6997
      %v6999 = vrot.slane %v6994, %v6998
      %v7009 = vunpack.c.l.b16 %v6986
      %v7010 = vunpack.c.l.b16 %v6987
      %v7011 = vunpack.c.l.b16 %v6988
      %v7012 = vunpack.c.l.b16 %v6989
      %v7013 = vunpack.c.l.b16 %v6990
      %v7014 = vunpack.c.l.b16 %v6991
      %v7015 = vunpack.c.l.b16 %v6992
      %v7016 = vunpack.c.l.b16 %v6993
      %v7017 = vpack.c.b16 %v7010, %v7009
      %v7018 = vpack.c.b16 %v7012, %v7011
      %v7019 = vpack.c.b16 %v7014, %v7013
      %v7020 = vpack.c.b16 %v7016, %v7015
      %v7026 = vsel %vm1385, %v6954, 0
      %v7029 = vsel %vm1385, %v6955, 0
      %v7032 = vsel %vm1385, %v6956, 0
      %v7035 = vsel %vm1385, %v6957, 0
      %v7038 = vsel %vm1385, %v6958, 0
      %v7041 = vsel %vm1385, %v6959, 0
      %v7044 = vsel %vm1385, %v6960, 0
      %v7047 = vsel %vm1385, %v6961, 0
      %v7050 = vsel %vm1385, %v6962, 0
      %v7053 = vsel %vm1385, %v6963, 0
      %v7056 = vsel %vm1385, %v6964, 0
      %v7059 = vsel %vm1385, %v6965, 0
      %v7062 = vsel %vm1385, %v6966, 0
      %v7065 = vsel %vm1385, %v6967, 0
      %v7068 = vsel %vm1385, %v6968, 0
      %v7071 = vsel %vm1385, %v6969, 0
      %v7074 = vsel %vm1385, %v6970, 0
      %v7077 = vsel %vm1385, %v6971, 0
      %v7080 = vsel %vm1385, %v6972, 0
      %v7083 = vsel %vm1385, %v6973, 0
      %v7086 = vsel %vm1385, %v6974, 0
      %v7089 = vsel %vm1385, %v6975, 0
      %v7092 = vsel %vm1385, %v6976, 0
      %v7095 = vsel %vm1385, %v6977, 0
      %v7098 = vsel %vm1385, %v6978, 0
      %v7101 = vsel %vm1385, %v6979, 0
      %v7104 = vsel %vm1385, %v6980, 0
      %v7107 = vsel %vm1385, %v6981, 0
      %v7110 = vsel %vm1385, %v6982, 0
      %v7113 = vsel %vm1385, %v6983, 0
      %v7116 = vsel %vm1385, %v6984, 0
      %v7119 = vsel %vm1385, %v6985, 0
      %7121 = vmatprep.subr.bf16.mxu0 0
      %7122 = vmatpush1.bf16.msra.mxu0 %v7017
      %7123 = vmatprep.subr.bf16.mxu0 0
      %7124 = vmatpush1.bf16.msra.mxu0 %v7018
      %7125 = vmatprep.subr.bf16.mxu0 0
      %7126 = vmatpush1.bf16.msra.mxu0 %v7019
      %7127 = vmatprep.subr.bf16.mxu0 0
      %7128 = vmatpush1.bf16.msra.mxu0 %v7020
      %7129 = vmatprep.subr.bf16.mxu0 0
      %7130 = vmatpush1.bf16.msra.mxu0 0
      %7131 = vmatprep.subr.bf16.mxu0 0
      %7132 = vmatpush1.bf16.msra.mxu0 0
      %7133 = vmatprep.subr.bf16.mxu0 0
      %7134 = vmatpush1.bf16.msra.mxu0 0
      %7135 = vmatprep.subr.bf16.mxu0 0
      %7136 = vmatpush1.bf16.msra.mxu0 0
      %7137 = vmatprep.subr.bf16.mxu0 0
      %7138 = vmatpush1.bf16.msra.mxu0 0
      %7139 = vmatprep.subr.bf16.mxu0 0
      %7140 = vmatpush1.bf16.msra.mxu0 0
      %7141 = vmatprep.subr.bf16.mxu0 0
      %7142 = vmatpush1.bf16.msra.mxu0 0
      %7143 = vmatprep.subr.bf16.mxu0 0
      %7144 = vmatpush1.bf16.msra.mxu0 0
      %7145 = vmatprep.subr.bf16.mxu0 0
      %7146 = vmatpush1.bf16.msra.mxu0 0
      %7147 = vmatprep.subr.bf16.mxu0 0
      %7148 = vmatpush1.bf16.msra.mxu0 0
      %7149 = vmatprep.subr.bf16.mxu0 0
      %7150 = vmatpush1.bf16.msra.mxu0 0
      %7151 = vmatprep.subr.bf16.mxu0 0
      %7152 = vmatpush1.bf16.msra.mxu0 0
      %7153 = vmatprep.mubr.bf16.mxu0 0
      %7154 = vmatmul.mubr.bf16.gmra.mrb[0].mxu0 %v7026
      %v7155 = vpop.f32.mrb[0].mxu0
      %v7156 = vadd.f32 %v6999, %v7155
      %v7157 = vpop.f32.mrb[0].mxu0
      %v7158 = vpop.f32.mrb[0].mxu0
      %v7159 = vadd.f32 %v6999, %v7158
      %v7160 = vpop.f32.mrb[0].mxu0
      %7161 = vmatprep.mubr.bf16.mxu0 0
      %7162 = vmatmul.mubr.bf16.gmra.mrb[0].mxu0 %v7029
      %v7163 = vpop.f32.mrb[0].mxu0
      %v7164 = vadd.f32 %v6999, %v7163
      %v7165 = vpop.f32.mrb[0].mxu0
      %v7166 = vpop.f32.mrb[0].mxu0
      %v7167 = vadd.f32 %v6999, %v7166
      %v7168 = vpop.f32.mrb[0].mxu0
      %7169 = vmatprep.mubr.bf16.mxu0 0
      %7170 = vmatmul.mubr.bf16.gmra.mrb[0].mxu0 %v7032
      %v7171 = vpop.f32.mrb[0].mxu0
      %v7172 = vadd.f32 %v6999, %v7171
      %v7173 = vpop.f32.mrb[0].mxu0
      %v7174 = vpop.f32.mrb[0].mxu0
      %v7175 = vadd.f32 %v6999, %v7174
      %v7176 = vpop.f32.mrb[0].mxu0
      %7177 = vmatprep.mubr.bf16.mxu0 0
      %7178 = vmatmul.mubr.bf16.gmra.mrb[0].mxu0 %v7035
      %v7179 = vpop.f32.mrb[0].mxu0
      %v7180 = vadd.f32 %v6999, %v7179
      %v7181 = vpop.f32.mrb[0].mxu0
      %v7182 = vpop.f32.mrb[0].mxu0
      %v7183 = vadd.f32 %v6999, %v7182
      %v7184 = vpop.f32.mrb[0].mxu0
      %7185 = vmatprep.mubr.bf16.mxu0 0
      %7186 = vmatmul.mubr.bf16.gmra.mrb[0].mxu0 %v7038
      %v7187 = vpop.f32.mrb[0].mxu0
      %v7188 = vadd.f32 %v6999, %v7187
      %v7189 = vpop.f32.mrb[0].mxu0
      %v7190 = vpop.f32.mrb[0].mxu0
      %v7191 = vadd.f32 %v6999, %v7190
      %v7192 = vpop.f32.mrb[0].mxu0
      %7193 = vmatprep.mubr.bf16.mxu0 0
      %7194 = vmatmul.mubr.bf16.gmra.mrb[0].mxu0 %v7041
      %v7195 = vpop.f32.mrb[0].mxu0
      %v7196 = vadd.f32 %v6999, %v7195
      %v7197 = vpop.f32.mrb[0].mxu0
      %v7198 = vpop.f32.mrb[0].mxu0
      %v7199 = vadd.f32 %v6999, %v7198
      %v7200 = vpop.f32.mrb[0].mxu0
      %7201 = vmatprep.mubr.bf16.mxu0 0
      %7202 = vmatmul.mubr.bf16.gmra.mrb[0].mxu0 %v7044
      %v7203 = vpop.f32.mrb[0].mxu0
      %v7204 = vadd.f32 %v6999, %v7203
      %v7205 = vpop.f32.mrb[0].mxu0
      %v7206 = vpop.f32.mrb[0].mxu0
      %v7207 = vadd.f32 %v6999, %v7206
      %v7208 = vpop.f32.mrb[0].mxu0
      %7209 = vmatprep.mubr.bf16.mxu0 0
      %7210 = vmatmul.mubr.bf16.gmra.mrb[0].mxu0 %v7047
      %v7211 = vpop.f32.mrb[0].mxu0
      %v7212 = vadd.f32 %v6999, %v7211
      %v7213 = vpop.f32.mrb[0].mxu0
      %v7214 = vpop.f32.mrb[0].mxu0
      %v7215 = vadd.f32 %v6999, %v7214
      %v7216 = vpop.f32.mrb[0].mxu0
      %7217 = vmatprep.mubr.bf16.mxu0 0
      %7218 = vmatmul.mubr.bf16.gmra.mrb[0].mxu0 %v7050
      %v7219 = vpop.f32.mrb[0].mxu0
      %v7220 = vadd.f32 %v6999, %v7219
      %v7221 = vpop.f32.mrb[0].mxu0
      %v7222 = vpop.f32.mrb[0].mxu0
      %v7223 = vadd.f32 %v6999, %v7222
      %v7224 = vpop.f32.mrb[0].mxu0
      %7225 = vmatprep.mubr.bf16.mxu0 0
      %7226 = vmatmul.mubr.bf16.gmra.mrb[0].mxu0 %v7053
      %v7227 = vpop.f32.mrb[0].mxu0
      %v7228 = vadd.f32 %v6999, %v7227
      %v7229 = vpop.f32.mrb[0].mxu0
      %v7230 = vpop.f32.mrb[0].mxu0
      %v7231 = vadd.f32 %v6999, %v7230
      %v7232 = vpop.f32.mrb[0].mxu0
      %7233 = vmatprep.mubr.bf16.mxu0 0
      %7234 = vmatmul.mubr.bf16.gmra.mrb[0].mxu0 %v7056
      %v7235 = vpop.f32.mrb[0].mxu0
      %v7236 = vadd.f32 %v6999, %v7235
      %v7237 = vpop.f32.mrb[0].mxu0
      %v7238 = vpop.f32.mrb[0].mxu0
      %v7239 = vadd.f32 %v6999, %v7238
      %v7240 = vpop.f32.mrb[0].mxu0
      %7241 = vmatprep.mubr.bf16.mxu0 0
      %7242 = vmatmul.mubr.bf16.gmra.mrb[0].mxu0 %v7059
      %v7243 = vpop.f32.mrb[0].mxu0
      %v7244 = vadd.f32 %v6999, %v7243
      %v7245 = vpop.f32.mrb[0].mxu0
      %v7246 = vpop.f32.mrb[0].mxu0
      %v7247 = vadd.f32 %v6999, %v7246
      %v7248 = vpop.f32.mrb[0].mxu0
      %7249 = vmatprep.mubr.bf16.mxu0 0
      %7250 = vmatmul.mubr.bf16.gmra.mrb[0].mxu0 %v7062
      %v7251 = vpop.f32.mrb[0].mxu0
      %v7252 = vadd.f32 %v6999, %v7251
      %v7253 = vpop.f32.mrb[0].mxu0
      %v7254 = vpop.f32.mrb[0].mxu0
      %v7255 = vadd.f32 %v6999, %v7254
      %v7256 = vpop.f32.mrb[0].mxu0
      %7257 = vmatprep.mubr.bf16.mxu0 0
      %7258 = vmatmul.mubr.bf16.gmra.mrb[0].mxu0 %v7065
      %v7259 = vpop.f32.mrb[0].mxu0
      %v7260 = vadd.f32 %v6999, %v7259
      %v7261 = vpop.f32.mrb[0].mxu0
      %v7262 = vpop.f32.mrb[0].mxu0
      %v7263 = vadd.f32 %v6999, %v7262
      %v7264 = vpop.f32.mrb[0].mxu0
      %7265 = vmatprep.mubr.bf16.mxu0 0
      %7266 = vmatmul.mubr.bf16.gmra.mrb[0].mxu0 %v7068
      %v7267 = vpop.f32.mrb[0].mxu0
      %v7268 = vadd.f32 %v6999, %v7267
      %v7269 = vpop.f32.mrb[0].mxu0
      %v7270 = vpop.f32.mrb[0].mxu0
      %v7271 = vadd.f32 %v6999, %v7270
      %v7272 = vpop.f32.mrb[0].mxu0
      %7273 = vmatprep.mubr.bf16.mxu0 0
      %7274 = vmatmul.mubr.bf16.gmra.mrb[0].mxu0 %v7071
      %v7275 = vpop.f32.mrb[0].mxu0
      %v7276 = vadd.f32 %v6999, %v7275
      %v7277 = vpop.f32.mrb[0].mxu0
      %v7278 = vpop.f32.mrb[0].mxu0
      %v7279 = vadd.f32 %v6999, %v7278
      %v7280 = vpop.f32.mrb[0].mxu0
      %7281 = vmatprep.mubr.bf16.mxu0 0
      %7282 = vmatmul.mubr.bf16.gmra.mrb[0].mxu0 %v7074
      %v7283 = vpop.f32.mrb[0].mxu0
      %v7284 = vadd.f32 %v6999, %v7283
      %v7285 = vpop.f32.mrb[0].mxu0
      %v7286 = vpop.f32.mrb[0].mxu0
      %v7287 = vadd.f32 %v6999, %v7286
      %v7288 = vpop.f32.mrb[0].mxu0
      %7289 = vmatprep.mubr.bf16.mxu0 0
      %7290 = vmatmul.mubr.bf16.gmra.mrb[0].mxu0 %v7077
      %v7291 = vpop.f32.mrb[0].mxu0
      %v7292 = vadd.f32 %v6999, %v7291
      %v7293 = vpop.f32.mrb[0].mxu0
      %v7294 = vpop.f32.mrb[0].mxu0
      %v7295 = vadd.f32 %v6999, %v7294
      %v7296 = vpop.f32.mrb[0].mxu0
      %7297 = vmatprep.mubr.bf16.mxu0 0
      %7298 = vmatmul.mubr.bf16.gmra.mrb[0].mxu0 %v7080
      %v7299 = vpop.f32.mrb[0].mxu0
      %v7300 = vadd.f32 %v6999, %v7299
      %v7301 = vpop.f32.mrb[0].mxu0
      %v7302 = vpop.f32.mrb[0].mxu0
      %v7303 = vadd.f32 %v6999, %v7302
      %v7304 = vpop.f32.mrb[0].mxu0
      %7305 = vmatprep.mubr.bf16.mxu0 0
      %7306 = vmatmul.mubr.bf16.gmra.mrb[0].mxu0 %v7083
      %v7307 = vpop.f32.mrb[0].mxu0
      %v7308 = vadd.f32 %v6999, %v7307
      %v7309 = vpop.f32.mrb[0].mxu0
      %v7310 = vpop.f32.mrb[0].mxu0
      %v7311 = vadd.f32 %v6999, %v7310
      %v7312 = vpop.f32.mrb[0].mxu0
      %7313 = vmatprep.mubr.bf16.mxu0 0
      %7314 = vmatmul.mubr.bf16.gmra.mrb[0].mxu0 %v7086
      %v7315 = vpop.f32.mrb[0].mxu0
      %v7316 = vadd.f32 %v6999, %v7315
      %v7317 = vpop.f32.mrb[0].mxu0
      %v7318 = vpop.f32.mrb[0].mxu0
      %v7319 = vadd.f32 %v6999, %v7318
      %v7320 = vpop.f32.mrb[0].mxu0
      %7321 = vmatprep.mubr.bf16.mxu0 0
      %7322 = vmatmul.mubr.bf16.gmra.mrb[0].mxu0 %v7089
      %v7323 = vpop.f32.mrb[0].mxu0
      %v7324 = vadd.f32 %v6999, %v7323
      %v7325 = vpop.f32.mrb[0].mxu0
      %v7326 = vpop.f32.mrb[0].mxu0
      %v7327 = vadd.f32 %v6999, %v7326
      %v7328 = vpop.f32.mrb[0].mxu0
      %7329 = vmatprep.mubr.bf16.mxu0 0
      %7330 = vmatmul.mubr.bf16.gmra.mrb[0].mxu0 %v7092
      %v7331 = vpop.f32.mrb[0].mxu0
      %v7332 = vadd.f32 %v6999, %v7331
      %v7333 = vpop.f32.mrb[0].mxu0
      %v7334 = vpop.f32.mrb[0].mxu0
      %v7335 = vadd.f32 %v6999, %v7334
      %v7336 = vpop.f32.mrb[0].mxu0
      %7337 = vmatprep.mubr.bf16.mxu0 0
      %7338 = vmatmul.mubr.bf16.gmra.mrb[0].mxu0 %v7095
      %v7339 = vpop.f32.mrb[0].mxu0
      %v7340 = vadd.f32 %v6999, %v7339
      %v7341 = vpop.f32.mrb[0].mxu0
      %v7342 = vpop.f32.mrb[0].mxu0
      %v7343 = vadd.f32 %v6999, %v7342
      %v7344 = vpop.f32.mrb[0].mxu0
      %7345 = vmatprep.mubr.bf16.mxu0 0
      %7346 = vmatmul.mubr.bf16.gmra.mrb[0].mxu0 %v7098
      %v7347 = vpop.f32.mrb[0].mxu0
      %v7348 = vadd.f32 %v6999, %v7347
      %v7349 = vpop.f32.mrb[0].mxu0
      %v7350 = vpop.f32.mrb[0].mxu0
      %v7351 = vadd.f32 %v6999, %v7350
      %v7352 = vpop.f32.mrb[0].mxu0
      %7353 = vmatprep.mubr.bf16.mxu0 0
      %7354 = vmatmul.mubr.bf16.gmra.mrb[0].mxu0 %v7101
      %v7355 = vpop.f32.mrb[0].mxu0
      %v7356 = vadd.f32 %v6999, %v7355
      %v7357 = vpop.f32.mrb[0].mxu0
      %v7358 = vpop.f32.mrb[0].mxu0
      %v7359 = vadd.f32 %v6999, %v7358
      %v7360 = vpop.f32.mrb[0].mxu0
      %7361 = vmatprep.mubr.bf16.mxu0 0
      %7362 = vmatmul.mubr.bf16.gmra.mrb[0].mxu0 %v7104
      %v7363 = vpop.f32.mrb[0].mxu0
      %v7364 = vadd.f32 %v6999, %v7363
      %v7365 = vpop.f32.mrb[0].mxu0
      %v7366 = vpop.f32.mrb[0].mxu0
      %v7367 = vadd.f32 %v6999, %v7366
      %v7368 = vpop.f32.mrb[0].mxu0
      %7369 = vmatprep.mubr.bf16.mxu0 0
      %7370 = vmatmul.mubr.bf16.gmra.mrb[0].mxu0 %v7107
      %v7371 = vpop.f32.mrb[0].mxu0
      %v7372 = vadd.f32 %v6999, %v7371
      %v7373 = vpop.f32.mrb[0].mxu0
      %v7374 = vpop.f32.mrb[0].mxu0
      %v7375 = vadd.f32 %v6999, %v7374
      %v7376 = vpop.f32.mrb[0].mxu0
      %7377 = vmatprep.mubr.bf16.mxu0 0
      %7378 = vmatmul.mubr.bf16.gmra.mrb[0].mxu0 %v7110
      %v7379 = vpop.f32.mrb[0].mxu0
      %v7380 = vadd.f32 %v6999, %v7379
      %v7381 = vpop.f32.mrb[0].mxu0
      %v7382 = vpop.f32.mrb[0].mxu0
      %v7383 = vadd.f32 %v6999, %v7382
      %v7384 = vpop.f32.mrb[0].mxu0
      %7385 = vmatprep.mubr.bf16.mxu0 0
      %7386 = vmatmul.mubr.bf16.gmra.mrb[0].mxu0 %v7113
      %v7387 = vpop.f32.mrb[0].mxu0
      %v7388 = vadd.f32 %v6999, %v7387
      %v7389 = vpop.f32.mrb[0].mxu0
      %v7390 = vpop.f32.mrb[0].mxu0
      %v7391 = vadd.f32 %v6999, %v7390
      %v7392 = vpop.f32.mrb[0].mxu0
      %7393 = vmatprep.mubr.bf16.mxu0 0
      %7394 = vmatmul.mubr.bf16.gmra.mrb[0].mxu0 %v7116
      %v7395 = vpop.f32.mrb[0].mxu0
      %v7396 = vadd.f32 %v6999, %v7395
      %v7397 = vpop.f32.mrb[0].mxu0
      %v7398 = vpop.f32.mrb[0].mxu0
      %v7399 = vadd.f32 %v6999, %v7398
      %v7400 = vpop.f32.mrb[0].mxu0
      %7401 = vmatprep.mubr.bf16.mxu0 0
      %7402 = vmatmul.mubr.bf16.gmra.mrb[0].mxu0 %v7119
      %v7403 = vpop.f32.mrb[0].mxu0
      %v7404 = vadd.f32 %v6999, %v7403
      %v7405 = vpop.f32.mrb[0].mxu0
      %v7406 = vpop.f32.mrb[0].mxu0
      %v7407 = vadd.f32 %v6999, %v7406
      %v7408 = vpop.f32.mrb[0].mxu0
      %7409 = vdwg.mxu0
      %v7410 = vmul.f32 %v7156, 100.0
      %v7411 = vmul.f32 %v7159, 100.0
      %v7412 = vmul.f32 %v7164, 100.0
      %v7413 = vmul.f32 %v7167, 100.0
      %v7414 = vmul.f32 %v7172, 100.0
      %v7415 = vmul.f32 %v7175, 100.0
      %v7416 = vmul.f32 %v7180, 100.0
      %v7417 = vmul.f32 %v7183, 100.0
      %v7418 = vmul.f32 %v7188, 100.0
      %v7419 = vmul.f32 %v7191, 100.0
      %v7420 = vmul.f32 %v7196, 100.0
      %v7421 = vmul.f32 %v7199, 100.0
      %v7422 = vmul.f32 %v7204, 100.0
      %v7423 = vmul.f32 %v7207, 100.0
      %v7424 = vmul.f32 %v7212, 100.0
      %v7425 = vmul.f32 %v7215, 100.0
      %v7426 = vmul.f32 %v7220, 100.0
      %v7427 = vmul.f32 %v7223, 100.0
      %v7428 = vmul.f32 %v7228, 100.0
      %v7429 = vmul.f32 %v7231, 100.0
      %v7430 = vmul.f32 %v7236, 100.0
      %v7431 = vmul.f32 %v7239, 100.0
      %v7432 = vmul.f32 %v7244, 100.0
      %v7433 = vmul.f32 %v7247, 100.0
      %v7434 = vmul.f32 %v7252, 100.0
      %v7435 = vmul.f32 %v7255, 100.0
      %v7436 = vmul.f32 %v7260, 100.0
      %v7437 = vmul.f32 %v7263, 100.0
      %v7438 = vmul.f32 %v7268, 100.0
      %v7439 = vmul.f32 %v7271, 100.0
      %v7440 = vmul.f32 %v7276, 100.0
      %v7441 = vmul.f32 %v7279, 100.0
      %v7442 = vmul.f32 %v7284, 100.0
      %v7443 = vmul.f32 %v7287, 100.0
      %v7444 = vmul.f32 %v7292, 100.0
      %v7445 = vmul.f32 %v7295, 100.0
      %v7446 = vmul.f32 %v7300, 100.0
      %v7447 = vmul.f32 %v7303, 100.0
      %v7448 = vmul.f32 %v7308, 100.0
      %v7449 = vmul.f32 %v7311, 100.0
      %v7450 = vmul.f32 %v7316, 100.0
      %v7451 = vmul.f32 %v7319, 100.0
      %v7452 = vmul.f32 %v7324, 100.0
      %v7453 = vmul.f32 %v7327, 100.0
      %v7454 = vmul.f32 %v7332, 100.0
      %v7455 = vmul.f32 %v7335, 100.0
      %v7456 = vmul.f32 %v7340, 100.0
      %v7457 = vmul.f32 %v7343, 100.0
      %v7458 = vmul.f32 %v7348, 100.0
      %v7459 = vmul.f32 %v7351, 100.0
      %v7460 = vmul.f32 %v7356, 100.0
      %v7461 = vmul.f32 %v7359, 100.0
      %v7462 = vmul.f32 %v7364, 100.0
      %v7463 = vmul.f32 %v7367, 100.0
      %v7464 = vmul.f32 %v7372, 100.0
      %v7465 = vmul.f32 %v7375, 100.0
      %v7466 = vmul.f32 %v7380, 100.0
      %v7467 = vmul.f32 %v7383, 100.0
      %v7468 = vmul.f32 %v7388, 100.0
      %v7469 = vmul.f32 %v7391, 100.0
      %v7470 = vmul.f32 %v7396, 100.0
      %v7471 = vmul.f32 %v7399, 100.0
      %v7472 = vmul.f32 %v7404, 100.0
      %v7473 = vmul.f32 %v7407, 100.0
      %vm7474 = vcmp.gt.f32.partialorder %v7410, 20.0
      %vm7475 = vcmp.gt.f32.partialorder %v7411, 20.0
      %vm7476 = vcmp.gt.f32.partialorder %v7412, 20.0
      %vm7477 = vcmp.gt.f32.partialorder %v7413, 20.0
      %vm7478 = vcmp.gt.f32.partialorder %v7414, 20.0
      %vm7479 = vcmp.gt.f32.partialorder %v7415, 20.0
      %vm7480 = vcmp.gt.f32.partialorder %v7416, 20.0
      %vm7481 = vcmp.gt.f32.partialorder %v7417, 20.0
      %vm7482 = vcmp.gt.f32.partialorder %v7418, 20.0
      %vm7483 = vcmp.gt.f32.partialorder %v7419, 20.0
      %vm7484 = vcmp.gt.f32.partialorder %v7420, 20.0
      %vm7485 = vcmp.gt.f32.partialorder %v7421, 20.0
      %vm7486 = vcmp.gt.f32.partialorder %v7422, 20.0
      %vm7487 = vcmp.gt.f32.partialorder %v7423, 20.0
      %vm7488 = vcmp.gt.f32.partialorder %v7424, 20.0
      %vm7489 = vcmp.gt.f32.partialorder %v7425, 20.0
      %vm7490 = vcmp.gt.f32.partialorder %v7426, 20.0
      %vm7491 = vcmp.gt.f32.partialorder %v7427, 20.0
      %vm7492 = vcmp.gt.f32.partialorder %v7428, 20.0
      %vm7493 = vcmp.gt.f32.partialorder %v7429, 20.0
      %vm7494 = vcmp.gt.f32.partialorder %v7430, 20.0
      %vm7495 = vcmp.gt.f32.partialorder %v7431, 20.0
      %vm7496 = vcmp.gt.f32.partialorder %v7432, 20.0
      %vm7497 = vcmp.gt.f32.partialorder %v7433, 20.0
      %vm7498 = vcmp.gt.f32.partialorder %v7434, 20.0
      %vm7499 = vcmp.gt.f32.partialorder %v7435, 20.0
      %vm7500 = vcmp.gt.f32.partialorder %v7436, 20.0
      %vm7501 = vcmp.gt.f32.partialorder %v7437, 20.0
      %vm7502 = vcmp.gt.f32.partialorder %v7438, 20.0
      %vm7503 = vcmp.gt.f32.partialorder %v7439, 20.0
      %vm7504 = vcmp.gt.f32.partialorder %v7440, 20.0
      %vm7505 = vcmp.gt.f32.partialorder %v7441, 20.0
      %vm7506 = vcmp.gt.f32.partialorder %v7442, 20.0
      %vm7507 = vcmp.gt.f32.partialorder %v7443, 20.0
      %vm7508 = vcmp.gt.f32.partialorder %v7444, 20.0
      %vm7509 = vcmp.gt.f32.partialorder %v7445, 20.0
      %vm7510 = vcmp.gt.f32.partialorder %v7446, 20.0
      %vm7511 = vcmp.gt.f32.partialorder %v7447, 20.0
      %vm7512 = vcmp.gt.f32.partialorder %v7448, 20.0
      %vm7513 = vcmp.gt.f32.partialorder %v7449, 20.0
      %vm7514 = vcmp.gt.f32.partialorder %v7450, 20.0
      %vm7515 = vcmp.gt.f32.partialorder %v7451, 20.0
      %vm7516 = vcmp.gt.f32.partialorder %v7452, 20.0
      %vm7517 = vcmp.gt.f32.partialorder %v7453, 20.0
      %vm7518 = vcmp.gt.f32.partialorder %v7454, 20.0
      %vm7519 = vcmp.gt.f32.partialorder %v7455, 20.0
      %vm7520 = vcmp.gt.f32.partialorder %v7456, 20.0
      %vm7521 = vcmp.gt.f32.partialorder %v7457, 20.0
      %vm7522 = vcmp.gt.f32.partialorder %v7458, 20.0
      %vm7523 = vcmp.gt.f32.partialorder %v7459, 20.0
      %vm7524 = vcmp.gt.f32.partialorder %v7460, 20.0
      %vm7525 = vcmp.gt.f32.partialorder %v7461, 20.0
      %vm7526 = vcmp.gt.f32.partialorder %v7462, 20.0
      %vm7527 = vcmp.gt.f32.partialorder %v7463, 20.0
      %vm7528 = vcmp.gt.f32.partialorder %v7464, 20.0
      %vm7529 = vcmp.gt.f32.partialorder %v7465, 20.0
      %vm7530 = vcmp.gt.f32.partialorder %v7466, 20.0
      %vm7531 = vcmp.gt.f32.partialorder %v7467, 20.0
      %vm7532 = vcmp.gt.f32.partialorder %v7468, 20.0
      %vm7533 = vcmp.gt.f32.partialorder %v7469, 20.0
      %vm7534 = vcmp.gt.f32.partialorder %v7470, 20.0
      %vm7535 = vcmp.gt.f32.partialorder %v7471, 20.0
      %vm7536 = vcmp.gt.f32.partialorder %v7472, 20.0
      %vm7537 = vcmp.gt.f32.partialorder %v7473, 20.0
      %v7538 = vmin.f32 %v7410, 20.0
      %v7539 = vmin.f32 %v7411, 20.0
      %v7540 = vmin.f32 %v7412, 20.0
      %v7541 = vmin.f32 %v7413, 20.0
      %v7542 = vmin.f32 %v7414, 20.0
      %v7543 = vmin.f32 %v7415, 20.0
      %v7544 = vmin.f32 %v7416, 20.0
      %v7545 = vmin.f32 %v7417, 20.0
      %v7546 = vmin.f32 %v7418, 20.0
      %v7547 = vmin.f32 %v7419, 20.0
      %v7548 = vmin.f32 %v7420, 20.0
      %v7549 = vmin.f32 %v7421, 20.0
      %v7550 = vmin.f32 %v7422, 20.0
      %v7551 = vmin.f32 %v7423, 20.0
      %v7552 = vmin.f32 %v7424, 20.0
      %v7553 = vmin.f32 %v7425, 20.0
      %v7554 = vmin.f32 %v7426, 20.0
      %v7555 = vmin.f32 %v7427, 20.0
      %v7556 = vmin.f32 %v7428, 20.0
      %v7557 = vmin.f32 %v7429, 20.0
      %v7558 = vmin.f32 %v7430, 20.0
      %v7559 = vmin.f32 %v7431, 20.0
      %v7560 = vmin.f32 %v7432, 20.0
      %v7561 = vmin.f32 %v7433, 20.0
      %v7562 = vmin.f32 %v7434, 20.0
      %v7563 = vmin.f32 %v7435, 20.0
      %v7564 = vmin.f32 %v7436, 20.0
      %v7565 = vmin.f32 %v7437, 20.0
      %v7566 = vmin.f32 %v7438, 20.0
      %v7567 = vmin.f32 %v7439, 20.0
      %v7568 = vmin.f32 %v7440, 20.0
      %v7569 = vmin.f32 %v7441, 20.0
      %v7570 = vmin.f32 %v7442, 20.0
      %v7571 = vmin.f32 %v7443, 20.0
      %v7572 = vmin.f32 %v7444, 20.0
      %v7573 = vmin.f32 %v7445, 20.0
      %v7574 = vmin.f32 %v7446, 20.0
      %v7575 = vmin.f32 %v7447, 20.0
      %v7576 = vmin.f32 %v7448, 20.0
      %v7577 = vmin.f32 %v7449, 20.0
      %v7578 = vmin.f32 %v7450, 20.0
      %v7579 = vmin.f32 %v7451, 20.0
      %v7580 = vmin.f32 %v7452, 20.0
      %v7581 = vmin.f32 %v7453, 20.0
      %v7582 = vmin.f32 %v7454, 20.0
      %v7583 = vmin.f32 %v7455, 20.0
      %v7584 = vmin.f32 %v7456, 20.0
      %v7585 = vmin.f32 %v7457, 20.0
      %v7586 = vmin.f32 %v7458, 20.0
      %v7587 = vmin.f32 %v7459, 20.0
      %v7588 = vmin.f32 %v7460, 20.0
      %v7589 = vmin.f32 %v7461, 20.0
      %v7590 = vmin.f32 %v7462, 20.0
      %v7591 = vmin.f32 %v7463, 20.0
      %v7592 = vmin.f32 %v7464, 20.0
      %v7593 = vmin.f32 %v7465, 20.0
      %v7594 = vmin.f32 %v7466, 20.0
      %v7595 = vmin.f32 %v7467, 20.0
      %v7596 = vmin.f32 %v7468, 20.0
      %v7597 = vmin.f32 %v7469, 20.0
      %v7598 = vmin.f32 %v7470, 20.0
      %v7599 = vmin.f32 %v7471, 20.0
      %v7600 = vmin.f32 %v7472, 20.0
      %v7601 = vmin.f32 %v7473, 20.0
      %v7602 = vmul.f32 %v7538, 1.442695
      %v7603 = vpow.pop %v7602
      %v7604 = vmul.f32 %v7539, 1.442695
      %v7605 = vpow.pop %v7604
      %v7606 = vmul.f32 %v7540, 1.442695
      %v7607 = vpow.pop %v7606
      %v7608 = vmul.f32 %v7541, 1.442695
      %v7609 = vpow.pop %v7608
      %v7610 = vmul.f32 %v7542, 1.442695
      %v7611 = vpow.pop %v7610
      %v7612 = vmul.f32 %v7543, 1.442695
      %v7613 = vpow.pop %v7612
      %v7614 = vmul.f32 %v7544, 1.442695
      %v7615 = vpow.pop %v7614
      %v7616 = vmul.f32 %v7545, 1.442695
      %v7617 = vpow.pop %v7616
      %v7618 = vmul.f32 %v7546, 1.442695
      %v7619 = vpow.pop %v7618
      %v7620 = vmul.f32 %v7547, 1.442695
      %v7621 = vpow.pop %v7620
      %v7622 = vmul.f32 %v7548, 1.442695
      %v7623 = vpow.pop %v7622
      %v7624 = vmul.f32 %v7549, 1.442695
      %v7625 = vpow.pop %v7624
      %v7626 = vmul.f32 %v7550, 1.442695
      %v7627 = vpow.pop %v7626
      %v7628 = vmul.f32 %v7551, 1.442695
      %v7629 = vpow.pop %v7628
      %v7630 = vmul.f32 %v7552, 1.442695
      %v7631 = vpow.pop %v7630
      %v7632 = vmul.f32 %v7553, 1.442695
      %v7633 = vpow.pop %v7632
      %v7634 = vmul.f32 %v7554, 1.442695
      %v7635 = vpow.pop %v7634
      %v7636 = vmul.f32 %v7555, 1.442695
      %v7637 = vpow.pop %v7636
      %v7638 = vmul.f32 %v7556, 1.442695
      %v7639 = vpow.pop %v7638
      %v7640 = vmul.f32 %v7557, 1.442695
      %v7641 = vpow.pop %v7640
      %v7642 = vmul.f32 %v7558, 1.442695
      %v7643 = vpow.pop %v7642
      %v7644 = vmul.f32 %v7559, 1.442695
      %v7645 = vpow.pop %v7644
      %v7646 = vmul.f32 %v7560, 1.442695
      %v7647 = vpow.pop %v7646
      %v7648 = vmul.f32 %v7561, 1.442695
      %v7649 = vpow.pop %v7648
      %v7650 = vmul.f32 %v7562, 1.442695
      %v7651 = vpow.pop %v7650
      %v7652 = vmul.f32 %v7563, 1.442695
      %v7653 = vpow.pop %v7652
      %v7654 = vmul.f32 %v7564, 1.442695
      %v7655 = vpow.pop %v7654
      %v7656 = vmul.f32 %v7565, 1.442695
      %v7657 = vpow.pop %v7656
      %v7658 = vmul.f32 %v7566, 1.442695
      %v7659 = vpow.pop %v7658
      %v7660 = vmul.f32 %v7567, 1.442695
      %v7661 = vpow.pop %v7660
      %v7662 = vmul.f32 %v7568, 1.442695
      %v7663 = vpow.pop %v7662
      %v7664 = vmul.f32 %v7569, 1.442695
      %v7665 = vpow.pop %v7664
      %v7666 = vmul.f32 %v7570, 1.442695
      %v7667 = vpow.pop %v7666
      %v7668 = vmul.f32 %v7571, 1.442695
      %v7669 = vpow.pop %v7668
      %v7670 = vmul.f32 %v7572, 1.442695
      %v7671 = vpow.pop %v7670
      %v7672 = vmul.f32 %v7573, 1.442695
      %v7673 = vpow.pop %v7672
      %v7674 = vmul.f32 %v7574, 1.442695
      %v7675 = vpow.pop %v7674
      %v7676 = vmul.f32 %v7575, 1.442695
      %v7677 = vpow.pop %v7676
      %v7678 = vmul.f32 %v7576, 1.442695
      %v7679 = vpow.pop %v7678
      %v7680 = vmul.f32 %v7577, 1.442695
      %v7681 = vpow.pop %v7680
      %v7682 = vmul.f32 %v7578, 1.442695
      %v7683 = vpow.pop %v7682
      %v7684 = vmul.f32 %v7579, 1.442695
      %v7685 = vpow.pop %v7684
      %v7686 = vmul.f32 %v7580, 1.442695
      %v7687 = vpow.pop %v7686
      %v7688 = vmul.f32 %v7581, 1.442695
      %v7689 = vpow.pop %v7688
      %v7690 = vmul.f32 %v7582, 1.442695
      %v7691 = vpow.pop %v7690
      %v7692 = vmul.f32 %v7583, 1.442695
      %v7693 = vpow.pop %v7692
      %v7694 = vmul.f32 %v7584, 1.442695
      %v7695 = vpow.pop %v7694
      %v7696 = vmul.f32 %v7585, 1.442695
      %v7697 = vpow.pop %v7696
      %v7698 = vmul.f32 %v7586, 1.442695
      %v7699 = vpow.pop %v7698
      %v7700 = vmul.f32 %v7587, 1.442695
      %v7701 = vpow.pop %v7700
      %v7702 = vmul.f32 %v7588, 1.442695
      %v7703 = vpow.pop %v7702
      %v7704 = vmul.f32 %v7589, 1.442695
      %v7705 = vpow.pop %v7704
      %v7706 = vmul.f32 %v7590, 1.442695
      %v7707 = vpow.pop %v7706
      %v7708 = vmul.f32 %v7591, 1.442695
      %v7709 = vpow.pop %v7708
      %v7710 = vmul.f32 %v7592, 1.442695
      %v7711 = vpow.pop %v7710
      %v7712 = vmul.f32 %v7593, 1.442695
      %v7713 = vpow.pop %v7712
      %v7714 = vmul.f32 %v7594, 1.442695
      %v7715 = vpow.pop %v7714
      %v7716 = vmul.f32 %v7595, 1.442695
      %v7717 = vpow.pop %v7716
      %v7718 = vmul.f32 %v7596, 1.442695
      %v7719 = vpow.pop %v7718
      %v7720 = vmul.f32 %v7597, 1.442695
      %v7721 = vpow.pop %v7720
      %v7722 = vmul.f32 %v7598, 1.442695
      %v7723 = vpow.pop %v7722
      %v7724 = vmul.f32 %v7599, 1.442695
      %v7725 = vpow.pop %v7724
      %v7726 = vmul.f32 %v7600, 1.442695
      %v7727 = vpow.pop %v7726
      %v7728 = vmul.f32 %v7601, 1.442695
      %v7729 = vpow.pop %v7728
      %v7730 = vadd.f32 %v7603, 1.0
      %v7731 = vlog2.pop %v7730
      %v7732 = vmul.f32 %v7731, 0.6931472
      %v7733 = vmul.f32 -0.5, %v7603
      %v7734 = vadd.f32 %v7733, 1.0
      %v7735 = vmul.f32 %v7734, %v7603
      %v7736 = vand.u32 2147483647, %v7603
      %vm7737 = vcmp.lt.f32.partialorder %v7736, 0.0004427343
      %v7738 = vsel %vm7737, %v7735, %v7732
      %v7739 = vadd.f32 %v7605, 1.0
      %v7740 = vlog2.pop %v7739
      %v7741 = vmul.f32 %v7740, 0.6931472
      %v7742 = vmul.f32 -0.5, %v7605
      %v7743 = vadd.f32 %v7742, 1.0
      %v7744 = vmul.f32 %v7743, %v7605
      %v7745 = vand.u32 2147483647, %v7605
      %vm7746 = vcmp.lt.f32.partialorder %v7745, 0.0004427343
      %v7747 = vsel %vm7746, %v7744, %v7741
      %v7748 = vadd.f32 %v7607, 1.0
      %v7749 = vlog2.pop %v7748
      %v7750 = vmul.f32 %v7749, 0.6931472
      %v7751 = vmul.f32 -0.5, %v7607
      %v7752 = vadd.f32 %v7751, 1.0
      %v7753 = vmul.f32 %v7752, %v7607
      %v7754 = vand.u32 2147483647, %v7607
      %vm7755 = vcmp.lt.f32.partialorder %v7754, 0.0004427343
      %v7756 = vsel %vm7755, %v7753, %v7750
      %v7757 = vadd.f32 %v7609, 1.0
      %v7758 = vlog2.pop %v7757
      %v7759 = vmul.f32 %v7758, 0.6931472
      %v7760 = vmul.f32 -0.5, %v7609
      %v7761 = vadd.f32 %v7760, 1.0
      %v7762 = vmul.f32 %v7761, %v7609
      %v7763 = vand.u32 2147483647, %v7609
      %vm7764 = vcmp.lt.f32.partialorder %v7763, 0.0004427343
      %v7765 = vsel %vm7764, %v7762, %v7759
      %v7766 = vadd.f32 %v7611, 1.0
      %v7767 = vlog2.pop %v7766
      %v7768 = vmul.f32 %v7767, 0.6931472
      %v7769 = vmul.f32 -0.5, %v7611
      %v7770 = vadd.f32 %v7769, 1.0
      %v7771 = vmul.f32 %v7770, %v7611
      %v7772 = vand.u32 2147483647, %v7611
      %vm7773 = vcmp.lt.f32.partialorder %v7772, 0.0004427343
      %v7774 = vsel %vm7773, %v7771, %v7768
      %v7775 = vadd.f32 %v7613, 1.0
      %v7776 = vlog2.pop %v7775
      %v7777 = vmul.f32 %v7776, 0.6931472
      %v7778 = vmul.f32 -0.5, %v7613
      %v7779 = vadd.f32 %v7778, 1.0
      %v7780 = vmul.f32 %v7779, %v7613
      %v7781 = vand.u32 2147483647, %v7613
      %vm7782 = vcmp.lt.f32.partialorder %v7781, 0.0004427343
      %v7783 = vsel %vm7782, %v7780, %v7777
      %v7784 = vadd.f32 %v7615, 1.0
      %v7785 = vlog2.pop %v7784
      %v7786 = vmul.f32 %v7785, 0.6931472
      %v7787 = vmul.f32 -0.5, %v7615
      %v7788 = vadd.f32 %v7787, 1.0
      %v7789 = vmul.f32 %v7788, %v7615
      %v7790 = vand.u32 2147483647, %v7615
      %vm7791 = vcmp.lt.f32.partialorder %v7790, 0.0004427343
      %v7792 = vsel %vm7791, %v7789, %v7786
      %v7793 = vadd.f32 %v7617, 1.0
      %v7794 = vlog2.pop %v7793
      %v7795 = vmul.f32 %v7794, 0.6931472
      %v7796 = vmul.f32 -0.5, %v7617
      %v7797 = vadd.f32 %v7796, 1.0
      %v7798 = vmul.f32 %v7797, %v7617
      %v7799 = vand.u32 2147483647, %v7617
      %vm7800 = vcmp.lt.f32.partialorder %v7799, 0.0004427343
      %v7801 = vsel %vm7800, %v7798, %v7795
      %v7802 = vadd.f32 %v7619, 1.0
      %v7803 = vlog2.pop %v7802
      %v7804 = vmul.f32 %v7803, 0.6931472
      %v7805 = vmul.f32 -0.5, %v7619
      %v7806 = vadd.f32 %v7805, 1.0
      %v7807 = vmul.f32 %v7806, %v7619
      %v7808 = vand.u32 2147483647, %v7619
      %vm7809 = vcmp.lt.f32.partialorder %v7808, 0.0004427343
      %v7810 = vsel %vm7809, %v7807, %v7804
      %v7811 = vadd.f32 %v7621, 1.0
      %v7812 = vlog2.pop %v7811
      %v7813 = vmul.f32 %v7812, 0.6931472
      %v7814 = vmul.f32 -0.5, %v7621
      %v7815 = vadd.f32 %v7814, 1.0
      %v7816 = vmul.f32 %v7815, %v7621
      %v7817 = vand.u32 2147483647, %v7621
      %vm7818 = vcmp.lt.f32.partialorder %v7817, 0.0004427343
      %v7819 = vsel %vm7818, %v7816, %v7813
      %v7820 = vadd.f32 %v7623, 1.0
      %v7821 = vlog2.pop %v7820
      %v7822 = vmul.f32 %v7821, 0.6931472
      %v7823 = vmul.f32 -0.5, %v7623
      %v7824 = vadd.f32 %v7823, 1.0
      %v7825 = vmul.f32 %v7824, %v7623
      %v7826 = vand.u32 2147483647, %v7623
      %vm7827 = vcmp.lt.f32.partialorder %v7826, 0.0004427343
      %v7828 = vsel %vm7827, %v7825, %v7822
      %v7829 = vadd.f32 %v7625, 1.0
      %v7830 = vlog2.pop %v7829
      %v7831 = vmul.f32 %v7830, 0.6931472
      %v7832 = vmul.f32 -0.5, %v7625
      %v7833 = vadd.f32 %v7832, 1.0
      %v7834 = vmul.f32 %v7833, %v7625
      %v7835 = vand.u32 2147483647, %v7625
      %vm7836 = vcmp.lt.f32.partialorder %v7835, 0.0004427343
      %v7837 = vsel %vm7836, %v7834, %v7831
      %v7838 = vadd.f32 %v7627, 1.0
      %v7839 = vlog2.pop %v7838
      %v7840 = vmul.f32 %v7839, 0.6931472
      %v7841 = vmul.f32 -0.5, %v7627
      %v7842 = vadd.f32 %v7841, 1.0
      %v7843 = vmul.f32 %v7842, %v7627
      %v7844 = vand.u32 2147483647, %v7627
      %vm7845 = vcmp.lt.f32.partialorder %v7844, 0.0004427343
      %v7846 = vsel %vm7845, %v7843, %v7840
      %v7847 = vadd.f32 %v7629, 1.0
      %v7848 = vlog2.pop %v7847
      %v7849 = vmul.f32 %v7848, 0.6931472
      %v7850 = vmul.f32 -0.5, %v7629
      %v7851 = vadd.f32 %v7850, 1.0
      %v7852 = vmul.f32 %v7851, %v7629
      %v7853 = vand.u32 2147483647, %v7629
      %vm7854 = vcmp.lt.f32.partialorder %v7853, 0.0004427343
      %v7855 = vsel %vm7854, %v7852, %v7849
      %v7856 = vadd.f32 %v7631, 1.0
      %v7857 = vlog2.pop %v7856
      %v7858 = vmul.f32 %v7857, 0.6931472
      %v7859 = vmul.f32 -0.5, %v7631
      %v7860 = vadd.f32 %v7859, 1.0
      %v7861 = vmul.f32 %v7860, %v7631
      %v7862 = vand.u32 2147483647, %v7631
      %vm7863 = vcmp.lt.f32.partialorder %v7862, 0.0004427343
      %v7864 = vsel %vm7863, %v7861, %v7858
      %v7865 = vadd.f32 %v7633, 1.0
      %v7866 = vlog2.pop %v7865
      %v7867 = vmul.f32 %v7866, 0.6931472
      %v7868 = vmul.f32 -0.5, %v7633
      %v7869 = vadd.f32 %v7868, 1.0
      %v7870 = vmul.f32 %v7869, %v7633
      %v7871 = vand.u32 2147483647, %v7633
      %vm7872 = vcmp.lt.f32.partialorder %v7871, 0.0004427343
      %v7873 = vsel %vm7872, %v7870, %v7867
      %v7874 = vadd.f32 %v7635, 1.0
      %v7875 = vlog2.pop %v7874
      %v7876 = vmul.f32 %v7875, 0.6931472
      %v7877 = vmul.f32 -0.5, %v7635
      %v7878 = vadd.f32 %v7877, 1.0
      %v7879 = vmul.f32 %v7878, %v7635
      %v7880 = vand.u32 2147483647, %v7635
      %vm7881 = vcmp.lt.f32.partialorder %v7880, 0.0004427343
      %v7882 = vsel %vm7881, %v7879, %v7876
      %v7883 = vadd.f32 %v7637, 1.0
      %v7884 = vlog2.pop %v7883
      %v7885 = vmul.f32 %v7884, 0.6931472
      %v7886 = vmul.f32 -0.5, %v7637
      %v7887 = vadd.f32 %v7886, 1.0
      %v7888 = vmul.f32 %v7887, %v7637
      %v7889 = vand.u32 2147483647, %v7637
      %vm7890 = vcmp.lt.f32.partialorder %v7889, 0.0004427343
      %v7891 = vsel %vm7890, %v7888, %v7885
      %v7892 = vadd.f32 %v7639, 1.0
      %v7893 = vlog2.pop %v7892
      %v7894 = vmul.f32 %v7893, 0.6931472
      %v7895 = vmul.f32 -0.5, %v7639
      %v7896 = vadd.f32 %v7895, 1.0
      %v7897 = vmul.f32 %v7896, %v7639
      %v7898 = vand.u32 2147483647, %v7639
      %vm7899 = vcmp.lt.f32.partialorder %v7898, 0.0004427343
      %v7900 = vsel %vm7899, %v7897, %v7894
      %v7901 = vadd.f32 %v7641, 1.0
      %v7902 = vlog2.pop %v7901
      %v7903 = vmul.f32 %v7902, 0.6931472
      %v7904 = vmul.f32 -0.5, %v7641
      %v7905 = vadd.f32 %v7904, 1.0
      %v7906 = vmul.f32 %v7905, %v7641
      %v7907 = vand.u32 2147483647, %v7641
      %vm7908 = vcmp.lt.f32.partialorder %v7907, 0.0004427343
      %v7909 = vsel %vm7908, %v7906, %v7903
      %v7910 = vadd.f32 %v7643, 1.0
      %v7911 = vlog2.pop %v7910
      %v7912 = vmul.f32 %v7911, 0.6931472
      %v7913 = vmul.f32 -0.5, %v7643
      %v7914 = vadd.f32 %v7913, 1.0
      %v7915 = vmul.f32 %v7914, %v7643
      %v7916 = vand.u32 2147483647, %v7643
      %vm7917 = vcmp.lt.f32.partialorder %v7916, 0.0004427343
      %v7918 = vsel %vm7917, %v7915, %v7912
      %v7919 = vadd.f32 %v7645, 1.0
      %v7920 = vlog2.pop %v7919
      %v7921 = vmul.f32 %v7920, 0.6931472
      %v7922 = vmul.f32 -0.5, %v7645
      %v7923 = vadd.f32 %v7922, 1.0
      %v7924 = vmul.f32 %v7923, %v7645
      %v7925 = vand.u32 2147483647, %v7645
      %vm7926 = vcmp.lt.f32.partialorder %v7925, 0.0004427343
      %v7927 = vsel %vm7926, %v7924, %v7921
      %v7928 = vadd.f32 %v7647, 1.0
      %v7929 = vlog2.pop %v7928
      %v7930 = vmul.f32 %v7929, 0.6931472
      %v7931 = vmul.f32 -0.5, %v7647
      %v7932 = vadd.f32 %v7931, 1.0
      %v7933 = vmul.f32 %v7932, %v7647
      %v7934 = vand.u32 2147483647, %v7647
      %vm7935 = vcmp.lt.f32.partialorder %v7934, 0.0004427343
      %v7936 = vsel %vm7935, %v7933, %v7930
      %v7937 = vadd.f32 %v7649, 1.0
      %v7938 = vlog2.pop %v7937
      %v7939 = vmul.f32 %v7938, 0.6931472
      %v7940 = vmul.f32 -0.5, %v7649
      %v7941 = vadd.f32 %v7940, 1.0
      %v7942 = vmul.f32 %v7941, %v7649
      %v7943 = vand.u32 2147483647, %v7649
      %vm7944 = vcmp.lt.f32.partialorder %v7943, 0.0004427343
      %v7945 = vsel %vm7944, %v7942, %v7939
      %v7946 = vadd.f32 %v7651, 1.0
      %v7947 = vlog2.pop %v7946
      %v7948 = vmul.f32 %v7947, 0.6931472
      %v7949 = vmul.f32 -0.5, %v7651
      %v7950 = vadd.f32 %v7949, 1.0
      %v7951 = vmul.f32 %v7950, %v7651
      %v7952 = vand.u32 2147483647, %v7651
      %vm7953 = vcmp.lt.f32.partialorder %v7952, 0.0004427343
      %v7954 = vsel %vm7953, %v7951, %v7948
      %v7955 = vadd.f32 %v7653, 1.0
      %v7956 = vlog2.pop %v7955
      %v7957 = vmul.f32 %v7956, 0.6931472
      %v7958 = vmul.f32 -0.5, %v7653
      %v7959 = vadd.f32 %v7958, 1.0
      %v7960 = vmul.f32 %v7959, %v7653
      %v7961 = vand.u32 2147483647, %v7653
      %vm7962 = vcmp.lt.f32.partialorder %v7961, 0.0004427343
      %v7963 = vsel %vm7962, %v7960, %v7957
      %v7964 = vadd.f32 %v7655, 1.0
      %v7965 = vlog2.pop %v7964
      %v7966 = vmul.f32 %v7965, 0.6931472
      %v7967 = vmul.f32 -0.5, %v7655
      %v7968 = vadd.f32 %v7967, 1.0
      %v7969 = vmul.f32 %v7968, %v7655
      %v7970 = vand.u32 2147483647, %v7655
      %vm7971 = vcmp.lt.f32.partialorder %v7970, 0.0004427343
      %v7972 = vsel %vm7971, %v7969, %v7966
      %v7973 = vadd.f32 %v7657, 1.0
      %v7974 = vlog2.pop %v7973
      %v7975 = vmul.f32 %v7974, 0.6931472
      %v7976 = vmul.f32 -0.5, %v7657
      %v7977 = vadd.f32 %v7976, 1.0
      %v7978 = vmul.f32 %v7977, %v7657
      %v7979 = vand.u32 2147483647, %v7657
      %vm7980 = vcmp.lt.f32.partialorder %v7979, 0.0004427343
      %v7981 = vsel %vm7980, %v7978, %v7975
      %v7982 = vadd.f32 %v7659, 1.0
      %v7983 = vlog2.pop %v7982
      %v7984 = vmul.f32 %v7983, 0.6931472
      %v7985 = vmul.f32 -0.5, %v7659
      %v7986 = vadd.f32 %v7985, 1.0
      %v7987 = vmul.f32 %v7986, %v7659
      %v7988 = vand.u32 2147483647, %v7659
      %vm7989 = vcmp.lt.f32.partialorder %v7988, 0.0004427343
      %v7990 = vsel %vm7989, %v7987, %v7984
      %v7991 = vadd.f32 %v7661, 1.0
      %v7992 = vlog2.pop %v7991
      %v7993 = vmul.f32 %v7992, 0.6931472
      %v7994 = vmul.f32 -0.5, %v7661
      %v7995 = vadd.f32 %v7994, 1.0
      %v7996 = vmul.f32 %v7995, %v7661
      %v7997 = vand.u32 2147483647, %v7661
      %vm7998 = vcmp.lt.f32.partialorder %v7997, 0.0004427343
      %v7999 = vsel %vm7998, %v7996, %v7993
      %v8000 = vadd.f32 %v7663, 1.0
      %v8001 = vlog2.pop %v8000
      %v8002 = vmul.f32 %v8001, 0.6931472
      %v8003 = vmul.f32 -0.5, %v7663
      %v8004 = vadd.f32 %v8003, 1.0
      %v8005 = vmul.f32 %v8004, %v7663
      %v8006 = vand.u32 2147483647, %v7663
      %vm8007 = vcmp.lt.f32.partialorder %v8006, 0.0004427343
      %v8008 = vsel %vm8007, %v8005, %v8002
      %v8009 = vadd.f32 %v7665, 1.0
      %v8010 = vlog2.pop %v8009
      %v8011 = vmul.f32 %v8010, 0.6931472
      %v8012 = vmul.f32 -0.5, %v7665
      %v8013 = vadd.f32 %v8012, 1.0
      %v8014 = vmul.f32 %v8013, %v7665
      %v8015 = vand.u32 2147483647, %v7665
      %vm8016 = vcmp.lt.f32.partialorder %v8015, 0.0004427343
      %v8017 = vsel %vm8016, %v8014, %v8011
      %v8018 = vadd.f32 %v7667, 1.0
      %v8019 = vlog2.pop %v8018
      %v8020 = vmul.f32 %v8019, 0.6931472
      %v8021 = vmul.f32 -0.5, %v7667
      %v8022 = vadd.f32 %v8021, 1.0
      %v8023 = vmul.f32 %v8022, %v7667
      %v8024 = vand.u32 2147483647, %v7667
      %vm8025 = vcmp.lt.f32.partialorder %v8024, 0.0004427343
      %v8026 = vsel %vm8025, %v8023, %v8020
      %v8027 = vadd.f32 %v7669, 1.0
      %v8028 = vlog2.pop %v8027
      %v8029 = vmul.f32 %v8028, 0.6931472
      %v8030 = vmul.f32 -0.5, %v7669
      %v8031 = vadd.f32 %v8030, 1.0
      %v8032 = vmul.f32 %v8031, %v7669
      %v8033 = vand.u32 2147483647, %v7669
      %vm8034 = vcmp.lt.f32.partialorder %v8033, 0.0004427343
      %v8035 = vsel %vm8034, %v8032, %v8029
      %v8036 = vadd.f32 %v7671, 1.0
      %v8037 = vlog2.pop %v8036
      %v8038 = vmul.f32 %v8037, 0.6931472
      %v8039 = vmul.f32 -0.5, %v7671
      %v8040 = vadd.f32 %v8039, 1.0
      %v8041 = vmul.f32 %v8040, %v7671
      %v8042 = vand.u32 2147483647, %v7671
      %vm8043 = vcmp.lt.f32.partialorder %v8042, 0.0004427343
      %v8044 = vsel %vm8043, %v8041, %v8038
      %v8045 = vadd.f32 %v7673, 1.0
      %v8046 = vlog2.pop %v8045
      %v8047 = vmul.f32 %v8046, 0.6931472
      %v8048 = vmul.f32 -0.5, %v7673
      %v8049 = vadd.f32 %v8048, 1.0
      %v8050 = vmul.f32 %v8049, %v7673
      %v8051 = vand.u32 2147483647, %v7673
      %vm8052 = vcmp.lt.f32.partialorder %v8051, 0.0004427343
      %v8053 = vsel %vm8052, %v8050, %v8047
      %v8054 = vadd.f32 %v7675, 1.0
      %v8055 = vlog2.pop %v8054
      %v8056 = vmul.f32 %v8055, 0.6931472
      %v8057 = vmul.f32 -0.5, %v7675
      %v8058 = vadd.f32 %v8057, 1.0
      %v8059 = vmul.f32 %v8058, %v7675
      %v8060 = vand.u32 2147483647, %v7675
      %vm8061 = vcmp.lt.f32.partialorder %v8060, 0.0004427343
      %v8062 = vsel %vm8061, %v8059, %v8056
      %v8063 = vadd.f32 %v7677, 1.0
      %v8064 = vlog2.pop %v8063
      %v8065 = vmul.f32 %v8064, 0.6931472
      %v8066 = vmul.f32 -0.5, %v7677
      %v8067 = vadd.f32 %v8066, 1.0
      %v8068 = vmul.f32 %v8067, %v7677
      %v8069 = vand.u32 2147483647, %v7677
      %vm8070 = vcmp.lt.f32.partialorder %v8069, 0.0004427343
      %v8071 = vsel %vm8070, %v8068, %v8065
      %v8072 = vadd.f32 %v7679, 1.0
      %v8073 = vlog2.pop %v8072
      %v8074 = vmul.f32 %v8073, 0.6931472
      %v8075 = vmul.f32 -0.5, %v7679
      %v8076 = vadd.f32 %v8075, 1.0
      %v8077 = vmul.f32 %v8076, %v7679
      %v8078 = vand.u32 2147483647, %v7679
      %vm8079 = vcmp.lt.f32.partialorder %v8078, 0.0004427343
      %v8080 = vsel %vm8079, %v8077, %v8074
      %v8081 = vadd.f32 %v7681, 1.0
      %v8082 = vlog2.pop %v8081
      %v8083 = vmul.f32 %v8082, 0.6931472
      %v8084 = vmul.f32 -0.5, %v7681
      %v8085 = vadd.f32 %v8084, 1.0
      %v8086 = vmul.f32 %v8085, %v7681
      %v8087 = vand.u32 2147483647, %v7681
      %vm8088 = vcmp.lt.f32.partialorder %v8087, 0.0004427343
      %v8089 = vsel %vm8088, %v8086, %v8083
      %v8090 = vadd.f32 %v7683, 1.0
      %v8091 = vlog2.pop %v8090
      %v8092 = vmul.f32 %v8091, 0.6931472
      %v8093 = vmul.f32 -0.5, %v7683
      %v8094 = vadd.f32 %v8093, 1.0
      %v8095 = vmul.f32 %v8094, %v7683
      %v8096 = vand.u32 2147483647, %v7683
      %vm8097 = vcmp.lt.f32.partialorder %v8096, 0.0004427343
      %v8098 = vsel %vm8097, %v8095, %v8092
      %v8099 = vadd.f32 %v7685, 1.0
      %v8100 = vlog2.pop %v8099
      %v8101 = vmul.f32 %v8100, 0.6931472
      %v8102 = vmul.f32 -0.5, %v7685
      %v8103 = vadd.f32 %v8102, 1.0
      %v8104 = vmul.f32 %v8103, %v7685
      %v8105 = vand.u32 2147483647, %v7685
      %vm8106 = vcmp.lt.f32.partialorder %v8105, 0.0004427343
      %v8107 = vsel %vm8106, %v8104, %v8101
      %v8108 = vadd.f32 %v7687, 1.0
      %v8109 = vlog2.pop %v8108
      %v8110 = vmul.f32 %v8109, 0.6931472
      %v8111 = vmul.f32 -0.5, %v7687
      %v8112 = vadd.f32 %v8111, 1.0
      %v8113 = vmul.f32 %v8112, %v7687
      %v8114 = vand.u32 2147483647, %v7687
      %vm8115 = vcmp.lt.f32.partialorder %v8114, 0.0004427343
      %v8116 = vsel %vm8115, %v8113, %v8110
      %v8117 = vadd.f32 %v7689, 1.0
      %v8118 = vlog2.pop %v8117
      %v8119 = vmul.f32 %v8118, 0.6931472
      %v8120 = vmul.f32 -0.5, %v7689
      %v8121 = vadd.f32 %v8120, 1.0
      %v8122 = vmul.f32 %v8121, %v7689
      %v8123 = vand.u32 2147483647, %v7689
      %vm8124 = vcmp.lt.f32.partialorder %v8123, 0.0004427343
      %v8125 = vsel %vm8124, %v8122, %v8119
      %v8126 = vadd.f32 %v7691, 1.0
      %v8127 = vlog2.pop %v8126
      %v8128 = vmul.f32 %v8127, 0.6931472
      %v8129 = vmul.f32 -0.5, %v7691
      %v8130 = vadd.f32 %v8129, 1.0
      %v8131 = vmul.f32 %v8130, %v7691
      %v8132 = vand.u32 2147483647, %v7691
      %vm8133 = vcmp.lt.f32.partialorder %v8132, 0.0004427343
      %v8134 = vsel %vm8133, %v8131, %v8128
      %v8135 = vadd.f32 %v7693, 1.0
      %v8136 = vlog2.pop %v8135
      %v8137 = vmul.f32 %v8136, 0.6931472
      %v8138 = vmul.f32 -0.5, %v7693
      %v8139 = vadd.f32 %v8138, 1.0
      %v8140 = vmul.f32 %v8139, %v7693
      %v8141 = vand.u32 2147483647, %v7693
      %vm8142 = vcmp.lt.f32.partialorder %v8141, 0.0004427343
      %v8143 = vsel %vm8142, %v8140, %v8137
      %v8144 = vadd.f32 %v7695, 1.0
      %v8145 = vlog2.pop %v8144
      %v8146 = vmul.f32 %v8145, 0.6931472
      %v8147 = vmul.f32 -0.5, %v7695
      %v8148 = vadd.f32 %v8147, 1.0
      %v8149 = vmul.f32 %v8148, %v7695
      %v8150 = vand.u32 2147483647, %v7695
      %vm8151 = vcmp.lt.f32.partialorder %v8150, 0.0004427343
      %v8152 = vsel %vm8151, %v8149, %v8146
      %v8153 = vadd.f32 %v7697, 1.0
      %v8154 = vlog2.pop %v8153
      %v8155 = vmul.f32 %v8154, 0.6931472
      %v8156 = vmul.f32 -0.5, %v7697
      %v8157 = vadd.f32 %v8156, 1.0
      %v8158 = vmul.f32 %v8157, %v7697
      %v8159 = vand.u32 2147483647, %v7697
      %vm8160 = vcmp.lt.f32.partialorder %v8159, 0.0004427343
      %v8161 = vsel %vm8160, %v8158, %v8155
      %v8162 = vadd.f32 %v7699, 1.0
      %v8163 = vlog2.pop %v8162
      %v8164 = vmul.f32 %v8163, 0.6931472
      %v8165 = vmul.f32 -0.5, %v7699
      %v8166 = vadd.f32 %v8165, 1.0
      %v8167 = vmul.f32 %v8166, %v7699
      %v8168 = vand.u32 2147483647, %v7699
      %vm8169 = vcmp.lt.f32.partialorder %v8168, 0.0004427343
      %v8170 = vsel %vm8169, %v8167, %v8164
      %v8171 = vadd.f32 %v7701, 1.0
      %v8172 = vlog2.pop %v8171
      %v8173 = vmul.f32 %v8172, 0.6931472
      %v8174 = vmul.f32 -0.5, %v7701
      %v8175 = vadd.f32 %v8174, 1.0
      %v8176 = vmul.f32 %v8175, %v7701
      %v8177 = vand.u32 2147483647, %v7701
      %vm8178 = vcmp.lt.f32.partialorder %v8177, 0.0004427343
      %v8179 = vsel %vm8178, %v8176, %v8173
      %v8180 = vadd.f32 %v7703, 1.0
      %v8181 = vlog2.pop %v8180
      %v8182 = vmul.f32 %v8181, 0.6931472
      %v8183 = vmul.f32 -0.5, %v7703
      %v8184 = vadd.f32 %v8183, 1.0
      %v8185 = vmul.f32 %v8184, %v7703
      %v8186 = vand.u32 2147483647, %v7703
      %vm8187 = vcmp.lt.f32.partialorder %v8186, 0.0004427343
      %v8188 = vsel %vm8187, %v8185, %v8182
      %v8189 = vadd.f32 %v7705, 1.0
      %v8190 = vlog2.pop %v8189
      %v8191 = vmul.f32 %v8190, 0.6931472
      %v8192 = vmul.f32 -0.5, %v7705
      %v8193 = vadd.f32 %v8192, 1.0
      %v8194 = vmul.f32 %v8193, %v7705
      %v8195 = vand.u32 2147483647, %v7705
      %vm8196 = vcmp.lt.f32.partialorder %v8195, 0.0004427343
      %v8197 = vsel %vm8196, %v8194, %v8191
      %v8198 = vadd.f32 %v7707, 1.0
      %v8199 = vlog2.pop %v8198
      %v8200 = vmul.f32 %v8199, 0.6931472
      %v8201 = vmul.f32 -0.5, %v7707
      %v8202 = vadd.f32 %v8201, 1.0
      %v8203 = vmul.f32 %v8202, %v7707
      %v8204 = vand.u32 2147483647, %v7707
      %vm8205 = vcmp.lt.f32.partialorder %v8204, 0.0004427343
      %v8206 = vsel %vm8205, %v8203, %v8200
      %v8207 = vadd.f32 %v7709, 1.0
      %v8208 = vlog2.pop %v8207
      %v8209 = vmul.f32 %v8208, 0.6931472
      %v8210 = vmul.f32 -0.5, %v7709
      %v8211 = vadd.f32 %v8210, 1.0
      %v8212 = vmul.f32 %v8211, %v7709
      %v8213 = vand.u32 2147483647, %v7709
      %vm8214 = vcmp.lt.f32.partialorder %v8213, 0.0004427343
      %v8215 = vsel %vm8214, %v8212, %v8209
      %v8216 = vadd.f32 %v7711, 1.0
      %v8217 = vlog2.pop %v8216
      %v8218 = vmul.f32 %v8217, 0.6931472
      %v8219 = vmul.f32 -0.5, %v7711
      %v8220 = vadd.f32 %v8219, 1.0
      %v8221 = vmul.f32 %v8220, %v7711
      %v8222 = vand.u32 2147483647, %v7711
      %vm8223 = vcmp.lt.f32.partialorder %v8222, 0.0004427343
      %v8224 = vsel %vm8223, %v8221, %v8218
      %v8225 = vadd.f32 %v7713, 1.0
      %v8226 = vlog2.pop %v8225
      %v8227 = vmul.f32 %v8226, 0.6931472
      %v8228 = vmul.f32 -0.5, %v7713
      %v8229 = vadd.f32 %v8228, 1.0
      %v8230 = vmul.f32 %v8229, %v7713
      %v8231 = vand.u32 2147483647, %v7713
      %vm8232 = vcmp.lt.f32.partialorder %v8231, 0.0004427343
      %v8233 = vsel %vm8232, %v8230, %v8227
      %v8234 = vadd.f32 %v7715, 1.0
      %v8235 = vlog2.pop %v8234
      %v8236 = vmul.f32 %v8235, 0.6931472
      %v8237 = vmul.f32 -0.5, %v7715
      %v8238 = vadd.f32 %v8237, 1.0
      %v8239 = vmul.f32 %v8238, %v7715
      %v8240 = vand.u32 2147483647, %v7715
      %vm8241 = vcmp.lt.f32.partialorder %v8240, 0.0004427343
      %v8242 = vsel %vm8241, %v8239, %v8236
      %v8243 = vadd.f32 %v7717, 1.0
      %v8244 = vlog2.pop %v8243
      %v8245 = vmul.f32 %v8244, 0.6931472
      %v8246 = vmul.f32 -0.5, %v7717
      %v8247 = vadd.f32 %v8246, 1.0
      %v8248 = vmul.f32 %v8247, %v7717
      %v8249 = vand.u32 2147483647, %v7717
      %vm8250 = vcmp.lt.f32.partialorder %v8249, 0.0004427343
      %v8251 = vsel %vm8250, %v8248, %v8245
      %v8252 = vadd.f32 %v7719, 1.0
      %v8253 = vlog2.pop %v8252
      %v8254 = vmul.f32 %v8253, 0.6931472
      %v8255 = vmul.f32 -0.5, %v7719
      %v8256 = vadd.f32 %v8255, 1.0
      %v8257 = vmul.f32 %v8256, %v7719
      %v8258 = vand.u32 2147483647, %v7719
      %vm8259 = vcmp.lt.f32.partialorder %v8258, 0.0004427343
      %v8260 = vsel %vm8259, %v8257, %v8254
      %v8261 = vadd.f32 %v7721, 1.0
      %v8262 = vlog2.pop %v8261
      %v8263 = vmul.f32 %v8262, 0.6931472
      %v8264 = vmul.f32 -0.5, %v7721
      %v8265 = vadd.f32 %v8264, 1.0
      %v8266 = vmul.f32 %v8265, %v7721
      %v8267 = vand.u32 2147483647, %v7721
      %vm8268 = vcmp.lt.f32.partialorder %v8267, 0.0004427343
      %v8269 = vsel %vm8268, %v8266, %v8263
      %v8270 = vadd.f32 %v7723, 1.0
      %v8271 = vlog2.pop %v8270
      %v8272 = vmul.f32 %v8271, 0.6931472
      %v8273 = vmul.f32 -0.5, %v7723
      %v8274 = vadd.f32 %v8273, 1.0
      %v8275 = vmul.f32 %v8274, %v7723
      %v8276 = vand.u32 2147483647, %v7723
      %vm8277 = vcmp.lt.f32.partialorder %v8276, 0.0004427343
      %v8278 = vsel %vm8277, %v8275, %v8272
      %v8279 = vadd.f32 %v7725, 1.0
      %v8280 = vlog2.pop %v8279
      %v8281 = vmul.f32 %v8280, 0.6931472
      %v8282 = vmul.f32 -0.5, %v7725
      %v8283 = vadd.f32 %v8282, 1.0
      %v8284 = vmul.f32 %v8283, %v7725
      %v8285 = vand.u32 2147483647, %v7725
      %vm8286 = vcmp.lt.f32.partialorder %v8285, 0.0004427343
      %v8287 = vsel %vm8286, %v8284, %v8281
      %v8288 = vadd.f32 %v7727, 1.0
      %v8289 = vlog2.pop %v8288
      %v8290 = vmul.f32 %v8289, 0.6931472
      %v8291 = vmul.f32 -0.5, %v7727
      %v8292 = vadd.f32 %v8291, 1.0
      %v8293 = vmul.f32 %v8292, %v7727
      %v8294 = vand.u32 2147483647, %v7727
      %vm8295 = vcmp.lt.f32.partialorder %v8294, 0.0004427343
      %v8296 = vsel %vm8295, %v8293, %v8290
      %v8297 = vadd.f32 %v7729, 1.0
      %v8298 = vlog2.pop %v8297
      %v8299 = vmul.f32 %v8298, 0.6931472
      %v8300 = vmul.f32 -0.5, %v7729
      %v8301 = vadd.f32 %v8300, 1.0
      %v8302 = vmul.f32 %v8301, %v7729
      %v8303 = vand.u32 2147483647, %v7729
      %vm8304 = vcmp.lt.f32.partialorder %v8303, 0.0004427343
      %v8305 = vsel %vm8304, %v8302, %v8299
      %v8306 = vmul.f32 %v7738, 0.01
      %v8307 = vmul.f32 %v7747, 0.01
      %v8308 = vmul.f32 %v7756, 0.01
      %v8309 = vmul.f32 %v7765, 0.01
      %v8310 = vmul.f32 %v7774, 0.01
      %v8311 = vmul.f32 %v7783, 0.01
      %v8312 = vmul.f32 %v7792, 0.01
      %v8313 = vmul.f32 %v7801, 0.01
      %v8314 = vmul.f32 %v7810, 0.01
      %v8315 = vmul.f32 %v7819, 0.01
      %v8316 = vmul.f32 %v7828, 0.01
      %v8317 = vmul.f32 %v7837, 0.01
      %v8318 = vmul.f32 %v7846, 0.01
      %v8319 = vmul.f32 %v7855, 0.01
      %v8320 = vmul.f32 %v7864, 0.01
      %v8321 = vmul.f32 %v7873, 0.01
      %v8322 = vmul.f32 %v7882, 0.01
      %v8323 = vmul.f32 %v7891, 0.01
      %v8324 = vmul.f32 %v7900, 0.01
      %v8325 = vmul.f32 %v7909, 0.01
      %v8326 = vmul.f32 %v7918, 0.01
      %v8327 = vmul.f32 %v7927, 0.01
      %v8328 = vmul.f32 %v7936, 0.01
      %v8329 = vmul.f32 %v7945, 0.01
      %v8330 = vmul.f32 %v7954, 0.01
      %v8331 = vmul.f32 %v7963, 0.01
      %v8332 = vmul.f32 %v7972, 0.01
      %v8333 = vmul.f32 %v7981, 0.01
      %v8334 = vmul.f32 %v7990, 0.01
      %v8335 = vmul.f32 %v7999, 0.01
      %v8336 = vmul.f32 %v8008, 0.01
      %v8337 = vmul.f32 %v8017, 0.01
      %v8338 = vmul.f32 %v8026, 0.01
      %v8339 = vmul.f32 %v8035, 0.01
      %v8340 = vmul.f32 %v8044, 0.01
      %v8341 = vmul.f32 %v8053, 0.01
      %v8342 = vmul.f32 %v8062, 0.01
      %v8343 = vmul.f32 %v8071, 0.01
      %v8344 = vmul.f32 %v8080, 0.01
      %v8345 = vmul.f32 %v8089, 0.01
      %v8346 = vmul.f32 %v8098, 0.01
      %v8347 = vmul.f32 %v8107, 0.01
      %v8348 = vmul.f32 %v8116, 0.01
      %v8349 = vmul.f32 %v8125, 0.01
      %v8350 = vmul.f32 %v8134, 0.01
      %v8351 = vmul.f32 %v8143, 0.01
      %v8352 = vmul.f32 %v8152, 0.01
      %v8353 = vmul.f32 %v8161, 0.01
      %v8354 = vmul.f32 %v8170, 0.01
      %v8355 = vmul.f32 %v8179, 0.01
      %v8356 = vmul.f32 %v8188, 0.01
      %v8357 = vmul.f32 %v8197, 0.01
      %v8358 = vmul.f32 %v8206, 0.01
      %v8359 = vmul.f32 %v8215, 0.01
      %v8360 = vmul.f32 %v8224, 0.01
      %v8361 = vmul.f32 %v8233, 0.01
      %v8362 = vmul.f32 %v8242, 0.01
      %v8363 = vmul.f32 %v8251, 0.01
      %v8364 = vmul.f32 %v8260, 0.01
      %v8365 = vmul.f32 %v8269, 0.01
      %v8366 = vmul.f32 %v8278, 0.01
      %v8367 = vmul.f32 %v8287, 0.01
      %v8368 = vmul.f32 %v8296, 0.01
      %v8369 = vmul.f32 %v8305, 0.01
      %v8370 = vsel %vm7474, %v7156, %v8306
      %v8371 = vsel %vm7475, %v7159, %v8307
      %v8372 = vsel %vm7476, %v7164, %v8308
      %v8373 = vsel %vm7477, %v7167, %v8309
      %v8374 = vsel %vm7478, %v7172, %v8310
      %v8375 = vsel %vm7479, %v7175, %v8311
      %v8376 = vsel %vm7480, %v7180, %v8312
      %v8377 = vsel %vm7481, %v7183, %v8313
      %v8378 = vsel %vm7482, %v7188, %v8314
      %v8379 = vsel %vm7483, %v7191, %v8315
      %v8380 = vsel %vm7484, %v7196, %v8316
      %v8381 = vsel %vm7485, %v7199, %v8317
      %v8382 = vsel %vm7486, %v7204, %v8318
      %v8383 = vsel %vm7487, %v7207, %v8319
      %v8384 = vsel %vm7488, %v7212, %v8320
      %v8385 = vsel %vm7489, %v7215, %v8321
      %v8386 = vsel %vm7490, %v7220, %v8322
      %v8387 = vsel %vm7491, %v7223, %v8323
      %v8388 = vsel %vm7492, %v7228, %v8324
      %v8389 = vsel %vm7493, %v7231, %v8325
      %v8390 = vsel %vm7494, %v7236, %v8326
      %v8391 = vsel %vm7495, %v7239, %v8327
      %v8392 = vsel %vm7496, %v7244, %v8328
      %v8393 = vsel %vm7497, %v7247, %v8329
      %v8394 = vsel %vm7498, %v7252, %v8330
      %v8395 = vsel %vm7499, %v7255, %v8331
      %v8396 = vsel %vm7500, %v7260, %v8332
      %v8397 = vsel %vm7501, %v7263, %v8333
      %v8398 = vsel %vm7502, %v7268, %v8334
      %v8399 = vsel %vm7503, %v7271, %v8335
      %v8400 = vsel %vm7504, %v7276, %v8336
      %v8401 = vsel %vm7505, %v7279, %v8337
      %v8402 = vsel %vm7506, %v7284, %v8338
      %v8403 = vsel %vm7507, %v7287, %v8339
      %v8404 = vsel %vm7508, %v7292, %v8340
      %v8405 = vsel %vm7509, %v7295, %v8341
      %v8406 = vsel %vm7510, %v7300, %v8342
      %v8407 = vsel %vm7511, %v7303, %v8343
      %v8408 = vsel %vm7512, %v7308, %v8344
      %v8409 = vsel %vm7513, %v7311, %v8345
      %v8410 = vsel %vm7514, %v7316, %v8346
      %v8411 = vsel %vm7515, %v7319, %v8347
      %v8412 = vsel %vm7516, %v7324, %v8348
      %v8413 = vsel %vm7517, %v7327, %v8349
      %v8414 = vsel %vm7518, %v7332, %v8350
      %v8415 = vsel %vm7519, %v7335, %v8351
      %v8416 = vsel %vm7520, %v7340, %v8352
      %v8417 = vsel %vm7521, %v7343, %v8353
      %v8418 = vsel %vm7522, %v7348, %v8354
      %v8419 = vsel %vm7523, %v7351, %v8355
      %v8420 = vsel %vm7524, %v7356, %v8356
      %v8421 = vsel %vm7525, %v7359, %v8357
      %v8422 = vsel %vm7526, %v7364, %v8358
      %v8423 = vsel %vm7527, %v7367, %v8359
      %v8424 = vsel %vm7528, %v7372, %v8360
      %v8425 = vsel %vm7529, %v7375, %v8361
      %v8426 = vsel %vm7530, %v7380, %v8362
      %v8427 = vsel %vm7531, %v7383, %v8363
      %v8428 = vsel %vm7532, %v7388, %v8364
      %v8429 = vsel %vm7533, %v7391, %v8365
      %v8430 = vsel %vm7534, %v7396, %v8366
      %v8431 = vsel %vm7535, %v7399, %v8367
      %v8432 = vsel %vm7536, %v7404, %v8368
      %v8433 = vsel %vm7537, %v7407, %v8369
      %v8434 = vpack.c.bf16 %v8371, %v8370
      %v8435 = vpack.c.bf16 %v8373, %v8372
      %v8436 = vpack.c.bf16 %v8375, %v8374
      %v8437 = vpack.c.bf16 %v8377, %v8376
      %v8438 = vpack.c.bf16 %v8379, %v8378
      %v8439 = vpack.c.bf16 %v8381, %v8380
      %v8440 = vpack.c.bf16 %v8383, %v8382
      %v8441 = vpack.c.bf16 %v8385, %v8384
      %v8442 = vpack.c.bf16 %v8387, %v8386
      %v8443 = vpack.c.bf16 %v8389, %v8388
      %v8444 = vpack.c.bf16 %v8391, %v8390
      %v8445 = vpack.c.bf16 %v8393, %v8392
      %v8446 = vpack.c.bf16 %v8395, %v8394
      %v8447 = vpack.c.bf16 %v8397, %v8396
      %v8448 = vpack.c.bf16 %v8399, %v8398
      %v8449 = vpack.c.bf16 %v8401, %v8400
      %v8450 = vpack.c.bf16 %v8403, %v8402
      %v8451 = vpack.c.bf16 %v8405, %v8404
      %v8452 = vpack.c.bf16 %v8407, %v8406
      %v8453 = vpack.c.bf16 %v8409, %v8408
      %v8454 = vpack.c.bf16 %v8411, %v8410
      %v8455 = vpack.c.bf16 %v8413, %v8412
      %v8456 = vpack.c.bf16 %v8415, %v8414
      %v8457 = vpack.c.bf16 %v8417, %v8416
      %v8458 = vpack.c.bf16 %v8419, %v8418
      %v8459 = vpack.c.bf16 %v8421, %v8420
      %v8460 = vpack.c.bf16 %v8423, %v8422
      %v8461 = vpack.c.bf16 %v8425, %v8424
      %v8462 = vpack.c.bf16 %v8427, %v8426
      %v8463 = vpack.c.bf16 %v8429, %v8428
      %v8464 = vpack.c.bf16 %v8431, %v8430
      %v8465 = vpack.c.bf16 %v8433, %v8432
      %v8466 = vld [vmem:[%s7] sm:$0xf]
      %v8467 = vld [vmem:[%s7 + $0x4] sm:$0xf]
      %v8468 = vld [vmem:[%s7 + $0x8] sm:$0xf]
      %v8469 = vld [vmem:[%s7 + $0xc] sm:$0xf]
      %v8470 = vld [vmem:[%s7 + $0x10] sm:$0xf]
      %v8471 = vld [vmem:[%s7 + $0x14] sm:$0xf]
      %v8472 = vld [vmem:[%s7 + $0x18] sm:$0xf]
      %v8473 = vld [vmem:[%s7 + $0x1c] sm:$0xf]
      %v8474 = vld [vmem:[%s7 + $0x20] sm:$0xf]
      %v8475 = vld [vmem:[%s7 + $0x24] sm:$0xf]
      %v8476 = vld [vmem:[%s7 + $0x28] sm:$0xf]
      %v8477 = vld [vmem:[%s7 + $0x2c] sm:$0xf]
      %v8478 = vld [vmem:[%s7 + $0x30] sm:$0xf]
      %v8479 = vld [vmem:[%s7 + $0x34] sm:$0xf]
      %v8480 = vld [vmem:[%s7 + $0x38] sm:$0xf]
      %v8481 = vld [vmem:[%s7 + $0x3c] sm:$0xf]
      %v8482 = vld [vmem:[%s8] sm:$0x1]
      %v8484 = vlaneseq
      %v8485 = vshrl.u32 %v8484, 7
      %v8486 = vsub.s32 0, %v8485
      %v8487 = vrot.slane %v8482, %v8486
      %v8505 = vunpack.c.l.b16 %v8466
      %v8506 = vunpack.c.l.b16 %v8467
      %v8507 = vunpack.c.l.b16 %v8468
      %v8508 = vunpack.c.l.b16 %v8469
      %v8509 = vunpack.c.l.b16 %v8470
      %v8510 = vunpack.c.l.b16 %v8471
      %v8511 = vunpack.c.l.b16 %v8472
      %v8512 = vunpack.c.l.b16 %v8473
      %v8513 = vunpack.c.l.b16 %v8474
      %v8514 = vunpack.c.l.b16 %v8475
      %v8515 = vunpack.c.l.b16 %v8476
      %v8516 = vunpack.c.l.b16 %v8477
      %v8517 = vunpack.c.l.b16 %v8478
      %v8518 = vunpack.c.l.b16 %v8479
      %v8519 = vunpack.c.l.b16 %v8480
      %v8520 = vunpack.c.l.b16 %v8481
      %v8521 = vpack.c.b16 %v8506, %v8505
      %v8522 = vpack.c.b16 %v8508, %v8507
      %v8523 = vpack.c.b16 %v8510, %v8509
      %v8524 = vpack.c.b16 %v8512, %v8511
      %v8525 = vpack.c.b16 %v8514, %v8513
      %v8526 = vpack.c.b16 %v8516, %v8515
      %v8527 = vpack.c.b16 %v8518, %v8517
      %v8528 = vpack.c.b16 %v8520, %v8519
      %8537 = vmatprep.subr.bf16.mxu0 0
      %8538 = vmatpush1.bf16.msra.mxu0 %v8521
      %8539 = vmatprep.subr.bf16.mxu0 0
      %8540 = vmatpush1.bf16.msra.mxu0 %v8522
      %8541 = vmatprep.subr.bf16.mxu0 0
      %8542 = vmatpush1.bf16.msra.mxu0 %v8523
      %8543 = vmatprep.subr.bf16.mxu0 0
      %8544 = vmatpush1.bf16.msra.mxu0 %v8524
      %8545 = vmatprep.subr.bf16.mxu0 0
      %8546 = vmatpush1.bf16.msra.mxu0 %v8525
      %8547 = vmatprep.subr.bf16.mxu0 0
      %8548 = vmatpush1.bf16.msra.mxu0 %v8526
      %8549 = vmatprep.subr.bf16.mxu0 0
      %8550 = vmatpush1.bf16.msra.mxu0 %v8527
      %8551 = vmatprep.subr.bf16.mxu0 0
      %8552 = vmatpush1.bf16.msra.mxu0 %v8528
      %8553 = vmatprep.subr.bf16.mxu0 0
      %8554 = vmatpush1.bf16.msra.mxu0 0
      %8555 = vmatprep.subr.bf16.mxu0 0
      %8556 = vmatpush1.bf16.msra.mxu0 0
      %8557 = vmatprep.subr.bf16.mxu0 0
      %8558 = vmatpush1.bf16.msra.mxu0 0
      %8559 = vmatprep.subr.bf16.mxu0 0
      %8560 = vmatpush1.bf16.msra.mxu0 0
      %8561 = vmatprep.subr.bf16.mxu0 0
      %8562 = vmatpush1.bf16.msra.mxu0 0
      %8563 = vmatprep.subr.bf16.mxu0 0
      %8564 = vmatpush1.bf16.msra.mxu0 0
      %8565 = vmatprep.subr.bf16.mxu0 0
      %8566 = vmatpush1.bf16.msra.mxu0 0
      %8567 = vmatprep.subr.bf16.mxu0 0
      %8568 = vmatpush1.bf16.msra.mxu0 0
      %8569 = vmatprep.mubr.bf16.mxu0 0
      %8570 = vmatmul.mubr.bf16.gmra.mrb[0].mxu0 %v8434
      %v8571 = vpop.f32.mrb[0].mxu0
      %v8572 = vadd.f32 %v8487, %v8571
      %v8573 = vpop.f32.mrb[0].mxu0
      %v8574 = vpop.f32.mrb[0].mxu0
      %v8575 = vadd.f32 %v8487, %v8574
      %v8576 = vpop.f32.mrb[0].mxu0
      %8577 = vmatprep.mubr.bf16.mxu0 0
      %8578 = vmatmul.mubr.bf16.gmra.mrb[0].mxu0 %v8435
      %v8579 = vpop.f32.mrb[0].mxu0
      %v8580 = vadd.f32 %v8487, %v8579
      %v8581 = vpop.f32.mrb[0].mxu0
      %v8582 = vpop.f32.mrb[0].mxu0
      %v8583 = vadd.f32 %v8487, %v8582
      %v8584 = vpop.f32.mrb[0].mxu0
      %8585 = vmatprep.mubr.bf16.mxu0 0
      %8586 = vmatmul.mubr.bf16.gmra.mrb[0].mxu0 %v8436
      %v8587 = vpop.f32.mrb[0].mxu0
      %v8588 = vadd.f32 %v8487, %v8587
      %v8589 = vpop.f32.mrb[0].mxu0
      %v8590 = vpop.f32.mrb[0].mxu0
      %v8591 = vadd.f32 %v8487, %v8590
      %v8592 = vpop.f32.mrb[0].mxu0
      %8593 = vmatprep.mubr.bf16.mxu0 0
      %8594 = vmatmul.mubr.bf16.gmra.mrb[0].mxu0 %v8437
      %v8595 = vpop.f32.mrb[0].mxu0
      %v8596 = vadd.f32 %v8487, %v8595
      %v8597 = vpop.f32.mrb[0].mxu0
      %v8598 = vpop.f32.mrb[0].mxu0
      %v8599 = vadd.f32 %v8487, %v8598
      %v8600 = vpop.f32.mrb[0].mxu0
      %8601 = vmatprep.mubr.bf16.mxu0 0
      %8602 = vmatmul.mubr.bf16.gmra.mrb[0].mxu0 %v8438
      %v8603 = vpop.f32.mrb[0].mxu0
      %v8604 = vadd.f32 %v8487, %v8603
      %v8605 = vpop.f32.mrb[0].mxu0
      %v8606 = vpop.f32.mrb[0].mxu0
      %v8607 = vadd.f32 %v8487, %v8606
      %v8608 = vpop.f32.mrb[0].mxu0
      %8609 = vmatprep.mubr.bf16.mxu0 0
      %8610 = vmatmul.mubr.bf16.gmra.mrb[0].mxu0 %v8439
      %v8611 = vpop.f32.mrb[0].mxu0
      %v8612 = vadd.f32 %v8487, %v8611
      %v8613 = vpop.f32.mrb[0].mxu0
      %v8614 = vpop.f32.mrb[0].mxu0
      %v8615 = vadd.f32 %v8487, %v8614
      %v8616 = vpop.f32.mrb[0].mxu0
      %8617 = vmatprep.mubr.bf16.mxu0 0
      %8618 = vmatmul.mubr.bf16.gmra.mrb[0].mxu0 %v8440
      %v8619 = vpop.f32.mrb[0].mxu0
      %v8620 = vadd.f32 %v8487, %v8619
      %v8621 = vpop.f32.mrb[0].mxu0
      %v8622 = vpop.f32.mrb[0].mxu0
      %v8623 = vadd.f32 %v8487, %v8622
      %v8624 = vpop.f32.mrb[0].mxu0
      %8625 = vmatprep.mubr.bf16.mxu0 0
      %8626 = vmatmul.mubr.bf16.gmra.mrb[0].mxu0 %v8441
      %v8627 = vpop.f32.mrb[0].mxu0
      %v8628 = vadd.f32 %v8487, %v8627
      %v8629 = vpop.f32.mrb[0].mxu0
      %v8630 = vpop.f32.mrb[0].mxu0
      %v8631 = vadd.f32 %v8487, %v8630
      %v8632 = vpop.f32.mrb[0].mxu0
      %8633 = vmatprep.mubr.bf16.mxu0 0
      %8634 = vmatmul.mubr.bf16.gmra.mrb[0].mxu0 %v8442
      %v8635 = vpop.f32.mrb[0].mxu0
      %v8636 = vadd.f32 %v8487, %v8635
      %v8637 = vpop.f32.mrb[0].mxu0
      %v8638 = vpop.f32.mrb[0].mxu0
      %v8639 = vadd.f32 %v8487, %v8638
      %v8640 = vpop.f32.mrb[0].mxu0
      %8641 = vmatprep.mubr.bf16.mxu0 0
      %8642 = vmatmul.mubr.bf16.gmra.mrb[0].mxu0 %v8443
      %v8643 = vpop.f32.mrb[0].mxu0
      %v8644 = vadd.f32 %v8487, %v8643
      %v8645 = vpop.f32.mrb[0].mxu0
      %v8646 = vpop.f32.mrb[0].mxu0
      %v8647 = vadd.f32 %v8487, %v8646
      %v8648 = vpop.f32.mrb[0].mxu0
      %8649 = vmatprep.mubr.bf16.mxu0 0
      %8650 = vmatmul.mubr.bf16.gmra.mrb[0].mxu0 %v8444
      %v8651 = vpop.f32.mrb[0].mxu0
      %v8652 = vadd.f32 %v8487, %v8651
      %v8653 = vpop.f32.mrb[0].mxu0
      %v8654 = vpop.f32.mrb[0].mxu0
      %v8655 = vadd.f32 %v8487, %v8654
      %v8656 = vpop.f32.mrb[0].mxu0
      %8657 = vmatprep.mubr.bf16.mxu0 0
      %8658 = vmatmul.mubr.bf16.gmra.mrb[0].mxu0 %v8445
      %v8659 = vpop.f32.mrb[0].mxu0
      %v8660 = vadd.f32 %v8487, %v8659
      %v8661 = vpop.f32.mrb[0].mxu0
      %v8662 = vpop.f32.mrb[0].mxu0
      %v8663 = vadd.f32 %v8487, %v8662
      %v8664 = vpop.f32.mrb[0].mxu0
      %8665 = vmatprep.mubr.bf16.mxu0 0
      %8666 = vmatmul.mubr.bf16.gmra.mrb[0].mxu0 %v8446
      %v8667 = vpop.f32.mrb[0].mxu0
      %v8668 = vadd.f32 %v8487, %v8667
      %v8669 = vpop.f32.mrb[0].mxu0
      %v8670 = vpop.f32.mrb[0].mxu0
      %v8671 = vadd.f32 %v8487, %v8670
      %v8672 = vpop.f32.mrb[0].mxu0
      %8673 = vmatprep.mubr.bf16.mxu0 0
      %8674 = vmatmul.mubr.bf16.gmra.mrb[0].mxu0 %v8447
      %v8675 = vpop.f32.mrb[0].mxu0
      %v8676 = vadd.f32 %v8487, %v8675
      %v8677 = vpop.f32.mrb[0].mxu0
      %v8678 = vpop.f32.mrb[0].mxu0
      %v8679 = vadd.f32 %v8487, %v8678
      %v8680 = vpop.f32.mrb[0].mxu0
      %8681 = vmatprep.mubr.bf16.mxu0 0
      %8682 = vmatmul.mubr.bf16.gmra.mrb[0].mxu0 %v8448
      %v8683 = vpop.f32.mrb[0].mxu0
      %v8684 = vadd.f32 %v8487, %v8683
      %v8685 = vpop.f32.mrb[0].mxu0
      %v8686 = vpop.f32.mrb[0].mxu0
      %v8687 = vadd.f32 %v8487, %v8686
      %v8688 = vpop.f32.mrb[0].mxu0
      %8689 = vmatprep.mubr.bf16.mxu0 0
      %8690 = vmatmul.mubr.bf16.gmra.mrb[0].mxu0 %v8449
      %v8691 = vpop.f32.mrb[0].mxu0
      %v8692 = vadd.f32 %v8487, %v8691
      %v8693 = vpop.f32.mrb[0].mxu0
      %v8694 = vpop.f32.mrb[0].mxu0
      %v8695 = vadd.f32 %v8487, %v8694
      %v8696 = vpop.f32.mrb[0].mxu0
      %8697 = vmatprep.mubr.bf16.mxu0 0
      %8698 = vmatmul.mubr.bf16.gmra.mrb[0].mxu0 %v8450
      %v8699 = vpop.f32.mrb[0].mxu0
      %v8700 = vadd.f32 %v8487, %v8699
      %v8701 = vpop.f32.mrb[0].mxu0
      %v8702 = vpop.f32.mrb[0].mxu0
      %v8703 = vadd.f32 %v8487, %v8702
      %v8704 = vpop.f32.mrb[0].mxu0
      %8705 = vmatprep.mubr.bf16.mxu0 0
      %8706 = vmatmul.mubr.bf16.gmra.mrb[0].mxu0 %v8451
      %v8707 = vpop.f32.mrb[0].mxu0
      %v8708 = vadd.f32 %v8487, %v8707
      %v8709 = vpop.f32.mrb[0].mxu0
      %v8710 = vpop.f32.mrb[0].mxu0
      %v8711 = vadd.f32 %v8487, %v8710
      %v8712 = vpop.f32.mrb[0].mxu0
      %8713 = vmatprep.mubr.bf16.mxu0 0
      %8714 = vmatmul.mubr.bf16.gmra.mrb[0].mxu0 %v8452
      %v8715 = vpop.f32.mrb[0].mxu0
      %v8716 = vadd.f32 %v8487, %v8715
      %v8717 = vpop.f32.mrb[0].mxu0
      %v8718 = vpop.f32.mrb[0].mxu0
      %v8719 = vadd.f32 %v8487, %v8718
      %v8720 = vpop.f32.mrb[0].mxu0
      %8721 = vmatprep.mubr.bf16.mxu0 0
      %8722 = vmatmul.mubr.bf16.gmra.mrb[0].mxu0 %v8453
      %v8723 = vpop.f32.mrb[0].mxu0
      %v8724 = vadd.f32 %v8487, %v8723
      %v8725 = vpop.f32.mrb[0].mxu0
      %v8726 = vpop.f32.mrb[0].mxu0
      %v8727 = vadd.f32 %v8487, %v8726
      %v8728 = vpop.f32.mrb[0].mxu0
      %8729 = vmatprep.mubr.bf16.mxu0 0
      %8730 = vmatmul.mubr.bf16.gmra.mrb[0].mxu0 %v8454
      %v8731 = vpop.f32.mrb[0].mxu0
      %v8732 = vadd.f32 %v8487, %v8731
      %v8733 = vpop.f32.mrb[0].mxu0
      %v8734 = vpop.f32.mrb[0].mxu0
      %v8735 = vadd.f32 %v8487, %v8734
      %v8736 = vpop.f32.mrb[0].mxu0
      %8737 = vmatprep.mubr.bf16.mxu0 0
      %8738 = vmatmul.mubr.bf16.gmra.mrb[0].mxu0 %v8455
      %v8739 = vpop.f32.mrb[0].mxu0
      %v8740 = vadd.f32 %v8487, %v8739
      %v8741 = vpop.f32.mrb[0].mxu0
      %v8742 = vpop.f32.mrb[0].mxu0
      %v8743 = vadd.f32 %v8487, %v8742
      %v8744 = vpop.f32.mrb[0].mxu0
      %8745 = vmatprep.mubr.bf16.mxu0 0
      %8746 = vmatmul.mubr.bf16.gmra.mrb[0].mxu0 %v8456
      %v8747 = vpop.f32.mrb[0].mxu0
      %v8748 = vadd.f32 %v8487, %v8747
      %v8749 = vpop.f32.mrb[0].mxu0
      %v8750 = vpop.f32.mrb[0].mxu0
      %v8751 = vadd.f32 %v8487, %v8750
      %v8752 = vpop.f32.mrb[0].mxu0
      %8753 = vmatprep.mubr.bf16.mxu0 0
      %8754 = vmatmul.mubr.bf16.gmra.mrb[0].mxu0 %v8457
      %v8755 = vpop.f32.mrb[0].mxu0
      %v8756 = vadd.f32 %v8487, %v8755
      %v8757 = vpop.f32.mrb[0].mxu0
      %v8758 = vpop.f32.mrb[0].mxu0
      %v8759 = vadd.f32 %v8487, %v8758
      %v8760 = vpop.f32.mrb[0].mxu0
      %8761 = vmatprep.mubr.bf16.mxu0 0
      %8762 = vmatmul.mubr.bf16.gmra.mrb[0].mxu0 %v8458
      %v8763 = vpop.f32.mrb[0].mxu0
      %v8764 = vadd.f32 %v8487, %v8763
      %v8765 = vpop.f32.mrb[0].mxu0
      %v8766 = vpop.f32.mrb[0].mxu0
      %v8767 = vadd.f32 %v8487, %v8766
      %v8768 = vpop.f32.mrb[0].mxu0
      %8769 = vmatprep.mubr.bf16.mxu0 0
      %8770 = vmatmul.mubr.bf16.gmra.mrb[0].mxu0 %v8459
      %v8771 = vpop.f32.mrb[0].mxu0
      %v8772 = vadd.f32 %v8487, %v8771
      %v8773 = vpop.f32.mrb[0].mxu0
      %v8774 = vpop.f32.mrb[0].mxu0
      %v8775 = vadd.f32 %v8487, %v8774
      %v8776 = vpop.f32.mrb[0].mxu0
      %8777 = vmatprep.mubr.bf16.mxu0 0
      %8778 = vmatmul.mubr.bf16.gmra.mrb[0].mxu0 %v8460
      %v8779 = vpop.f32.mrb[0].mxu0
      %v8780 = vadd.f32 %v8487, %v8779
      %v8781 = vpop.f32.mrb[0].mxu0
      %v8782 = vpop.f32.mrb[0].mxu0
      %v8783 = vadd.f32 %v8487, %v8782
      %v8784 = vpop.f32.mrb[0].mxu0
      %8785 = vmatprep.mubr.bf16.mxu0 0
      %8786 = vmatmul.mubr.bf16.gmra.mrb[0].mxu0 %v8461
      %v8787 = vpop.f32.mrb[0].mxu0
      %v8788 = vadd.f32 %v8487, %v8787
      %v8789 = vpop.f32.mrb[0].mxu0
      %v8790 = vpop.f32.mrb[0].mxu0
      %v8791 = vadd.f32 %v8487, %v8790
      %v8792 = vpop.f32.mrb[0].mxu0
      %8793 = vmatprep.mubr.bf16.mxu0 0
      %8794 = vmatmul.mubr.bf16.gmra.mrb[0].mxu0 %v8462
      %v8795 = vpop.f32.mrb[0].mxu0
      %v8796 = vadd.f32 %v8487, %v8795
      %v8797 = vpop.f32.mrb[0].mxu0
      %v8798 = vpop.f32.mrb[0].mxu0
      %v8799 = vadd.f32 %v8487, %v8798
      %v8800 = vpop.f32.mrb[0].mxu0
      %8801 = vmatprep.mubr.bf16.mxu0 0
      %8802 = vmatmul.mubr.bf16.gmra.mrb[0].mxu0 %v8463
      %v8803 = vpop.f32.mrb[0].mxu0
      %v8804 = vadd.f32 %v8487, %v8803
      %v8805 = vpop.f32.mrb[0].mxu0
      %v8806 = vpop.f32.mrb[0].mxu0
      %v8807 = vadd.f32 %v8487, %v8806
      %v8808 = vpop.f32.mrb[0].mxu0
      %8809 = vmatprep.mubr.bf16.mxu0 0
      %8810 = vmatmul.mubr.bf16.gmra.mrb[0].mxu0 %v8464
      %v8811 = vpop.f32.mrb[0].mxu0
      %v8812 = vadd.f32 %v8487, %v8811
      %v8813 = vpop.f32.mrb[0].mxu0
      %v8814 = vpop.f32.mrb[0].mxu0
      %v8815 = vadd.f32 %v8487, %v8814
      %v8816 = vpop.f32.mrb[0].mxu0
      %8817 = vmatprep.mubr.bf16.mxu0 0
      %8818 = vmatmul.mubr.bf16.gmra.mrb[0].mxu0 %v8465
      %v8819 = vpop.f32.mrb[0].mxu0
      %v8820 = vadd.f32 %v8487, %v8819
      %v8821 = vpop.f32.mrb[0].mxu0
      %v8822 = vpop.f32.mrb[0].mxu0
      %v8823 = vadd.f32 %v8487, %v8822
      %v8824 = vpop.f32.mrb[0].mxu0
      %8825 = vdwg.mxu0
      %v8826 = vlaneseq
      %v8827 = vand.u32 %v8826, 127
      %v8828 = vadd.f32 %v8572, %v337
      %v8829 = vadd.f32 %v8575, %v338
      %v8830 = vadd.f32 %v8580, %v339
      %v8831 = vadd.f32 %v8583, %v340
      %v8832 = vadd.f32 %v8588, %v341
      %v8833 = vadd.f32 %v8591, %v342
      %v8834 = vadd.f32 %v8596, %v343
      %v8835 = vadd.f32 %v8599, %v344
      %v8836 = vadd.f32 %v8604, %v345
      %v8837 = vadd.f32 %v8607, %v346
      %v8838 = vadd.f32 %v8612, %v347
      %v8839 = vadd.f32 %v8615, %v348
      %v8840 = vadd.f32 %v8620, %v349
      %v8841 = vadd.f32 %v8623, %v350
      %v8842 = vadd.f32 %v8628, %v351
      %v8843 = vadd.f32 %v8631, %v352
      %v8844 = vadd.f32 %v8636, %v353
      %v8845 = vadd.f32 %v8639, %v354
      %v8846 = vadd.f32 %v8644, %v355
      %v8847 = vadd.f32 %v8647, %v356
      %v8848 = vadd.f32 %v8652, %v357
      %v8849 = vadd.f32 %v8655, %v358
      %v8850 = vadd.f32 %v8660, %v359
      %v8851 = vadd.f32 %v8663, %v360
      %v8852 = vadd.f32 %v8668, %v361
      %v8853 = vadd.f32 %v8671, %v362
      %v8854 = vadd.f32 %v8676, %v363
      %v8855 = vadd.f32 %v8679, %v364
      %v8856 = vadd.f32 %v8684, %v365
      %v8857 = vadd.f32 %v8687, %v366
      %v8858 = vadd.f32 %v8692, %v367
      %v8859 = vadd.f32 %v8695, %v368
      %v8860 = vadd.f32 %v8700, %v369
      %v8861 = vadd.f32 %v8703, %v370
      %v8862 = vadd.f32 %v8708, %v371
      %v8863 = vadd.f32 %v8711, %v372
      %v8864 = vadd.f32 %v8716, %v373
      %v8865 = vadd.f32 %v8719, %v374
      %v8866 = vadd.f32 %v8724, %v375
      %v8867 = vadd.f32 %v8727, %v376
      %v8868 = vadd.f32 %v8732, %v377
      %v8869 = vadd.f32 %v8735, %v378
      %v8870 = vadd.f32 %v8740, %v379
      %v8871 = vadd.f32 %v8743, %v380
      %v8872 = vadd.f32 %v8748, %v381
      %v8873 = vadd.f32 %v8751, %v382
      %v8874 = vadd.f32 %v8756, %v383
      %v8875 = vadd.f32 %v8759, %v384
      %v8876 = vadd.f32 %v8764, %v385
      %v8877 = vadd.f32 %v8767, %v386
      %v8878 = vadd.f32 %v8772, %v387
      %v8879 = vadd.f32 %v8775, %v388
      %v8880 = vadd.f32 %v8780, %v389
      %v8881 = vadd.f32 %v8783, %v390
      %v8882 = vadd.f32 %v8788, %v391
      %v8883 = vadd.f32 %v8791, %v392
      %v8884 = vadd.f32 %v8796, %v393
      %v8885 = vadd.f32 %v8799, %v394
      %v8886 = vadd.f32 %v8804, %v395
      %v8887 = vadd.f32 %v8807, %v396
      %v8888 = vadd.f32 %v8812, %v397
      %v8889 = vadd.f32 %v8815, %v398
      %v8890 = vadd.f32 %v8820, %v399
      %v8891 = vadd.f32 %v8823, %v400
      %v8892 = vxor.u32 %v8572, 2147483648
      %v8893 = vxor.u32 %v8575, 2147483648
      %v8894 = vxor.u32 %v8580, 2147483648
      %v8895 = vxor.u32 %v8583, 2147483648
      %v8896 = vxor.u32 %v8588, 2147483648
      %v8897 = vxor.u32 %v8591, 2147483648
      %v8898 = vxor.u32 %v8596, 2147483648
      %v8899 = vxor.u32 %v8599, 2147483648
      %v8900 = vxor.u32 %v8604, 2147483648
      %v8901 = vxor.u32 %v8607, 2147483648
      %v8902 = vxor.u32 %v8612, 2147483648
      %v8903 = vxor.u32 %v8615, 2147483648
      %v8904 = vxor.u32 %v8620, 2147483648
      %v8905 = vxor.u32 %v8623, 2147483648
      %v8906 = vxor.u32 %v8628, 2147483648
      %v8907 = vxor.u32 %v8631, 2147483648
      %v8908 = vxor.u32 %v8636, 2147483648
      %v8909 = vxor.u32 %v8639, 2147483648
      %v8910 = vxor.u32 %v8644, 2147483648
      %v8911 = vxor.u32 %v8647, 2147483648
      %v8912 = vxor.u32 %v8652, 2147483648
      %v8913 = vxor.u32 %v8655, 2147483648
      %v8914 = vxor.u32 %v8660, 2147483648
      %v8915 = vxor.u32 %v8663, 2147483648
      %v8916 = vxor.u32 %v8668, 2147483648
      %v8917 = vxor.u32 %v8671, 2147483648
      %v8918 = vxor.u32 %v8676, 2147483648
      %v8919 = vxor.u32 %v8679, 2147483648
      %v8920 = vxor.u32 %v8684, 2147483648
      %v8921 = vxor.u32 %v8687, 2147483648
      %v8922 = vxor.u32 %v8692, 2147483648
      %v8923 = vxor.u32 %v8695, 2147483648
      %v8924 = vxor.u32 %v8700, 2147483648
      %v8925 = vxor.u32 %v8703, 2147483648
      %v8926 = vxor.u32 %v8708, 2147483648
      %v8927 = vxor.u32 %v8711, 2147483648
      %v8928 = vxor.u32 %v8716, 2147483648
      %v8929 = vxor.u32 %v8719, 2147483648
      %v8930 = vxor.u32 %v8724, 2147483648
      %v8931 = vxor.u32 %v8727, 2147483648
      %v8932 = vxor.u32 %v8732, 2147483648
      %v8933 = vxor.u32 %v8735, 2147483648
      %v8934 = vxor.u32 %v8740, 2147483648
      %v8935 = vxor.u32 %v8743, 2147483648
      %v8936 = vxor.u32 %v8748, 2147483648
      %v8937 = vxor.u32 %v8751, 2147483648
      %v8938 = vxor.u32 %v8756, 2147483648
      %v8939 = vxor.u32 %v8759, 2147483648
      %v8940 = vxor.u32 %v8764, 2147483648
      %v8941 = vxor.u32 %v8767, 2147483648
      %v8942 = vxor.u32 %v8772, 2147483648
      %v8943 = vxor.u32 %v8775, 2147483648
      %v8944 = vxor.u32 %v8780, 2147483648
      %v8945 = vxor.u32 %v8783, 2147483648
      %v8946 = vxor.u32 %v8788, 2147483648
      %v8947 = vxor.u32 %v8791, 2147483648
      %v8948 = vxor.u32 %v8796, 2147483648
      %v8949 = vxor.u32 %v8799, 2147483648
      %v8950 = vxor.u32 %v8804, 2147483648
      %v8951 = vxor.u32 %v8807, 2147483648
      %v8952 = vxor.u32 %v8812, 2147483648
      %v8953 = vxor.u32 %v8815, 2147483648
      %v8954 = vxor.u32 %v8820, 2147483648
      %v8955 = vxor.u32 %v8823, 2147483648
      %v8956 = vmul.f32 %v8892, 1.442695
      %v8957 = vpow.pop %v8956
      %v8958 = vmul.f32 %v8893, 1.442695
      %v8959 = vpow.pop %v8958
      %v8960 = vmul.f32 %v8894, 1.442695
      %v8961 = vpow.pop %v8960
      %v8962 = vmul.f32 %v8895, 1.442695
      %v8963 = vpow.pop %v8962
      %v8964 = vmul.f32 %v8896, 1.442695
      %v8965 = vpow.pop %v8964
      %v8966 = vmul.f32 %v8897, 1.442695
      %v8967 = vpow.pop %v8966
      %v8968 = vmul.f32 %v8898, 1.442695
      %v8969 = vpow.pop %v8968
      %v8970 = vmul.f32 %v8899, 1.442695
      %v8971 = vpow.pop %v8970
      %v8972 = vmul.f32 %v8900, 1.442695
      %v8973 = vpow.pop %v8972
      %v8974 = vmul.f32 %v8901, 1.442695
      %v8975 = vpow.pop %v8974
      %v8976 = vmul.f32 %v8902, 1.442695
      %v8977 = vpow.pop %v8976
      %v8978 = vmul.f32 %v8903, 1.442695
      %v8979 = vpow.pop %v8978
      %v8980 = vmul.f32 %v8904, 1.442695
      %v8981 = vpow.pop %v8980
      %v8982 = vmul.f32 %v8905, 1.442695
      %v8983 = vpow.pop %v8982
      %v8984 = vmul.f32 %v8906, 1.442695
      %v8985 = vpow.pop %v8984
      %v8986 = vmul.f32 %v8907, 1.442695
      %v8987 = vpow.pop %v8986
      %v8988 = vmul.f32 %v8908, 1.442695
      %v8989 = vpow.pop %v8988
      %v8990 = vmul.f32 %v8909, 1.442695
      %v8991 = vpow.pop %v8990
      %v8992 = vmul.f32 %v8910, 1.442695
      %v8993 = vpow.pop %v8992
      %v8994 = vmul.f32 %v8911, 1.442695
      %v8995 = vpow.pop %v8994
      %v8996 = vmul.f32 %v8912, 1.442695
      %v8997 = vpow.pop %v8996
      %v8998 = vmul.f32 %v8913, 1.442695
      %v8999 = vpow.pop %v8998
      %v9000 = vmul.f32 %v8914, 1.442695
      %v9001 = vpow.pop %v9000
      %v9002 = vmul.f32 %v8915, 1.442695
      %v9003 = vpow.pop %v9002
      %v9004 = vmul.f32 %v8916, 1.442695
      %v9005 = vpow.pop %v9004
      %v9006 = vmul.f32 %v8917, 1.442695
      %v9007 = vpow.pop %v9006
      %v9008 = vmul.f32 %v8918, 1.442695
      %v9009 = vpow.pop %v9008
      %v9010 = vmul.f32 %v8919, 1.442695
      %v9011 = vpow.pop %v9010
      %v9012 = vmul.f32 %v8920, 1.442695
      %v9013 = vpow.pop %v9012
      %v9014 = vmul.f32 %v8921, 1.442695
      %v9015 = vpow.pop %v9014
      %v9016 = vmul.f32 %v8922, 1.442695
      %v9017 = vpow.pop %v9016
      %v9018 = vmul.f32 %v8923, 1.442695
      %v9019 = vpow.pop %v9018
      %v9020 = vmul.f32 %v8924, 1.442695
      %v9021 = vpow.pop %v9020
      %v9022 = vmul.f32 %v8925, 1.442695
      %v9023 = vpow.pop %v9022
      %v9024 = vmul.f32 %v8926, 1.442695
      %v9025 = vpow.pop %v9024
      %v9026 = vmul.f32 %v8927, 1.442695
      %v9027 = vpow.pop %v9026
      %v9028 = vmul.f32 %v8928, 1.442695
      %v9029 = vpow.pop %v9028
      %v9030 = vmul.f32 %v8929, 1.442695
      %v9031 = vpow.pop %v9030
      %v9032 = vmul.f32 %v8930, 1.442695
      %v9033 = vpow.pop %v9032
      %v9034 = vmul.f32 %v8931, 1.442695
      %v9035 = vpow.pop %v9034
      %v9036 = vmul.f32 %v8932, 1.442695
      %v9037 = vpow.pop %v9036
      %v9038 = vmul.f32 %v8933, 1.442695
      %v9039 = vpow.pop %v9038
      %v9040 = vmul.f32 %v8934, 1.442695
      %v9041 = vpow.pop %v9040
      %v9042 = vmul.f32 %v8935, 1.442695
      %v9043 = vpow.pop %v9042
      %v9044 = vmul.f32 %v8936, 1.442695
      %v9045 = vpow.pop %v9044
      %v9046 = vmul.f32 %v8937, 1.442695
      %v9047 = vpow.pop %v9046
      %v9048 = vmul.f32 %v8938, 1.442695
      %v9049 = vpow.pop %v9048
      %v9050 = vmul.f32 %v8939, 1.442695
      %v9051 = vpow.pop %v9050
      %v9052 = vmul.f32 %v8940, 1.442695
      %v9053 = vpow.pop %v9052
      %v9054 = vmul.f32 %v8941, 1.442695
      %v9055 = vpow.pop %v9054
      %v9056 = vmul.f32 %v8942, 1.442695
      %v9057 = vpow.pop %v9056
      %v9058 = vmul.f32 %v8943, 1.442695
      %v9059 = vpow.pop %v9058
      %v9060 = vmul.f32 %v8944, 1.442695
      %v9061 = vpow.pop %v9060
      %v9062 = vmul.f32 %v8945, 1.442695
      %v9063 = vpow.pop %v9062
      %v9064 = vmul.f32 %v8946, 1.442695
      %v9065 = vpow.pop %v9064
      %v9066 = vmul.f32 %v8947, 1.442695
      %v9067 = vpow.pop %v9066
      %v9068 = vmul.f32 %v8948, 1.442695
      %v9069 = vpow.pop %v9068
      %v9070 = vmul.f32 %v8949, 1.442695
      %v9071 = vpow.pop %v9070
      %v9072 = vmul.f32 %v8950, 1.442695
      %v9073 = vpow.pop %v9072
      %v9074 = vmul.f32 %v8951, 1.442695
      %v9075 = vpow.pop %v9074
      %v9076 = vmul.f32 %v8952, 1.442695
      %v9077 = vpow.pop %v9076
      %v9078 = vmul.f32 %v8953, 1.442695
      %v9079 = vpow.pop %v9078
      %v9080 = vmul.f32 %v8954, 1.442695
      %v9081 = vpow.pop %v9080
      %v9082 = vmul.f32 %v8955, 1.442695
      %v9083 = vpow.pop %v9082
      %v9084 = vadd.f32 %v8957, 1.0
      %v9085 = vadd.f32 %v8959, 1.0
      %v9086 = vadd.f32 %v8961, 1.0
      %v9087 = vadd.f32 %v8963, 1.0
      %v9088 = vadd.f32 %v8965, 1.0
      %v9089 = vadd.f32 %v8967, 1.0
      %v9090 = vadd.f32 %v8969, 1.0
      %v9091 = vadd.f32 %v8971, 1.0
      %v9092 = vadd.f32 %v8973, 1.0
      %v9093 = vadd.f32 %v8975, 1.0
      %v9094 = vadd.f32 %v8977, 1.0
      %v9095 = vadd.f32 %v8979, 1.0
      %v9096 = vadd.f32 %v8981, 1.0
      %v9097 = vadd.f32 %v8983, 1.0
      %v9098 = vadd.f32 %v8985, 1.0
      %v9099 = vadd.f32 %v8987, 1.0
      %v9100 = vadd.f32 %v8989, 1.0
      %v9101 = vadd.f32 %v8991, 1.0
      %v9102 = vadd.f32 %v8993, 1.0
      %v9103 = vadd.f32 %v8995, 1.0
      %v9104 = vadd.f32 %v8997, 1.0
      %v9105 = vadd.f32 %v8999, 1.0
      %v9106 = vadd.f32 %v9001, 1.0
      %v9107 = vadd.f32 %v9003, 1.0
      %v9108 = vadd.f32 %v9005, 1.0
      %v9109 = vadd.f32 %v9007, 1.0
      %v9110 = vadd.f32 %v9009, 1.0
      %v9111 = vadd.f32 %v9011, 1.0
      %v9112 = vadd.f32 %v9013, 1.0
      %v9113 = vadd.f32 %v9015, 1.0
      %v9114 = vadd.f32 %v9017, 1.0
      %v9115 = vadd.f32 %v9019, 1.0
      %v9116 = vadd.f32 %v9021, 1.0
      %v9117 = vadd.f32 %v9023, 1.0
      %v9118 = vadd.f32 %v9025, 1.0
      %v9119 = vadd.f32 %v9027, 1.0
      %v9120 = vadd.f32 %v9029, 1.0
      %v9121 = vadd.f32 %v9031, 1.0
      %v9122 = vadd.f32 %v9033, 1.0
      %v9123 = vadd.f32 %v9035, 1.0
      %v9124 = vadd.f32 %v9037, 1.0
      %v9125 = vadd.f32 %v9039, 1.0
      %v9126 = vadd.f32 %v9041, 1.0
      %v9127 = vadd.f32 %v9043, 1.0
      %v9128 = vadd.f32 %v9045, 1.0
      %v9129 = vadd.f32 %v9047, 1.0
      %v9130 = vadd.f32 %v9049, 1.0
      %v9131 = vadd.f32 %v9051, 1.0
      %v9132 = vadd.f32 %v9053, 1.0
      %v9133 = vadd.f32 %v9055, 1.0
      %v9134 = vadd.f32 %v9057, 1.0
      %v9135 = vadd.f32 %v9059, 1.0
      %v9136 = vadd.f32 %v9061, 1.0
      %v9137 = vadd.f32 %v9063, 1.0
      %v9138 = vadd.f32 %v9065, 1.0
      %v9139 = vadd.f32 %v9067, 1.0
      %v9140 = vadd.f32 %v9069, 1.0
      %v9141 = vadd.f32 %v9071, 1.0
      %v9142 = vadd.f32 %v9073, 1.0
      %v9143 = vadd.f32 %v9075, 1.0
      %v9144 = vadd.f32 %v9077, 1.0
      %v9145 = vadd.f32 %v9079, 1.0
      %v9146 = vadd.f32 %v9081, 1.0
      %v9147 = vadd.f32 %v9083, 1.0
      %v9148 = vrcp.pop %v9084
      %v9149 = vmul.f32 1.0, %v9148
      %v9150 = vrcp.pop %v9085
      %v9151 = vmul.f32 1.0, %v9150
      %v9152 = vrcp.pop %v9086
      %v9153 = vmul.f32 1.0, %v9152
      %v9154 = vrcp.pop %v9087
      %v9155 = vmul.f32 1.0, %v9154
      %v9156 = vrcp.pop %v9088
      %v9157 = vmul.f32 1.0, %v9156
      %v9158 = vrcp.pop %v9089
      %v9159 = vmul.f32 1.0, %v9158
      %v9160 = vrcp.pop %v9090
      %v9161 = vmul.f32 1.0, %v9160
      %v9162 = vrcp.pop %v9091
      %v9163 = vmul.f32 1.0, %v9162
      %v9164 = vrcp.pop %v9092
      %v9165 = vmul.f32 1.0, %v9164
      %v9166 = vrcp.pop %v9093
      %v9167 = vmul.f32 1.0, %v9166
      %v9168 = vrcp.pop %v9094
      %v9169 = vmul.f32 1.0, %v9168
      %v9170 = vrcp.pop %v9095
      %v9171 = vmul.f32 1.0, %v9170
      %v9172 = vrcp.pop %v9096
      %v9173 = vmul.f32 1.0, %v9172
      %v9174 = vrcp.pop %v9097
      %v9175 = vmul.f32 1.0, %v9174
      %v9176 = vrcp.pop %v9098
      %v9177 = vmul.f32 1.0, %v9176
      %v9178 = vrcp.pop %v9099
      %v9179 = vmul.f32 1.0, %v9178
      %v9180 = vrcp.pop %v9100
      %v9181 = vmul.f32 1.0, %v9180
      %v9182 = vrcp.pop %v9101
      %v9183 = vmul.f32 1.0, %v9182
      %v9184 = vrcp.pop %v9102
      %v9185 = vmul.f32 1.0, %v9184
      %v9186 = vrcp.pop %v9103
      %v9187 = vmul.f32 1.0, %v9186
      %v9188 = vrcp.pop %v9104
      %v9189 = vmul.f32 1.0, %v9188
      %v9190 = vrcp.pop %v9105
      %v9191 = vmul.f32 1.0, %v9190
      %v9192 = vrcp.pop %v9106
      %v9193 = vmul.f32 1.0, %v9192
      %v9194 = vrcp.pop %v9107
      %v9195 = vmul.f32 1.0, %v9194
      %v9196 = vrcp.pop %v9108
      %v9197 = vmul.f32 1.0, %v9196
      %v9198 = vrcp.pop %v9109
      %v9199 = vmul.f32 1.0, %v9198
      %v9200 = vrcp.pop %v9110
      %v9201 = vmul.f32 1.0, %v9200
      %v9202 = vrcp.pop %v9111
      %v9203 = vmul.f32 1.0, %v9202
      %v9204 = vrcp.pop %v9112
      %v9205 = vmul.f32 1.0, %v9204
      %v9206 = vrcp.pop %v9113
      %v9207 = vmul.f32 1.0, %v9206
      %v9208 = vrcp.pop %v9114
      %v9209 = vmul.f32 1.0, %v9208
      %v9210 = vrcp.pop %v9115
      %v9211 = vmul.f32 1.0, %v9210
      %v9212 = vrcp.pop %v9116
      %v9213 = vmul.f32 1.0, %v9212
      %v9214 = vrcp.pop %v9117
      %v9215 = vmul.f32 1.0, %v9214
      %v9216 = vrcp.pop %v9118
      %v9217 = vmul.f32 1.0, %v9216
      %v9218 = vrcp.pop %v9119
      %v9219 = vmul.f32 1.0, %v9218
      %v9220 = vrcp.pop %v9120
      %v9221 = vmul.f32 1.0, %v9220
      %v9222 = vrcp.pop %v9121
      %v9223 = vmul.f32 1.0, %v9222
      %v9224 = vrcp.pop %v9122
      %v9225 = vmul.f32 1.0, %v9224
      %v9226 = vrcp.pop %v9123
      %v9227 = vmul.f32 1.0, %v9226
      %v9228 = vrcp.pop %v9124
      %v9229 = vmul.f32 1.0, %v9228
      %v9230 = vrcp.pop %v9125
      %v9231 = vmul.f32 1.0, %v9230
      %v9232 = vrcp.pop %v9126
      %v9233 = vmul.f32 1.0, %v9232
      %v9234 = vrcp.pop %v9127
      %v9235 = vmul.f32 1.0, %v9234
      %v9236 = vrcp.pop %v9128
      %v9237 = vmul.f32 1.0, %v9236
      %v9238 = vrcp.pop %v9129
      %v9239 = vmul.f32 1.0, %v9238
      %v9240 = vrcp.pop %v9130
      %v9241 = vmul.f32 1.0, %v9240
      %v9242 = vrcp.pop %v9131
      %v9243 = vmul.f32 1.0, %v9242
      %v9244 = vrcp.pop %v9132
      %v9245 = vmul.f32 1.0, %v9244
      %v9246 = vrcp.pop %v9133
      %v9247 = vmul.f32 1.0, %v9246
      %v9248 = vrcp.pop %v9134
      %v9249 = vmul.f32 1.0, %v9248
      %v9250 = vrcp.pop %v9135
      %v9251 = vmul.f32 1.0, %v9250
      %v9252 = vrcp.pop %v9136
      %v9253 = vmul.f32 1.0, %v9252
      %v9254 = vrcp.pop %v9137
      %v9255 = vmul.f32 1.0, %v9254
      %v9256 = vrcp.pop %v9138
      %v9257 = vmul.f32 1.0, %v9256
      %v9258 = vrcp.pop %v9139
      %v9259 = vmul.f32 1.0, %v9258
      %v9260 = vrcp.pop %v9140
      %v9261 = vmul.f32 1.0, %v9260
      %v9262 = vrcp.pop %v9141
      %v9263 = vmul.f32 1.0, %v9262
      %v9264 = vrcp.pop %v9142
      %v9265 = vmul.f32 1.0, %v9264
      %v9266 = vrcp.pop %v9143
      %v9267 = vmul.f32 1.0, %v9266
      %v9268 = vrcp.pop %v9144
      %v9269 = vmul.f32 1.0, %v9268
      %v9270 = vrcp.pop %v9145
      %v9271 = vmul.f32 1.0, %v9270
      %v9272 = vrcp.pop %v9146
      %v9273 = vmul.f32 1.0, %v9272
      %v9274 = vrcp.pop %v9147
      %v9275 = vmul.f32 1.0, %v9274
      %v9276 = vmul.f32 %v8572, 1.442695
      %v9277 = vpow.pop %v9276
      %v9278 = vmul.f32 %v8575, 1.442695
      %v9279 = vpow.pop %v9278
      %v9280 = vmul.f32 %v8580, 1.442695
      %v9281 = vpow.pop %v9280
      %v9282 = vmul.f32 %v8583, 1.442695
      %v9283 = vpow.pop %v9282
      %v9284 = vmul.f32 %v8588, 1.442695
      %v9285 = vpow.pop %v9284
      %v9286 = vmul.f32 %v8591, 1.442695
      %v9287 = vpow.pop %v9286
      %v9288 = vmul.f32 %v8596, 1.442695
      %v9289 = vpow.pop %v9288
      %v9290 = vmul.f32 %v8599, 1.442695
      %v9291 = vpow.pop %v9290
      %v9292 = vmul.f32 %v8604, 1.442695
      %v9293 = vpow.pop %v9292
      %v9294 = vmul.f32 %v8607, 1.442695
      %v9295 = vpow.pop %v9294
      %v9296 = vmul.f32 %v8612, 1.442695
      %v9297 = vpow.pop %v9296
      %v9298 = vmul.f32 %v8615, 1.442695
      %v9299 = vpow.pop %v9298
      %v9300 = vmul.f32 %v8620, 1.442695
      %v9301 = vpow.pop %v9300
      %v9302 = vmul.f32 %v8623, 1.442695
      %v9303 = vpow.pop %v9302
      %v9304 = vmul.f32 %v8628, 1.442695
      %v9305 = vpow.pop %v9304
      %v9306 = vmul.f32 %v8631, 1.442695
      %v9307 = vpow.pop %v9306
      %v9308 = vmul.f32 %v8636, 1.442695
      %v9309 = vpow.pop %v9308
      %v9310 = vmul.f32 %v8639, 1.442695
      %v9311 = vpow.pop %v9310
      %v9312 = vmul.f32 %v8644, 1.442695
      %v9313 = vpow.pop %v9312
      %v9314 = vmul.f32 %v8647, 1.442695
      %v9315 = vpow.pop %v9314
      %v9316 = vmul.f32 %v8652, 1.442695
      %v9317 = vpow.pop %v9316
      %v9318 = vmul.f32 %v8655, 1.442695
      %v9319 = vpow.pop %v9318
      %v9320 = vmul.f32 %v8660, 1.442695
      %v9321 = vpow.pop %v9320
      %v9322 = vmul.f32 %v8663, 1.442695
      %v9323 = vpow.pop %v9322
      %v9324 = vmul.f32 %v8668, 1.442695
      %v9325 = vpow.pop %v9324
      %v9326 = vmul.f32 %v8671, 1.442695
      %v9327 = vpow.pop %v9326
      %v9328 = vmul.f32 %v8676, 1.442695
      %v9329 = vpow.pop %v9328
      %v9330 = vmul.f32 %v8679, 1.442695
      %v9331 = vpow.pop %v9330
      %v9332 = vmul.f32 %v8684, 1.442695
      %v9333 = vpow.pop %v9332
      %v9334 = vmul.f32 %v8687, 1.442695
      %v9335 = vpow.pop %v9334
      %v9336 = vmul.f32 %v8692, 1.442695
      %v9337 = vpow.pop %v9336
      %v9338 = vmul.f32 %v8695, 1.442695
      %v9339 = vpow.pop %v9338
      %v9340 = vmul.f32 %v8700, 1.442695
      %v9341 = vpow.pop %v9340
      %v9342 = vmul.f32 %v8703, 1.442695
      %v9343 = vpow.pop %v9342
      %v9344 = vmul.f32 %v8708, 1.442695
      %v9345 = vpow.pop %v9344
      %v9346 = vmul.f32 %v8711, 1.442695
      %v9347 = vpow.pop %v9346
      %v9348 = vmul.f32 %v8716, 1.442695
      %v9349 = vpow.pop %v9348
      %v9350 = vmul.f32 %v8719, 1.442695
      %v9351 = vpow.pop %v9350
      %v9352 = vmul.f32 %v8724, 1.442695
      %v9353 = vpow.pop %v9352
      %v9354 = vmul.f32 %v8727, 1.442695
      %v9355 = vpow.pop %v9354
      %v9356 = vmul.f32 %v8732, 1.442695
      %v9357 = vpow.pop %v9356
      %v9358 = vmul.f32 %v8735, 1.442695
      %v9359 = vpow.pop %v9358
      %v9360 = vmul.f32 %v8740, 1.442695
      %v9361 = vpow.pop %v9360
      %v9362 = vmul.f32 %v8743, 1.442695
      %v9363 = vpow.pop %v9362
      %v9364 = vmul.f32 %v8748, 1.442695
      %v9365 = vpow.pop %v9364
      %v9366 = vmul.f32 %v8751, 1.442695
      %v9367 = vpow.pop %v9366
      %v9368 = vmul.f32 %v8756, 1.442695
      %v9369 = vpow.pop %v9368
      %v9370 = vmul.f32 %v8759, 1.442695
      %v9371 = vpow.pop %v9370
      %v9372 = vmul.f32 %v8764, 1.442695
      %v9373 = vpow.pop %v9372
      %v9374 = vmul.f32 %v8767, 1.442695
      %v9375 = vpow.pop %v9374
      %v9376 = vmul.f32 %v8772, 1.442695
      %v9377 = vpow.pop %v9376
      %v9378 = vmul.f32 %v8775, 1.442695
      %v9379 = vpow.pop %v9378
      %v9380 = vmul.f32 %v8780, 1.442695
      %v9381 = vpow.pop %v9380
      %v9382 = vmul.f32 %v8783, 1.442695
      %v9383 = vpow.pop %v9382
      %v9384 = vmul.f32 %v8788, 1.442695
      %v9385 = vpow.pop %v9384
      %v9386 = vmul.f32 %v8791, 1.442695
      %v9387 = vpow.pop %v9386
      %v9388 = vmul.f32 %v8796, 1.442695
      %v9389 = vpow.pop %v9388
      %v9390 = vmul.f32 %v8799, 1.442695
      %v9391 = vpow.pop %v9390
      %v9392 = vmul.f32 %v8804, 1.442695
      %v9393 = vpow.pop %v9392
      %v9394 = vmul.f32 %v8807, 1.442695
      %v9395 = vpow.pop %v9394
      %v9396 = vmul.f32 %v8812, 1.442695
      %v9397 = vpow.pop %v9396
      %v9398 = vmul.f32 %v8815, 1.442695
      %v9399 = vpow.pop %v9398
      %v9400 = vmul.f32 %v8820, 1.442695
      %v9401 = vpow.pop %v9400
      %v9402 = vmul.f32 %v8823, 1.442695
      %v9403 = vpow.pop %v9402
      %v9404 = vmin.f32 %v9277, 0.05
      %v9405 = vmin.f32 %v9279, 0.05
      %v9406 = vmin.f32 %v9281, 0.05
      %v9407 = vmin.f32 %v9283, 0.05
      %v9408 = vmin.f32 %v9285, 0.05
      %v9409 = vmin.f32 %v9287, 0.05
      %v9410 = vmin.f32 %v9289, 0.05
      %v9411 = vmin.f32 %v9291, 0.05
      %v9412 = vmin.f32 %v9293, 0.05
      %v9413 = vmin.f32 %v9295, 0.05
      %v9414 = vmin.f32 %v9297, 0.05
      %v9415 = vmin.f32 %v9299, 0.05
      %v9416 = vmin.f32 %v9301, 0.05
      %v9417 = vmin.f32 %v9303, 0.05
      %v9418 = vmin.f32 %v9305, 0.05
      %v9419 = vmin.f32 %v9307, 0.05
      %v9420 = vmin.f32 %v9309, 0.05
      %v9421 = vmin.f32 %v9311, 0.05
      %v9422 = vmin.f32 %v9313, 0.05
      %v9423 = vmin.f32 %v9315, 0.05
      %v9424 = vmin.f32 %v9317, 0.05
      %v9425 = vmin.f32 %v9319, 0.05
      %v9426 = vmin.f32 %v9321, 0.05
      %v9427 = vmin.f32 %v9323, 0.05
      %v9428 = vmin.f32 %v9325, 0.05
      %v9429 = vmin.f32 %v9327, 0.05
      %v9430 = vmin.f32 %v9329, 0.05
      %v9431 = vmin.f32 %v9331, 0.05
      %v9432 = vmin.f32 %v9333, 0.05
      %v9433 = vmin.f32 %v9335, 0.05
      %v9434 = vmin.f32 %v9337, 0.05
      %v9435 = vmin.f32 %v9339, 0.05
      %v9436 = vmin.f32 %v9341, 0.05
      %v9437 = vmin.f32 %v9343, 0.05
      %v9438 = vmin.f32 %v9345, 0.05
      %v9439 = vmin.f32 %v9347, 0.05
      %v9440 = vmin.f32 %v9349, 0.05
      %v9441 = vmin.f32 %v9351, 0.05
      %v9442 = vmin.f32 %v9353, 0.05
      %v9443 = vmin.f32 %v9355, 0.05
      %v9444 = vmin.f32 %v9357, 0.05
      %v9445 = vmin.f32 %v9359, 0.05
      %v9446 = vmin.f32 %v9361, 0.05
      %v9447 = vmin.f32 %v9363, 0.05
      %v9448 = vmin.f32 %v9365, 0.05
      %v9449 = vmin.f32 %v9367, 0.05
      %v9450 = vmin.f32 %v9369, 0.05
      %v9451 = vmin.f32 %v9371, 0.05
      %v9452 = vmin.f32 %v9373, 0.05
      %v9453 = vmin.f32 %v9375, 0.05
      %v9454 = vmin.f32 %v9377, 0.05
      %v9455 = vmin.f32 %v9379, 0.05
      %v9456 = vmin.f32 %v9381, 0.05
      %v9457 = vmin.f32 %v9383, 0.05
      %v9458 = vmin.f32 %v9385, 0.05
      %v9459 = vmin.f32 %v9387, 0.05
      %v9460 = vmin.f32 %v9389, 0.05
      %v9461 = vmin.f32 %v9391, 0.05
      %v9462 = vmin.f32 %v9393, 0.05
      %v9463 = vmin.f32 %v9395, 0.05
      %v9464 = vmin.f32 %v9397, 0.05
      %v9465 = vmin.f32 %v9399, 0.05
      %v9466 = vmin.f32 %v9401, 0.05
      %v9467 = vmin.f32 %v9403, 0.05
      %vm9468 = vcmp.ge.s32.totalorder %v8827, 7
      %vm9469 = vcmp.lt.s32.totalorder %v8827, 11
      %vm9470 = vmand %vm9468, %vm9469
      %v9471 = vmul.f32 %v8572, %v8572
      %v9472 = vmul.f32 %v8575, %v8575
      %v9473 = vmul.f32 %v8580, %v8580
      %v9474 = vmul.f32 %v8583, %v8583
      %v9475 = vmul.f32 %v8588, %v8588
      %v9476 = vmul.f32 %v8591, %v8591
      %v9477 = vmul.f32 %v8596, %v8596
      %v9478 = vmul.f32 %v8599, %v8599
      %v9479 = vmul.f32 %v8604, %v8604
      %v9480 = vmul.f32 %v8607, %v8607
      %v9481 = vmul.f32 %v8612, %v8612
      %v9482 = vmul.f32 %v8615, %v8615
      %v9483 = vmul.f32 %v8620, %v8620
      %v9484 = vmul.f32 %v8623, %v8623
      %v9485 = vmul.f32 %v8628, %v8628
      %v9486 = vmul.f32 %v8631, %v8631
      %v9487 = vmul.f32 %v8636, %v8636
      %v9488 = vmul.f32 %v8639, %v8639
      %v9489 = vmul.f32 %v8644, %v8644
      %v9490 = vmul.f32 %v8647, %v8647
      %v9491 = vmul.f32 %v8652, %v8652
      %v9492 = vmul.f32 %v8655, %v8655
      %v9493 = vmul.f32 %v8660, %v8660
      %v9494 = vmul.f32 %v8663, %v8663
      %v9495 = vmul.f32 %v8668, %v8668
      %v9496 = vmul.f32 %v8671, %v8671
      %v9497 = vmul.f32 %v8676, %v8676
      %v9498 = vmul.f32 %v8679, %v8679
      %v9499 = vmul.f32 %v8684, %v8684
      %v9500 = vmul.f32 %v8687, %v8687
      %v9501 = vmul.f32 %v8692, %v8692
      %v9502 = vmul.f32 %v8695, %v8695
      %v9503 = vmul.f32 %v8700, %v8700
      %v9504 = vmul.f32 %v8703, %v8703
      %v9505 = vmul.f32 %v8708, %v8708
      %v9506 = vmul.f32 %v8711, %v8711
      %v9507 = vmul.f32 %v8716, %v8716
      %v9508 = vmul.f32 %v8719, %v8719
      %v9509 = vmul.f32 %v8724, %v8724
      %v9510 = vmul.f32 %v8727, %v8727
      %v9511 = vmul.f32 %v8732, %v8732
      %v9512 = vmul.f32 %v8735, %v8735
      %v9513 = vmul.f32 %v8740, %v8740
      %v9514 = vmul.f32 %v8743, %v8743
      %v9515 = vmul.f32 %v8748, %v8748
      %v9516 = vmul.f32 %v8751, %v8751
      %v9517 = vmul.f32 %v8756, %v8756
      %v9518 = vmul.f32 %v8759, %v8759
      %v9519 = vmul.f32 %v8764, %v8764
      %v9520 = vmul.f32 %v8767, %v8767
      %v9521 = vmul.f32 %v8772, %v8772
      %v9522 = vmul.f32 %v8775, %v8775
      %v9523 = vmul.f32 %v8780, %v8780
      %v9524 = vmul.f32 %v8783, %v8783
      %v9525 = vmul.f32 %v8788, %v8788
      %v9526 = vmul.f32 %v8791, %v8791
      %v9527 = vmul.f32 %v8796, %v8796
      %v9528 = vmul.f32 %v8799, %v8799
      %v9529 = vmul.f32 %v8804, %v8804
      %v9530 = vmul.f32 %v8807, %v8807
      %v9531 = vmul.f32 %v8812, %v8812
      %v9532 = vmul.f32 %v8815, %v8815
      %v9533 = vmul.f32 %v8820, %v8820
      %v9534 = vmul.f32 %v8823, %v8823
      %v9535 = vsel %vm9470, %v9471, 0.0
      %v9536 = vsel %vm9470, %v9472, 0.0
      %v9537 = vsel %vm9470, %v9473, 0.0
      %v9538 = vsel %vm9470, %v9474, 0.0
      %v9539 = vsel %vm9470, %v9475, 0.0
      %v9540 = vsel %vm9470, %v9476, 0.0
      %v9541 = vsel %vm9470, %v9477, 0.0
      %v9542 = vsel %vm9470, %v9478, 0.0
      %v9543 = vsel %vm9470, %v9479, 0.0
      %v9544 = vsel %vm9470, %v9480, 0.0
      %v9545 = vsel %vm9470, %v9481, 0.0
      %v9546 = vsel %vm9470, %v9482, 0.0
      %v9547 = vsel %vm9470, %v9483, 0.0
      %v9548 = vsel %vm9470, %v9484, 0.0
      %v9549 = vsel %vm9470, %v9485, 0.0
      %v9550 = vsel %vm9470, %v9486, 0.0
      %v9551 = vsel %vm9470, %v9487, 0.0
      %v9552 = vsel %vm9470, %v9488, 0.0
      %v9553 = vsel %vm9470, %v9489, 0.0
      %v9554 = vsel %vm9470, %v9490, 0.0
      %v9555 = vsel %vm9470, %v9491, 0.0
      %v9556 = vsel %vm9470, %v9492, 0.0
      %v9557 = vsel %vm9470, %v9493, 0.0
      %v9558 = vsel %vm9470, %v9494, 0.0
      %v9559 = vsel %vm9470, %v9495, 0.0
      %v9560 = vsel %vm9470, %v9496, 0.0
      %v9561 = vsel %vm9470, %v9497, 0.0
      %v9562 = vsel %vm9470, %v9498, 0.0
      %v9563 = vsel %vm9470, %v9499, 0.0
      %v9564 = vsel %vm9470, %v9500, 0.0
      %v9565 = vsel %vm9470, %v9501, 0.0
      %v9566 = vsel %vm9470, %v9502, 0.0
      %v9567 = vsel %vm9470, %v9503, 0.0
      %v9568 = vsel %vm9470, %v9504, 0.0
      %v9569 = vsel %vm9470, %v9505, 0.0
      %v9570 = vsel %vm9470, %v9506, 0.0
      %v9571 = vsel %vm9470, %v9507, 0.0
      %v9572 = vsel %vm9470, %v9508, 0.0
      %v9573 = vsel %vm9470, %v9509, 0.0
      %v9574 = vsel %vm9470, %v9510, 0.0
      %v9575 = vsel %vm9470, %v9511, 0.0
      %v9576 = vsel %vm9470, %v9512, 0.0
      %v9577 = vsel %vm9470, %v9513, 0.0
      %v9578 = vsel %vm9470, %v9514, 0.0
      %v9579 = vsel %vm9470, %v9515, 0.0
      %v9580 = vsel %vm9470, %v9516, 0.0
      %v9581 = vsel %vm9470, %v9517, 0.0
      %v9582 = vsel %vm9470, %v9518, 0.0
      %v9583 = vsel %vm9470, %v9519, 0.0
      %v9584 = vsel %vm9470, %v9520, 0.0
      %v9585 = vsel %vm9470, %v9521, 0.0
      %v9586 = vsel %vm9470, %v9522, 0.0
      %v9587 = vsel %vm9470, %v9523, 0.0
      %v9588 = vsel %vm9470, %v9524, 0.0
      %v9589 = vsel %vm9470, %v9525, 0.0
      %v9590 = vsel %vm9470, %v9526, 0.0
      %v9591 = vsel %vm9470, %v9527, 0.0
      %v9592 = vsel %vm9470, %v9528, 0.0
      %v9593 = vsel %vm9470, %v9529, 0.0
      %v9594 = vsel %vm9470, %v9530, 0.0
      %v9595 = vsel %vm9470, %v9531, 0.0
      %v9596 = vsel %vm9470, %v9532, 0.0
      %v9597 = vsel %vm9470, %v9533, 0.0
      %v9598 = vsel %vm9470, %v9534, 0.0
      %9599 = vadd.xlane.f32.xlu0 %v9535
      %v9600 = vpop.xlane.xlu0 %9599
      %9601 = vadd.xlane.f32.xlu0 %v9536
      %v9602 = vpop.xlane.xlu0 %9601
      %9603 = vadd.xlane.f32.xlu0 %v9537
      %v9604 = vpop.xlane.xlu0 %9603
      %9605 = vadd.xlane.f32.xlu0 %v9538
      %v9606 = vpop.xlane.xlu0 %9605
      %9607 = vadd.xlane.f32.xlu0 %v9539
      %v9608 = vpop.xlane.xlu0 %9607
      %9609 = vadd.xlane.f32.xlu0 %v9540
      %v9610 = vpop.xlane.xlu0 %9609
      %9611 = vadd.xlane.f32.xlu0 %v9541
      %v9612 = vpop.xlane.xlu0 %9611
      %9613 = vadd.xlane.f32.xlu0 %v9542
      %v9614 = vpop.xlane.xlu0 %9613
      %9615 = vadd.xlane.f32.xlu0 %v9543
      %v9616 = vpop.xlane.xlu0 %9615
      %9617 = vadd.xlane.f32.xlu0 %v9544
      %v9618 = vpop.xlane.xlu0 %9617
      %9619 = vadd.xlane.f32.xlu0 %v9545
      %v9620 = vpop.xlane.xlu0 %9619
      %9621 = vadd.xlane.f32.xlu0 %v9546
      %v9622 = vpop.xlane.xlu0 %9621
      %9623 = vadd.xlane.f32.xlu0 %v9547
      %v9624 = vpop.xlane.xlu0 %9623
      %9625 = vadd.xlane.f32.xlu0 %v9548
      %v9626 = vpop.xlane.xlu0 %9625
      %9627 = vadd.xlane.f32.xlu0 %v9549
      %v9628 = vpop.xlane.xlu0 %9627
      %9629 = vadd.xlane.f32.xlu0 %v9550
      %v9630 = vpop.xlane.xlu0 %9629
      %9631 = vadd.xlane.f32.xlu0 %v9551
      %v9632 = vpop.xlane.xlu0 %9631
      %9633 = vadd.xlane.f32.xlu0 %v9552
      %v9634 = vpop.xlane.xlu0 %9633
      %9635 = vadd.xlane.f32.xlu0 %v9553
      %v9636 = vpop.xlane.xlu0 %9635
      %9637 = vadd.xlane.f32.xlu0 %v9554
      %v9638 = vpop.xlane.xlu0 %9637
      %9639 = vadd.xlane.f32.xlu0 %v9555
      %v9640 = vpop.xlane.xlu0 %9639
      %9641 = vadd.xlane.f32.xlu0 %v9556
      %v9642 = vpop.xlane.xlu0 %9641
      %9643 = vadd.xlane.f32.xlu0 %v9557
      %v9644 = vpop.xlane.xlu0 %9643
      %9645 = vadd.xlane.f32.xlu0 %v9558
      %v9646 = vpop.xlane.xlu0 %9645
      %9647 = vadd.xlane.f32.xlu0 %v9559
      %v9648 = vpop.xlane.xlu0 %9647
      %9649 = vadd.xlane.f32.xlu0 %v9560
      %v9650 = vpop.xlane.xlu0 %9649
      %9651 = vadd.xlane.f32.xlu0 %v9561
      %v9652 = vpop.xlane.xlu0 %9651
      %9653 = vadd.xlane.f32.xlu0 %v9562
      %v9654 = vpop.xlane.xlu0 %9653
      %9655 = vadd.xlane.f32.xlu0 %v9563
      %v9656 = vpop.xlane.xlu0 %9655
      %9657 = vadd.xlane.f32.xlu0 %v9564
      %v9658 = vpop.xlane.xlu0 %9657
      %9659 = vadd.xlane.f32.xlu0 %v9565
      %v9660 = vpop.xlane.xlu0 %9659
      %9661 = vadd.xlane.f32.xlu0 %v9566
      %v9662 = vpop.xlane.xlu0 %9661
      %9663 = vadd.xlane.f32.xlu0 %v9567
      %v9664 = vpop.xlane.xlu0 %9663
      %9665 = vadd.xlane.f32.xlu0 %v9568
      %v9666 = vpop.xlane.xlu0 %9665
      %9667 = vadd.xlane.f32.xlu0 %v9569
      %v9668 = vpop.xlane.xlu0 %9667
      %9669 = vadd.xlane.f32.xlu0 %v9570
      %v9670 = vpop.xlane.xlu0 %9669
      %9671 = vadd.xlane.f32.xlu0 %v9571
      %v9672 = vpop.xlane.xlu0 %9671
      %9673 = vadd.xlane.f32.xlu0 %v9572
      %v9674 = vpop.xlane.xlu0 %9673
      %9675 = vadd.xlane.f32.xlu0 %v9573
      %v9676 = vpop.xlane.xlu0 %9675
      %9677 = vadd.xlane.f32.xlu0 %v9574
      %v9678 = vpop.xlane.xlu0 %9677
      %9679 = vadd.xlane.f32.xlu0 %v9575
      %v9680 = vpop.xlane.xlu0 %9679
      %9681 = vadd.xlane.f32.xlu0 %v9576
      %v9682 = vpop.xlane.xlu0 %9681
      %9683 = vadd.xlane.f32.xlu0 %v9577
      %v9684 = vpop.xlane.xlu0 %9683
      %9685 = vadd.xlane.f32.xlu0 %v9578
      %v9686 = vpop.xlane.xlu0 %9685
      %9687 = vadd.xlane.f32.xlu0 %v9579
      %v9688 = vpop.xlane.xlu0 %9687
      %9689 = vadd.xlane.f32.xlu0 %v9580
      %v9690 = vpop.xlane.xlu0 %9689
      %9691 = vadd.xlane.f32.xlu0 %v9581
      %v9692 = vpop.xlane.xlu0 %9691
      %9693 = vadd.xlane.f32.xlu0 %v9582
      %v9694 = vpop.xlane.xlu0 %9693
      %9695 = vadd.xlane.f32.xlu0 %v9583
      %v9696 = vpop.xlane.xlu0 %9695
      %9697 = vadd.xlane.f32.xlu0 %v9584
      %v9698 = vpop.xlane.xlu0 %9697
      %9699 = vadd.xlane.f32.xlu0 %v9585
      %v9700 = vpop.xlane.xlu0 %9699
      %9701 = vadd.xlane.f32.xlu0 %v9586
      %v9702 = vpop.xlane.xlu0 %9701
      %9703 = vadd.xlane.f32.xlu0 %v9587
      %v9704 = vpop.xlane.xlu0 %9703
      %9705 = vadd.xlane.f32.xlu0 %v9588
      %v9706 = vpop.xlane.xlu0 %9705
      %9707 = vadd.xlane.f32.xlu0 %v9589
      %v9708 = vpop.xlane.xlu0 %9707
      %9709 = vadd.xlane.f32.xlu0 %v9590
      %v9710 = vpop.xlane.xlu0 %9709
      %9711 = vadd.xlane.f32.xlu0 %v9591
      %v9712 = vpop.xlane.xlu0 %9711
      %9713 = vadd.xlane.f32.xlu0 %v9592
      %v9714 = vpop.xlane.xlu0 %9713
      %9715 = vadd.xlane.f32.xlu0 %v9593
      %v9716 = vpop.xlane.xlu0 %9715
      %9717 = vadd.xlane.f32.xlu0 %v9594
      %v9718 = vpop.xlane.xlu0 %9717
      %9719 = vadd.xlane.f32.xlu0 %v9595
      %v9720 = vpop.xlane.xlu0 %9719
      %9721 = vadd.xlane.f32.xlu0 %v9596
      %v9722 = vpop.xlane.xlu0 %9721
      %9723 = vadd.xlane.f32.xlu0 %v9597
      %v9724 = vpop.xlane.xlu0 %9723
      %9725 = vadd.xlane.f32.xlu0 %v9598
      %v9726 = vpop.xlane.xlu0 %9725
      %v9727 = vmax.f32 %v9600, 1e-24
      %v9728 = vmax.f32 %v9602, 1e-24
      %v9729 = vmax.f32 %v9604, 1e-24
      %v9730 = vmax.f32 %v9606, 1e-24
      %v9731 = vmax.f32 %v9608, 1e-24
      %v9732 = vmax.f32 %v9610, 1e-24
      %v9733 = vmax.f32 %v9612, 1e-24
      %v9734 = vmax.f32 %v9614, 1e-24
      %v9735 = vmax.f32 %v9616, 1e-24
      %v9736 = vmax.f32 %v9618, 1e-24
      %v9737 = vmax.f32 %v9620, 1e-24
      %v9738 = vmax.f32 %v9622, 1e-24
      %v9739 = vmax.f32 %v9624, 1e-24
      %v9740 = vmax.f32 %v9626, 1e-24
      %v9741 = vmax.f32 %v9628, 1e-24
      %v9742 = vmax.f32 %v9630, 1e-24
      %v9743 = vmax.f32 %v9632, 1e-24
      %v9744 = vmax.f32 %v9634, 1e-24
      %v9745 = vmax.f32 %v9636, 1e-24
      %v9746 = vmax.f32 %v9638, 1e-24
      %v9747 = vmax.f32 %v9640, 1e-24
      %v9748 = vmax.f32 %v9642, 1e-24
      %v9749 = vmax.f32 %v9644, 1e-24
      %v9750 = vmax.f32 %v9646, 1e-24
      %v9751 = vmax.f32 %v9648, 1e-24
      %v9752 = vmax.f32 %v9650, 1e-24
      %v9753 = vmax.f32 %v9652, 1e-24
      %v9754 = vmax.f32 %v9654, 1e-24
      %v9755 = vmax.f32 %v9656, 1e-24
      %v9756 = vmax.f32 %v9658, 1e-24
      %v9757 = vmax.f32 %v9660, 1e-24
      %v9758 = vmax.f32 %v9662, 1e-24
      %v9759 = vmax.f32 %v9664, 1e-24
      %v9760 = vmax.f32 %v9666, 1e-24
      %v9761 = vmax.f32 %v9668, 1e-24
      %v9762 = vmax.f32 %v9670, 1e-24
      %v9763 = vmax.f32 %v9672, 1e-24
      %v9764 = vmax.f32 %v9674, 1e-24
      %v9765 = vmax.f32 %v9676, 1e-24
      %v9766 = vmax.f32 %v9678, 1e-24
      %v9767 = vmax.f32 %v9680, 1e-24
      %v9768 = vmax.f32 %v9682, 1e-24
      %v9769 = vmax.f32 %v9684, 1e-24
      %v9770 = vmax.f32 %v9686, 1e-24
      %v9771 = vmax.f32 %v9688, 1e-24
      %v9772 = vmax.f32 %v9690, 1e-24
      %v9773 = vmax.f32 %v9692, 1e-24
      %v9774 = vmax.f32 %v9694, 1e-24
      %v9775 = vmax.f32 %v9696, 1e-24
      %v9776 = vmax.f32 %v9698, 1e-24
      %v9777 = vmax.f32 %v9700, 1e-24
      %v9778 = vmax.f32 %v9702, 1e-24
      %v9779 = vmax.f32 %v9704, 1e-24
      %v9780 = vmax.f32 %v9706, 1e-24
      %v9781 = vmax.f32 %v9708, 1e-24
      %v9782 = vmax.f32 %v9710, 1e-24
      %v9783 = vmax.f32 %v9712, 1e-24
      %v9784 = vmax.f32 %v9714, 1e-24
      %v9785 = vmax.f32 %v9716, 1e-24
      %v9786 = vmax.f32 %v9718, 1e-24
      %v9787 = vmax.f32 %v9720, 1e-24
      %v9788 = vmax.f32 %v9722, 1e-24
      %v9789 = vmax.f32 %v9724, 1e-24
      %v9790 = vmax.f32 %v9726, 1e-24
      %v9791 = vrsqrt.pop %v9727
      %v9792 = vrsqrt.pop %v9728
      %v9793 = vrsqrt.pop %v9729
      %v9794 = vrsqrt.pop %v9730
      %v9795 = vrsqrt.pop %v9731
      %v9796 = vrsqrt.pop %v9732
      %v9797 = vrsqrt.pop %v9733
      %v9798 = vrsqrt.pop %v9734
      %v9799 = vrsqrt.pop %v9735
      %v9800 = vrsqrt.pop %v9736
      %v9801 = vrsqrt.pop %v9737
      %v9802 = vrsqrt.pop %v9738
      %v9803 = vrsqrt.pop %v9739
      %v9804 = vrsqrt.pop %v9740
      %v9805 = vrsqrt.pop %v9741
      %v9806 = vrsqrt.pop %v9742
      %v9807 = vrsqrt.pop %v9743
      %v9808 = vrsqrt.pop %v9744
      %v9809 = vrsqrt.pop %v9745
      %v9810 = vrsqrt.pop %v9746
      %v9811 = vrsqrt.pop %v9747
      %v9812 = vrsqrt.pop %v9748
      %v9813 = vrsqrt.pop %v9749
      %v9814 = vrsqrt.pop %v9750
      %v9815 = vrsqrt.pop %v9751
      %v9816 = vrsqrt.pop %v9752
      %v9817 = vrsqrt.pop %v9753
      %v9818 = vrsqrt.pop %v9754
      %v9819 = vrsqrt.pop %v9755
      %v9820 = vrsqrt.pop %v9756
      %v9821 = vrsqrt.pop %v9757
      %v9822 = vrsqrt.pop %v9758
      %v9823 = vrsqrt.pop %v9759
      %v9824 = vrsqrt.pop %v9760
      %v9825 = vrsqrt.pop %v9761
      %v9826 = vrsqrt.pop %v9762
      %v9827 = vrsqrt.pop %v9763
      %v9828 = vrsqrt.pop %v9764
      %v9829 = vrsqrt.pop %v9765
      %v9830 = vrsqrt.pop %v9766
      %v9831 = vrsqrt.pop %v9767
      %v9832 = vrsqrt.pop %v9768
      %v9833 = vrsqrt.pop %v9769
      %v9834 = vrsqrt.pop %v9770
      %v9835 = vrsqrt.pop %v9771
      %v9836 = vrsqrt.pop %v9772
      %v9837 = vrsqrt.pop %v9773
      %v9838 = vrsqrt.pop %v9774
      %v9839 = vrsqrt.pop %v9775
      %v9840 = vrsqrt.pop %v9776
      %v9841 = vrsqrt.pop %v9777
      %v9842 = vrsqrt.pop %v9778
      %v9843 = vrsqrt.pop %v9779
      %v9844 = vrsqrt.pop %v9780
      %v9845 = vrsqrt.pop %v9781
      %v9846 = vrsqrt.pop %v9782
      %v9847 = vrsqrt.pop %v9783
      %v9848 = vrsqrt.pop %v9784
      %v9849 = vrsqrt.pop %v9785
      %v9850 = vrsqrt.pop %v9786
      %v9851 = vrsqrt.pop %v9787
      %v9852 = vrsqrt.pop %v9788
      %v9853 = vrsqrt.pop %v9789
      %v9854 = vrsqrt.pop %v9790
      %v9855 = vmul.f32 %v8572, %v9791
      %v9856 = vmul.f32 %v8575, %v9792
      %v9857 = vmul.f32 %v8580, %v9793
      %v9858 = vmul.f32 %v8583, %v9794
      %v9859 = vmul.f32 %v8588, %v9795
      %v9860 = vmul.f32 %v8591, %v9796
      %v9861 = vmul.f32 %v8596, %v9797
      %v9862 = vmul.f32 %v8599, %v9798
      %v9863 = vmul.f32 %v8604, %v9799
      %v9864 = vmul.f32 %v8607, %v9800
      %v9865 = vmul.f32 %v8612, %v9801
      %v9866 = vmul.f32 %v8615, %v9802
      %v9867 = vmul.f32 %v8620, %v9803
      %v9868 = vmul.f32 %v8623, %v9804
      %v9869 = vmul.f32 %v8628, %v9805
      %v9870 = vmul.f32 %v8631, %v9806
      %v9871 = vmul.f32 %v8636, %v9807
      %v9872 = vmul.f32 %v8639, %v9808
      %v9873 = vmul.f32 %v8644, %v9809
      %v9874 = vmul.f32 %v8647, %v9810
      %v9875 = vmul.f32 %v8652, %v9811
      %v9876 = vmul.f32 %v8655, %v9812
      %v9877 = vmul.f32 %v8660, %v9813
      %v9878 = vmul.f32 %v8663, %v9814
      %v9879 = vmul.f32 %v8668, %v9815
      %v9880 = vmul.f32 %v8671, %v9816
      %v9881 = vmul.f32 %v8676, %v9817
      %v9882 = vmul.f32 %v8679, %v9818
      %v9883 = vmul.f32 %v8684, %v9819
      %v9884 = vmul.f32 %v8687, %v9820
      %v9885 = vmul.f32 %v8692, %v9821
      %v9886 = vmul.f32 %v8695, %v9822
      %v9887 = vmul.f32 %v8700, %v9823
      %v9888 = vmul.f32 %v8703, %v9824
      %v9889 = vmul.f32 %v8708, %v9825
      %v9890 = vmul.f32 %v8711, %v9826
      %v9891 = vmul.f32 %v8716, %v9827
      %v9892 = vmul.f32 %v8719, %v9828
      %v9893 = vmul.f32 %v8724, %v9829
      %v9894 = vmul.f32 %v8727, %v9830
      %v9895 = vmul.f32 %v8732, %v9831
      %v9896 = vmul.f32 %v8735, %v9832
      %v9897 = vmul.f32 %v8740, %v9833
      %v9898 = vmul.f32 %v8743, %v9834
      %v9899 = vmul.f32 %v8748, %v9835
      %v9900 = vmul.f32 %v8751, %v9836
      %v9901 = vmul.f32 %v8756, %v9837
      %v9902 = vmul.f32 %v8759, %v9838
      %v9903 = vmul.f32 %v8764, %v9839
      %v9904 = vmul.f32 %v8767, %v9840
      %v9905 = vmul.f32 %v8772, %v9841
      %v9906 = vmul.f32 %v8775, %v9842
      %v9907 = vmul.f32 %v8780, %v9843
      %v9908 = vmul.f32 %v8783, %v9844
      %v9909 = vmul.f32 %v8788, %v9845
      %v9910 = vmul.f32 %v8791, %v9846
      %v9911 = vmul.f32 %v8796, %v9847
      %v9912 = vmul.f32 %v8799, %v9848
      %v9913 = vmul.f32 %v8804, %v9849
      %v9914 = vmul.f32 %v8807, %v9850
      %v9915 = vmul.f32 %v8812, %v9851
      %v9916 = vmul.f32 %v8815, %v9852
      %v9917 = vmul.f32 %v8820, %v9853
      %v9918 = vmul.f32 %v8823, %v9854
      %vm9919 = vcmp.lt.s32.totalorder %v8827, 3
      %vm9920 = vcmp.lt.s32.totalorder %v8827, 4
      %vm9921 = vcmp.lt.s32.totalorder %v8827, 7
      %v9922 = vsel %vm9469, %v9855, %v8572
      %v9923 = vsel %vm9469, %v9856, %v8575
      %v9924 = vsel %vm9469, %v9857, %v8580
      %v9925 = vsel %vm9469, %v9858, %v8583
      %v9926 = vsel %vm9469, %v9859, %v8588
      %v9927 = vsel %vm9469, %v9860, %v8591
      %v9928 = vsel %vm9469, %v9861, %v8596
      %v9929 = vsel %vm9469, %v9862, %v8599
      %v9930 = vsel %vm9469, %v9863, %v8604
      %v9931 = vsel %vm9469, %v9864, %v8607
      %v9932 = vsel %vm9469, %v9865, %v8612
      %v9933 = vsel %vm9469, %v9866, %v8615
      %v9934 = vsel %vm9469, %v9867, %v8620
      %v9935 = vsel %vm9469, %v9868, %v8623
      %v9936 = vsel %vm9469, %v9869, %v8628
      %v9937 = vsel %vm9469, %v9870, %v8631
      %v9938 = vsel %vm9469, %v9871, %v8636
      %v9939 = vsel %vm9469, %v9872, %v8639
      %v9940 = vsel %vm9469, %v9873, %v8644
      %v9941 = vsel %vm9469, %v9874, %v8647
      %v9942 = vsel %vm9469, %v9875, %v8652
      %v9943 = vsel %vm9469, %v9876, %v8655
      %v9944 = vsel %vm9469, %v9877, %v8660
      %v9945 = vsel %vm9469, %v9878, %v8663
      %v9946 = vsel %vm9469, %v9879, %v8668
      %v9947 = vsel %vm9469, %v9880, %v8671
      %v9948 = vsel %vm9469, %v9881, %v8676
      %v9949 = vsel %vm9469, %v9882, %v8679
      %v9950 = vsel %vm9469, %v9883, %v8684
      %v9951 = vsel %vm9469, %v9884, %v8687
      %v9952 = vsel %vm9469, %v9885, %v8692
      %v9953 = vsel %vm9469, %v9886, %v8695
      %v9954 = vsel %vm9469, %v9887, %v8700
      %v9955 = vsel %vm9469, %v9888, %v8703
      %v9956 = vsel %vm9469, %v9889, %v8708
      %v9957 = vsel %vm9469, %v9890, %v8711
      %v9958 = vsel %vm9469, %v9891, %v8716
      %v9959 = vsel %vm9469, %v9892, %v8719
      %v9960 = vsel %vm9469, %v9893, %v8724
      %v9961 = vsel %vm9469, %v9894, %v8727
      %v9962 = vsel %vm9469, %v9895, %v8732
      %v9963 = vsel %vm9469, %v9896, %v8735
      %v9964 = vsel %vm9469, %v9897, %v8740
      %v9965 = vsel %vm9469, %v9898, %v8743
      %v9966 = vsel %vm9469, %v9899, %v8748
      %v9967 = vsel %vm9469, %v9900, %v8751
      %v9968 = vsel %vm9469, %v9901, %v8756
      %v9969 = vsel %vm9469, %v9902, %v8759
      %v9970 = vsel %vm9469, %v9903, %v8764
      %v9971 = vsel %vm9469, %v9904, %v8767
      %v9972 = vsel %vm9469, %v9905, %v8772
      %v9973 = vsel %vm9469, %v9906, %v8775
      %v9974 = vsel %vm9469, %v9907, %v8780
      %v9975 = vsel %vm9469, %v9908, %v8783
      %v9976 = vsel %vm9469, %v9909, %v8788
      %v9977 = vsel %vm9469, %v9910, %v8791
      %v9978 = vsel %vm9469, %v9911, %v8796
      %v9979 = vsel %vm9469, %v9912, %v8799
      %v9980 = vsel %vm9469, %v9913, %v8804
      %v9981 = vsel %vm9469, %v9914, %v8807
      %v9982 = vsel %vm9469, %v9915, %v8812
      %v9983 = vsel %vm9469, %v9916, %v8815
      %v9984 = vsel %vm9469, %v9917, %v8820
      %v9985 = vsel %vm9469, %v9918, %v8823
      %v9986 = vsel %vm9921, %v9404, %v9922
      %v9987 = vsel %vm9921, %v9405, %v9923
      %v9988 = vsel %vm9921, %v9406, %v9924
      %v9989 = vsel %vm9921, %v9407, %v9925
      %v9990 = vsel %vm9921, %v9408, %v9926
      %v9991 = vsel %vm9921, %v9409, %v9927
      %v9992 = vsel %vm9921, %v9410, %v9928
      %v9993 = vsel %vm9921, %v9411, %v9929
      %v9994 = vsel %vm9921, %v9412, %v9930
      %v9995 = vsel %vm9921, %v9413, %v9931
      %v9996 = vsel %vm9921, %v9414, %v9932
      %v9997 = vsel %vm9921, %v9415, %v9933
      %v9998 = vsel %vm9921, %v9416, %v9934
      %v9999 = vsel %vm9921, %v9417, %v9935
      %v10000 = vsel %vm9921, %v9418, %v9936
      %v10001 = vsel %vm9921, %v9419, %v9937
      %v10002 = vsel %vm9921, %v9420, %v9938
      %v10003 = vsel %vm9921, %v9421, %v9939
      %v10004 = vsel %vm9921, %v9422, %v9940
      %v10005 = vsel %vm9921, %v9423, %v9941
      %v10006 = vsel %vm9921, %v9424, %v9942
      %v10007 = vsel %vm9921, %v9425, %v9943
      %v10008 = vsel %vm9921, %v9426, %v9944
      %v10009 = vsel %vm9921, %v9427, %v9945
      %v10010 = vsel %vm9921, %v9428, %v9946
      %v10011 = vsel %vm9921, %v9429, %v9947
      %v10012 = vsel %vm9921, %v9430, %v9948
      %v10013 = vsel %vm9921, %v9431, %v9949
      %v10014 = vsel %vm9921, %v9432, %v9950
      %v10015 = vsel %vm9921, %v9433, %v9951
      %v10016 = vsel %vm9921, %v9434, %v9952
      %v10017 = vsel %vm9921, %v9435, %v9953
      %v10018 = vsel %vm9921, %v9436, %v9954
      %v10019 = vsel %vm9921, %v9437, %v9955
      %v10020 = vsel %vm9921, %v9438, %v9956
      %v10021 = vsel %vm9921, %v9439, %v9957
      %v10022 = vsel %vm9921, %v9440, %v9958
      %v10023 = vsel %vm9921, %v9441, %v9959
      %v10024 = vsel %vm9921, %v9442, %v9960
      %v10025 = vsel %vm9921, %v9443, %v9961
      %v10026 = vsel %vm9921, %v9444, %v9962
      %v10027 = vsel %vm9921, %v9445, %v9963
      %v10028 = vsel %vm9921, %v9446, %v9964
      %v10029 = vsel %vm9921, %v9447, %v9965
      %v10030 = vsel %vm9921, %v9448, %v9966
      %v10031 = vsel %vm9921, %v9449, %v9967
      %v10032 = vsel %vm9921, %v9450, %v9968
      %v10033 = vsel %vm9921, %v9451, %v9969
      %v10034 = vsel %vm9921, %v9452, %v9970
      %v10035 = vsel %vm9921, %v9453, %v9971
      %v10036 = vsel %vm9921, %v9454, %v9972
      %v10037 = vsel %vm9921, %v9455, %v9973
      %v10038 = vsel %vm9921, %v9456, %v9974
      %v10039 = vsel %vm9921, %v9457, %v9975
      %v10040 = vsel %vm9921, %v9458, %v9976
      %v10041 = vsel %vm9921, %v9459, %v9977
      %v10042 = vsel %vm9921, %v9460, %v9978
      %v10043 = vsel %vm9921, %v9461, %v9979
      %v10044 = vsel %vm9921, %v9462, %v9980
      %v10045 = vsel %vm9921, %v9463, %v9981
      %v10046 = vsel %vm9921, %v9464, %v9982
      %v10047 = vsel %vm9921, %v9465, %v9983
      %v10048 = vsel %vm9921, %v9466, %v9984
      %v10049 = vsel %vm9921, %v9467, %v9985
      %v10050 = vsel %vm9920, %v9149, %v9986
      %v10051 = vsel %vm9920, %v9151, %v9987
      %v10052 = vsel %vm9920, %v9153, %v9988
      %v10053 = vsel %vm9920, %v9155, %v9989
      %v10054 = vsel %vm9920, %v9157, %v9990
      %v10055 = vsel %vm9920, %v9159, %v9991
      %v10056 = vsel %vm9920, %v9161, %v9992
      %v10057 = vsel %vm9920, %v9163, %v9993
      %v10058 = vsel %vm9920, %v9165, %v9994
      %v10059 = vsel %vm9920, %v9167, %v9995
      %v10060 = vsel %vm9920, %v9169, %v9996
      %v10061 = vsel %vm9920, %v9171, %v9997
      %v10062 = vsel %vm9920, %v9173, %v9998
      %v10063 = vsel %vm9920, %v9175, %v9999
      %v10064 = vsel %vm9920, %v9177, %v10000
      %v10065 = vsel %vm9920, %v9179, %v10001
      %v10066 = vsel %vm9920, %v9181, %v10002
      %v10067 = vsel %vm9920, %v9183, %v10003
      %v10068 = vsel %vm9920, %v9185, %v10004
      %v10069 = vsel %vm9920, %v9187, %v10005
      %v10070 = vsel %vm9920, %v9189, %v10006
      %v10071 = vsel %vm9920, %v9191, %v10007
      %v10072 = vsel %vm9920, %v9193, %v10008
      %v10073 = vsel %vm9920, %v9195, %v10009
      %v10074 = vsel %vm9920, %v9197, %v10010
      %v10075 = vsel %vm9920, %v9199, %v10011
      %v10076 = vsel %vm9920, %v9201, %v10012
      %v10077 = vsel %vm9920, %v9203, %v10013
      %v10078 = vsel %vm9920, %v9205, %v10014
      %v10079 = vsel %vm9920, %v9207, %v10015
      %v10080 = vsel %vm9920, %v9209, %v10016
      %v10081 = vsel %vm9920, %v9211, %v10017
      %v10082 = vsel %vm9920, %v9213, %v10018
      %v10083 = vsel %vm9920, %v9215, %v10019
      %v10084 = vsel %vm9920, %v9217, %v10020
      %v10085 = vsel %vm9920, %v9219, %v10021
      %v10086 = vsel %vm9920, %v9221, %v10022
      %v10087 = vsel %vm9920, %v9223, %v10023
      %v10088 = vsel %vm9920, %v9225, %v10024
      %v10089 = vsel %vm9920, %v9227, %v10025
      %v10090 = vsel %vm9920, %v9229, %v10026
      %v10091 = vsel %vm9920, %v9231, %v10027
      %v10092 = vsel %vm9920, %v9233, %v10028
      %v10093 = vsel %vm9920, %v9235, %v10029
      %v10094 = vsel %vm9920, %v9237, %v10030
      %v10095 = vsel %vm9920, %v9239, %v10031
      %v10096 = vsel %vm9920, %v9241, %v10032
      %v10097 = vsel %vm9920, %v9243, %v10033
      %v10098 = vsel %vm9920, %v9245, %v10034
      %v10099 = vsel %vm9920, %v9247, %v10035
      %v10100 = vsel %vm9920, %v9249, %v10036
      %v10101 = vsel %vm9920, %v9251, %v10037
      %v10102 = vsel %vm9920, %v9253, %v10038
      %v10103 = vsel %vm9920, %v9255, %v10039
      %v10104 = vsel %vm9920, %v9257, %v10040
      %v10105 = vsel %vm9920, %v9259, %v10041
      %v10106 = vsel %vm9920, %v9261, %v10042
      %v10107 = vsel %vm9920, %v9263, %v10043
      %v10108 = vsel %vm9920, %v9265, %v10044
      %v10109 = vsel %vm9920, %v9267, %v10045
      %v10110 = vsel %vm9920, %v9269, %v10046
      %v10111 = vsel %vm9920, %v9271, %v10047
      %v10112 = vsel %vm9920, %v9273, %v10048
      %v10113 = vsel %vm9920, %v9275, %v10049
      %v10114 = vsel %vm9919, %v8828, %v10050
      %v10115 = vsel %vm9919, %v8829, %v10051
      %v10116 = vsel %vm9919, %v8830, %v10052
      %v10117 = vsel %vm9919, %v8831, %v10053
      %v10118 = vsel %vm9919, %v8832, %v10054
      %v10119 = vsel %vm9919, %v8833, %v10055
      %v10120 = vsel %vm9919, %v8834, %v10056
      %v10121 = vsel %vm9919, %v8835, %v10057
      %v10122 = vsel %vm9919, %v8836, %v10058
      %v10123 = vsel %vm9919, %v8837, %v10059
      %v10124 = vsel %vm9919, %v8838, %v10060
      %v10125 = vsel %vm9919, %v8839, %v10061
      %v10126 = vsel %vm9919, %v8840, %v10062
      %v10127 = vsel %vm9919, %v8841, %v10063
      %v10128 = vsel %vm9919, %v8842, %v10064
      %v10129 = vsel %vm9919, %v8843, %v10065
      %v10130 = vsel %vm9919, %v8844, %v10066
      %v10131 = vsel %vm9919, %v8845, %v10067
      %v10132 = vsel %vm9919, %v8846, %v10068
      %v10133 = vsel %vm9919, %v8847, %v10069
      %v10134 = vsel %vm9919, %v8848, %v10070
      %v10135 = vsel %vm9919, %v8849, %v10071
      %v10136 = vsel %vm9919, %v8850, %v10072
      %v10137 = vsel %vm9919, %v8851, %v10073
      %v10138 = vsel %vm9919, %v8852, %v10074
      %v10139 = vsel %vm9919, %v8853, %v10075
      %v10140 = vsel %vm9919, %v8854, %v10076
      %v10141 = vsel %vm9919, %v8855, %v10077
      %v10142 = vsel %vm9919, %v8856, %v10078
      %v10143 = vsel %vm9919, %v8857, %v10079
      %v10144 = vsel %vm9919, %v8858, %v10080
      %v10145 = vsel %vm9919, %v8859, %v10081
      %v10146 = vsel %vm9919, %v8860, %v10082
      %v10147 = vsel %vm9919, %v8861, %v10083
      %v10148 = vsel %vm9919, %v8862, %v10084
      %v10149 = vsel %vm9919, %v8863, %v10085
      %v10150 = vsel %vm9919, %v8864, %v10086
      %v10151 = vsel %vm9919, %v8865, %v10087
      %v10152 = vsel %vm9919, %v8866, %v10088
      %v10153 = vsel %vm9919, %v8867, %v10089
      %v10154 = vsel %vm9919, %v8868, %v10090
      %v10155 = vsel %vm9919, %v8869, %v10091
      %v10156 = vsel %vm9919, %v8870, %v10092
      %v10157 = vsel %vm9919, %v8871, %v10093
      %v10158 = vsel %vm9919, %v8872, %v10094
      %v10159 = vsel %vm9919, %v8873, %v10095
      %v10160 = vsel %vm9919, %v8874, %v10096
      %v10161 = vsel %vm9919, %v8875, %v10097
      %v10162 = vsel %vm9919, %v8876, %v10098
      %v10163 = vsel %vm9919, %v8877, %v10099
      %v10164 = vsel %vm9919, %v8878, %v10100
      %v10165 = vsel %vm9919, %v8879, %v10101
      %v10166 = vsel %vm9919, %v8880, %v10102
      %v10167 = vsel %vm9919, %v8881, %v10103
      %v10168 = vsel %vm9919, %v8882, %v10104
      %v10169 = vsel %vm9919, %v8883, %v10105
      %v10170 = vsel %vm9919, %v8884, %v10106
      %v10171 = vsel %vm9919, %v8885, %v10107
      %v10172 = vsel %vm9919, %v8886, %v10108
      %v10173 = vsel %vm9919, %v8887, %v10109
      %v10174 = vsel %vm9919, %v8888, %v10110
      %v10175 = vsel %vm9919, %v8889, %v10111
      %v10176 = vsel %vm9919, %v8890, %v10112
      %v10177 = vsel %vm9919, %v8891, %v10113
      %10178 = vst [vmem:[%s334] sm:$0xff] %v10114
      %10179 = vst [vmem:[%s334 + $0x8] sm:$0xff] %v10115
      %10180 = vst [vmem:[%s334 + $0x10] sm:$0xff] %v10116
      %10181 = vst [vmem:[%s334 + $0x18] sm:$0xff] %v10117
      %10182 = vst [vmem:[%s334 + $0x20] sm:$0xff] %v10118
      %10183 = vst [vmem:[%s334 + $0x28] sm:$0xff] %v10119
      %10184 = vst [vmem:[%s334 + $0x30] sm:$0xff] %v10120
      %10185 = vst [vmem:[%s334 + $0x38] sm:$0xff] %v10121
      %10186 = vst [vmem:[%s334 + $0x40] sm:$0xff] %v10122
      %10187 = vst [vmem:[%s334 + $0x48] sm:$0xff] %v10123
      %10188 = vst [vmem:[%s334 + $0x50] sm:$0xff] %v10124
      %10189 = vst [vmem:[%s334 + $0x58] sm:$0xff] %v10125
      %10190 = vst [vmem:[%s334 + $0x60] sm:$0xff] %v10126
      %10191 = vst [vmem:[%s334 + $0x68] sm:$0xff] %v10127
      %10192 = vst [vmem:[%s334 + $0x70] sm:$0xff] %v10128
      %10193 = vst [vmem:[%s334 + $0x78] sm:$0xff] %v10129
      %10194 = vst [vmem:[%s334 + $0x80] sm:$0xff] %v10130
      %10195 = vst [vmem:[%s334 + $0x88] sm:$0xff] %v10131
      %10196 = vst [vmem:[%s334 + $0x90] sm:$0xff] %v10132
      %10197 = vst [vmem:[%s334 + $0x98] sm:$0xff] %v10133
      %10198 = vst [vmem:[%s334 + $0xa0] sm:$0xff] %v10134
      %10199 = vst [vmem:[%s334 + $0xa8] sm:$0xff] %v10135
      %10200 = vst [vmem:[%s334 + $0xb0] sm:$0xff] %v10136
      %10201 = vst [vmem:[%s334 + $0xb8] sm:$0xff] %v10137
      %10202 = vst [vmem:[%s334 + $0xc0] sm:$0xff] %v10138
      %10203 = vst [vmem:[%s334 + $0xc8] sm:$0xff] %v10139
      %10204 = vst [vmem:[%s334 + $0xd0] sm:$0xff] %v10140
      %10205 = vst [vmem:[%s334 + $0xd8] sm:$0xff] %v10141
      %10206 = vst [vmem:[%s334 + $0xe0] sm:$0xff] %v10142
      %10207 = vst [vmem:[%s334 + $0xe8] sm:$0xff] %v10143
      %10208 = vst [vmem:[%s334 + $0xf0] sm:$0xff] %v10144
      %10209 = vst [vmem:[%s334 + $0xf8] sm:$0xff] %v10145
      %10210 = vst [vmem:[%s334 + $0x100] sm:$0xff] %v10146
      %10211 = vst [vmem:[%s334 + $0x108] sm:$0xff] %v10147
      %10212 = vst [vmem:[%s334 + $0x110] sm:$0xff] %v10148
      %10213 = vst [vmem:[%s334 + $0x118] sm:$0xff] %v10149
      %10214 = vst [vmem:[%s334 + $0x120] sm:$0xff] %v10150
      %10215 = vst [vmem:[%s334 + $0x128] sm:$0xff] %v10151
      %10216 = vst [vmem:[%s334 + $0x130] sm:$0xff] %v10152
      %10217 = vst [vmem:[%s334 + $0x138] sm:$0xff] %v10153
      %10218 = vst [vmem:[%s334 + $0x140] sm:$0xff] %v10154
      %10219 = vst [vmem:[%s334 + $0x148] sm:$0xff] %v10155
      %10220 = vst [vmem:[%s334 + $0x150] sm:$0xff] %v10156
      %10221 = vst [vmem:[%s334 + $0x158] sm:$0xff] %v10157
      %10222 = vst [vmem:[%s334 + $0x160] sm:$0xff] %v10158
      %10223 = vst [vmem:[%s334 + $0x168] sm:$0xff] %v10159
      %10224 = vst [vmem:[%s334 + $0x170] sm:$0xff] %v10160
      %10225 = vst [vmem:[%s334 + $0x178] sm:$0xff] %v10161
      %10226 = vst [vmem:[%s334 + $0x180] sm:$0xff] %v10162
      %10227 = vst [vmem:[%s334 + $0x188] sm:$0xff] %v10163
      %10228 = vst [vmem:[%s334 + $0x190] sm:$0xff] %v10164
      %10229 = vst [vmem:[%s334 + $0x198] sm:$0xff] %v10165
      %10230 = vst [vmem:[%s334 + $0x1a0] sm:$0xff] %v10166
      %10231 = vst [vmem:[%s334 + $0x1a8] sm:$0xff] %v10167
      %10232 = vst [vmem:[%s334 + $0x1b0] sm:$0xff] %v10168
      %10233 = vst [vmem:[%s334 + $0x1b8] sm:$0xff] %v10169
      %10234 = vst [vmem:[%s334 + $0x1c0] sm:$0xff] %v10170
      %10235 = vst [vmem:[%s334 + $0x1c8] sm:$0xff] %v10171
      %10236 = vst [vmem:[%s334 + $0x1d0] sm:$0xff] %v10172
      %10237 = vst [vmem:[%s334 + $0x1d8] sm:$0xff] %v10173
      %10238 = vst [vmem:[%s334 + $0x1e0] sm:$0xff] %v10174
      %10239 = vst [vmem:[%s334 + $0x1e8] sm:$0xff] %v10175
      %10240 = vst [vmem:[%s334 + $0x1f0] sm:$0xff] %v10176
      %10241 = vst [vmem:[%s334 + $0x1f8] sm:$0xff] %v10177
      %s10242 = smul.u32 64, %s20
      %p10243 = scmp.lt.s32.totalorder %s10242, 127
      %s10244 = scalar_select %p10243, %s10242, 127
      %s10245 = smul.addr %s10244, 8
      %s10246 = scalar_lea.vmem %s9, %s10245
      // Predicated region
      $region57: #{gs_embed_forward.1} parent=55 // pred_check
        %p10247 = pneg %p232
      $region58: #{gs_embed_forward.1} parent=55 // pred_check_branch
        %10249 = sbr.rel (%p10247) target = $region60
      $region59: #{gs_embed_forward.1} parent=55 // pred_region
        %s10250 = smul.u32 64, %s20
      $region60: #{gs_embed_forward.1} parent=55 // pred_fallthru
        _
    $region56: #{gs_embed_forward.1} parent=5 // pred_fallthru
      _
    %p10251 = scmp.le.s32.totalorder 2, %s15
    // Predicated region
    $region61: #{gs_embed_forward.1} parent=5 // pred_check
      %p10252 = pneg %p10251
    $region62: #{gs_embed_forward.1} parent=5 // pred_check_branch
      %10254 = sbr.rel (%p10252) target = $region64
    $region63: #{gs_embed_forward.1} parent=5 // pred_region
      %s10255 = ssub.s32 %s15, 2
      // Predicated region
      $region65: #{gs_embed_forward.1} parent=63 // pred_check
        %p10256 = pneg %p238
      $region66: #{gs_embed_forward.1} parent=63 // pred_check_branch
        %10258 = sbr.rel (%p10256) target = $region68
      $region67: #{gs_embed_forward.1} parent=63 // pred_region
        %s10259 = smul.u32 64, %s21
        %p10260 = scmp.lt.s32.totalorder %s10259, 127
        %s10261 = scalar_select %p10260, %s10259, 127
        %s10262 = smul.addr %s10261, 8
        %s10263 = scalar_lea.vmem %s9, %s10262
      $region68: #{gs_embed_forward.1} parent=63 // pred_fallthru
        _
    $region64: #{gs_embed_forward.1} parent=5 // pred_fallthru
      _
  $region6: #{gs_embed_forward.1} parent=0 // loop_footer
    %s19 = sadd.s32 1, %s15
  $region7: #{gs_embed_forward.1} parent=0 // loop_footer_branch
    %14 = sbr.rel target = $region3
  $region8: #{gs_embed_forward.1} parent=0 // loop_exit
    _

</llo_original>
